<compile_context>
chip_gen: v7x
topology: tpu7x:2x2x1
jax: 0.10.0
libtpu: 0.0.40
codegen_flags: <defaults>
</compile_context>

<pallas_src>
import functools

import jax
import jax.numpy as jnp
from jax.experimental import pallas as pl
from jax.experimental.pallas import tpu as pltpu

LATENT_DIM = 100
N_NOTES = 128
SEQ_LENGTH = 128
HIDDEN = (256, 512, 1024)
OUT_DIM = SEQ_LENGTH * N_NOTES  # 16384
BN_EPS = 1e-5
LRELU_SLOPE = 0.2


# --------------------------------------------------------------------------
# Kernel
# --------------------------------------------------------------------------
def _dense_bn_lrelu(h, w_ref, b_ref, g_ref, beta_ref):
    """bf16 matmul with f32 accumulation, then fp32 BN (train stats) + LeakyReLU."""
    y = jnp.dot(h.astype(jnp.bfloat16), w_ref[...],
                preferred_element_type=jnp.float32)
    y = y + b_ref[...]
    mean = jnp.mean(y, axis=0, keepdims=True)
    var = jnp.mean((y - mean) * (y - mean), axis=0, keepdims=True)
    y = (y - mean) * jax.lax.rsqrt(var + BN_EPS)
    y = y * g_ref[...] + beta_ref[...]
    return jnp.where(y > 0, y, LRELU_SLOPE * y)


def _generator_kernel(x_ref,
                      w1_ref, b1_ref, g1_ref, be1_ref,
                      w2_ref, b2_ref, g2_ref, be2_ref,
                      w3_ref, b3_ref, g3_ref, be3_ref,
                      w4_ref, b4_ref,
                      o_ref,
                      h_ref):
    # Hidden trunk: computed once (grid step 0), cached in VMEM scratch.
    @pl.when(pl.program_id(0) == 0)
    def _():
        h = x_ref[...]                                     # (B, 100) f32
        h = _dense_bn_lrelu(h, w1_ref, b1_ref, g1_ref, be1_ref)   # (B, 256)
        h = _dense_bn_lrelu(h, w2_ref, b2_ref, g2_ref, be2_ref)   # (B, 512)
        h = _dense_bn_lrelu(h, w3_ref, b3_ref, g3_ref, be3_ref)   # (B, 1024)
        h_ref[...] = h.astype(jnp.bfloat16)

    # Final layer: one lane-dense (1024, tn) bf16 weight tile per grid step.
    y = jnp.dot(h_ref[...], w4_ref[...], preferred_element_type=jnp.float32)
    y = y + b4_ref[...]
    o_ref[...] = jax.nn.sigmoid(y)


# --------------------------------------------------------------------------
# Wrapper
# --------------------------------------------------------------------------
def generator_pallas(x, params, *, tn=2048):
    B, _ = x.shape
    assert OUT_DIM % tn == 0
    n_tiles = OUT_DIM // tn

    def const_spec(shape):
        # Constant block index across the grid -> DMA'd once, stays resident.
        return pl.BlockSpec(shape, lambda j: (0, 0))

    in_specs = [
        const_spec((B, LATENT_DIM)),                                   # x
        const_spec((LATENT_DIM, HIDDEN[0])), const_spec((1, HIDDEN[0])),
        const_spec((1, HIDDEN[0])), const_spec((1, HIDDEN[0])),        # layer 1
        const_spec((HIDDEN[0], HIDDEN[1])), const_spec((1, HIDDEN[1])),
        const_spec((1, HIDDEN[1])), const_spec((1, HIDDEN[1])),        # layer 2
        const_spec((HIDDEN[1], HIDDEN[2])), const_spec((1, HIDDEN[2])),
        const_spec((1, HIDDEN[2])), const_spec((1, HIDDEN[2])),        # layer 3
        pl.BlockSpec((HIDDEN[2], tn), lambda j: (0, j)),               # W4 tile
        pl.BlockSpec((1, tn), lambda j: (0, j)),                       # b4 tile
    ]

    grid_spec = pltpu.PrefetchScalarGridSpec(
        num_scalar_prefetch=0,
        grid=(n_tiles,),
        in_specs=in_specs,
        out_specs=pl.BlockSpec((B, tn), lambda j: (0, j)),
        scratch_shapes=[pltpu.VMEM((B, HIDDEN[2]), jnp.bfloat16)],
    )

    l1, l2, l3, l4 = params
    args = (
        x,
        l1["w"], l1["b"].reshape(1, -1), l1["gamma"].reshape(1, -1), l1["beta"].reshape(1, -1),
        l2["w"], l2["b"].reshape(1, -1), l2["gamma"].reshape(1, -1), l2["beta"].reshape(1, -1),
        l3["w"], l3["b"].reshape(1, -1), l3["gamma"].reshape(1, -1), l3["beta"].reshape(1, -1),
        l4["w"], l4["b"].reshape(1, -1),
    )

    out = pl.pallas_call(
        _generator_kernel,
        out_shape=jax.ShapeDtypeStruct((B, OUT_DIM), jnp.float32),
        grid_spec=grid_spec,
        compiler_params=pltpu.CompilerParams(
            # Trunk is computed on step 0 and reused -> must stay sequential.
            dimension_semantics=("arbitrary",),
            # ~11 MiB working set; 32 MiB is safe on v5e/v6e/v7x.
            vmem_limit_bytes=32 << 20,
        ),
    )(*args)

    # x.view(-1, SEQ_LENGTH, N_NOTES)
    return out.reshape(-1, SEQ_LENGTH, N_NOTES)


@jax.jit
def generator_forward(x, params):
    return generator_pallas(x, params)


# --------------------------------------------------------------------------
# Parameter init (deterministic, PyTorch-Linear-like uniform scaling).
# Weights stored bf16 (HBM-bandwidth win), biases / BN params fp32.
# --------------------------------------------------------------------------
def init_params(key):
    dims = [LATENT_DIM, *HIDDEN, OUT_DIM]
    params = []
    for i in range(4):
        fan_in, fan_out = dims[i], dims[i + 1]
        key, kw, kb = jax.random.split(key, 3)
        bound = 1.0 / (fan_in ** 0.5)
        w = jax.random.uniform(kw, (fan_in, fan_out), jnp.float32, -bound, bound)
        b = jax.random.uniform(kb, (fan_out,), jnp.float32, -bound, bound)
        layer = {"w": w.astype(jnp.bfloat16), "b": b}
        if i < 3:  # BatchNorm affine params (gamma=1, beta=0 at init)
            layer["gamma"] = jnp.ones((fan_out,), jnp.float32)
            layer["beta"] = jnp.zeros((fan_out,), jnp.float32)
        params.append(layer)
    return params


# --------------------------------------------------------------------------
if __name__ == "__main__":
    key = jax.random.PRNGKey(0)
    k_params, k_x = jax.random.split(key)
    params = init_params(k_params)

    B = 4  # BatchNorm1d (training mode) needs batch > 1
    x = jax.random.normal(k_x, (B, LATENT_DIM), jnp.float32)

    y = generator_forward(x, params)
    jax.block_until_ready(y)

    assert y.shape == (B, SEQ_LENGTH, N_NOTES), y.shape
    assert y.dtype == jnp.float32
    assert bool(jnp.all((y >= 0.0) & (y <= 1.0)))  # sigmoid range sanity check
    assert bool(jnp.all(jnp.isfinite(y)))

    print("KERNEL_OK")
</pallas_src>

<mosaic_0001>
module attributes {stable_mosaic.version = 11 : i64} {
  func.func @_generator_kernel(%arg0: i32, %arg1: memref<4x100xf32, #tpu.memory_space<vmem>>, %arg2: memref<100x256xbf16, #tpu.memory_space<vmem>>, %arg3: memref<1x256xf32, #tpu.memory_space<vmem>>, %arg4: memref<1x256xf32, #tpu.memory_space<vmem>>, %arg5: memref<1x256xf32, #tpu.memory_space<vmem>>, %arg6: memref<256x512xbf16, #tpu.memory_space<vmem>>, %arg7: memref<1x512xf32, #tpu.memory_space<vmem>>, %arg8: memref<1x512xf32, #tpu.memory_space<vmem>>, %arg9: memref<1x512xf32, #tpu.memory_space<vmem>>, %arg10: memref<512x1024xbf16, #tpu.memory_space<vmem>>, %arg11: memref<1x1024xf32, #tpu.memory_space<vmem>>, %arg12: memref<1x1024xf32, #tpu.memory_space<vmem>>, %arg13: memref<1x1024xf32, #tpu.memory_space<vmem>>, %arg14: memref<1024x2048xbf16, #tpu.memory_space<vmem>>, %arg15: memref<1x2048xf32, #tpu.memory_space<vmem>>, %arg16: memref<4x2048xf32, #tpu.memory_space<vmem>>, %arg17: memref<4x1024xbf16, #tpu.memory_space<vmem>>) attributes {dimension_semantics = [#tpu.dimension_semantics<arbitrary>], iteration_bounds = array<i64: 8>, scalar_prefetch = 0 : i64, scratch_operands = 1 : i64, tpu.core_type = #tpu.core_type<tc>, window_params = [{pipeline_mode = #tpu.pipeline_mode<synchronous>, transform_indices = @transform_0, window_bounds = array<i64: 4, 100>}, {pipeline_mode = #tpu.pipeline_mode<synchronous>, transform_indices = @transform_1, window_bounds = array<i64: 100, 256>}, {pipeline_mode = #tpu.pipeline_mode<synchronous>, transform_indices = @transform_2, window_bounds = array<i64: 1, 256>}, {pipeline_mode = #tpu.pipeline_mode<synchronous>, transform_indices = @transform_3, window_bounds = array<i64: 1, 256>}, {pipeline_mode = #tpu.pipeline_mode<synchronous>, transform_indices = @transform_4, window_bounds = array<i64: 1, 256>}, {pipeline_mode = #tpu.pipeline_mode<synchronous>, transform_indices = @transform_5, window_bounds = array<i64: 256, 512>}, {pipeline_mode = #tpu.pipeline_mode<synchronous>, transform_indices = @transform_6, window_bounds = array<i64: 1, 512>}, {pipeline_mode = #tpu.pipeline_mode<synchronous>, transform_indices = @transform_7, window_bounds = array<i64: 1, 512>}, {pipeline_mode = #tpu.pipeline_mode<synchronous>, transform_indices = @transform_8, window_bounds = array<i64: 1, 512>}, {pipeline_mode = #tpu.pipeline_mode<synchronous>, transform_indices = @transform_9, window_bounds = array<i64: 512, 1024>}, {pipeline_mode = #tpu.pipeline_mode<synchronous>, transform_indices = @transform_10, window_bounds = array<i64: 1, 1024>}, {pipeline_mode = #tpu.pipeline_mode<synchronous>, transform_indices = @transform_11, window_bounds = array<i64: 1, 1024>}, {pipeline_mode = #tpu.pipeline_mode<synchronous>, transform_indices = @transform_12, window_bounds = array<i64: 1, 1024>}, {transform_indices = @transform_13, window_bounds = array<i64: 1024, 2048>}, {transform_indices = @transform_14, window_bounds = array<i64: 1, 2048>}, {transform_indices = @transform_15, window_bounds = array<i64: 4, 2048>}]} {
    %c0_i32 = arith.constant 0 : i32
    %0 = arith.cmpi eq, %arg0, %c0_i32 : i32
    %1 = arith.extui %0 : i1 to i32
    %c0_i32_0 = arith.constant 0 : i32
    %2 = arith.cmpi ne, %1, %c0_i32_0 : i32
    scf.if %2 {
      %c0_9 = arith.constant 0 : index
      %c0_10 = arith.constant 0 : index
      %15 = vector.load %arg1[%c0_9, %c0_10] : memref<4x100xf32, #tpu.memory_space<vmem>>, vector<4x100xf32>
      %16 = arith.truncf %15 : vector<4x100xf32> to vector<4x100xbf16>
      %c0_11 = arith.constant 0 : index
      %c0_12 = arith.constant 0 : index
      %17 = vector.load %arg2[%c0_11, %c0_12] : memref<100x256xbf16, #tpu.memory_space<vmem>>, vector<100x256xbf16>
      %cst_13 = arith.constant dense<0.000000e+00> : vector<4x256xf32>
      %18 = tpu.matmul %16, %17, %cst_13 {dimension_numbers = #tpu.dot_dimension_numbers<[1], [0], [0], [1], [0, 0, 1, 1], [], []>} : vector<4x100xbf16>, vector<100x256xbf16>, vector<4x256xf32> -> vector<4x256xf32>
      %c0_14 = arith.constant 0 : index
      %c0_15 = arith.constant 0 : index
      %19 = vector.load %arg3[%c0_14, %c0_15] : memref<1x256xf32, #tpu.memory_space<vmem>>, vector<1x256xf32>
      %20 = vector.broadcast %19 : vector<1x256xf32> to vector<4x256xf32>
      %21 = arith.addf %18, %20 : vector<4x256xf32>
      %cst_16 = arith.constant dense<0.000000e+00> : vector<256xf32>
      %22 = vector.multi_reduction <add>, %21, %cst_16 [0] : vector<4x256xf32> to vector<256xf32>
      %23 = vector.shape_cast %22 : vector<256xf32> to vector<1x256xf32>
      %cst_17 = arith.constant 4.000000e+00 : f32
      %24 = vector.broadcast %cst_17 : f32 to vector<1x256xf32>
      %25 = arith.divf %23, %24 : vector<1x256xf32>
      %26 = vector.broadcast %25 : vector<1x256xf32> to vector<4x256xf32>
      %27 = arith.subf %21, %26 : vector<4x256xf32>
      %28 = vector.broadcast %25 : vector<1x256xf32> to vector<4x256xf32>
      %29 = arith.subf %21, %28 : vector<4x256xf32>
      %30 = arith.mulf %27, %29 : vector<4x256xf32>
      %cst_18 = arith.constant dense<0.000000e+00> : vector<256xf32>
      %31 = vector.multi_reduction <add>, %30, %cst_18 [0] : vector<4x256xf32> to vector<256xf32>
      %32 = vector.shape_cast %31 : vector<256xf32> to vector<1x256xf32>
      %cst_19 = arith.constant 4.000000e+00 : f32
      %33 = vector.broadcast %cst_19 : f32 to vector<1x256xf32>
      %34 = arith.divf %32, %33 : vector<1x256xf32>
      %35 = vector.broadcast %25 : vector<1x256xf32> to vector<4x256xf32>
      %36 = arith.subf %21, %35 : vector<4x256xf32>
      %cst_20 = arith.constant 9.99999974E-6 : f32
      %37 = vector.broadcast %cst_20 : f32 to vector<1x256xf32>
      %38 = arith.addf %34, %37 : vector<1x256xf32>
      %39 = math.rsqrt %38 : vector<1x256xf32>
      %40 = vector.broadcast %39 : vector<1x256xf32> to vector<4x256xf32>
      %41 = arith.mulf %36, %40 : vector<4x256xf32>
      %c0_21 = arith.constant 0 : index
      %c0_22 = arith.constant 0 : index
      %42 = vector.load %arg4[%c0_21, %c0_22] : memref<1x256xf32, #tpu.memory_space<vmem>>, vector<1x256xf32>
      %43 = vector.broadcast %42 : vector<1x256xf32> to vector<4x256xf32>
      %44 = arith.mulf %41, %43 : vector<4x256xf32>
      %c0_23 = arith.constant 0 : index
      %c0_24 = arith.constant 0 : index
      %45 = vector.load %arg5[%c0_23, %c0_24] : memref<1x256xf32, #tpu.memory_space<vmem>>, vector<1x256xf32>
      %46 = vector.broadcast %45 : vector<1x256xf32> to vector<4x256xf32>
      %47 = arith.addf %44, %46 : vector<4x256xf32>
      %cst_25 = arith.constant 0.000000e+00 : f32
      %48 = vector.broadcast %cst_25 : f32 to vector<4x256xf32>
      %49 = arith.cmpf ogt, %47, %48 : vector<4x256xf32>
      %cst_26 = arith.constant 2.000000e-01 : f32
      %50 = vector.broadcast %cst_26 : f32 to vector<4x256xf32>
      %51 = arith.mulf %50, %47 : vector<4x256xf32>
      %52 = arith.select %49, %47, %51 : vector<4x256xi1>, vector<4x256xf32>
      %53 = arith.truncf %52 : vector<4x256xf32> to vector<4x256xbf16>
      %c0_27 = arith.constant 0 : index
      %c0_28 = arith.constant 0 : index
      %54 = vector.load %arg6[%c0_27, %c0_28] : memref<256x512xbf16, #tpu.memory_space<vmem>>, vector<256x512xbf16>
      %cst_29 = arith.constant dense<0.000000e+00> : vector<4x512xf32>
      %55 = tpu.matmul %53, %54, %cst_29 {dimension_numbers = #tpu.dot_dimension_numbers<[1], [0], [0], [1], [0, 0, 1, 1], [], []>} : vector<4x256xbf16>, vector<256x512xbf16>, vector<4x512xf32> -> vector<4x512xf32>
      %c0_30 = arith.constant 0 : index
      %c0_31 = arith.constant 0 : index
      %56 = vector.load %arg7[%c0_30, %c0_31] : memref<1x512xf32, #tpu.memory_space<vmem>>, vector<1x512xf32>
      %57 = vector.broadcast %56 : vector<1x512xf32> to vector<4x512xf32>
      %58 = arith.addf %55, %57 : vector<4x512xf32>
      %cst_32 = arith.constant dense<0.000000e+00> : vector<512xf32>
      %59 = vector.multi_reduction <add>, %58, %cst_32 [0] : vector<4x512xf32> to vector<512xf32>
      %60 = vector.shape_cast %59 : vector<512xf32> to vector<1x512xf32>
      %cst_33 = arith.constant 4.000000e+00 : f32
      %61 = vector.broadcast %cst_33 : f32 to vector<1x512xf32>
      %62 = arith.divf %60, %61 : vector<1x512xf32>
      %63 = vector.broadcast %62 : vector<1x512xf32> to vector<4x512xf32>
      %64 = arith.subf %58, %63 : vector<4x512xf32>
      %65 = vector.broadcast %62 : vector<1x512xf32> to vector<4x512xf32>
      %66 = arith.subf %58, %65 : vector<4x512xf32>
      %67 = arith.mulf %64, %66 : vector<4x512xf32>
      %cst_34 = arith.constant dense<0.000000e+00> : vector<512xf32>
      %68 = vector.multi_reduction <add>, %67, %cst_34 [0] : vector<4x512xf32> to vector<512xf32>
      %69 = vector.shape_cast %68 : vector<512xf32> to vector<1x512xf32>
      %cst_35 = arith.constant 4.000000e+00 : f32
      %70 = vector.broadcast %cst_35 : f32 to vector<1x512xf32>
      %71 = arith.divf %69, %70 : vector<1x512xf32>
      %72 = vector.broadcast %62 : vector<1x512xf32> to vector<4x512xf32>
      %73 = arith.subf %58, %72 : vector<4x512xf32>
      %cst_36 = arith.constant 9.99999974E-6 : f32
      %74 = vector.broadcast %cst_36 : f32 to vector<1x512xf32>
      %75 = arith.addf %71, %74 : vector<1x512xf32>
      %76 = math.rsqrt %75 : vector<1x512xf32>
      %77 = vector.broadcast %76 : vector<1x512xf32> to vector<4x512xf32>
      %78 = arith.mulf %73, %77 : vector<4x512xf32>
      %c0_37 = arith.constant 0 : index
      %c0_38 = arith.constant 0 : index
      %79 = vector.load %arg8[%c0_37, %c0_38] : memref<1x512xf32, #tpu.memory_space<vmem>>, vector<1x512xf32>
      %80 = vector.broadcast %79 : vector<1x512xf32> to vector<4x512xf32>
      %81 = arith.mulf %78, %80 : vector<4x512xf32>
      %c0_39 = arith.constant 0 : index
      %c0_40 = arith.constant 0 : index
      %82 = vector.load %arg9[%c0_39, %c0_40] : memref<1x512xf32, #tpu.memory_space<vmem>>, vector<1x512xf32>
      %83 = vector.broadcast %82 : vector<1x512xf32> to vector<4x512xf32>
      %84 = arith.addf %81, %83 : vector<4x512xf32>
      %cst_41 = arith.constant 0.000000e+00 : f32
      %85 = vector.broadcast %cst_41 : f32 to vector<4x512xf32>
      %86 = arith.cmpf ogt, %84, %85 : vector<4x512xf32>
      %cst_42 = arith.constant 2.000000e-01 : f32
      %87 = vector.broadcast %cst_42 : f32 to vector<4x512xf32>
      %88 = arith.mulf %87, %84 : vector<4x512xf32>
      %89 = arith.select %86, %84, %88 : vector<4x512xi1>, vector<4x512xf32>
      %90 = arith.truncf %89 : vector<4x512xf32> to vector<4x512xbf16>
      %c0_43 = arith.constant 0 : index
      %c0_44 = arith.constant 0 : index
      %91 = vector.load %arg10[%c0_43, %c0_44] : memref<512x1024xbf16, #tpu.memory_space<vmem>>, vector<512x1024xbf16>
      %cst_45 = arith.constant dense<0.000000e+00> : vector<4x1024xf32>
      %92 = tpu.matmul %90, %91, %cst_45 {dimension_numbers = #tpu.dot_dimension_numbers<[1], [0], [0], [1], [0, 0, 1, 1], [], []>} : vector<4x512xbf16>, vector<512x1024xbf16>, vector<4x1024xf32> -> vector<4x1024xf32>
      %c0_46 = arith.constant 0 : index
      %c0_47 = arith.constant 0 : index
      %93 = vector.load %arg11[%c0_46, %c0_47] : memref<1x1024xf32, #tpu.memory_space<vmem>>, vector<1x1024xf32>
      %94 = vector.broadcast %93 : vector<1x1024xf32> to vector<4x1024xf32>
      %95 = arith.addf %92, %94 : vector<4x1024xf32>
      %cst_48 = arith.constant dense<0.000000e+00> : vector<1024xf32>
      %96 = vector.multi_reduction <add>, %95, %cst_48 [0] : vector<4x1024xf32> to vector<1024xf32>
      %97 = vector.shape_cast %96 : vector<1024xf32> to vector<1x1024xf32>
      %cst_49 = arith.constant 4.000000e+00 : f32
      %98 = vector.broadcast %cst_49 : f32 to vector<1x1024xf32>
      %99 = arith.divf %97, %98 : vector<1x1024xf32>
      %100 = vector.broadcast %99 : vector<1x1024xf32> to vector<4x1024xf32>
      %101 = arith.subf %95, %100 : vector<4x1024xf32>
      %102 = vector.broadcast %99 : vector<1x1024xf32> to vector<4x1024xf32>
      %103 = arith.subf %95, %102 : vector<4x1024xf32>
      %104 = arith.mulf %101, %103 : vector<4x1024xf32>
      %cst_50 = arith.constant dense<0.000000e+00> : vector<1024xf32>
      %105 = vector.multi_reduction <add>, %104, %cst_50 [0] : vector<4x1024xf32> to vector<1024xf32>
      %106 = vector.shape_cast %105 : vector<1024xf32> to vector<1x1024xf32>
      %cst_51 = arith.constant 4.000000e+00 : f32
      %107 = vector.broadcast %cst_51 : f32 to vector<1x1024xf32>
      %108 = arith.divf %106, %107 : vector<1x1024xf32>
      %109 = vector.broadcast %99 : vector<1x1024xf32> to vector<4x1024xf32>
      %110 = arith.subf %95, %109 : vector<4x1024xf32>
      %cst_52 = arith.constant 9.99999974E-6 : f32
      %111 = vector.broadcast %cst_52 : f32 to vector<1x1024xf32>
      %112 = arith.addf %108, %111 : vector<1x1024xf32>
      %113 = math.rsqrt %112 : vector<1x1024xf32>
      %114 = vector.broadcast %113 : vector<1x1024xf32> to vector<4x1024xf32>
      %115 = arith.mulf %110, %114 : vector<4x1024xf32>
      %c0_53 = arith.constant 0 : index
      %c0_54 = arith.constant 0 : index
      %116 = vector.load %arg12[%c0_53, %c0_54] : memref<1x1024xf32, #tpu.memory_space<vmem>>, vector<1x1024xf32>
      %117 = vector.broadcast %116 : vector<1x1024xf32> to vector<4x1024xf32>
      %118 = arith.mulf %115, %117 : vector<4x1024xf32>
      %c0_55 = arith.constant 0 : index
      %c0_56 = arith.constant 0 : index
      %119 = vector.load %arg13[%c0_55, %c0_56] : memref<1x1024xf32, #tpu.memory_space<vmem>>, vector<1x1024xf32>
      %120 = vector.broadcast %119 : vector<1x1024xf32> to vector<4x1024xf32>
      %121 = arith.addf %118, %120 : vector<4x1024xf32>
      %cst_57 = arith.constant 0.000000e+00 : f32
      %122 = vector.broadcast %cst_57 : f32 to vector<4x1024xf32>
      %123 = arith.cmpf ogt, %121, %122 : vector<4x1024xf32>
      %cst_58 = arith.constant 2.000000e-01 : f32
      %124 = vector.broadcast %cst_58 : f32 to vector<4x1024xf32>
      %125 = arith.mulf %124, %121 : vector<4x1024xf32>
      %126 = arith.select %123, %121, %125 : vector<4x1024xi1>, vector<4x1024xf32>
      %127 = arith.truncf %126 : vector<4x1024xf32> to vector<4x1024xbf16>
      %c0_59 = arith.constant 0 : index
      %c0_60 = arith.constant 0 : index
      %128 = vector.load %arg17[%c0_59, %c0_60] : memref<4x1024xbf16, #tpu.memory_space<vmem>>, vector<4x1024xbf16>
      tpu.vector_store %arg17[%c0_59, %c0_60], %127 {strides = array<i32>} : memref<4x1024xbf16, #tpu.memory_space<vmem>>, vector<4x1024xbf16>,
    } else {
    }
    %c0 = arith.constant 0 : index
    %c0_1 = arith.constant 0 : index
    %3 = vector.load %arg17[%c0, %c0_1] : memref<4x1024xbf16, #tpu.memory_space<vmem>>, vector<4x1024xbf16>
    %c0_2 = arith.constant 0 : index
    %c0_3 = arith.constant 0 : index
    %4 = vector.load %arg14[%c0_2, %c0_3] : memref<1024x2048xbf16, #tpu.memory_space<vmem>>, vector<1024x2048xbf16>
    %cst = arith.constant dense<0.000000e+00> : vector<4x2048xf32>
    %5 = tpu.matmul %3, %4, %cst {dimension_numbers = #tpu.dot_dimension_numbers<[1], [0], [0], [1], [0, 0, 1, 1], [], []>} : vector<4x1024xbf16>, vector<1024x2048xbf16>, vector<4x2048xf32> -> vector<4x2048xf32>
    %c0_4 = arith.constant 0 : index
    %c0_5 = arith.constant 0 : index
    %6 = vector.load %arg15[%c0_4, %c0_5] : memref<1x2048xf32, #tpu.memory_space<vmem>>, vector<1x2048xf32>
    %7 = vector.broadcast %6 : vector<1x2048xf32> to vector<4x2048xf32>
    %8 = arith.addf %5, %7 : vector<4x2048xf32>
    %9 = arith.negf %8 : vector<4x2048xf32>
    %10 = math.exp %9 : vector<4x2048xf32>
    %cst_6 = arith.constant 1.000000e+00 : f32
    %11 = vector.broadcast %cst_6 : f32 to vector<4x2048xf32>
    %12 = arith.addf %11, %10 : vector<4x2048xf32>
    %13 = arith.divf %11, %12 : vector<4x2048xf32>
    %c0_7 = arith.constant 0 : index
    %c0_8 = arith.constant 0 : index
    %14 = vector.load %arg16[%c0_7, %c0_8] : memref<4x2048xf32, #tpu.memory_space<vmem>>, vector<4x2048xf32>
    tpu.vector_store %arg16[%c0_7, %c0_8], %13 {strides = array<i32>} : memref<4x2048xf32, #tpu.memory_space<vmem>>, vector<4x2048xf32>,
    return
  }
  func.func @transform_0(%arg0: i32) -> (i32, i32) {
    %c0_i32 = arith.constant 0 : i32
    %c0_i32_0 = arith.constant 0 : i32
    %c0_i32_1 = arith.constant 0 : i32
    return %c0_i32, %c0_i32_0 : i32, i32
  }
  func.func @transform_1(%arg0: i32) -> (i32, i32) {
    %c0_i32 = arith.constant 0 : i32
    %c0_i32_0 = arith.constant 0 : i32
    %c0_i32_1 = arith.constant 0 : i32
    return %c0_i32, %c0_i32_0 : i32, i32
  }
  func.func @transform_2(%arg0: i32) -> (i32, i32) {
    %c0_i32 = arith.constant 0 : i32
    %c0_i32_0 = arith.constant 0 : i32
    %c0_i32_1 = arith.constant 0 : i32
    return %c0_i32, %c0_i32_0 : i32, i32
  }
  func.func @transform_3(%arg0: i32) -> (i32, i32) {
    %c0_i32 = arith.constant 0 : i32
    %c0_i32_0 = arith.constant 0 : i32
    %c0_i32_1 = arith.constant 0 : i32
    return %c0_i32, %c0_i32_0 : i32, i32
  }
  func.func @transform_4(%arg0: i32) -> (i32, i32) {
    %c0_i32 = arith.constant 0 : i32
    %c0_i32_0 = arith.constant 0 : i32
    %c0_i32_1 = arith.constant 0 : i32
    return %c0_i32, %c0_i32_0 : i32, i32
  }
  func.func @transform_5(%arg0: i32) -> (i32, i32) {
    %c0_i32 = arith.constant 0 : i32
    %c0_i32_0 = arith.constant 0 : i32
    %c0_i32_1 = arith.constant 0 : i32
    return %c0_i32, %c0_i32_0 : i32, i32
  }
  func.func @transform_6(%arg0: i32) -> (i32, i32) {
    %c0_i32 = arith.constant 0 : i32
    %c0_i32_0 = arith.constant 0 : i32
    %c0_i32_1 = arith.constant 0 : i32
    return %c0_i32, %c0_i32_0 : i32, i32
  }
  func.func @transform_7(%arg0: i32) -> (i32, i32) {
    %c0_i32 = arith.constant 0 : i32
    %c0_i32_0 = arith.constant 0 : i32
    %c0_i32_1 = arith.constant 0 : i32
    return %c0_i32, %c0_i32_0 : i32, i32
  }
  func.func @transform_8(%arg0: i32) -> (i32, i32) {
    %c0_i32 = arith.constant 0 : i32
    %c0_i32_0 = arith.constant 0 : i32
    %c0_i32_1 = arith.constant 0 : i32
    return %c0_i32, %c0_i32_0 : i32, i32
  }
  func.func @transform_9(%arg0: i32) -> (i32, i32) {
    %c0_i32 = arith.constant 0 : i32
    %c0_i32_0 = arith.constant 0 : i32
    %c0_i32_1 = arith.constant 0 : i32
    return %c0_i32, %c0_i32_0 : i32, i32
  }
  func.func @transform_10(%arg0: i32) -> (i32, i32) {
    %c0_i32 = arith.constant 0 : i32
    %c0_i32_0 = arith.constant 0 : i32
    %c0_i32_1 = arith.constant 0 : i32
    return %c0_i32, %c0_i32_0 : i32, i32
  }
  func.func @transform_11(%arg0: i32) -> (i32, i32) {
    %c0_i32 = arith.constant 0 : i32
    %c0_i32_0 = arith.constant 0 : i32
    %c0_i32_1 = arith.constant 0 : i32
    return %c0_i32, %c0_i32_0 : i32, i32
  }
  func.func @transform_12(%arg0: i32) -> (i32, i32) {
    %c0_i32 = arith.constant 0 : i32
    %c0_i32_0 = arith.constant 0 : i32
    %c0_i32_1 = arith.constant 0 : i32
    return %c0_i32, %c0_i32_0 : i32, i32
  }
  func.func @transform_13(%arg0: i32) -> (i32, i32) {
    %c0_i32 = arith.constant 0 : i32
    %c0_i32_0 = arith.constant 0 : i32
    return %c0_i32, %arg0 : i32, i32
  }
  func.func @transform_14(%arg0: i32) -> (i32, i32) {
    %c0_i32 = arith.constant 0 : i32
    %c0_i32_0 = arith.constant 0 : i32
    return %c0_i32, %arg0 : i32, i32
  }
  func.func @transform_15(%arg0: i32) -> (i32, i32) {
    %c0_i32 = arith.constant 0 : i32
    %c0_i32_0 = arith.constant 0 : i32
    return %c0_i32, %arg0 : i32, i32
  }
}

</mosaic_0001>

<llo_original>
// kernel: generator_forward.1
$region0: #{generator_forward.1}
  #allocation0 [shape = 'u32[]', space=smem, size = 0x4, offset = 0x4, fixed_abs, tag = 'smem constant byte address 0x4 - core index']
  #allocation1 [shape = 'u32[144,128]{1,0:T(1,128)}', space=vmem, size = 0x12000, scoped, tag = 'internal scratch']
  #allocation2 [shape = 'bf16[4,1024]{1,0:T(4,128)(2,1)}', space=vmem, size = 0x2000, scoped, tag = 'scratch operand']
  %s0 = inlined_call_operand.hbm [shape: f32[4,100], index: 0, kind: input, shape index: {}]
  %s1 = inlined_call_operand.hbm [shape: bf16[100,256], index: 1, kind: input, shape index: {}]
  %s2 = inlined_call_operand.hbm [shape: f32[1,256], index: 2, kind: input, shape index: {}]
  %s3 = inlined_call_operand.hbm [shape: f32[1,256], index: 3, kind: input, shape index: {}]
  %s4 = inlined_call_operand.hbm [shape: f32[1,256], index: 4, kind: input, shape index: {}]
  %s5 = inlined_call_operand.hbm [shape: bf16[256,512], index: 5, kind: input, shape index: {}]
  %s6 = inlined_call_operand.hbm [shape: f32[1,512], index: 6, kind: input, shape index: {}]
  %s7 = inlined_call_operand.hbm [shape: f32[1,512], index: 7, kind: input, shape index: {}]
  %s8 = inlined_call_operand.hbm [shape: f32[1,512], index: 8, kind: input, shape index: {}]
  %s9 = inlined_call_operand.hbm [shape: bf16[512,1024], index: 9, kind: input, shape index: {}]
  %s10 = inlined_call_operand.hbm [shape: f32[1,1024], index: 10, kind: input, shape index: {}]
  %s11 = inlined_call_operand.hbm [shape: f32[1,1024], index: 11, kind: input, shape index: {}]
  %s12 = inlined_call_operand.hbm [shape: f32[1,1024], index: 12, kind: input, shape index: {}]
  %s13 = inlined_call_operand.hbm [shape: bf16[1024,16384], index: 13, kind: input, shape index: {}]
  %s14 = inlined_call_operand.hbm [shape: f32[1,16384], index: 14, kind: input, shape index: {}]
  %s15 = inlined_call_operand.vmem [shape: f32[4,16384], index: 15, kind: output, shape index: {}]
  %s16 = sld [smem:[#allocation0]]
  $region157: #{generator_forward.1} parent=0
    _
  %s18 = ssub.s32 1, %s16
  %s19 = scalar_select 0, %s18, %s16
  $region1: #{generator_forward.1} parent=0
    #allocation3 [shape = 'u8[2048]{0}', space=vmem, size = 0x800, scoped, tag = 'input window, operand 0, single buffered']
    #allocation4 [shape = 's32[2]{0}', space=sflag, size = 0x8, scoped, tag = 'scoped memory for generator_forward.1']
    #allocation5 [shape = 'u8[53248]{0}', space=vmem, size = 0xd000, scoped, tag = 'input window, operand 1, single buffered']
    #allocation6 [shape = 's32[1]{0}', space=sflag, size = 0x4, scoped, tag = 'scoped memory for generator_forward.1']
    #allocation7 [shape = 'u8[1024]{0}', space=vmem, size = 0x400, scoped, tag = 'input window, operand 2, single buffered']
    #allocation8 [shape = 'u8[1024]{0}', space=vmem, size = 0x400, scoped, tag = 'input window, operand 3, single buffered']
    #allocation9 [shape = 's32[1]{0}', space=sflag, size = 0x4, scoped, tag = 'scoped memory for generator_forward.1']
    #allocation10 [shape = 'u8[1024]{0}', space=vmem, size = 0x400, scoped, tag = 'input window, operand 4, single buffered']
    #allocation11 [shape = 'u8[262144]{0}', space=vmem, size = 0x40000, scoped, tag = 'input window, operand 5, single buffered']
    #allocation12 [shape = 's32[1]{0}', space=sflag, size = 0x4, scoped, tag = 'scoped memory for generator_forward.1']
    #allocation13 [shape = 'u8[2048]{0}', space=vmem, size = 0x800, scoped, tag = 'input window, operand 6, single buffered']
    #allocation14 [shape = 'u8[2048]{0}', space=vmem, size = 0x800, scoped, tag = 'input window, operand 7, single buffered']
    #allocation15 [shape = 's32[1]{0}', space=sflag, size = 0x4, scoped, tag = 'scoped memory for generator_forward.1']
    #allocation16 [shape = 'u8[2048]{0}', space=vmem, size = 0x800, scoped, tag = 'input window, operand 8, single buffered']
    #allocation17 [shape = 'u8[1048576]{0}', space=vmem, size = 0x100000, scoped, tag = 'input window, operand 9, single buffered']
    #allocation18 [shape = 's32[1]{0}', space=sflag, size = 0x4, scoped, tag = 'scoped memory for generator_forward.1']
    #allocation19 [shape = 'u8[4096]{0}', space=vmem, size = 0x1000, scoped, tag = 'input window, operand 10, single buffered']
    #allocation20 [shape = 'u8[4096]{0}', space=vmem, size = 0x1000, scoped, tag = 'input window, operand 11, single buffered']
    #allocation21 [shape = 's32[1]{0}', space=sflag, size = 0x4, scoped, tag = 'scoped memory for generator_forward.1']
    #allocation22 [shape = 'u8[4096]{0}', space=vmem, size = 0x1000, scoped, tag = 'input window, operand 12, single buffered']
    #allocation23 [shape = 'u8[8388608]{0}', space=vmem, size = 0x800000, scoped, tag = 'input window, operand 13']
    #allocation24 [shape = 's32[2]{0}', space=sflag, size = 0x8, scoped, tag = 'scoped memory for generator_forward.1']
    #allocation25 [shape = 'u8[16384]{0}', space=vmem, size = 0x4000, scoped, tag = 'input window, operand 14']
    %20 = vsyncpa [#allocation4], 0
    %21 = vsyncpa [#allocation6], 0
    %22 = vsyncpa [#allocation9], 0
    %23 = vsyncpa [#allocation12], 0
    %24 = vsyncpa [#allocation15], 0
    %25 = vsyncpa [#allocation18], 0
    %26 = vsyncpa [#allocation21], 0
    %27 = vsyncpa [#allocation24], 0
    %s28 = scalar_lea.sflag [#allocation24], 1
    %29 = vsyncpa %s28, 0
    loop: start=0, step=1, limit=10
    $region2: #{generator_forward.1} parent=1 // loop_pre_header
      _
    $region3: #{generator_forward.1} parent=1 // loop_header
      %s31 = sphi 0, %s35
      %p32 = scmp.ge.s32.totalorder %s31, 10
      %s39 = sphi 0, %s39
      %s41 = sphi 0, %s39
      %s42 = sphi 0, %s41
      %s56 = sphi 0, %s42
      %s60 = sphi 0, %s60
      %s62 = sphi 0, %s60
      %s63 = sphi 0, %s62
      %s77 = sphi 0, %s63
      %s81 = sphi 0, %s81
      %s83 = sphi 0, %s81
      %s84 = sphi 0, %s83
      %s98 = sphi 0, %s84
      %s102 = sphi 0, %s102
      %s104 = sphi 0, %s102
      %s105 = sphi 0, %s104
      %s119 = sphi 0, %s105
      %s123 = sphi 0, %s123
      %s125 = sphi 0, %s123
      %s126 = sphi 0, %s125
      %s140 = sphi 0, %s126
      %s144 = sphi 0, %s144
      %s146 = sphi 0, %s144
      %s147 = sphi 0, %s146
      %s161 = sphi 0, %s147
      %s165 = sphi 0, %s165
      %s167 = sphi 0, %s165
      %s168 = sphi 0, %s167
      %s182 = sphi 0, %s168
      %s186 = sphi 0, %s186
      %s188 = sphi 0, %s186
      %s189 = sphi 0, %s188
      %s203 = sphi 0, %s189
      %s207 = sphi 0, %s207
      %s209 = sphi 0, %s207
      %s210 = sphi 0, %s209
      %s224 = sphi 0, %s210
      %s228 = sphi 0, %s228
      %s230 = sphi 0, %s228
      %s231 = sphi 0, %s230
      %s245 = sphi 0, %s231
      %s249 = sphi 0, %s249
      %s251 = sphi 0, %s249
      %s252 = sphi 0, %s251
      %s266 = sphi 0, %s252
      %s270 = sphi 0, %s270
      %s272 = sphi 0, %s270
      %s273 = sphi 0, %s272
      %s287 = sphi 0, %s273
      %s291 = sphi 0, %s291
      %s293 = sphi 0, %s291
      %s294 = sphi 0, %s293
      %s308 = sphi 0, %s294
      %s314 = sphi 0, %s316
      %s317 = sphi 0, %s314
      %s318 = sphi 0, %s317
      %s334 = sphi 0, %s318
      %s340 = sphi 0, %s342
      %s343 = sphi 0, %s340
      %s344 = sphi 0, %s343
      %s360 = sphi 0, %s344
      %s366 = sphi 0, %s368
      %s369 = sphi 0, %s366
      %s370 = sphi 0, %s369
      %s386 = sphi 0, %s370
    $region4: #{generator_forward.1} parent=1 // loop_header_branch
      %34 = sbr.rel (%p32) target = $region8
    $region5: #{generator_forward.1} parent=1 // loop_body
      %s36 = ssub.s32 %s31, 1
      %s37 = ssub.s32 %s31, 2
      %s38 = sadd.s32 %s31, 1
      %s40 = sadd.s32 %s39, 1
      %p43 = scmp.eq.s32.totalorder %s31, 7
      %p44 = scmp.ne.s32.totalorder %s39, %s41
      %p45 = scmp.eq.s32.totalorder %s31, 0
      %p46 = por %p44, %p45
      %p47 = scmp.ne.s32.totalorder %s39, %s41
      %p48 = scmp.eq.s32.totalorder %s36, 7
      %p49 = por %p47, %p48
      %p50 = scmp.ne.s32.totalorder %s41, %s42
      %p51 = scmp.eq.s32.totalorder %s36, 0
      %p52 = por %p50, %p51
      %p53 = scmp.ne.s32.totalorder %s41, %s42
      %p54 = scmp.eq.s32.totalorder %s37, 7
      %p55 = por %p53, %p54
      %p57 = scmp.ne.s32.totalorder %s42, %s56
      %p58 = scmp.eq.s32.totalorder %s37, 0
      %p59 = por %p57, %p58
      %s61 = sadd.s32 %s60, 1
      %p64 = scmp.eq.s32.totalorder %s31, 7
      %p65 = scmp.ne.s32.totalorder %s60, %s62
      %p66 = scmp.eq.s32.totalorder %s31, 0
      %p67 = por %p65, %p66
      %p68 = scmp.ne.s32.totalorder %s60, %s62
      %p69 = scmp.eq.s32.totalorder %s36, 7
      %p70 = por %p68, %p69
      %p71 = scmp.ne.s32.totalorder %s62, %s63
      %p72 = scmp.eq.s32.totalorder %s36, 0
      %p73 = por %p71, %p72
      %p74 = scmp.ne.s32.totalorder %s62, %s63
      %p75 = scmp.eq.s32.totalorder %s37, 7
      %p76 = por %p74, %p75
      %p78 = scmp.ne.s32.totalorder %s63, %s77
      %p79 = scmp.eq.s32.totalorder %s37, 0
      %p80 = por %p78, %p79
      %s82 = sadd.s32 %s81, 1
      %p85 = scmp.eq.s32.totalorder %s31, 7
      %p86 = scmp.ne.s32.totalorder %s81, %s83
      %p87 = scmp.eq.s32.totalorder %s31, 0
      %p88 = por %p86, %p87
      %p89 = scmp.ne.s32.totalorder %s81, %s83
      %p90 = scmp.eq.s32.totalorder %s36, 7
      %p91 = por %p89, %p90
      %p92 = scmp.ne.s32.totalorder %s83, %s84
      %p93 = scmp.eq.s32.totalorder %s36, 0
      %p94 = por %p92, %p93
      %p95 = scmp.ne.s32.totalorder %s83, %s84
      %p96 = scmp.eq.s32.totalorder %s37, 7
      %p97 = por %p95, %p96
      %p99 = scmp.ne.s32.totalorder %s84, %s98
      %p100 = scmp.eq.s32.totalorder %s37, 0
      %p101 = por %p99, %p100
      %s103 = sadd.s32 %s102, 1
      %p106 = scmp.eq.s32.totalorder %s31, 7
      %p107 = scmp.ne.s32.totalorder %s102, %s104
      %p108 = scmp.eq.s32.totalorder %s31, 0
      %p109 = por %p107, %p108
      %p110 = scmp.ne.s32.totalorder %s102, %s104
      %p111 = scmp.eq.s32.totalorder %s36, 7
      %p112 = por %p110, %p111
      %p113 = scmp.ne.s32.totalorder %s104, %s105
      %p114 = scmp.eq.s32.totalorder %s36, 0
      %p115 = por %p113, %p114
      %p116 = scmp.ne.s32.totalorder %s104, %s105
      %p117 = scmp.eq.s32.totalorder %s37, 7
      %p118 = por %p116, %p117
      %p120 = scmp.ne.s32.totalorder %s105, %s119
      %p121 = scmp.eq.s32.totalorder %s37, 0
      %p122 = por %p120, %p121
      %s124 = sadd.s32 %s123, 1
      %p127 = scmp.eq.s32.totalorder %s31, 7
      %p128 = scmp.ne.s32.totalorder %s123, %s125
      %p129 = scmp.eq.s32.totalorder %s31, 0
      %p130 = por %p128, %p129
      %p131 = scmp.ne.s32.totalorder %s123, %s125
      %p132 = scmp.eq.s32.totalorder %s36, 7
      %p133 = por %p131, %p132
      %p134 = scmp.ne.s32.totalorder %s125, %s126
      %p135 = scmp.eq.s32.totalorder %s36, 0
      %p136 = por %p134, %p135
      %p137 = scmp.ne.s32.totalorder %s125, %s126
      %p138 = scmp.eq.s32.totalorder %s37, 7
      %p139 = por %p137, %p138
      %p141 = scmp.ne.s32.totalorder %s126, %s140
      %p142 = scmp.eq.s32.totalorder %s37, 0
      %p143 = por %p141, %p142
      %s145 = sadd.s32 %s144, 1
      %p148 = scmp.eq.s32.totalorder %s31, 7
      %p149 = scmp.ne.s32.totalorder %s144, %s146
      %p150 = scmp.eq.s32.totalorder %s31, 0
      %p151 = por %p149, %p150
      %p152 = scmp.ne.s32.totalorder %s144, %s146
      %p153 = scmp.eq.s32.totalorder %s36, 7
      %p154 = por %p152, %p153
      %p155 = scmp.ne.s32.totalorder %s146, %s147
      %p156 = scmp.eq.s32.totalorder %s36, 0
      %p157 = por %p155, %p156
      %p158 = scmp.ne.s32.totalorder %s146, %s147
      %p159 = scmp.eq.s32.totalorder %s37, 7
      %p160 = por %p158, %p159
      %p162 = scmp.ne.s32.totalorder %s147, %s161
      %p163 = scmp.eq.s32.totalorder %s37, 0
      %p164 = por %p162, %p163
      %s166 = sadd.s32 %s165, 1
      %p169 = scmp.eq.s32.totalorder %s31, 7
      %p170 = scmp.ne.s32.totalorder %s165, %s167
      %p171 = scmp.eq.s32.totalorder %s31, 0
      %p172 = por %p170, %p171
      %p173 = scmp.ne.s32.totalorder %s165, %s167
      %p174 = scmp.eq.s32.totalorder %s36, 7
      %p175 = por %p173, %p174
      %p176 = scmp.ne.s32.totalorder %s167, %s168
      %p177 = scmp.eq.s32.totalorder %s36, 0
      %p178 = por %p176, %p177
      %p179 = scmp.ne.s32.totalorder %s167, %s168
      %p180 = scmp.eq.s32.totalorder %s37, 7
      %p181 = por %p179, %p180
      %p183 = scmp.ne.s32.totalorder %s168, %s182
      %p184 = scmp.eq.s32.totalorder %s37, 0
      %p185 = por %p183, %p184
      %s187 = sadd.s32 %s186, 1
      %p190 = scmp.eq.s32.totalorder %s31, 7
      %p191 = scmp.ne.s32.totalorder %s186, %s188
      %p192 = scmp.eq.s32.totalorder %s31, 0
      %p193 = por %p191, %p192
      %p194 = scmp.ne.s32.totalorder %s186, %s188
      %p195 = scmp.eq.s32.totalorder %s36, 7
      %p196 = por %p194, %p195
      %p197 = scmp.ne.s32.totalorder %s188, %s189
      %p198 = scmp.eq.s32.totalorder %s36, 0
      %p199 = por %p197, %p198
      %p200 = scmp.ne.s32.totalorder %s188, %s189
      %p201 = scmp.eq.s32.totalorder %s37, 7
      %p202 = por %p200, %p201
      %p204 = scmp.ne.s32.totalorder %s189, %s203
      %p205 = scmp.eq.s32.totalorder %s37, 0
      %p206 = por %p204, %p205
      %s208 = sadd.s32 %s207, 1
      %p211 = scmp.eq.s32.totalorder %s31, 7
      %p212 = scmp.ne.s32.totalorder %s207, %s209
      %p213 = scmp.eq.s32.totalorder %s31, 0
      %p214 = por %p212, %p213
      %p215 = scmp.ne.s32.totalorder %s207, %s209
      %p216 = scmp.eq.s32.totalorder %s36, 7
      %p217 = por %p215, %p216
      %p218 = scmp.ne.s32.totalorder %s209, %s210
      %p219 = scmp.eq.s32.totalorder %s36, 0
      %p220 = por %p218, %p219
      %p221 = scmp.ne.s32.totalorder %s209, %s210
      %p222 = scmp.eq.s32.totalorder %s37, 7
      %p223 = por %p221, %p222
      %p225 = scmp.ne.s32.totalorder %s210, %s224
      %p226 = scmp.eq.s32.totalorder %s37, 0
      %p227 = por %p225, %p226
      %s229 = sadd.s32 %s228, 1
      %p232 = scmp.eq.s32.totalorder %s31, 7
      %p233 = scmp.ne.s32.totalorder %s228, %s230
      %p234 = scmp.eq.s32.totalorder %s31, 0
      %p235 = por %p233, %p234
      %p236 = scmp.ne.s32.totalorder %s228, %s230
      %p237 = scmp.eq.s32.totalorder %s36, 7
      %p238 = por %p236, %p237
      %p239 = scmp.ne.s32.totalorder %s230, %s231
      %p240 = scmp.eq.s32.totalorder %s36, 0
      %p241 = por %p239, %p240
      %p242 = scmp.ne.s32.totalorder %s230, %s231
      %p243 = scmp.eq.s32.totalorder %s37, 7
      %p244 = por %p242, %p243
      %p246 = scmp.ne.s32.totalorder %s231, %s245
      %p247 = scmp.eq.s32.totalorder %s37, 0
      %p248 = por %p246, %p247
      %s250 = sadd.s32 %s249, 1
      %p253 = scmp.eq.s32.totalorder %s31, 7
      %p254 = scmp.ne.s32.totalorder %s249, %s251
      %p255 = scmp.eq.s32.totalorder %s31, 0
      %p256 = por %p254, %p255
      %p257 = scmp.ne.s32.totalorder %s249, %s251
      %p258 = scmp.eq.s32.totalorder %s36, 7
      %p259 = por %p257, %p258
      %p260 = scmp.ne.s32.totalorder %s251, %s252
      %p261 = scmp.eq.s32.totalorder %s36, 0
      %p262 = por %p260, %p261
      %p263 = scmp.ne.s32.totalorder %s251, %s252
      %p264 = scmp.eq.s32.totalorder %s37, 7
      %p265 = por %p263, %p264
      %p267 = scmp.ne.s32.totalorder %s252, %s266
      %p268 = scmp.eq.s32.totalorder %s37, 0
      %p269 = por %p267, %p268
      %s271 = sadd.s32 %s270, 1
      %p274 = scmp.eq.s32.totalorder %s31, 7
      %p275 = scmp.ne.s32.totalorder %s270, %s272
      %p276 = scmp.eq.s32.totalorder %s31, 0
      %p277 = por %p275, %p276
      %p278 = scmp.ne.s32.totalorder %s270, %s272
      %p279 = scmp.eq.s32.totalorder %s36, 7
      %p280 = por %p278, %p279
      %p281 = scmp.ne.s32.totalorder %s272, %s273
      %p282 = scmp.eq.s32.totalorder %s36, 0
      %p283 = por %p281, %p282
      %p284 = scmp.ne.s32.totalorder %s272, %s273
      %p285 = scmp.eq.s32.totalorder %s37, 7
      %p286 = por %p284, %p285
      %p288 = scmp.ne.s32.totalorder %s273, %s287
      %p289 = scmp.eq.s32.totalorder %s37, 0
      %p290 = por %p288, %p289
      %s292 = sadd.s32 %s291, 1
      %p295 = scmp.eq.s32.totalorder %s31, 7
      %p296 = scmp.ne.s32.totalorder %s291, %s293
      %p297 = scmp.eq.s32.totalorder %s31, 0
      %p298 = por %p296, %p297
      %p299 = scmp.ne.s32.totalorder %s291, %s293
      %p300 = scmp.eq.s32.totalorder %s36, 7
      %p301 = por %p299, %p300
      %p302 = scmp.ne.s32.totalorder %s293, %s294
      %p303 = scmp.eq.s32.totalorder %s36, 0
      %p304 = por %p302, %p303
      %p305 = scmp.ne.s32.totalorder %s293, %s294
      %p306 = scmp.eq.s32.totalorder %s37, 7
      %p307 = por %p305, %p306
      %p309 = scmp.ne.s32.totalorder %s294, %s308
      %p310 = scmp.eq.s32.totalorder %s37, 0
      %p311 = por %p309, %p310
      %s312 = ssub.s32 %s31, %s38
      %p313 = scmp.eq.s32.totalorder %s312, 0
      %s315 = sadd.s32 %s314, 1
      %s316 = scalar_select %p313, %s314, %s315
      %p319 = pneg %p313
      %p320 = scmp.eq.s32.totalorder %s31, 7
      %p321 = por %p319, %p320
      %p322 = scmp.ne.s32.totalorder %s314, %s317
      %p323 = scmp.eq.s32.totalorder %s31, 0
      %p324 = por %p322, %p323
      %p325 = scmp.ne.s32.totalorder %s314, %s317
      %p326 = scmp.eq.s32.totalorder %s36, 7
      %p327 = por %p325, %p326
      %p328 = scmp.ne.s32.totalorder %s317, %s318
      %p329 = scmp.eq.s32.totalorder %s36, 0
      %p330 = por %p328, %p329
      %p331 = scmp.ne.s32.totalorder %s317, %s318
      %p332 = scmp.eq.s32.totalorder %s37, 7
      %p333 = por %p331, %p332
      %p335 = scmp.ne.s32.totalorder %s318, %s334
      %p336 = scmp.eq.s32.totalorder %s37, 0
      %p337 = por %p335, %p336
      %s338 = ssub.s32 %s31, %s38
      %p339 = scmp.eq.s32.totalorder %s338, 0
      %s341 = sadd.s32 %s340, 1
      %s342 = scalar_select %p339, %s340, %s341
      %p345 = pneg %p339
      %p346 = scmp.eq.s32.totalorder %s31, 7
      %p347 = por %p345, %p346
      %p348 = scmp.ne.s32.totalorder %s340, %s343
      %p349 = scmp.eq.s32.totalorder %s31, 0
      %p350 = por %p348, %p349
      %p351 = scmp.ne.s32.totalorder %s340, %s343
      %p352 = scmp.eq.s32.totalorder %s36, 7
      %p353 = por %p351, %p352
      %p354 = scmp.ne.s32.totalorder %s343, %s344
      %p355 = scmp.eq.s32.totalorder %s36, 0
      %p356 = por %p354, %p355
      %p357 = scmp.ne.s32.totalorder %s343, %s344
      %p358 = scmp.eq.s32.totalorder %s37, 7
      %p359 = por %p357, %p358
      %p361 = scmp.ne.s32.totalorder %s344, %s360
      %p362 = scmp.eq.s32.totalorder %s37, 0
      %p363 = por %p361, %p362
      %s364 = ssub.s32 %s31, %s38
      %p365 = scmp.eq.s32.totalorder %s364, 0
      %s367 = sadd.s32 %s366, 1
      %s368 = scalar_select %p365, %s366, %s367
      %p371 = pneg %p365
      %p372 = scmp.eq.s32.totalorder %s31, 7
      %p373 = por %p371, %p372
      %p374 = scmp.ne.s32.totalorder %s366, %s369
      %p375 = scmp.eq.s32.totalorder %s31, 0
      %p376 = por %p374, %p375
      %p377 = scmp.ne.s32.totalorder %s366, %s369
      %p378 = scmp.eq.s32.totalorder %s36, 7
      %p379 = por %p377, %p378
      %p380 = scmp.ne.s32.totalorder %s369, %s370
      %p381 = scmp.eq.s32.totalorder %s36, 0
      %p382 = por %p380, %p381
      %p383 = scmp.ne.s32.totalorder %s369, %s370
      %p384 = scmp.eq.s32.totalorder %s37, 7
      %p385 = por %p383, %p384
      %p387 = scmp.ne.s32.totalorder %s370, %s386
      %p388 = scmp.eq.s32.totalorder %s37, 0
      %p389 = por %p387, %p388
      %p390 = scmp.le.s32.totalorder 1, %s31
      %p391 = scmp.lt.s32.totalorder %s31, 9
      %p392 = pnand %p390, %p391
      %p393 = pneg %p392
      // Predicated region
      $region9: #{generator_forward.1} parent=5 // pred_check
        _
      $region10: #{generator_forward.1} parent=5 // pred_check_branch
        %395 = sbr.rel (%p392) target = $region12
      $region11: #{generator_forward.1} parent=5 // pred_region
        %s396 = ssub.s32 %s31, 1
        // Predicated region
        $region13: #{generator_forward.1} parent=11 // pred_check
          %p397 = pneg %p52
        $region14: #{generator_forward.1} parent=11 // pred_check_branch
          %399 = sbr.rel (%p397) target = $region16
        $region15: #{generator_forward.1} parent=11 // pred_region
          %s401 = ssub.s32 64, 64
          %402 = vsyncadd [#allocation4], %s401
          %s404 = sshll.u32 [#allocation3], 4
          %s405 = int_to_ptr.vmem [resolvable:$true] %s404
          %407 = dma.hbm_to_vmem [thread:$0]  %s0, 64, %s405, [#allocation4]
        $region16: #{generator_forward.1} parent=11 // pred_fallthru
          _
        // Predicated region
        $region17: #{generator_forward.1} parent=11 // pred_check
          %p408 = pneg %p73
        $region18: #{generator_forward.1} parent=11 // pred_check_branch
          %410 = sbr.rel (%p408) target = $region20
        $region19: #{generator_forward.1} parent=11 // pred_region
          %s412 = ssub.s32 1664, 1664
          %413 = vsyncadd [#allocation6], %s412
          %s414 = sshll.u32 [#allocation5], 4
          %s415 = int_to_ptr.vmem [resolvable:$true] %s414
          %420 = dma.hbm_to_vmem [thread:$0]  %s1, 1664, %s415, [#allocation6], 128, 128, 8
        $region20: #{generator_forward.1} parent=11 // pred_fallthru
          _
        // Predicated region
        $region21: #{generator_forward.1} parent=11 // pred_check
          %p421 = pneg %p94
        $region22: #{generator_forward.1} parent=11 // pred_check_branch
          %423 = sbr.rel (%p421) target = $region24
        $region23: #{generator_forward.1} parent=11 // pred_region
          %s425 = ssub.s32 32, 32
          %426 = vsyncadd [#allocation6], %s425
          %s428 = sshll.u32 [#allocation7], 4
          %s429 = int_to_ptr.vmem [resolvable:$true] %s428
          %431 = dma.hbm_to_vmem [thread:$0]  %s2, 32, %s429, [#allocation6]
        $region24: #{generator_forward.1} parent=11 // pred_fallthru
          _
        // Predicated region
        $region25: #{generator_forward.1} parent=11 // pred_check
          %p432 = pneg %p115
        $region26: #{generator_forward.1} parent=11 // pred_check_branch
          %434 = sbr.rel (%p432) target = $region28
        $region27: #{generator_forward.1} parent=11 // pred_region
          %s436 = ssub.s32 32, 32
          %437 = vsyncadd [#allocation9], %s436
          %s439 = sshll.u32 [#allocation8], 4
          %s440 = int_to_ptr.vmem [resolvable:$true] %s439
          %442 = dma.hbm_to_vmem [thread:$0]  %s3, 32, %s440, [#allocation9]
        $region28: #{generator_forward.1} parent=11 // pred_fallthru
          _
        // Predicated region
        $region29: #{generator_forward.1} parent=11 // pred_check
          %p443 = pneg %p136
        $region30: #{generator_forward.1} parent=11 // pred_check_branch
          %445 = sbr.rel (%p443) target = $region32
        $region31: #{generator_forward.1} parent=11 // pred_region
          %s447 = ssub.s32 32, 32
          %448 = vsyncadd [#allocation9], %s447
          %s450 = sshll.u32 [#allocation10], 4
          %s451 = int_to_ptr.vmem [resolvable:$true] %s450
          %453 = dma.hbm_to_vmem [thread:$0]  %s4, 32, %s451, [#allocation9]
        $region32: #{generator_forward.1} parent=11 // pred_fallthru
          _
        // Predicated region
        $region33: #{generator_forward.1} parent=11 // pred_check
          %p454 = pneg %p157
        $region34: #{generator_forward.1} parent=11 // pred_check_branch
          %456 = sbr.rel (%p454) target = $region36
        $region35: #{generator_forward.1} parent=11 // pred_region
          %s458 = ssub.s32 8192, 8192
          %459 = vsyncadd [#allocation12], %s458
          %s460 = sshll.u32 [#allocation11], 4
          %s461 = int_to_ptr.vmem [resolvable:$true] %s460
          %466 = dma.hbm_to_vmem [thread:$0]  %s5, 8192, %s461, [#allocation12], 256, 256, 16
        $region36: #{generator_forward.1} parent=11 // pred_fallthru
          _
        // Predicated region
        $region37: #{generator_forward.1} parent=11 // pred_check
          %p467 = pneg %p178
        $region38: #{generator_forward.1} parent=11 // pred_check_branch
          %469 = sbr.rel (%p467) target = $region40
        $region39: #{generator_forward.1} parent=11 // pred_region
          %s471 = ssub.s32 64, 64
          %472 = vsyncadd [#allocation12], %s471
          %s474 = sshll.u32 [#allocation13], 4
          %s475 = int_to_ptr.vmem [resolvable:$true] %s474
          %477 = dma.hbm_to_vmem [thread:$0]  %s6, 64, %s475, [#allocation12]
        $region40: #{generator_forward.1} parent=11 // pred_fallthru
          _
        // Predicated region
        $region41: #{generator_forward.1} parent=11 // pred_check
          %p478 = pneg %p199
        $region42: #{generator_forward.1} parent=11 // pred_check_branch
          %480 = sbr.rel (%p478) target = $region44
        $region43: #{generator_forward.1} parent=11 // pred_region
          %s482 = ssub.s32 64, 64
          %483 = vsyncadd [#allocation15], %s482
          %s485 = sshll.u32 [#allocation14], 4
          %s486 = int_to_ptr.vmem [resolvable:$true] %s485
          %488 = dma.hbm_to_vmem [thread:$0]  %s7, 64, %s486, [#allocation15]
        $region44: #{generator_forward.1} parent=11 // pred_fallthru
          _
        // Predicated region
        $region45: #{generator_forward.1} parent=11 // pred_check
          %p489 = pneg %p220
        $region46: #{generator_forward.1} parent=11 // pred_check_branch
          %491 = sbr.rel (%p489) target = $region48
        $region47: #{generator_forward.1} parent=11 // pred_region
          %s493 = ssub.s32 64, 64
          %494 = vsyncadd [#allocation15], %s493
          %s496 = sshll.u32 [#allocation16], 4
          %s497 = int_to_ptr.vmem [resolvable:$true] %s496
          %499 = dma.hbm_to_vmem [thread:$0]  %s8, 64, %s497, [#allocation15]
        $region48: #{generator_forward.1} parent=11 // pred_fallthru
          _
        // Predicated region
        $region49: #{generator_forward.1} parent=11 // pred_check
          %p500 = pneg %p241
        $region50: #{generator_forward.1} parent=11 // pred_check_branch
          %502 = sbr.rel (%p500) target = $region52
        $region51: #{generator_forward.1} parent=11 // pred_region
          %s504 = ssub.s32 32768, 32768
          %505 = vsyncadd [#allocation18], %s504
          %s506 = sshll.u32 [#allocation17], 4
          %s507 = int_to_ptr.vmem [resolvable:$true] %s506
          %512 = dma.hbm_to_vmem [thread:$0]  %s9, 32768, %s507, [#allocation18], 512, 512, 32
        $region52: #{generator_forward.1} parent=11 // pred_fallthru
          _
        // Predicated region
        $region53: #{generator_forward.1} parent=11 // pred_check
          %p513 = pneg %p262
        $region54: #{generator_forward.1} parent=11 // pred_check_branch
          %515 = sbr.rel (%p513) target = $region56
        $region55: #{generator_forward.1} parent=11 // pred_region
          %s517 = ssub.s32 128, 128
          %518 = vsyncadd [#allocation18], %s517
          %s520 = sshll.u32 [#allocation19], 4
          %s521 = int_to_ptr.vmem [resolvable:$true] %s520
          %523 = dma.hbm_to_vmem [thread:$0]  %s10, 128, %s521, [#allocation18]
        $region56: #{generator_forward.1} parent=11 // pred_fallthru
          _
        // Predicated region
        $region57: #{generator_forward.1} parent=11 // pred_check
          %p524 = pneg %p283
        $region58: #{generator_forward.1} parent=11 // pred_check_branch
          %526 = sbr.rel (%p524) target = $region60
        $region59: #{generator_forward.1} parent=11 // pred_region
          %s528 = ssub.s32 128, 128
          %529 = vsyncadd [#allocation21], %s528
          %s531 = sshll.u32 [#allocation20], 4
          %s532 = int_to_ptr.vmem [resolvable:$true] %s531
          %534 = dma.hbm_to_vmem [thread:$0]  %s11, 128, %s532, [#allocation21]
        $region60: #{generator_forward.1} parent=11 // pred_fallthru
          _
        // Predicated region
        $region61: #{generator_forward.1} parent=11 // pred_check
          %p535 = pneg %p304
        $region62: #{generator_forward.1} parent=11 // pred_check_branch
          %537 = sbr.rel (%p535) target = $region64
        $region63: #{generator_forward.1} parent=11 // pred_region
          %s539 = ssub.s32 128, 128
          %540 = vsyncadd [#allocation21], %s539
          %s542 = sshll.u32 [#allocation22], 4
          %s543 = int_to_ptr.vmem [resolvable:$true] %s542
          %545 = dma.hbm_to_vmem [thread:$0]  %s12, 128, %s543, [#allocation21]
        $region64: #{generator_forward.1} parent=11 // pred_fallthru
          _
      $region12: #{generator_forward.1} parent=5 // pred_fallthru
        _
      %p546 = scmp.lt.s32.totalorder %s31, 8
      // Predicated region
      $region65: #{generator_forward.1} parent=5 // pred_check
        %p547 = pneg %p546
      $region66: #{generator_forward.1} parent=5 // pred_check_branch
        %549 = sbr.rel (%p547) target = $region68
      $region67: #{generator_forward.1} parent=5 // pred_region
        // Predicated region
        $region69: #{generator_forward.1} parent=67 // pred_check
          %p550 = pneg %p324
        $region70: #{generator_forward.1} parent=67 // pred_check_branch
          %552 = sbr.rel (%p550) target = $region72
        $region71: #{generator_forward.1} parent=67 // pred_region
          %s553 = sand.u32 %s31, 1
          %s554 = scalar_lea.sflag [#allocation24], %s553
          %s555 = sand.u32 %s314, 1
          %s556 = smul.addr %s555, 8192
          %s557 = scalar_lea.vmem [#allocation23], %s556
          %s558 = smul.u32 16, %s31
          %s560 = ssub.s32 131072, 131072
          %561 = vsyncadd %s554, %s560
          %s562 = smul.addr %s558, 64
          %s563 = scalar_lea.hbm %s13, %s562
          %s564 = sshll.u32 %s557, 4
          %s565 = int_to_ptr.vmem [resolvable:$true] %s564
          %570 = dma.hbm_to_vmem [thread:$0]  %s563, 131072, %s565, %s554, 8192, 1024, 64
        $region72: #{generator_forward.1} parent=67 // pred_fallthru
          _
        // Predicated region
        $region73: #{generator_forward.1} parent=67 // pred_check
          %p571 = pneg %p350
        $region74: #{generator_forward.1} parent=67 // pred_check_branch
          %573 = sbr.rel (%p571) target = $region76
        $region75: #{generator_forward.1} parent=67 // pred_region
          %s574 = sand.u32 %s31, 1
          %s575 = scalar_lea.sflag [#allocation24], %s574
          %s576 = sand.u32 %s340, 1
          %s577 = smul.addr %s576, 16
          %s578 = scalar_lea.vmem [#allocation25], %s577
          %s579 = smul.u32 16, %s31
          %s581 = ssub.s32 256, 256
          %582 = vsyncadd %s575, %s581
          %s583 = smul.addr %s579, 16
          %s584 = scalar_lea.hbm %s14, %s583
          %s586 = sshll.u32 %s578, 4
          %s587 = int_to_ptr.vmem [resolvable:$true] %s586
          %589 = dma.hbm_to_vmem [thread:$0]  %s584, 256, %s587, %s575
        $region76: #{generator_forward.1} parent=67 // pred_fallthru
          _
      $region68: #{generator_forward.1} parent=5 // pred_fallthru
        _
      %p590 = scmp.le.s32.totalorder 1, %s31
      %p591 = scmp.lt.s32.totalorder %s31, 9
      %p592 = pnand %p590, %p591
      %p593 = pneg %p592
      // Predicated region
      $region77: #{generator_forward.1} parent=5 // pred_check
        _
      $region78: #{generator_forward.1} parent=5 // pred_check_branch
        %595 = sbr.rel (%p592) target = $region80
      $region79: #{generator_forward.1} parent=5 // pred_region
        %s596 = ssub.s32 %s31, 1
        // Predicated region
        $region81: #{generator_forward.1} parent=79 // pred_check
          %p597 = pneg %p52
        $region82: #{generator_forward.1} parent=79 // pred_check_branch
          %599 = sbr.rel (%p597) target = $region84
        $region83: #{generator_forward.1} parent=79 // pred_region
          %600 = dma.done [#allocation4], 64
        $region84: #{generator_forward.1} parent=79 // pred_fallthru
          _
        // Predicated region
        $region85: #{generator_forward.1} parent=79 // pred_check
          %p601 = pneg %p73
        $region86: #{generator_forward.1} parent=79 // pred_check_branch
          %603 = sbr.rel (%p601) target = $region88
        $region87: #{generator_forward.1} parent=79 // pred_region
          %604 = dma.done [#allocation6], 1664
        $region88: #{generator_forward.1} parent=79 // pred_fallthru
          _
        // Predicated region
        $region89: #{generator_forward.1} parent=79 // pred_check
          %p605 = pneg %p94
        $region90: #{generator_forward.1} parent=79 // pred_check_branch
          %607 = sbr.rel (%p605) target = $region92
        $region91: #{generator_forward.1} parent=79 // pred_region
          %608 = dma.done [#allocation6], 32
        $region92: #{generator_forward.1} parent=79 // pred_fallthru
          _
        // Predicated region
        $region93: #{generator_forward.1} parent=79 // pred_check
          %p609 = pneg %p115
        $region94: #{generator_forward.1} parent=79 // pred_check_branch
          %611 = sbr.rel (%p609) target = $region96
        $region95: #{generator_forward.1} parent=79 // pred_region
          %612 = dma.done [#allocation9], 32
        $region96: #{generator_forward.1} parent=79 // pred_fallthru
          _
        // Predicated region
        $region97: #{generator_forward.1} parent=79 // pred_check
          %p613 = pneg %p136
        $region98: #{generator_forward.1} parent=79 // pred_check_branch
          %615 = sbr.rel (%p613) target = $region100
        $region99: #{generator_forward.1} parent=79 // pred_region
          %616 = dma.done [#allocation9], 32
        $region100: #{generator_forward.1} parent=79 // pred_fallthru
          _
        // Predicated region
        $region101: #{generator_forward.1} parent=79 // pred_check
          %p617 = pneg %p157
        $region102: #{generator_forward.1} parent=79 // pred_check_branch
          %619 = sbr.rel (%p617) target = $region104
        $region103: #{generator_forward.1} parent=79 // pred_region
          %620 = dma.done [#allocation12], 8192
        $region104: #{generator_forward.1} parent=79 // pred_fallthru
          _
        // Predicated region
        $region105: #{generator_forward.1} parent=79 // pred_check
          %p621 = pneg %p178
        $region106: #{generator_forward.1} parent=79 // pred_check_branch
          %623 = sbr.rel (%p621) target = $region108
        $region107: #{generator_forward.1} parent=79 // pred_region
          %624 = dma.done [#allocation12], 64
        $region108: #{generator_forward.1} parent=79 // pred_fallthru
          _
        // Predicated region
        $region109: #{generator_forward.1} parent=79 // pred_check
          %p625 = pneg %p199
        $region110: #{generator_forward.1} parent=79 // pred_check_branch
          %627 = sbr.rel (%p625) target = $region112
        $region111: #{generator_forward.1} parent=79 // pred_region
          %628 = dma.done [#allocation15], 64
        $region112: #{generator_forward.1} parent=79 // pred_fallthru
          _
        // Predicated region
        $region113: #{generator_forward.1} parent=79 // pred_check
          %p629 = pneg %p220
        $region114: #{generator_forward.1} parent=79 // pred_check_branch
          %631 = sbr.rel (%p629) target = $region116
        $region115: #{generator_forward.1} parent=79 // pred_region
          %632 = dma.done [#allocation15], 64
        $region116: #{generator_forward.1} parent=79 // pred_fallthru
          _
        // Predicated region
        $region117: #{generator_forward.1} parent=79 // pred_check
          %p633 = pneg %p241
        $region118: #{generator_forward.1} parent=79 // pred_check_branch
          %635 = sbr.rel (%p633) target = $region120
        $region119: #{generator_forward.1} parent=79 // pred_region
          %636 = dma.done [#allocation18], 32768
        $region120: #{generator_forward.1} parent=79 // pred_fallthru
          _
        // Predicated region
        $region121: #{generator_forward.1} parent=79 // pred_check
          %p637 = pneg %p262
        $region122: #{generator_forward.1} parent=79 // pred_check_branch
          %639 = sbr.rel (%p637) target = $region124
        $region123: #{generator_forward.1} parent=79 // pred_region
          %640 = dma.done [#allocation18], 128
        $region124: #{generator_forward.1} parent=79 // pred_fallthru
          _
        // Predicated region
        $region125: #{generator_forward.1} parent=79 // pred_check
          %p641 = pneg %p283
        $region126: #{generator_forward.1} parent=79 // pred_check_branch
          %643 = sbr.rel (%p641) target = $region128
        $region127: #{generator_forward.1} parent=79 // pred_region
          %644 = dma.done [#allocation21], 128
        $region128: #{generator_forward.1} parent=79 // pred_fallthru
          _
        // Predicated region
        $region129: #{generator_forward.1} parent=79 // pred_check
          %p645 = pneg %p304
        $region130: #{generator_forward.1} parent=79 // pred_check_branch
          %647 = sbr.rel (%p645) target = $region132
        $region131: #{generator_forward.1} parent=79 // pred_region
          %648 = dma.done [#allocation21], 128
        $region132: #{generator_forward.1} parent=79 // pred_fallthru
          _
        %s649 = sand.u32 %s36, 1
        %s650 = scalar_lea.sflag [#allocation24], %s649
        %s651 = sand.u32 %s317, 1
        %s652 = smul.addr %s651, 8192
        %s653 = scalar_lea.vmem [#allocation23], %s652
        // Predicated region
        $region133: #{generator_forward.1} parent=79 // pred_check
          %p654 = pneg %p330
        $region134: #{generator_forward.1} parent=79 // pred_check_branch
          %656 = sbr.rel (%p654) target = $region136
        $region135: #{generator_forward.1} parent=79 // pred_region
          %657 = dma.done %s650, 131072
        $region136: #{generator_forward.1} parent=79 // pred_fallthru
          _
        %s658 = sand.u32 %s36, 1
        %s659 = scalar_lea.sflag [#allocation24], %s658
        %s660 = sand.u32 %s343, 1
        %s661 = smul.addr %s660, 16
        %s662 = scalar_lea.vmem [#allocation25], %s661
        // Predicated region
        $region137: #{generator_forward.1} parent=79 // pred_check
          %p663 = pneg %p356
        $region138: #{generator_forward.1} parent=79 // pred_check_branch
          %665 = sbr.rel (%p663) target = $region140
        $region139: #{generator_forward.1} parent=79 // pred_region
          %666 = dma.done %s659, 256
        $region140: #{generator_forward.1} parent=79 // pred_fallthru
          _
        %p667 = pneg %p52
        %p668 = pneg %p49
        %p669 = pneg %p73
        %p670 = pneg %p70
        %p671 = pneg %p94
        %p672 = pneg %p91
        %p673 = pneg %p115
        %p674 = pneg %p112
        %p675 = pneg %p136
        %p676 = pneg %p133
        %p677 = pneg %p157
        %p678 = pneg %p154
        %p679 = pneg %p178
        %p680 = pneg %p175
        %p681 = pneg %p199
        %p682 = pneg %p196
        %p683 = pneg %p220
        %p684 = pneg %p217
        %p685 = pneg %p241
        %p686 = pneg %p238
        %p687 = pneg %p262
        %p688 = pneg %p259
        %p689 = pneg %p283
        %p690 = pneg %p280
        %p691 = pneg %p304
        %p692 = pneg %p301
        %s693 = sand.u32 %s36, 1
        %s694 = scalar_lea.sflag [#allocation24], %s693
        %s695 = sand.u32 %s317, 1
        %s696 = smul.addr %s695, 8192
        %s697 = scalar_lea.vmem [#allocation23], %s696
        %p698 = pneg %p330
        %p699 = pneg %p327
        %s700 = sand.u32 %s36, 1
        %s701 = scalar_lea.sflag [#allocation24], %s700
        %s702 = sand.u32 %s343, 1
        %s703 = smul.addr %s702, 16
        %s704 = scalar_lea.vmem [#allocation25], %s703
        %p705 = pneg %p356
        %p706 = pneg %p353
        %p707 = pneg %p382
        %p708 = pneg %p379
        %s709 = smul.u32 16, %s36
        %p710 = scmp.lt.s32.totalorder %s709, 127
        %s711 = scalar_select %p710, %s709, 127
        %s712 = smul.addr %s711, 4
        %s713 = scalar_lea.vmem %s15, %s712
        %s714 = smul.u32 16, %s36
        %s715 = smul.u32 16, %s36
        %s716 = smul.u32 16, %s36
        %p717 = scmp.lt.s32.totalorder %s716, 127
        %s718 = scalar_select %p717, %s716, 127
        %s719 = smul.addr %s718, 4
        %s720 = scalar_lea.vmem %s15, %s719
        %s721 = smul.u32 16, %s36
        %p723 = scmp.eq.s32.totalorder %s36, 0
        // Predicated region
        $region141: #{generator_forward.1} parent=79 // pred_check
          %p724 = pneg %p723
        $region142: #{generator_forward.1} parent=79 // pred_check_branch
          %726 = sbr.rel (%p724) target = $region144
        $region143: #{generator_forward.1} parent=79 // pred_region
          %v727 = vld [vmem:[#allocation3] sm:$0xf]
          %v728 = vpack.c.bf16 %v727, %v727
          %v729 = vld [vmem:[#allocation5] sm:$0xff]
          %v730 = vld [vmem:[#allocation5 + $0x8] sm:$0xff]
          %v731 = vld [vmem:[#allocation5 + $0x10] sm:$0xff]
          %v732 = vld [vmem:[#allocation5 + $0x18] sm:$0xff]
          %v733 = vld [vmem:[#allocation5 + $0x20] sm:$0xff]
          %v734 = vld [vmem:[#allocation5 + $0x28] sm:$0xff]
          %v735 = vld [vmem:[#allocation5 + $0x30] sm:$0xff]
          %v736 = vld [vmem:[#allocation5 + $0x38] sm:$0xff]
          %v737 = vld [vmem:[#allocation5 + $0x40] sm:$0xff]
          %v738 = vld [vmem:[#allocation5 + $0x48] sm:$0xff]
          %v739 = vld [vmem:[#allocation5 + $0x50] sm:$0xff]
          %v740 = vld [vmem:[#allocation5 + $0x58] sm:$0xff]
          %v741 = vld [vmem:[#allocation5 + $0x60] sm:$0x33]
          %v742 = vld [vmem:[#allocation7] sm:$0x3]
          %v744 = vlaneseq
          %v745 = vshrl.u32 %v744, 7
          %v746 = vsub.s32 0, %v745
          %v747 = vrot.slane %v742, %v746
          %v748 = vlaneseq
          %v749 = vshrl.u32 %v748, 7
          %v750 = vsub.s32 1, %v749
          %v751 = vrot.slane %v742, %v750
          %v767 = vunpack.c.l.b16 %v729
          %v768 = vunpack.c.h.b16 %v729
          %v769 = vunpack.c.l.b16 %v730
          %v770 = vunpack.c.h.b16 %v730
          %v771 = vunpack.c.l.b16 %v731
          %v772 = vunpack.c.h.b16 %v731
          %v773 = vunpack.c.l.b16 %v732
          %v774 = vunpack.c.h.b16 %v732
          %v775 = vunpack.c.l.b16 %v733
          %v776 = vunpack.c.h.b16 %v733
          %v777 = vunpack.c.l.b16 %v734
          %v778 = vunpack.c.h.b16 %v734
          %v779 = vunpack.c.l.b16 %v735
          %v780 = vunpack.c.h.b16 %v735
          %v781 = vunpack.c.l.b16 %v736
          %v782 = vunpack.c.h.b16 %v736
          %v783 = vunpack.c.l.b16 %v737
          %v784 = vunpack.c.h.b16 %v737
          %v785 = vunpack.c.l.b16 %v738
          %v786 = vunpack.c.h.b16 %v738
          %v787 = vunpack.c.l.b16 %v739
          %v788 = vunpack.c.h.b16 %v739
          %v789 = vunpack.c.l.b16 %v740
          %v790 = vunpack.c.h.b16 %v740
          %v791 = vunpack.c.l.b16 %v741
          %v792 = vunpack.c.h.b16 %v741
          %v793 = vpack.c.b16 %v769, %v767
          %v794 = vpack.c.b16 %v770, %v768
          %v795 = vpack.c.b16 %v773, %v771
          %v796 = vpack.c.b16 %v774, %v772
          %v797 = vpack.c.b16 %v777, %v775
          %v798 = vpack.c.b16 %v778, %v776
          %v799 = vpack.c.b16 %v781, %v779
          %v800 = vpack.c.b16 %v782, %v780
          %v801 = vpack.c.b16 %v785, %v783
          %v802 = vpack.c.b16 %v786, %v784
          %v803 = vpack.c.b16 %v789, %v787
          %v804 = vpack.c.b16 %v790, %v788
          %v805 = vpack.c.b16 %v791, %v791
          %v806 = vpack.c.b16 %v792, %v792
          %vm819 = vcmask 818176
          %v821 = vsel %vm819, %v728, 0
          %vm823 = vcmask 1041408
          %v825 = vsel %vm823, %v805, 0
          %v828 = vsel %vm823, %v806, 0
          %830 = vmatprep.subr.bf16.mxu0 %v794
          %831 = vmatpush1.bf16.msra.mxu0 %v793
          %832 = vmatprep.subr.bf16.mxu0 %v796
          %833 = vmatpush1.bf16.msra.mxu0 %v795
          %834 = vmatprep.subr.bf16.mxu0 %v798
          %835 = vmatpush1.bf16.msra.mxu0 %v797
          %836 = vmatprep.subr.bf16.mxu0 %v800
          %837 = vmatpush1.bf16.msra.mxu0 %v799
          %838 = vmatprep.subr.bf16.mxu0 %v802
          %839 = vmatpush1.bf16.msra.mxu0 %v801
          %840 = vmatprep.subr.bf16.mxu0 %v804
          %841 = vmatpush1.bf16.msra.mxu0 %v803
          %842 = vmatprep.subr.bf16.mxu0 %v828
          %843 = vmatpush1.bf16.msra.mxu0 %v825
          %844 = vmatprep.subr.bf16.mxu0 0
          %845 = vmatpush1.bf16.msra.mxu0 0
          %846 = vmatprep.subr.bf16.mxu0 0
          %847 = vmatpush1.bf16.msra.mxu0 0
          %848 = vmatprep.subr.bf16.mxu0 0
          %849 = vmatpush1.bf16.msra.mxu0 0
          %850 = vmatprep.subr.bf16.mxu0 0
          %851 = vmatpush1.bf16.msra.mxu0 0
          %852 = vmatprep.subr.bf16.mxu0 0
          %853 = vmatpush1.bf16.msra.mxu0 0
          %854 = vmatprep.subr.bf16.mxu0 0
          %855 = vmatpush1.bf16.msra.mxu0 0
          %856 = vmatprep.subr.bf16.mxu0 0
          %857 = vmatpush1.bf16.msra.mxu0 0
          %858 = vmatprep.subr.bf16.mxu0 0
          %859 = vmatpush1.bf16.msra.mxu0 0
          %860 = vmatprep.subr.bf16.mxu0 0
          %861 = vmatpush1.bf16.msra.mxu0 0
          %862 = vmatprep.mubr.bf16.mxu0 0
          %863 = vmatmul.mubr.bf16.gmra.mrb[0].mxu0 %v821
          %v864 = vpop.f32.mrb[0].mxu0
          %v865 = vadd.f32 %v747, %v864
          %v866 = vpop.f32.mrb[0].mxu0
          %v867 = vadd.f32 %v751, %v866
          %v868 = vpop.f32.mrb[0].mxu0
          %v869 = vpop.f32.mrb[0].mxu0
          %870 = vdwg.mxu0
          %vm871 = vcmask 1043456
          %v872 = vsel %vm871, %v865, 0.0
          %v873 = vrot.slane %v872, 4
          %v874 = vadd.f32 %v872, %v873
          %v875 = vrot.slane %v874, 2
          %v876 = vadd.f32 %v874, %v875
          %v877 = vrot.slane %v876, 1
          %v878 = vadd.f32 %v876, %v877
          %v879 = vsel %vm871, %v867, 0.0
          %v880 = vrot.slane %v879, 4
          %v881 = vadd.f32 %v879, %v880
          %v882 = vrot.slane %v881, 2
          %v883 = vadd.f32 %v881, %v882
          %v884 = vrot.slane %v883, 1
          %v885 = vadd.f32 %v883, %v884
          %v886 = vrcp.pop 4.0
          %v887 = vmul.f32 %v878, %v886
          %v888 = vmul.f32 %v885, %v886
          %v889 = vsub.f32 %v865, %v887
          %v890 = vsub.f32 %v867, %v888
          %v891 = vmul.f32 %v889, %v889
          %v892 = vmul.f32 %v890, %v890
          %v893 = vsel %vm871, %v891, 0.0
          %v894 = vrot.slane %v893, 4
          %v895 = vadd.f32 %v893, %v894
          %v896 = vrot.slane %v895, 2
          %v897 = vadd.f32 %v895, %v896
          %v898 = vrot.slane %v897, 1
          %v899 = vadd.f32 %v897, %v898
          %v900 = vsel %vm871, %v892, 0.0
          %v901 = vrot.slane %v900, 4
          %v902 = vadd.f32 %v900, %v901
          %v903 = vrot.slane %v902, 2
          %v904 = vadd.f32 %v902, %v903
          %v905 = vrot.slane %v904, 1
          %v906 = vadd.f32 %v904, %v905
          %v907 = vmul.f32 %v899, %v886
          %v908 = vmul.f32 %v906, %v886
          %v909 = vadd.f32 %v907, 1e-05
          %v910 = vadd.f32 %v908, 1e-05
          %v911 = vrsqrt.pop %v909
          %v912 = vrsqrt.pop %v910
          %v913 = vmul.f32 %v889, %v911
          %v914 = vmul.f32 %v890, %v912
          %v915 = vld [vmem:[#allocation8] sm:$0x3]
          %v917 = vlaneseq
          %v918 = vshrl.u32 %v917, 7
          %v919 = vsub.s32 0, %v918
          %v920 = vrot.slane %v915, %v919
          %v921 = vlaneseq
          %v922 = vshrl.u32 %v921, 7
          %v923 = vsub.s32 1, %v922
          %v924 = vrot.slane %v915, %v923
          %v927 = vmul.f32 %v913, %v920
          %v928 = vmul.f32 %v914, %v924
          %v929 = vld [vmem:[#allocation10] sm:$0x3]
          %v931 = vlaneseq
          %v932 = vshrl.u32 %v931, 7
          %v933 = vsub.s32 0, %v932
          %v934 = vrot.slane %v929, %v933
          %v935 = vlaneseq
          %v936 = vshrl.u32 %v935, 7
          %v937 = vsub.s32 1, %v936
          %v938 = vrot.slane %v929, %v937
          %v941 = vadd.f32 %v927, %v934
          %v942 = vadd.f32 %v928, %v938
          %vm943 = vcmp.gt.f32.partialorder %v941, 0.0
          %vm944 = vcmp.gt.f32.partialorder %v942, 0.0
          %v945 = vmul.f32 %v941, 0.2
          %v946 = vmul.f32 %v942, 0.2
          %v947 = vsel %vm943, %v941, %v945
          %v948 = vsel %vm944, %v942, %v946
          %v949 = vpack.c.bf16 %v947, %v947
          %v950 = vpack.c.bf16 %v948, %v948
          %v951 = vld [vmem:[#allocation11] sm:$0xff]
          %v952 = vld [vmem:[#allocation11 + $0x8] sm:$0xff]
          %v953 = vld [vmem:[#allocation11 + $0x10] sm:$0xff]
          %v954 = vld [vmem:[#allocation11 + $0x18] sm:$0xff]
          %v955 = vld [vmem:[#allocation11 + $0x20] sm:$0xff]
          %v956 = vld [vmem:[#allocation11 + $0x28] sm:$0xff]
          %v957 = vld [vmem:[#allocation11 + $0x30] sm:$0xff]
          %v958 = vld [vmem:[#allocation11 + $0x38] sm:$0xff]
          %v959 = vld [vmem:[#allocation11 + $0x40] sm:$0xff]
          %v960 = vld [vmem:[#allocation11 + $0x48] sm:$0xff]
          %v961 = vld [vmem:[#allocation11 + $0x50] sm:$0xff]
          %v962 = vld [vmem:[#allocation11 + $0x58] sm:$0xff]
          %v963 = vld [vmem:[#allocation11 + $0x60] sm:$0xff]
          %v964 = vld [vmem:[#allocation11 + $0x68] sm:$0xff]
          %v965 = vld [vmem:[#allocation11 + $0x70] sm:$0xff]
          %v966 = vld [vmem:[#allocation11 + $0x78] sm:$0xff]
          %v967 = vld [vmem:[#allocation11 + $0x80] sm:$0xff]
          %v968 = vld [vmem:[#allocation11 + $0x88] sm:$0xff]
          %v969 = vld [vmem:[#allocation11 + $0x90] sm:$0xff]
          %v970 = vld [vmem:[#allocation11 + $0x98] sm:$0xff]
          %v971 = vld [vmem:[#allocation11 + $0xa0] sm:$0xff]
          %v972 = vld [vmem:[#allocation11 + $0xa8] sm:$0xff]
          %v973 = vld [vmem:[#allocation11 + $0xb0] sm:$0xff]
          %v974 = vld [vmem:[#allocation11 + $0xb8] sm:$0xff]
          %v975 = vld [vmem:[#allocation11 + $0xc0] sm:$0xff]
          %v976 = vld [vmem:[#allocation11 + $0xc8] sm:$0xff]
          %v977 = vld [vmem:[#allocation11 + $0xd0] sm:$0xff]
          %v978 = vld [vmem:[#allocation11 + $0xd8] sm:$0xff]
          %v979 = vld [vmem:[#allocation11 + $0xe0] sm:$0xff]
          %v980 = vld [vmem:[#allocation11 + $0xe8] sm:$0xff]
          %v981 = vld [vmem:[#allocation11 + $0xf0] sm:$0xff]
          %v982 = vld [vmem:[#allocation11 + $0xf8] sm:$0xff]
          %v983 = vld [vmem:[#allocation11 + $0x100] sm:$0xff]
          %v984 = vld [vmem:[#allocation11 + $0x108] sm:$0xff]
          %v985 = vld [vmem:[#allocation11 + $0x110] sm:$0xff]
          %v986 = vld [vmem:[#allocation11 + $0x118] sm:$0xff]
          %v987 = vld [vmem:[#allocation11 + $0x120] sm:$0xff]
          %v988 = vld [vmem:[#allocation11 + $0x128] sm:$0xff]
          %v989 = vld [vmem:[#allocation11 + $0x130] sm:$0xff]
          %v990 = vld [vmem:[#allocation11 + $0x138] sm:$0xff]
          %v991 = vld [vmem:[#allocation11 + $0x140] sm:$0xff]
          %v992 = vld [vmem:[#allocation11 + $0x148] sm:$0xff]
          %v993 = vld [vmem:[#allocation11 + $0x150] sm:$0xff]
          %v994 = vld [vmem:[#allocation11 + $0x158] sm:$0xff]
          %v995 = vld [vmem:[#allocation11 + $0x160] sm:$0xff]
          %v996 = vld [vmem:[#allocation11 + $0x168] sm:$0xff]
          %v997 = vld [vmem:[#allocation11 + $0x170] sm:$0xff]
          %v998 = vld [vmem:[#allocation11 + $0x178] sm:$0xff]
          %v999 = vld [vmem:[#allocation11 + $0x180] sm:$0xff]
          %v1000 = vld [vmem:[#allocation11 + $0x188] sm:$0xff]
          %v1001 = vld [vmem:[#allocation11 + $0x190] sm:$0xff]
          %v1002 = vld [vmem:[#allocation11 + $0x198] sm:$0xff]
          %v1003 = vld [vmem:[#allocation11 + $0x1a0] sm:$0xff]
          %v1004 = vld [vmem:[#allocation11 + $0x1a8] sm:$0xff]
          %v1005 = vld [vmem:[#allocation11 + $0x1b0] sm:$0xff]
          %v1006 = vld [vmem:[#allocation11 + $0x1b8] sm:$0xff]
          %v1007 = vld [vmem:[#allocation11 + $0x1c0] sm:$0xff]
          %v1008 = vld [vmem:[#allocation11 + $0x1c8] sm:$0xff]
          %v1009 = vld [vmem:[#allocation11 + $0x1d0] sm:$0xff]
          %v1010 = vld [vmem:[#allocation11 + $0x1d8] sm:$0xff]
          %v1011 = vld [vmem:[#allocation11 + $0x1e0] sm:$0xff]
          %v1012 = vld [vmem:[#allocation11 + $0x1e8] sm:$0xff]
          %v1013 = vld [vmem:[#allocation11 + $0x1f0] sm:$0xff]
          %v1014 = vld [vmem:[#allocation11 + $0x1f8] sm:$0xff]
          %v1015 = vld [vmem:[#allocation13] sm:$0xf]
          %v1017 = vlaneseq
          %v1018 = vshrl.u32 %v1017, 7
          %v1019 = vsub.s32 0, %v1018
          %v1020 = vrot.slane %v1015, %v1019
          %v1021 = vlaneseq
          %v1022 = vshrl.u32 %v1021, 7
          %v1023 = vsub.s32 1, %v1022
          %v1024 = vrot.slane %v1015, %v1023
          %v1025 = vlaneseq
          %v1026 = vshrl.u32 %v1025, 7
          %v1027 = vsub.s32 2, %v1026
          %v1028 = vrot.slane %v1015, %v1027
          %v1029 = vlaneseq
          %v1030 = vshrl.u32 %v1029, 7
          %v1031 = vsub.s32 3, %v1030
          %v1032 = vrot.slane %v1015, %v1031
          %v1101 = vunpack.c.l.b16 %v951
          %v1102 = vunpack.c.h.b16 %v951
          %v1103 = vunpack.c.l.b16 %v952
          %v1104 = vunpack.c.h.b16 %v952
          %v1105 = vunpack.c.l.b16 %v953
          %v1106 = vunpack.c.h.b16 %v953
          %v1107 = vunpack.c.l.b16 %v954
          %v1108 = vunpack.c.h.b16 %v954
          %v1109 = vunpack.c.l.b16 %v955
          %v1110 = vunpack.c.h.b16 %v955
          %v1111 = vunpack.c.l.b16 %v956
          %v1112 = vunpack.c.h.b16 %v956
          %v1113 = vunpack.c.l.b16 %v957
          %v1114 = vunpack.c.h.b16 %v957
          %v1115 = vunpack.c.l.b16 %v958
          %v1116 = vunpack.c.h.b16 %v958
          %v1117 = vunpack.c.l.b16 %v959
          %v1118 = vunpack.c.h.b16 %v959
          %v1119 = vunpack.c.l.b16 %v960
          %v1120 = vunpack.c.h.b16 %v960
          %v1121 = vunpack.c.l.b16 %v961
          %v1122 = vunpack.c.h.b16 %v961
          %v1123 = vunpack.c.l.b16 %v962
          %v1124 = vunpack.c.h.b16 %v962
          %v1125 = vunpack.c.l.b16 %v963
          %v1126 = vunpack.c.h.b16 %v963
          %v1127 = vunpack.c.l.b16 %v964
          %v1128 = vunpack.c.h.b16 %v964
          %v1129 = vunpack.c.l.b16 %v965
          %v1130 = vunpack.c.h.b16 %v965
          %v1131 = vunpack.c.l.b16 %v966
          %v1132 = vunpack.c.h.b16 %v966
          %v1133 = vunpack.c.l.b16 %v967
          %v1134 = vunpack.c.h.b16 %v967
          %v1135 = vunpack.c.l.b16 %v968
          %v1136 = vunpack.c.h.b16 %v968
          %v1137 = vunpack.c.l.b16 %v969
          %v1138 = vunpack.c.h.b16 %v969
          %v1139 = vunpack.c.l.b16 %v970
          %v1140 = vunpack.c.h.b16 %v970
          %v1141 = vunpack.c.l.b16 %v971
          %v1142 = vunpack.c.h.b16 %v971
          %v1143 = vunpack.c.l.b16 %v972
          %v1144 = vunpack.c.h.b16 %v972
          %v1145 = vunpack.c.l.b16 %v973
          %v1146 = vunpack.c.h.b16 %v973
          %v1147 = vunpack.c.l.b16 %v974
          %v1148 = vunpack.c.h.b16 %v974
          %v1149 = vunpack.c.l.b16 %v975
          %v1150 = vunpack.c.h.b16 %v975
          %v1151 = vunpack.c.l.b16 %v976
          %v1152 = vunpack.c.h.b16 %v976
          %v1153 = vunpack.c.l.b16 %v977
          %v1154 = vunpack.c.h.b16 %v977
          %v1155 = vunpack.c.l.b16 %v978
          %v1156 = vunpack.c.h.b16 %v978
          %v1157 = vunpack.c.l.b16 %v979
          %v1158 = vunpack.c.h.b16 %v979
          %v1159 = vunpack.c.l.b16 %v980
          %v1160 = vunpack.c.h.b16 %v980
          %v1161 = vunpack.c.l.b16 %v981
          %v1162 = vunpack.c.h.b16 %v981
          %v1163 = vunpack.c.l.b16 %v982
          %v1164 = vunpack.c.h.b16 %v982
          %v1165 = vunpack.c.l.b16 %v983
          %v1166 = vunpack.c.h.b16 %v983
          %v1167 = vunpack.c.l.b16 %v984
          %v1168 = vunpack.c.h.b16 %v984
          %v1169 = vunpack.c.l.b16 %v985
          %v1170 = vunpack.c.h.b16 %v985
          %v1171 = vunpack.c.l.b16 %v986
          %v1172 = vunpack.c.h.b16 %v986
          %v1173 = vunpack.c.l.b16 %v987
          %v1174 = vunpack.c.h.b16 %v987
          %v1175 = vunpack.c.l.b16 %v988
          %v1176 = vunpack.c.h.b16 %v988
          %v1177 = vunpack.c.l.b16 %v989
          %v1178 = vunpack.c.h.b16 %v989
          %v1179 = vunpack.c.l.b16 %v990
          %v1180 = vunpack.c.h.b16 %v990
          %v1181 = vunpack.c.l.b16 %v991
          %v1182 = vunpack.c.h.b16 %v991
          %v1183 = vunpack.c.l.b16 %v992
          %v1184 = vunpack.c.h.b16 %v992
          %v1185 = vunpack.c.l.b16 %v993
          %v1186 = vunpack.c.h.b16 %v993
          %v1187 = vunpack.c.l.b16 %v994
          %v1188 = vunpack.c.h.b16 %v994
          %v1189 = vunpack.c.l.b16 %v995
          %v1190 = vunpack.c.h.b16 %v995
          %v1191 = vunpack.c.l.b16 %v996
          %v1192 = vunpack.c.h.b16 %v996
          %v1193 = vunpack.c.l.b16 %v997
          %v1194 = vunpack.c.h.b16 %v997
          %v1195 = vunpack.c.l.b16 %v998
          %v1196 = vunpack.c.h.b16 %v998
          %v1197 = vunpack.c.l.b16 %v999
          %v1198 = vunpack.c.h.b16 %v999
          %v1199 = vunpack.c.l.b16 %v1000
          %v1200 = vunpack.c.h.b16 %v1000
          %v1201 = vunpack.c.l.b16 %v1001
          %v1202 = vunpack.c.h.b16 %v1001
          %v1203 = vunpack.c.l.b16 %v1002
          %v1204 = vunpack.c.h.b16 %v1002
          %v1205 = vunpack.c.l.b16 %v1003
          %v1206 = vunpack.c.h.b16 %v1003
          %v1207 = vunpack.c.l.b16 %v1004
          %v1208 = vunpack.c.h.b16 %v1004
          %v1209 = vunpack.c.l.b16 %v1005
          %v1210 = vunpack.c.h.b16 %v1005
          %v1211 = vunpack.c.l.b16 %v1006
          %v1212 = vunpack.c.h.b16 %v1006
          %v1213 = vunpack.c.l.b16 %v1007
          %v1214 = vunpack.c.h.b16 %v1007
          %v1215 = vunpack.c.l.b16 %v1008
          %v1216 = vunpack.c.h.b16 %v1008
          %v1217 = vunpack.c.l.b16 %v1009
          %v1218 = vunpack.c.h.b16 %v1009
          %v1219 = vunpack.c.l.b16 %v1010
          %v1220 = vunpack.c.h.b16 %v1010
          %v1221 = vunpack.c.l.b16 %v1011
          %v1222 = vunpack.c.h.b16 %v1011
          %v1223 = vunpack.c.l.b16 %v1012
          %v1224 = vunpack.c.h.b16 %v1012
          %v1225 = vunpack.c.l.b16 %v1013
          %v1226 = vunpack.c.h.b16 %v1013
          %v1227 = vunpack.c.l.b16 %v1014
          %v1228 = vunpack.c.h.b16 %v1014
          %v1229 = vpack.c.b16 %v1105, %v1101
          %v1230 = vpack.c.b16 %v1106, %v1102
          %v1231 = vpack.c.b16 %v1107, %v1103
          %v1232 = vpack.c.b16 %v1108, %v1104
          %v1233 = vpack.c.b16 %v1113, %v1109
          %v1234 = vpack.c.b16 %v1114, %v1110
          %v1235 = vpack.c.b16 %v1115, %v1111
          %v1236 = vpack.c.b16 %v1116, %v1112
          %v1237 = vpack.c.b16 %v1121, %v1117
          %v1238 = vpack.c.b16 %v1122, %v1118
          %v1239 = vpack.c.b16 %v1123, %v1119
          %v1240 = vpack.c.b16 %v1124, %v1120
          %v1241 = vpack.c.b16 %v1129, %v1125
          %v1242 = vpack.c.b16 %v1130, %v1126
          %v1243 = vpack.c.b16 %v1131, %v1127
          %v1244 = vpack.c.b16 %v1132, %v1128
          %v1245 = vpack.c.b16 %v1137, %v1133
          %v1246 = vpack.c.b16 %v1138, %v1134
          %v1247 = vpack.c.b16 %v1139, %v1135
          %v1248 = vpack.c.b16 %v1140, %v1136
          %v1249 = vpack.c.b16 %v1145, %v1141
          %v1250 = vpack.c.b16 %v1146, %v1142
          %v1251 = vpack.c.b16 %v1147, %v1143
          %v1252 = vpack.c.b16 %v1148, %v1144
          %v1253 = vpack.c.b16 %v1153, %v1149
          %v1254 = vpack.c.b16 %v1154, %v1150
          %v1255 = vpack.c.b16 %v1155, %v1151
          %v1256 = vpack.c.b16 %v1156, %v1152
          %v1257 = vpack.c.b16 %v1161, %v1157
          %v1258 = vpack.c.b16 %v1162, %v1158
          %v1259 = vpack.c.b16 %v1163, %v1159
          %v1260 = vpack.c.b16 %v1164, %v1160
          %v1261 = vpack.c.b16 %v1169, %v1165
          %v1262 = vpack.c.b16 %v1170, %v1166
          %v1263 = vpack.c.b16 %v1171, %v1167
          %v1264 = vpack.c.b16 %v1172, %v1168
          %v1265 = vpack.c.b16 %v1177, %v1173
          %v1266 = vpack.c.b16 %v1178, %v1174
          %v1267 = vpack.c.b16 %v1179, %v1175
          %v1268 = vpack.c.b16 %v1180, %v1176
          %v1269 = vpack.c.b16 %v1185, %v1181
          %v1270 = vpack.c.b16 %v1186, %v1182
          %v1271 = vpack.c.b16 %v1187, %v1183
          %v1272 = vpack.c.b16 %v1188, %v1184
          %v1273 = vpack.c.b16 %v1193, %v1189
          %v1274 = vpack.c.b16 %v1194, %v1190
          %v1275 = vpack.c.b16 %v1195, %v1191
          %v1276 = vpack.c.b16 %v1196, %v1192
          %v1277 = vpack.c.b16 %v1201, %v1197
          %v1278 = vpack.c.b16 %v1202, %v1198
          %v1279 = vpack.c.b16 %v1203, %v1199
          %v1280 = vpack.c.b16 %v1204, %v1200
          %v1281 = vpack.c.b16 %v1209, %v1205
          %v1282 = vpack.c.b16 %v1210, %v1206
          %v1283 = vpack.c.b16 %v1211, %v1207
          %v1284 = vpack.c.b16 %v1212, %v1208
          %v1285 = vpack.c.b16 %v1217, %v1213
          %v1286 = vpack.c.b16 %v1218, %v1214
          %v1287 = vpack.c.b16 %v1219, %v1215
          %v1288 = vpack.c.b16 %v1220, %v1216
          %v1289 = vpack.c.b16 %v1225, %v1221
          %v1290 = vpack.c.b16 %v1226, %v1222
          %v1291 = vpack.c.b16 %v1227, %v1223
          %v1292 = vpack.c.b16 %v1228, %v1224
          %1357 = vmatprep.subr.bf16.mxu0 %v1230
          %1358 = vmatpush1.bf16.msra.mxu0 %v1229
          %1359 = vmatprep.subr.bf16.mxu0 %v1234
          %1360 = vmatpush1.bf16.msra.mxu0 %v1233
          %1361 = vmatprep.subr.bf16.mxu0 %v1238
          %1362 = vmatpush1.bf16.msra.mxu0 %v1237
          %1363 = vmatprep.subr.bf16.mxu0 %v1242
          %1364 = vmatpush1.bf16.msra.mxu0 %v1241
          %1365 = vmatprep.subr.bf16.mxu0 %v1246
          %1366 = vmatpush1.bf16.msra.mxu0 %v1245
          %1367 = vmatprep.subr.bf16.mxu0 %v1250
          %1368 = vmatpush1.bf16.msra.mxu0 %v1249
          %1369 = vmatprep.subr.bf16.mxu0 %v1254
          %1370 = vmatpush1.bf16.msra.mxu0 %v1253
          %1371 = vmatprep.subr.bf16.mxu0 %v1258
          %1372 = vmatpush1.bf16.msra.mxu0 %v1257
          %1373 = vmatprep.subr.bf16.mxu0 %v1262
          %1374 = vmatpush1.bf16.msra.mxu0 %v1261
          %1375 = vmatprep.subr.bf16.mxu0 %v1266
          %1376 = vmatpush1.bf16.msra.mxu0 %v1265
          %1377 = vmatprep.subr.bf16.mxu0 %v1270
          %1378 = vmatpush1.bf16.msra.mxu0 %v1269
          %1379 = vmatprep.subr.bf16.mxu0 %v1274
          %1380 = vmatpush1.bf16.msra.mxu0 %v1273
          %1381 = vmatprep.subr.bf16.mxu0 %v1278
          %1382 = vmatpush1.bf16.msra.mxu0 %v1277
          %1383 = vmatprep.subr.bf16.mxu0 %v1282
          %1384 = vmatpush1.bf16.msra.mxu0 %v1281
          %1385 = vmatprep.subr.bf16.mxu0 %v1286
          %1386 = vmatpush1.bf16.msra.mxu0 %v1285
          %1387 = vmatprep.subr.bf16.mxu0 %v1290
          %1388 = vmatpush1.bf16.msra.mxu0 %v1289
          %1389 = vmatprep.mubr.bf16.mxu0 %v950
          %1390 = vmatmul.mubr.bf16.gmra.mrb[0].mxu0 %v949
          %v1391 = vpop.f32.mrb[0].mxu0
          %v1392 = vadd.f32 %v1020, %v1391
          %v1393 = vpop.f32.mrb[0].mxu0
          %v1394 = vadd.f32 %v1024, %v1393
          %v1395 = vpop.f32.mrb[0].mxu0
          %v1396 = vpop.f32.mrb[0].mxu0
          %1397 = vdwg.mxu0
          %1398 = vmatprep.subr.bf16.mxu0 %v1232
          %1399 = vmatpush1.bf16.msra.mxu0 %v1231
          %1400 = vmatprep.subr.bf16.mxu0 %v1236
          %1401 = vmatpush1.bf16.msra.mxu0 %v1235
          %1402 = vmatprep.subr.bf16.mxu0 %v1240
          %1403 = vmatpush1.bf16.msra.mxu0 %v1239
          %1404 = vmatprep.subr.bf16.mxu0 %v1244
          %1405 = vmatpush1.bf16.msra.mxu0 %v1243
          %1406 = vmatprep.subr.bf16.mxu0 %v1248
          %1407 = vmatpush1.bf16.msra.mxu0 %v1247
          %1408 = vmatprep.subr.bf16.mxu0 %v1252
          %1409 = vmatpush1.bf16.msra.mxu0 %v1251
          %1410 = vmatprep.subr.bf16.mxu0 %v1256
          %1411 = vmatpush1.bf16.msra.mxu0 %v1255
          %1412 = vmatprep.subr.bf16.mxu0 %v1260
          %1413 = vmatpush1.bf16.msra.mxu0 %v1259
          %1414 = vmatprep.subr.bf16.mxu0 %v1264
          %1415 = vmatpush1.bf16.msra.mxu0 %v1263
          %1416 = vmatprep.subr.bf16.mxu0 %v1268
          %1417 = vmatpush1.bf16.msra.mxu0 %v1267
          %1418 = vmatprep.subr.bf16.mxu0 %v1272
          %1419 = vmatpush1.bf16.msra.mxu0 %v1271
          %1420 = vmatprep.subr.bf16.mxu0 %v1276
          %1421 = vmatpush1.bf16.msra.mxu0 %v1275
          %1422 = vmatprep.subr.bf16.mxu0 %v1280
          %1423 = vmatpush1.bf16.msra.mxu0 %v1279
          %1424 = vmatprep.subr.bf16.mxu0 %v1284
          %1425 = vmatpush1.bf16.msra.mxu0 %v1283
          %1426 = vmatprep.subr.bf16.mxu0 %v1288
          %1427 = vmatpush1.bf16.msra.mxu0 %v1287
          %1428 = vmatprep.subr.bf16.mxu0 %v1292
          %1429 = vmatpush1.bf16.msra.mxu0 %v1291
          %1430 = vmatprep.mubr.bf16.mxu0 %v950
          %1431 = vmatmul.mubr.bf16.gmra.mrb[0].mxu0 %v949
          %v1432 = vpop.f32.mrb[0].mxu0
          %v1433 = vadd.f32 %v1028, %v1432
          %v1434 = vpop.f32.mrb[0].mxu0
          %v1435 = vadd.f32 %v1032, %v1434
          %v1436 = vpop.f32.mrb[0].mxu0
          %v1437 = vpop.f32.mrb[0].mxu0
          %1438 = vdwg.mxu0
          %v1439 = vsel %vm871, %v1392, 0.0
          %v1440 = vrot.slane %v1439, 4
          %v1441 = vadd.f32 %v1439, %v1440
          %v1442 = vrot.slane %v1441, 2
          %v1443 = vadd.f32 %v1441, %v1442
          %v1444 = vrot.slane %v1443, 1
          %v1445 = vadd.f32 %v1443, %v1444
          %v1446 = vsel %vm871, %v1394, 0.0
          %v1447 = vrot.slane %v1446, 4
          %v1448 = vadd.f32 %v1446, %v1447
          %v1449 = vrot.slane %v1448, 2
          %v1450 = vadd.f32 %v1448, %v1449
          %v1451 = vrot.slane %v1450, 1
          %v1452 = vadd.f32 %v1450, %v1451
          %v1453 = vsel %vm871, %v1433, 0.0
          %v1454 = vrot.slane %v1453, 4
          %v1455 = vadd.f32 %v1453, %v1454
          %v1456 = vrot.slane %v1455, 2
          %v1457 = vadd.f32 %v1455, %v1456
          %v1458 = vrot.slane %v1457, 1
          %v1459 = vadd.f32 %v1457, %v1458
          %v1460 = vsel %vm871, %v1435, 0.0
          %v1461 = vrot.slane %v1460, 4
          %v1462 = vadd.f32 %v1460, %v1461
          %v1463 = vrot.slane %v1462, 2
          %v1464 = vadd.f32 %v1462, %v1463
          %v1465 = vrot.slane %v1464, 1
          %v1466 = vadd.f32 %v1464, %v1465
          %v1467 = vmul.f32 %v1445, %v886
          %v1468 = vmul.f32 %v1452, %v886
          %v1469 = vmul.f32 %v1459, %v886
          %v1470 = vmul.f32 %v1466, %v886
          %v1471 = vsub.f32 %v1392, %v1467
          %v1472 = vsub.f32 %v1394, %v1468
          %v1473 = vsub.f32 %v1433, %v1469
          %v1474 = vsub.f32 %v1435, %v1470
          %v1475 = vmul.f32 %v1471, %v1471
          %v1476 = vmul.f32 %v1472, %v1472
          %v1477 = vmul.f32 %v1473, %v1473
          %v1478 = vmul.f32 %v1474, %v1474
          %v1479 = vsel %vm871, %v1475, 0.0
          %v1480 = vrot.slane %v1479, 4
          %v1481 = vadd.f32 %v1479, %v1480
          %v1482 = vrot.slane %v1481, 2
          %v1483 = vadd.f32 %v1481, %v1482
          %v1484 = vrot.slane %v1483, 1
          %v1485 = vadd.f32 %v1483, %v1484
          %v1486 = vsel %vm871, %v1476, 0.0
          %v1487 = vrot.slane %v1486, 4
          %v1488 = vadd.f32 %v1486, %v1487
          %v1489 = vrot.slane %v1488, 2
          %v1490 = vadd.f32 %v1488, %v1489
          %v1491 = vrot.slane %v1490, 1
          %v1492 = vadd.f32 %v1490, %v1491
          %v1493 = vsel %vm871, %v1477, 0.0
          %v1494 = vrot.slane %v1493, 4
          %v1495 = vadd.f32 %v1493, %v1494
          %v1496 = vrot.slane %v1495, 2
          %v1497 = vadd.f32 %v1495, %v1496
          %v1498 = vrot.slane %v1497, 1
          %v1499 = vadd.f32 %v1497, %v1498
          %v1500 = vsel %vm871, %v1478, 0.0
          %v1501 = vrot.slane %v1500, 4
          %v1502 = vadd.f32 %v1500, %v1501
          %v1503 = vrot.slane %v1502, 2
          %v1504 = vadd.f32 %v1502, %v1503
          %v1505 = vrot.slane %v1504, 1
          %v1506 = vadd.f32 %v1504, %v1505
          %v1507 = vmul.f32 %v1485, %v886
          %v1508 = vmul.f32 %v1492, %v886
          %v1509 = vmul.f32 %v1499, %v886
          %v1510 = vmul.f32 %v1506, %v886
          %v1511 = vadd.f32 %v1507, 1e-05
          %v1512 = vadd.f32 %v1508, 1e-05
          %v1513 = vadd.f32 %v1509, 1e-05
          %v1514 = vadd.f32 %v1510, 1e-05
          %v1515 = vrsqrt.pop %v1511
          %v1516 = vrsqrt.pop %v1512
          %v1517 = vrsqrt.pop %v1513
          %v1518 = vrsqrt.pop %v1514
          %v1519 = vmul.f32 %v1471, %v1515
          %v1520 = vmul.f32 %v1472, %v1516
          %v1521 = vmul.f32 %v1473, %v1517
          %v1522 = vmul.f32 %v1474, %v1518
          %v1523 = vld [vmem:[#allocation14] sm:$0xf]
          %v1525 = vlaneseq
          %v1526 = vshrl.u32 %v1525, 7
          %v1527 = vsub.s32 0, %v1526
          %v1528 = vrot.slane %v1523, %v1527
          %v1529 = vlaneseq
          %v1530 = vshrl.u32 %v1529, 7
          %v1531 = vsub.s32 1, %v1530
          %v1532 = vrot.slane %v1523, %v1531
          %v1533 = vlaneseq
          %v1534 = vshrl.u32 %v1533, 7
          %v1535 = vsub.s32 2, %v1534
          %v1536 = vrot.slane %v1523, %v1535
          %v1537 = vlaneseq
          %v1538 = vshrl.u32 %v1537, 7
          %v1539 = vsub.s32 3, %v1538
          %v1540 = vrot.slane %v1523, %v1539
          %v1545 = vmul.f32 %v1519, %v1528
          %v1546 = vmul.f32 %v1520, %v1532
          %v1547 = vmul.f32 %v1521, %v1536
          %v1548 = vmul.f32 %v1522, %v1540
          %v1549 = vld [vmem:[#allocation16] sm:$0xf]
          %v1551 = vlaneseq
          %v1552 = vshrl.u32 %v1551, 7
          %v1553 = vsub.s32 0, %v1552
          %v1554 = vrot.slane %v1549, %v1553
          %v1555 = vlaneseq
          %v1556 = vshrl.u32 %v1555, 7
          %v1557 = vsub.s32 1, %v1556
          %v1558 = vrot.slane %v1549, %v1557
          %v1559 = vlaneseq
          %v1560 = vshrl.u32 %v1559, 7
          %v1561 = vsub.s32 2, %v1560
          %v1562 = vrot.slane %v1549, %v1561
          %v1563 = vlaneseq
          %v1564 = vshrl.u32 %v1563, 7
          %v1565 = vsub.s32 3, %v1564
          %v1566 = vrot.slane %v1549, %v1565
          %v1571 = vadd.f32 %v1545, %v1554
          %v1572 = vadd.f32 %v1546, %v1558
          %v1573 = vadd.f32 %v1547, %v1562
          %v1574 = vadd.f32 %v1548, %v1566
          %vm1575 = vcmp.gt.f32.partialorder %v1571, 0.0
          %vm1576 = vcmp.gt.f32.partialorder %v1572, 0.0
          %vm1577 = vcmp.gt.f32.partialorder %v1573, 0.0
          %vm1578 = vcmp.gt.f32.partialorder %v1574, 0.0
          %v1579 = vmul.f32 %v1571, 0.2
          %v1580 = vmul.f32 %v1572, 0.2
          %v1581 = vmul.f32 %v1573, 0.2
          %v1582 = vmul.f32 %v1574, 0.2
          %v1583 = vsel %vm1575, %v1571, %v1579
          %v1584 = vsel %vm1576, %v1572, %v1580
          %v1585 = vsel %vm1577, %v1573, %v1581
          %v1586 = vsel %vm1578, %v1574, %v1582
          %v1587 = vpack.c.bf16 %v1583, %v1583
          %v1588 = vpack.c.bf16 %v1584, %v1584
          %v1589 = vpack.c.bf16 %v1585, %v1585
          %v1590 = vpack.c.bf16 %v1586, %v1586
          %v1591 = vld [vmem:[#allocation17] sm:$0xff]
          %v1592 = vld [vmem:[#allocation17 + $0x8] sm:$0xff]
          %v1593 = vld [vmem:[#allocation17 + $0x10] sm:$0xff]
          %v1594 = vld [vmem:[#allocation17 + $0x18] sm:$0xff]
          %v1595 = vld [vmem:[#allocation17 + $0x20] sm:$0xff]
          %v1596 = vld [vmem:[#allocation17 + $0x28] sm:$0xff]
          %v1597 = vld [vmem:[#allocation17 + $0x30] sm:$0xff]
          %v1598 = vld [vmem:[#allocation17 + $0x38] sm:$0xff]
          %v1599 = vld [vmem:[#allocation17 + $0x40] sm:$0xff]
          %v1600 = vld [vmem:[#allocation17 + $0x48] sm:$0xff]
          %v1601 = vld [vmem:[#allocation17 + $0x50] sm:$0xff]
          %v1602 = vld [vmem:[#allocation17 + $0x58] sm:$0xff]
          %v1603 = vld [vmem:[#allocation17 + $0x60] sm:$0xff]
          %v1604 = vld [vmem:[#allocation17 + $0x68] sm:$0xff]
          %v1605 = vld [vmem:[#allocation17 + $0x70] sm:$0xff]
          %v1606 = vld [vmem:[#allocation17 + $0x78] sm:$0xff]
          %v1607 = vld [vmem:[#allocation17 + $0x80] sm:$0xff]
          %v1608 = vld [vmem:[#allocation17 + $0x88] sm:$0xff]
          %v1609 = vld [vmem:[#allocation17 + $0x90] sm:$0xff]
          %v1610 = vld [vmem:[#allocation17 + $0x98] sm:$0xff]
          %v1611 = vld [vmem:[#allocation17 + $0xa0] sm:$0xff]
          %v1612 = vld [vmem:[#allocation17 + $0xa8] sm:$0xff]
          %v1613 = vld [vmem:[#allocation17 + $0xb0] sm:$0xff]
          %v1614 = vld [vmem:[#allocation17 + $0xb8] sm:$0xff]
          %v1615 = vld [vmem:[#allocation17 + $0xc0] sm:$0xff]
          %v1616 = vld [vmem:[#allocation17 + $0xc8] sm:$0xff]
          %v1617 = vld [vmem:[#allocation17 + $0xd0] sm:$0xff]
          %v1618 = vld [vmem:[#allocation17 + $0xd8] sm:$0xff]
          %v1619 = vld [vmem:[#allocation17 + $0xe0] sm:$0xff]
          %v1620 = vld [vmem:[#allocation17 + $0xe8] sm:$0xff]
          %v1621 = vld [vmem:[#allocation17 + $0xf0] sm:$0xff]
          %v1622 = vld [vmem:[#allocation17 + $0xf8] sm:$0xff]
          %v1623 = vld [vmem:[#allocation17 + $0x100] sm:$0xff]
          %v1624 = vld [vmem:[#allocation17 + $0x108] sm:$0xff]
          %v1625 = vld [vmem:[#allocation17 + $0x110] sm:$0xff]
          %v1626 = vld [vmem:[#allocation17 + $0x118] sm:$0xff]
          %v1627 = vld [vmem:[#allocation17 + $0x120] sm:$0xff]
          %v1628 = vld [vmem:[#allocation17 + $0x128] sm:$0xff]
          %v1629 = vld [vmem:[#allocation17 + $0x130] sm:$0xff]
          %v1630 = vld [vmem:[#allocation17 + $0x138] sm:$0xff]
          %v1631 = vld [vmem:[#allocation17 + $0x140] sm:$0xff]
          %v1632 = vld [vmem:[#allocation17 + $0x148] sm:$0xff]
          %v1633 = vld [vmem:[#allocation17 + $0x150] sm:$0xff]
          %v1634 = vld [vmem:[#allocation17 + $0x158] sm:$0xff]
          %v1635 = vld [vmem:[#allocation17 + $0x160] sm:$0xff]
          %v1636 = vld [vmem:[#allocation17 + $0x168] sm:$0xff]
          %v1637 = vld [vmem:[#allocation17 + $0x170] sm:$0xff]
          %v1638 = vld [vmem:[#allocation17 + $0x178] sm:$0xff]
          %v1639 = vld [vmem:[#allocation17 + $0x180] sm:$0xff]
          %v1640 = vld [vmem:[#allocation17 + $0x188] sm:$0xff]
          %v1641 = vld [vmem:[#allocation17 + $0x190] sm:$0xff]
          %v1642 = vld [vmem:[#allocation17 + $0x198] sm:$0xff]
          %v1643 = vld [vmem:[#allocation17 + $0x1a0] sm:$0xff]
          %v1644 = vld [vmem:[#allocation17 + $0x1a8] sm:$0xff]
          %v1645 = vld [vmem:[#allocation17 + $0x1b0] sm:$0xff]
          %v1646 = vld [vmem:[#allocation17 + $0x1b8] sm:$0xff]
          %v1647 = vld [vmem:[#allocation17 + $0x1c0] sm:$0xff]
          %v1648 = vld [vmem:[#allocation17 + $0x1c8] sm:$0xff]
          %v1649 = vld [vmem:[#allocation17 + $0x1d0] sm:$0xff]
          %v1650 = vld [vmem:[#allocation17 + $0x1d8] sm:$0xff]
          %v1651 = vld [vmem:[#allocation17 + $0x1e0] sm:$0xff]
          %v1652 = vld [vmem:[#allocation17 + $0x1e8] sm:$0xff]
          %v1653 = vld [vmem:[#allocation17 + $0x1f0] sm:$0xff]
          %v1654 = vld [vmem:[#allocation17 + $0x1f8] sm:$0xff]
          %v1655 = vld [vmem:[#allocation17 + $0x200] sm:$0xff]
          %v1656 = vld [vmem:[#allocation17 + $0x208] sm:$0xff]
          %v1657 = vld [vmem:[#allocation17 + $0x210] sm:$0xff]
          %v1658 = vld [vmem:[#allocation17 + $0x218] sm:$0xff]
          %v1659 = vld [vmem:[#allocation17 + $0x220] sm:$0xff]
          %v1660 = vld [vmem:[#allocation17 + $0x228] sm:$0xff]
          %v1661 = vld [vmem:[#allocation17 + $0x230] sm:$0xff]
          %v1662 = vld [vmem:[#allocation17 + $0x238] sm:$0xff]
          %v1663 = vld [vmem:[#allocation17 + $0x240] sm:$0xff]
          %v1664 = vld [vmem:[#allocation17 + $0x248] sm:$0xff]
          %v1665 = vld [vmem:[#allocation17 + $0x250] sm:$0xff]
          %v1666 = vld [vmem:[#allocation17 + $0x258] sm:$0xff]
          %v1667 = vld [vmem:[#allocation17 + $0x260] sm:$0xff]
          %v1668 = vld [vmem:[#allocation17 + $0x268] sm:$0xff]
          %v1669 = vld [vmem:[#allocation17 + $0x270] sm:$0xff]
          %v1670 = vld [vmem:[#allocation17 + $0x278] sm:$0xff]
          %v1671 = vld [vmem:[#allocation17 + $0x280] sm:$0xff]
          %v1672 = vld [vmem:[#allocation17 + $0x288] sm:$0xff]
          %v1673 = vld [vmem:[#allocation17 + $0x290] sm:$0xff]
          %v1674 = vld [vmem:[#allocation17 + $0x298] sm:$0xff]
          %v1675 = vld [vmem:[#allocation17 + $0x2a0] sm:$0xff]
          %v1676 = vld [vmem:[#allocation17 + $0x2a8] sm:$0xff]
          %v1677 = vld [vmem:[#allocation17 + $0x2b0] sm:$0xff]
          %v1678 = vld [vmem:[#allocation17 + $0x2b8] sm:$0xff]
          %v1679 = vld [vmem:[#allocation17 + $0x2c0] sm:$0xff]
          %v1680 = vld [vmem:[#allocation17 + $0x2c8] sm:$0xff]
          %v1681 = vld [vmem:[#allocation17 + $0x2d0] sm:$0xff]
          %v1682 = vld [vmem:[#allocation17 + $0x2d8] sm:$0xff]
          %v1683 = vld [vmem:[#allocation17 + $0x2e0] sm:$0xff]
          %v1684 = vld [vmem:[#allocation17 + $0x2e8] sm:$0xff]
          %v1685 = vld [vmem:[#allocation17 + $0x2f0] sm:$0xff]
          %v1686 = vld [vmem:[#allocation17 + $0x2f8] sm:$0xff]
          %v1687 = vld [vmem:[#allocation17 + $0x300] sm:$0xff]
          %v1688 = vld [vmem:[#allocation17 + $0x308] sm:$0xff]
          %v1689 = vld [vmem:[#allocation17 + $0x310] sm:$0xff]
          %v1690 = vld [vmem:[#allocation17 + $0x318] sm:$0xff]
          %v1691 = vld [vmem:[#allocation17 + $0x320] sm:$0xff]
          %v1692 = vld [vmem:[#allocation17 + $0x328] sm:$0xff]
          %v1693 = vld [vmem:[#allocation17 + $0x330] sm:$0xff]
          %v1694 = vld [vmem:[#allocation17 + $0x338] sm:$0xff]
          %v1695 = vld [vmem:[#allocation17 + $0x340] sm:$0xff]
          %v1696 = vld [vmem:[#allocation17 + $0x348] sm:$0xff]
          %v1697 = vld [vmem:[#allocation17 + $0x350] sm:$0xff]
          %v1698 = vld [vmem:[#allocation17 + $0x358] sm:$0xff]
          %v1699 = vld [vmem:[#allocation17 + $0x360] sm:$0xff]
          %v1700 = vld [vmem:[#allocation17 + $0x368] sm:$0xff]
          %v1701 = vld [vmem:[#allocation17 + $0x370] sm:$0xff]
          %v1702 = vld [vmem:[#allocation17 + $0x378] sm:$0xff]
          %v1703 = vld [vmem:[#allocation17 + $0x380] sm:$0xff]
          %v1704 = vld [vmem:[#allocation17 + $0x388] sm:$0xff]
          %v1705 = vld [vmem:[#allocation17 + $0x390] sm:$0xff]
          %v1706 = vld [vmem:[#allocation17 + $0x398] sm:$0xff]
          %v1707 = vld [vmem:[#allocation17 + $0x3a0] sm:$0xff]
          %v1708 = vld [vmem:[#allocation17 + $0x3a8] sm:$0xff]
          %v1709 = vld [vmem:[#allocation17 + $0x3b0] sm:$0xff]
          %v1710 = vld [vmem:[#allocation17 + $0x3b8] sm:$0xff]
          %v1711 = vld [vmem:[#allocation17 + $0x3c0] sm:$0xff]
          %v1712 = vld [vmem:[#allocation17 + $0x3c8] sm:$0xff]
          %v1713 = vld [vmem:[#allocation17 + $0x3d0] sm:$0xff]
          %v1714 = vld [vmem:[#allocation17 + $0x3d8] sm:$0xff]
          %v1715 = vld [vmem:[#allocation17 + $0x3e0] sm:$0xff]
          %v1716 = vld [vmem:[#allocation17 + $0x3e8] sm:$0xff]
          %v1717 = vld [vmem:[#allocation17 + $0x3f0] sm:$0xff]
          %v1718 = vld [vmem:[#allocation17 + $0x3f8] sm:$0xff]
          %v1719 = vld [vmem:[#allocation17 + $0x400] sm:$0xff]
          %v1720 = vld [vmem:[#allocation17 + $0x408] sm:$0xff]
          %v1721 = vld [vmem:[#allocation17 + $0x410] sm:$0xff]
          %v1722 = vld [vmem:[#allocation17 + $0x418] sm:$0xff]
          %v1723 = vld [vmem:[#allocation17 + $0x420] sm:$0xff]
          %v1724 = vld [vmem:[#allocation17 + $0x428] sm:$0xff]
          %v1725 = vld [vmem:[#allocation17 + $0x430] sm:$0xff]
          %v1726 = vld [vmem:[#allocation17 + $0x438] sm:$0xff]
          %v1727 = vld [vmem:[#allocation17 + $0x440] sm:$0xff]
          %v1728 = vld [vmem:[#allocation17 + $0x448] sm:$0xff]
          %v1729 = vld [vmem:[#allocation17 + $0x450] sm:$0xff]
          %v1730 = vld [vmem:[#allocation17 + $0x458] sm:$0xff]
          %v1731 = vld [vmem:[#allocation17 + $0x460] sm:$0xff]
          %v1732 = vld [vmem:[#allocation17 + $0x468] sm:$0xff]
          %v1733 = vld [vmem:[#allocation17 + $0x470] sm:$0xff]
          %v1734 = vld [vmem:[#allocation17 + $0x478] sm:$0xff]
          %v1735 = vld [vmem:[#allocation17 + $0x480] sm:$0xff]
          %v1736 = vld [vmem:[#allocation17 + $0x488] sm:$0xff]
          %v1737 = vld [vmem:[#allocation17 + $0x490] sm:$0xff]
          %v1738 = vld [vmem:[#allocation17 + $0x498] sm:$0xff]
          %v1739 = vld [vmem:[#allocation17 + $0x4a0] sm:$0xff]
          %v1740 = vld [vmem:[#allocation17 + $0x4a8] sm:$0xff]
          %v1741 = vld [vmem:[#allocation17 + $0x4b0] sm:$0xff]
          %v1742 = vld [vmem:[#allocation17 + $0x4b8] sm:$0xff]
          %v1743 = vld [vmem:[#allocation17 + $0x4c0] sm:$0xff]
          %v1744 = vld [vmem:[#allocation17 + $0x4c8] sm:$0xff]
          %v1745 = vld [vmem:[#allocation17 + $0x4d0] sm:$0xff]
          %v1746 = vld [vmem:[#allocation17 + $0x4d8] sm:$0xff]
          %v1747 = vld [vmem:[#allocation17 + $0x4e0] sm:$0xff]
          %v1748 = vld [vmem:[#allocation17 + $0x4e8] sm:$0xff]
          %v1749 = vld [vmem:[#allocation17 + $0x4f0] sm:$0xff]
          %v1750 = vld [vmem:[#allocation17 + $0x4f8] sm:$0xff]
          %v1751 = vld [vmem:[#allocation17 + $0x500] sm:$0xff]
          %v1752 = vld [vmem:[#allocation17 + $0x508] sm:$0xff]
          %v1753 = vld [vmem:[#allocation17 + $0x510] sm:$0xff]
          %v1754 = vld [vmem:[#allocation17 + $0x518] sm:$0xff]
          %v1755 = vld [vmem:[#allocation17 + $0x520] sm:$0xff]
          %v1756 = vld [vmem:[#allocation17 + $0x528] sm:$0xff]
          %v1757 = vld [vmem:[#allocation17 + $0x530] sm:$0xff]
          %v1758 = vld [vmem:[#allocation17 + $0x538] sm:$0xff]
          %v1759 = vld [vmem:[#allocation17 + $0x540] sm:$0xff]
          %v1760 = vld [vmem:[#allocation17 + $0x548] sm:$0xff]
          %v1761 = vld [vmem:[#allocation17 + $0x550] sm:$0xff]
          %v1762 = vld [vmem:[#allocation17 + $0x558] sm:$0xff]
          %v1763 = vld [vmem:[#allocation17 + $0x560] sm:$0xff]
          %v1764 = vld [vmem:[#allocation17 + $0x568] sm:$0xff]
          %v1765 = vld [vmem:[#allocation17 + $0x570] sm:$0xff]
          %v1766 = vld [vmem:[#allocation17 + $0x578] sm:$0xff]
          %v1767 = vld [vmem:[#allocation17 + $0x580] sm:$0xff]
          %v1768 = vld [vmem:[#allocation17 + $0x588] sm:$0xff]
          %v1769 = vld [vmem:[#allocation17 + $0x590] sm:$0xff]
          %v1770 = vld [vmem:[#allocation17 + $0x598] sm:$0xff]
          %v1771 = vld [vmem:[#allocation17 + $0x5a0] sm:$0xff]
          %v1772 = vld [vmem:[#allocation17 + $0x5a8] sm:$0xff]
          %v1773 = vld [vmem:[#allocation17 + $0x5b0] sm:$0xff]
          %v1774 = vld [vmem:[#allocation17 + $0x5b8] sm:$0xff]
          %v1775 = vld [vmem:[#allocation17 + $0x5c0] sm:$0xff]
          %v1776 = vld [vmem:[#allocation17 + $0x5c8] sm:$0xff]
          %v1777 = vld [vmem:[#allocation17 + $0x5d0] sm:$0xff]
          %v1778 = vld [vmem:[#allocation17 + $0x5d8] sm:$0xff]
          %v1779 = vld [vmem:[#allocation17 + $0x5e0] sm:$0xff]
          %v1780 = vld [vmem:[#allocation17 + $0x5e8] sm:$0xff]
          %v1781 = vld [vmem:[#allocation17 + $0x5f0] sm:$0xff]
          %v1782 = vld [vmem:[#allocation17 + $0x5f8] sm:$0xff]
          %v1783 = vld [vmem:[#allocation17 + $0x600] sm:$0xff]
          %v1784 = vld [vmem:[#allocation17 + $0x608] sm:$0xff]
          %v1785 = vld [vmem:[#allocation17 + $0x610] sm:$0xff]
          %v1786 = vld [vmem:[#allocation17 + $0x618] sm:$0xff]
          %v1787 = vld [vmem:[#allocation17 + $0x620] sm:$0xff]
          %v1788 = vld [vmem:[#allocation17 + $0x628] sm:$0xff]
          %v1789 = vld [vmem:[#allocation17 + $0x630] sm:$0xff]
          %v1790 = vld [vmem:[#allocation17 + $0x638] sm:$0xff]
          %v1791 = vld [vmem:[#allocation17 + $0x640] sm:$0xff]
          %v1792 = vld [vmem:[#allocation17 + $0x648] sm:$0xff]
          %v1793 = vld [vmem:[#allocation17 + $0x650] sm:$0xff]
          %v1794 = vld [vmem:[#allocation17 + $0x658] sm:$0xff]
          %v1795 = vld [vmem:[#allocation17 + $0x660] sm:$0xff]
          %v1796 = vld [vmem:[#allocation17 + $0x668] sm:$0xff]
          %v1797 = vld [vmem:[#allocation17 + $0x670] sm:$0xff]
          %v1798 = vld [vmem:[#allocation17 + $0x678] sm:$0xff]
          %v1799 = vld [vmem:[#allocation17 + $0x680] sm:$0xff]
          %v1800 = vld [vmem:[#allocation17 + $0x688] sm:$0xff]
          %v1801 = vld [vmem:[#allocation17 + $0x690] sm:$0xff]
          %v1802 = vld [vmem:[#allocation17 + $0x698] sm:$0xff]
          %v1803 = vld [vmem:[#allocation17 + $0x6a0] sm:$0xff]
          %v1804 = vld [vmem:[#allocation17 + $0x6a8] sm:$0xff]
          %v1805 = vld [vmem:[#allocation17 + $0x6b0] sm:$0xff]
          %v1806 = vld [vmem:[#allocation17 + $0x6b8] sm:$0xff]
          %v1807 = vld [vmem:[#allocation17 + $0x6c0] sm:$0xff]
          %v1808 = vld [vmem:[#allocation17 + $0x6c8] sm:$0xff]
          %v1809 = vld [vmem:[#allocation17 + $0x6d0] sm:$0xff]
          %v1810 = vld [vmem:[#allocation17 + $0x6d8] sm:$0xff]
          %v1811 = vld [vmem:[#allocation17 + $0x6e0] sm:$0xff]
          %v1812 = vld [vmem:[#allocation17 + $0x6e8] sm:$0xff]
          %v1813 = vld [vmem:[#allocation17 + $0x6f0] sm:$0xff]
          %v1814 = vld [vmem:[#allocation17 + $0x6f8] sm:$0xff]
          %v1815 = vld [vmem:[#allocation17 + $0x700] sm:$0xff]
          %v1816 = vld [vmem:[#allocation17 + $0x708] sm:$0xff]
          %v1817 = vld [vmem:[#allocation17 + $0x710] sm:$0xff]
          %v1818 = vld [vmem:[#allocation17 + $0x718] sm:$0xff]
          %v1819 = vld [vmem:[#allocation17 + $0x720] sm:$0xff]
          %v1820 = vld [vmem:[#allocation17 + $0x728] sm:$0xff]
          %v1821 = vld [vmem:[#allocation17 + $0x730] sm:$0xff]
          %v1822 = vld [vmem:[#allocation17 + $0x738] sm:$0xff]
          %v1823 = vld [vmem:[#allocation17 + $0x740] sm:$0xff]
          %v1824 = vld [vmem:[#allocation17 + $0x748] sm:$0xff]
          %v1825 = vld [vmem:[#allocation17 + $0x750] sm:$0xff]
          %v1826 = vld [vmem:[#allocation17 + $0x758] sm:$0xff]
          %v1827 = vld [vmem:[#allocation17 + $0x760] sm:$0xff]
          %v1828 = vld [vmem:[#allocation17 + $0x768] sm:$0xff]
          %v1829 = vld [vmem:[#allocation17 + $0x770] sm:$0xff]
          %v1830 = vld [vmem:[#allocation17 + $0x778] sm:$0xff]
          %v1831 = vld [vmem:[#allocation17 + $0x780] sm:$0xff]
          %v1832 = vld [vmem:[#allocation17 + $0x788] sm:$0xff]
          %v1833 = vld [vmem:[#allocation17 + $0x790] sm:$0xff]
          %v1834 = vld [vmem:[#allocation17 + $0x798] sm:$0xff]
          %v1835 = vld [vmem:[#allocation17 + $0x7a0] sm:$0xff]
          %v1836 = vld [vmem:[#allocation17 + $0x7a8] sm:$0xff]
          %v1837 = vld [vmem:[#allocation17 + $0x7b0] sm:$0xff]
          %v1838 = vld [vmem:[#allocation17 + $0x7b8] sm:$0xff]
          %v1839 = vld [vmem:[#allocation17 + $0x7c0] sm:$0xff]
          %v1840 = vld [vmem:[#allocation17 + $0x7c8] sm:$0xff]
          %v1841 = vld [vmem:[#allocation17 + $0x7d0] sm:$0xff]
          %v1842 = vld [vmem:[#allocation17 + $0x7d8] sm:$0xff]
          %v1843 = vld [vmem:[#allocation17 + $0x7e0] sm:$0xff]
          %v1844 = vld [vmem:[#allocation17 + $0x7e8] sm:$0xff]
          %v1845 = vld [vmem:[#allocation17 + $0x7f0] sm:$0xff]
          %v1846 = vld [vmem:[#allocation17 + $0x7f8] sm:$0xff]
          %v1847 = vld [vmem:[#allocation19] sm:$0xff]
          %v1849 = vlaneseq
          %v1850 = vshrl.u32 %v1849, 7
          %v1851 = vsub.s32 0, %v1850
          %v1852 = vrot.slane %v1847, %v1851
          %v1853 = vlaneseq
          %v1854 = vshrl.u32 %v1853, 7
          %v1855 = vsub.s32 1, %v1854
          %v1856 = vrot.slane %v1847, %v1855
          %v1857 = vlaneseq
          %v1858 = vshrl.u32 %v1857, 7
          %v1859 = vsub.s32 2, %v1858
          %v1860 = vrot.slane %v1847, %v1859
          %v1861 = vlaneseq
          %v1862 = vshrl.u32 %v1861, 7
          %v1863 = vsub.s32 3, %v1862
          %v1864 = vrot.slane %v1847, %v1863
          %v1865 = vlaneseq
          %v1866 = vshrl.u32 %v1865, 7
          %v1867 = vsub.s32 4, %v1866
          %v1868 = vrot.slane %v1847, %v1867
          %v1869 = vlaneseq
          %v1870 = vshrl.u32 %v1869, 7
          %v1871 = vsub.s32 5, %v1870
          %v1872 = vrot.slane %v1847, %v1871
          %v1873 = vlaneseq
          %v1874 = vshrl.u32 %v1873, 7
          %v1875 = vsub.s32 6, %v1874
          %v1876 = vrot.slane %v1847, %v1875
          %v1877 = vlaneseq
          %v1878 = vshrl.u32 %v1877, 7
          %v1879 = vsub.s32 7, %v1878
          %v1880 = vrot.slane %v1847, %v1879
          %v2145 = vunpack.c.l.b16 %v1591
          %v2146 = vunpack.c.h.b16 %v1591
          %v2147 = vunpack.c.l.b16 %v1592
          %v2148 = vunpack.c.h.b16 %v1592
          %v2149 = vunpack.c.l.b16 %v1593
          %v2150 = vunpack.c.h.b16 %v1593
          %v2151 = vunpack.c.l.b16 %v1594
          %v2152 = vunpack.c.h.b16 %v1594
          %v2153 = vunpack.c.l.b16 %v1595
          %v2154 = vunpack.c.h.b16 %v1595
          %v2155 = vunpack.c.l.b16 %v1596
          %v2156 = vunpack.c.h.b16 %v1596
          %v2157 = vunpack.c.l.b16 %v1597
          %v2158 = vunpack.c.h.b16 %v1597
          %v2159 = vunpack.c.l.b16 %v1598
          %v2160 = vunpack.c.h.b16 %v1598
          %v2161 = vunpack.c.l.b16 %v1599
          %v2162 = vunpack.c.h.b16 %v1599
          %v2163 = vunpack.c.l.b16 %v1600
          %v2164 = vunpack.c.h.b16 %v1600
          %v2165 = vunpack.c.l.b16 %v1601
          %v2166 = vunpack.c.h.b16 %v1601
          %v2167 = vunpack.c.l.b16 %v1602
          %v2168 = vunpack.c.h.b16 %v1602
          %v2169 = vunpack.c.l.b16 %v1603
          %v2170 = vunpack.c.h.b16 %v1603
          %v2171 = vunpack.c.l.b16 %v1604
          %v2172 = vunpack.c.h.b16 %v1604
          %v2173 = vunpack.c.l.b16 %v1605
          %v2174 = vunpack.c.h.b16 %v1605
          %v2175 = vunpack.c.l.b16 %v1606
          %v2176 = vunpack.c.h.b16 %v1606
          %v2177 = vunpack.c.l.b16 %v1607
          %v2178 = vunpack.c.h.b16 %v1607
          %v2179 = vunpack.c.l.b16 %v1608
          %v2180 = vunpack.c.h.b16 %v1608
          %v2181 = vunpack.c.l.b16 %v1609
          %v2182 = vunpack.c.h.b16 %v1609
          %v2183 = vunpack.c.l.b16 %v1610
          %v2184 = vunpack.c.h.b16 %v1610
          %v2185 = vunpack.c.l.b16 %v1611
          %v2186 = vunpack.c.h.b16 %v1611
          %v2187 = vunpack.c.l.b16 %v1612
          %v2188 = vunpack.c.h.b16 %v1612
          %v2189 = vunpack.c.l.b16 %v1613
          %v2190 = vunpack.c.h.b16 %v1613
          %v2191 = vunpack.c.l.b16 %v1614
          %v2192 = vunpack.c.h.b16 %v1614
          %v2193 = vunpack.c.l.b16 %v1615
          %v2194 = vunpack.c.h.b16 %v1615
          %v2195 = vunpack.c.l.b16 %v1616
          %v2196 = vunpack.c.h.b16 %v1616
          %v2197 = vunpack.c.l.b16 %v1617
          %v2198 = vunpack.c.h.b16 %v1617
          %v2199 = vunpack.c.l.b16 %v1618
          %v2200 = vunpack.c.h.b16 %v1618
          %v2201 = vunpack.c.l.b16 %v1619
          %v2202 = vunpack.c.h.b16 %v1619
          %v2203 = vunpack.c.l.b16 %v1620
          %v2204 = vunpack.c.h.b16 %v1620
          %v2205 = vunpack.c.l.b16 %v1621
          %v2206 = vunpack.c.h.b16 %v1621
          %v2207 = vunpack.c.l.b16 %v1622
          %v2208 = vunpack.c.h.b16 %v1622
          %v2209 = vunpack.c.l.b16 %v1623
          %v2210 = vunpack.c.h.b16 %v1623
          %v2211 = vunpack.c.l.b16 %v1624
          %v2212 = vunpack.c.h.b16 %v1624
          %v2213 = vunpack.c.l.b16 %v1625
          %v2214 = vunpack.c.h.b16 %v1625
          %v2215 = vunpack.c.l.b16 %v1626
          %v2216 = vunpack.c.h.b16 %v1626
          %v2217 = vunpack.c.l.b16 %v1627
          %v2218 = vunpack.c.h.b16 %v1627
          %v2219 = vunpack.c.l.b16 %v1628
          %v2220 = vunpack.c.h.b16 %v1628
          %v2221 = vunpack.c.l.b16 %v1629
          %v2222 = vunpack.c.h.b16 %v1629
          %v2223 = vunpack.c.l.b16 %v1630
          %v2224 = vunpack.c.h.b16 %v1630
          %v2225 = vunpack.c.l.b16 %v1631
          %v2226 = vunpack.c.h.b16 %v1631
          %v2227 = vunpack.c.l.b16 %v1632
          %v2228 = vunpack.c.h.b16 %v1632
          %v2229 = vunpack.c.l.b16 %v1633
          %v2230 = vunpack.c.h.b16 %v1633
          %v2231 = vunpack.c.l.b16 %v1634
          %v2232 = vunpack.c.h.b16 %v1634
          %v2233 = vunpack.c.l.b16 %v1635
          %v2234 = vunpack.c.h.b16 %v1635
          %v2235 = vunpack.c.l.b16 %v1636
          %v2236 = vunpack.c.h.b16 %v1636
          %v2237 = vunpack.c.l.b16 %v1637
          %v2238 = vunpack.c.h.b16 %v1637
          %v2239 = vunpack.c.l.b16 %v1638
          %v2240 = vunpack.c.h.b16 %v1638
          %v2241 = vunpack.c.l.b16 %v1639
          %v2242 = vunpack.c.h.b16 %v1639
          %v2243 = vunpack.c.l.b16 %v1640
          %v2244 = vunpack.c.h.b16 %v1640
          %v2245 = vunpack.c.l.b16 %v1641
          %v2246 = vunpack.c.h.b16 %v1641
          %v2247 = vunpack.c.l.b16 %v1642
          %v2248 = vunpack.c.h.b16 %v1642
          %v2249 = vunpack.c.l.b16 %v1643
          %v2250 = vunpack.c.h.b16 %v1643
          %v2251 = vunpack.c.l.b16 %v1644
          %v2252 = vunpack.c.h.b16 %v1644
          %v2253 = vunpack.c.l.b16 %v1645
          %v2254 = vunpack.c.h.b16 %v1645
          %v2255 = vunpack.c.l.b16 %v1646
          %v2256 = vunpack.c.h.b16 %v1646
          %v2257 = vunpack.c.l.b16 %v1647
          %v2258 = vunpack.c.h.b16 %v1647
          %v2259 = vunpack.c.l.b16 %v1648
          %v2260 = vunpack.c.h.b16 %v1648
          %v2261 = vunpack.c.l.b16 %v1649
          %v2262 = vunpack.c.h.b16 %v1649
          %v2263 = vunpack.c.l.b16 %v1650
          %v2264 = vunpack.c.h.b16 %v1650
          %v2265 = vunpack.c.l.b16 %v1651
          %v2266 = vunpack.c.h.b16 %v1651
          %v2267 = vunpack.c.l.b16 %v1652
          %v2268 = vunpack.c.h.b16 %v1652
          %v2269 = vunpack.c.l.b16 %v1653
          %v2270 = vunpack.c.h.b16 %v1653
          %v2271 = vunpack.c.l.b16 %v1654
          %v2272 = vunpack.c.h.b16 %v1654
          %v2273 = vunpack.c.l.b16 %v1655
          %v2274 = vunpack.c.h.b16 %v1655
          %v2275 = vunpack.c.l.b16 %v1656
          %v2276 = vunpack.c.h.b16 %v1656
          %v2277 = vunpack.c.l.b16 %v1657
          %v2278 = vunpack.c.h.b16 %v1657
          %v2279 = vunpack.c.l.b16 %v1658
          %v2280 = vunpack.c.h.b16 %v1658
          %v2281 = vunpack.c.l.b16 %v1659
          %v2282 = vunpack.c.h.b16 %v1659
          %v2283 = vunpack.c.l.b16 %v1660
          %v2284 = vunpack.c.h.b16 %v1660
          %v2285 = vunpack.c.l.b16 %v1661
          %v2286 = vunpack.c.h.b16 %v1661
          %v2287 = vunpack.c.l.b16 %v1662
          %v2288 = vunpack.c.h.b16 %v1662
          %v2289 = vunpack.c.l.b16 %v1663
          %v2290 = vunpack.c.h.b16 %v1663
          %v2291 = vunpack.c.l.b16 %v1664
          %v2292 = vunpack.c.h.b16 %v1664
          %v2293 = vunpack.c.l.b16 %v1665
          %v2294 = vunpack.c.h.b16 %v1665
          %v2295 = vunpack.c.l.b16 %v1666
          %v2296 = vunpack.c.h.b16 %v1666
          %v2297 = vunpack.c.l.b16 %v1667
          %v2298 = vunpack.c.h.b16 %v1667
          %v2299 = vunpack.c.l.b16 %v1668
          %v2300 = vunpack.c.h.b16 %v1668
          %v2301 = vunpack.c.l.b16 %v1669
          %v2302 = vunpack.c.h.b16 %v1669
          %v2303 = vunpack.c.l.b16 %v1670
          %v2304 = vunpack.c.h.b16 %v1670
          %v2305 = vunpack.c.l.b16 %v1671
          %v2306 = vunpack.c.h.b16 %v1671
          %v2307 = vunpack.c.l.b16 %v1672
          %v2308 = vunpack.c.h.b16 %v1672
          %v2309 = vunpack.c.l.b16 %v1673
          %v2310 = vunpack.c.h.b16 %v1673
          %v2311 = vunpack.c.l.b16 %v1674
          %v2312 = vunpack.c.h.b16 %v1674
          %v2313 = vunpack.c.l.b16 %v1675
          %v2314 = vunpack.c.h.b16 %v1675
          %v2315 = vunpack.c.l.b16 %v1676
          %v2316 = vunpack.c.h.b16 %v1676
          %v2317 = vunpack.c.l.b16 %v1677
          %v2318 = vunpack.c.h.b16 %v1677
          %v2319 = vunpack.c.l.b16 %v1678
          %v2320 = vunpack.c.h.b16 %v1678
          %v2321 = vunpack.c.l.b16 %v1679
          %v2322 = vunpack.c.h.b16 %v1679
          %v2323 = vunpack.c.l.b16 %v1680
          %v2324 = vunpack.c.h.b16 %v1680
          %v2325 = vunpack.c.l.b16 %v1681
          %v2326 = vunpack.c.h.b16 %v1681
          %v2327 = vunpack.c.l.b16 %v1682
          %v2328 = vunpack.c.h.b16 %v1682
          %v2329 = vunpack.c.l.b16 %v1683
          %v2330 = vunpack.c.h.b16 %v1683
          %v2331 = vunpack.c.l.b16 %v1684
          %v2332 = vunpack.c.h.b16 %v1684
          %v2333 = vunpack.c.l.b16 %v1685
          %v2334 = vunpack.c.h.b16 %v1685
          %v2335 = vunpack.c.l.b16 %v1686
          %v2336 = vunpack.c.h.b16 %v1686
          %v2337 = vunpack.c.l.b16 %v1687
          %v2338 = vunpack.c.h.b16 %v1687
          %v2339 = vunpack.c.l.b16 %v1688
          %v2340 = vunpack.c.h.b16 %v1688
          %v2341 = vunpack.c.l.b16 %v1689
          %v2342 = vunpack.c.h.b16 %v1689
          %v2343 = vunpack.c.l.b16 %v1690
          %v2344 = vunpack.c.h.b16 %v1690
          %v2345 = vunpack.c.l.b16 %v1691
          %v2346 = vunpack.c.h.b16 %v1691
          %v2347 = vunpack.c.l.b16 %v1692
          %v2348 = vunpack.c.h.b16 %v1692
          %v2349 = vunpack.c.l.b16 %v1693
          %v2350 = vunpack.c.h.b16 %v1693
          %v2351 = vunpack.c.l.b16 %v1694
          %v2352 = vunpack.c.h.b16 %v1694
          %v2353 = vunpack.c.l.b16 %v1695
          %v2354 = vunpack.c.h.b16 %v1695
          %v2355 = vunpack.c.l.b16 %v1696
          %v2356 = vunpack.c.h.b16 %v1696
          %v2357 = vunpack.c.l.b16 %v1697
          %v2358 = vunpack.c.h.b16 %v1697
          %v2359 = vunpack.c.l.b16 %v1698
          %v2360 = vunpack.c.h.b16 %v1698
          %v2361 = vunpack.c.l.b16 %v1699
          %v2362 = vunpack.c.h.b16 %v1699
          %v2363 = vunpack.c.l.b16 %v1700
          %v2364 = vunpack.c.h.b16 %v1700
          %v2365 = vunpack.c.l.b16 %v1701
          %v2366 = vunpack.c.h.b16 %v1701
          %v2367 = vunpack.c.l.b16 %v1702
          %v2368 = vunpack.c.h.b16 %v1702
          %v2369 = vunpack.c.l.b16 %v1703
          %v2370 = vunpack.c.h.b16 %v1703
          %v2371 = vunpack.c.l.b16 %v1704
          %v2372 = vunpack.c.h.b16 %v1704
          %v2373 = vunpack.c.l.b16 %v1705
          %v2374 = vunpack.c.h.b16 %v1705
          %v2375 = vunpack.c.l.b16 %v1706
          %v2376 = vunpack.c.h.b16 %v1706
          %v2377 = vunpack.c.l.b16 %v1707
          %v2378 = vunpack.c.h.b16 %v1707
          %v2379 = vunpack.c.l.b16 %v1708
          %v2380 = vunpack.c.h.b16 %v1708
          %v2381 = vunpack.c.l.b16 %v1709
          %v2382 = vunpack.c.h.b16 %v1709
          %v2383 = vunpack.c.l.b16 %v1710
          %v2384 = vunpack.c.h.b16 %v1710
          %v2385 = vunpack.c.l.b16 %v1711
          %v2386 = vunpack.c.h.b16 %v1711
          %v2387 = vunpack.c.l.b16 %v1712
          %v2388 = vunpack.c.h.b16 %v1712
          %v2389 = vunpack.c.l.b16 %v1713
          %v2390 = vunpack.c.h.b16 %v1713
          %v2391 = vunpack.c.l.b16 %v1714
          %v2392 = vunpack.c.h.b16 %v1714
          %v2393 = vunpack.c.l.b16 %v1715
          %v2394 = vunpack.c.h.b16 %v1715
          %v2395 = vunpack.c.l.b16 %v1716
          %v2396 = vunpack.c.h.b16 %v1716
          %v2397 = vunpack.c.l.b16 %v1717
          %v2398 = vunpack.c.h.b16 %v1717
          %v2399 = vunpack.c.l.b16 %v1718
          %v2400 = vunpack.c.h.b16 %v1718
          %v2401 = vunpack.c.l.b16 %v1719
          %v2402 = vunpack.c.h.b16 %v1719
          %v2403 = vunpack.c.l.b16 %v1720
          %v2404 = vunpack.c.h.b16 %v1720
          %v2405 = vunpack.c.l.b16 %v1721
          %v2406 = vunpack.c.h.b16 %v1721
          %v2407 = vunpack.c.l.b16 %v1722
          %v2408 = vunpack.c.h.b16 %v1722
          %v2409 = vunpack.c.l.b16 %v1723
          %v2410 = vunpack.c.h.b16 %v1723
          %v2411 = vunpack.c.l.b16 %v1724
          %v2412 = vunpack.c.h.b16 %v1724
          %v2413 = vunpack.c.l.b16 %v1725
          %v2414 = vunpack.c.h.b16 %v1725
          %v2415 = vunpack.c.l.b16 %v1726
          %v2416 = vunpack.c.h.b16 %v1726
          %v2417 = vunpack.c.l.b16 %v1727
          %v2418 = vunpack.c.h.b16 %v1727
          %v2419 = vunpack.c.l.b16 %v1728
          %v2420 = vunpack.c.h.b16 %v1728
          %v2421 = vunpack.c.l.b16 %v1729
          %v2422 = vunpack.c.h.b16 %v1729
          %v2423 = vunpack.c.l.b16 %v1730
          %v2424 = vunpack.c.h.b16 %v1730
          %v2425 = vunpack.c.l.b16 %v1731
          %v2426 = vunpack.c.h.b16 %v1731
          %v2427 = vunpack.c.l.b16 %v1732
          %v2428 = vunpack.c.h.b16 %v1732
          %v2429 = vunpack.c.l.b16 %v1733
          %v2430 = vunpack.c.h.b16 %v1733
          %v2431 = vunpack.c.l.b16 %v1734
          %v2432 = vunpack.c.h.b16 %v1734
          %v2433 = vunpack.c.l.b16 %v1735
          %v2434 = vunpack.c.h.b16 %v1735
          %v2435 = vunpack.c.l.b16 %v1736
          %v2436 = vunpack.c.h.b16 %v1736
          %v2437 = vunpack.c.l.b16 %v1737
          %v2438 = vunpack.c.h.b16 %v1737
          %v2439 = vunpack.c.l.b16 %v1738
          %v2440 = vunpack.c.h.b16 %v1738
          %v2441 = vunpack.c.l.b16 %v1739
          %v2442 = vunpack.c.h.b16 %v1739
          %v2443 = vunpack.c.l.b16 %v1740
          %v2444 = vunpack.c.h.b16 %v1740
          %v2445 = vunpack.c.l.b16 %v1741
          %v2446 = vunpack.c.h.b16 %v1741
          %v2447 = vunpack.c.l.b16 %v1742
          %v2448 = vunpack.c.h.b16 %v1742
          %v2449 = vunpack.c.l.b16 %v1743
          %v2450 = vunpack.c.h.b16 %v1743
          %v2451 = vunpack.c.l.b16 %v1744
          %v2452 = vunpack.c.h.b16 %v1744
          %v2453 = vunpack.c.l.b16 %v1745
          %v2454 = vunpack.c.h.b16 %v1745
          %v2455 = vunpack.c.l.b16 %v1746
          %v2456 = vunpack.c.h.b16 %v1746
          %v2457 = vunpack.c.l.b16 %v1747
          %v2458 = vunpack.c.h.b16 %v1747
          %v2459 = vunpack.c.l.b16 %v1748
          %v2460 = vunpack.c.h.b16 %v1748
          %v2461 = vunpack.c.l.b16 %v1749
          %v2462 = vunpack.c.h.b16 %v1749
          %v2463 = vunpack.c.l.b16 %v1750
          %v2464 = vunpack.c.h.b16 %v1750
          %v2465 = vunpack.c.l.b16 %v1751
          %v2466 = vunpack.c.h.b16 %v1751
          %v2467 = vunpack.c.l.b16 %v1752
          %v2468 = vunpack.c.h.b16 %v1752
          %v2469 = vunpack.c.l.b16 %v1753
          %v2470 = vunpack.c.h.b16 %v1753
          %v2471 = vunpack.c.l.b16 %v1754
          %v2472 = vunpack.c.h.b16 %v1754
          %v2473 = vunpack.c.l.b16 %v1755
          %v2474 = vunpack.c.h.b16 %v1755
          %v2475 = vunpack.c.l.b16 %v1756
          %v2476 = vunpack.c.h.b16 %v1756
          %v2477 = vunpack.c.l.b16 %v1757
          %v2478 = vunpack.c.h.b16 %v1757
          %v2479 = vunpack.c.l.b16 %v1758
          %v2480 = vunpack.c.h.b16 %v1758
          %v2481 = vunpack.c.l.b16 %v1759
          %v2482 = vunpack.c.h.b16 %v1759
          %v2483 = vunpack.c.l.b16 %v1760
          %v2484 = vunpack.c.h.b16 %v1760
          %v2485 = vunpack.c.l.b16 %v1761
          %v2486 = vunpack.c.h.b16 %v1761
          %v2487 = vunpack.c.l.b16 %v1762
          %v2488 = vunpack.c.h.b16 %v1762
          %v2489 = vunpack.c.l.b16 %v1763
          %v2490 = vunpack.c.h.b16 %v1763
          %v2491 = vunpack.c.l.b16 %v1764
          %v2492 = vunpack.c.h.b16 %v1764
          %v2493 = vunpack.c.l.b16 %v1765
          %v2494 = vunpack.c.h.b16 %v1765
          %v2495 = vunpack.c.l.b16 %v1766
          %v2496 = vunpack.c.h.b16 %v1766
          %v2497 = vunpack.c.l.b16 %v1767
          %v2498 = vunpack.c.h.b16 %v1767
          %v2499 = vunpack.c.l.b16 %v1768
          %v2500 = vunpack.c.h.b16 %v1768
          %v2501 = vunpack.c.l.b16 %v1769
          %v2502 = vunpack.c.h.b16 %v1769
          %v2503 = vunpack.c.l.b16 %v1770
          %v2504 = vunpack.c.h.b16 %v1770
          %v2505 = vunpack.c.l.b16 %v1771
          %v2506 = vunpack.c.h.b16 %v1771
          %v2507 = vunpack.c.l.b16 %v1772
          %v2508 = vunpack.c.h.b16 %v1772
          %v2509 = vunpack.c.l.b16 %v1773
          %v2510 = vunpack.c.h.b16 %v1773
          %v2511 = vunpack.c.l.b16 %v1774
          %v2512 = vunpack.c.h.b16 %v1774
          %v2513 = vunpack.c.l.b16 %v1775
          %v2514 = vunpack.c.h.b16 %v1775
          %v2515 = vunpack.c.l.b16 %v1776
          %v2516 = vunpack.c.h.b16 %v1776
          %v2517 = vunpack.c.l.b16 %v1777
          %v2518 = vunpack.c.h.b16 %v1777
          %v2519 = vunpack.c.l.b16 %v1778
          %v2520 = vunpack.c.h.b16 %v1778
          %v2521 = vunpack.c.l.b16 %v1779
          %v2522 = vunpack.c.h.b16 %v1779
          %v2523 = vunpack.c.l.b16 %v1780
          %v2524 = vunpack.c.h.b16 %v1780
          %v2525 = vunpack.c.l.b16 %v1781
          %v2526 = vunpack.c.h.b16 %v1781
          %v2527 = vunpack.c.l.b16 %v1782
          %v2528 = vunpack.c.h.b16 %v1782
          %v2529 = vunpack.c.l.b16 %v1783
          %v2530 = vunpack.c.h.b16 %v1783
          %v2531 = vunpack.c.l.b16 %v1784
          %v2532 = vunpack.c.h.b16 %v1784
          %v2533 = vunpack.c.l.b16 %v1785
          %v2534 = vunpack.c.h.b16 %v1785
          %v2535 = vunpack.c.l.b16 %v1786
          %v2536 = vunpack.c.h.b16 %v1786
          %v2537 = vunpack.c.l.b16 %v1787
          %v2538 = vunpack.c.h.b16 %v1787
          %v2539 = vunpack.c.l.b16 %v1788
          %v2540 = vunpack.c.h.b16 %v1788
          %v2541 = vunpack.c.l.b16 %v1789
          %v2542 = vunpack.c.h.b16 %v1789
          %v2543 = vunpack.c.l.b16 %v1790
          %v2544 = vunpack.c.h.b16 %v1790
          %v2545 = vunpack.c.l.b16 %v1791
          %v2546 = vunpack.c.h.b16 %v1791
          %v2547 = vunpack.c.l.b16 %v1792
          %v2548 = vunpack.c.h.b16 %v1792
          %v2549 = vunpack.c.l.b16 %v1793
          %v2550 = vunpack.c.h.b16 %v1793
          %v2551 = vunpack.c.l.b16 %v1794
          %v2552 = vunpack.c.h.b16 %v1794
          %v2553 = vunpack.c.l.b16 %v1795
          %v2554 = vunpack.c.h.b16 %v1795
          %v2555 = vunpack.c.l.b16 %v1796
          %v2556 = vunpack.c.h.b16 %v1796
          %v2557 = vunpack.c.l.b16 %v1797
          %v2558 = vunpack.c.h.b16 %v1797
          %v2559 = vunpack.c.l.b16 %v1798
          %v2560 = vunpack.c.h.b16 %v1798
          %v2561 = vunpack.c.l.b16 %v1799
          %v2562 = vunpack.c.h.b16 %v1799
          %v2563 = vunpack.c.l.b16 %v1800
          %v2564 = vunpack.c.h.b16 %v1800
          %v2565 = vunpack.c.l.b16 %v1801
          %v2566 = vunpack.c.h.b16 %v1801
          %v2567 = vunpack.c.l.b16 %v1802
          %v2568 = vunpack.c.h.b16 %v1802
          %v2569 = vunpack.c.l.b16 %v1803
          %v2570 = vunpack.c.h.b16 %v1803
          %v2571 = vunpack.c.l.b16 %v1804
          %v2572 = vunpack.c.h.b16 %v1804
          %v2573 = vunpack.c.l.b16 %v1805
          %v2574 = vunpack.c.h.b16 %v1805
          %v2575 = vunpack.c.l.b16 %v1806
          %v2576 = vunpack.c.h.b16 %v1806
          %v2577 = vunpack.c.l.b16 %v1807
          %v2578 = vunpack.c.h.b16 %v1807
          %v2579 = vunpack.c.l.b16 %v1808
          %v2580 = vunpack.c.h.b16 %v1808
          %v2581 = vunpack.c.l.b16 %v1809
          %v2582 = vunpack.c.h.b16 %v1809
          %v2583 = vunpack.c.l.b16 %v1810
          %v2584 = vunpack.c.h.b16 %v1810
          %v2585 = vunpack.c.l.b16 %v1811
          %v2586 = vunpack.c.h.b16 %v1811
          %v2587 = vunpack.c.l.b16 %v1812
          %v2588 = vunpack.c.h.b16 %v1812
          %v2589 = vunpack.c.l.b16 %v1813
          %v2590 = vunpack.c.h.b16 %v1813
          %v2591 = vunpack.c.l.b16 %v1814
          %v2592 = vunpack.c.h.b16 %v1814
          %v2593 = vunpack.c.l.b16 %v1815
          %v2594 = vunpack.c.h.b16 %v1815
          %v2595 = vunpack.c.l.b16 %v1816
          %v2596 = vunpack.c.h.b16 %v1816
          %v2597 = vunpack.c.l.b16 %v1817
          %v2598 = vunpack.c.h.b16 %v1817
          %v2599 = vunpack.c.l.b16 %v1818
          %v2600 = vunpack.c.h.b16 %v1818
          %v2601 = vunpack.c.l.b16 %v1819
          %v2602 = vunpack.c.h.b16 %v1819
          %v2603 = vunpack.c.l.b16 %v1820
          %v2604 = vunpack.c.h.b16 %v1820
          %v2605 = vunpack.c.l.b16 %v1821
          %v2606 = vunpack.c.h.b16 %v1821
          %v2607 = vunpack.c.l.b16 %v1822
          %v2608 = vunpack.c.h.b16 %v1822
          %v2609 = vunpack.c.l.b16 %v1823
          %v2610 = vunpack.c.h.b16 %v1823
          %v2611 = vunpack.c.l.b16 %v1824
          %v2612 = vunpack.c.h.b16 %v1824
          %v2613 = vunpack.c.l.b16 %v1825
          %v2614 = vunpack.c.h.b16 %v1825
          %v2615 = vunpack.c.l.b16 %v1826
          %v2616 = vunpack.c.h.b16 %v1826
          %v2617 = vunpack.c.l.b16 %v1827
          %v2618 = vunpack.c.h.b16 %v1827
          %v2619 = vunpack.c.l.b16 %v1828
          %v2620 = vunpack.c.h.b16 %v1828
          %v2621 = vunpack.c.l.b16 %v1829
          %v2622 = vunpack.c.h.b16 %v1829
          %v2623 = vunpack.c.l.b16 %v1830
          %v2624 = vunpack.c.h.b16 %v1830
          %v2625 = vunpack.c.l.b16 %v1831
          %v2626 = vunpack.c.h.b16 %v1831
          %v2627 = vunpack.c.l.b16 %v1832
          %v2628 = vunpack.c.h.b16 %v1832
          %v2629 = vunpack.c.l.b16 %v1833
          %v2630 = vunpack.c.h.b16 %v1833
          %v2631 = vunpack.c.l.b16 %v1834
          %v2632 = vunpack.c.h.b16 %v1834
          %v2633 = vunpack.c.l.b16 %v1835
          %v2634 = vunpack.c.h.b16 %v1835
          %v2635 = vunpack.c.l.b16 %v1836
          %v2636 = vunpack.c.h.b16 %v1836
          %v2637 = vunpack.c.l.b16 %v1837
          %v2638 = vunpack.c.h.b16 %v1837
          %v2639 = vunpack.c.l.b16 %v1838
          %v2640 = vunpack.c.h.b16 %v1838
          %v2641 = vunpack.c.l.b16 %v1839
          %v2642 = vunpack.c.h.b16 %v1839
          %v2643 = vunpack.c.l.b16 %v1840
          %v2644 = vunpack.c.h.b16 %v1840
          %v2645 = vunpack.c.l.b16 %v1841
          %v2646 = vunpack.c.h.b16 %v1841
          %v2647 = vunpack.c.l.b16 %v1842
          %v2648 = vunpack.c.h.b16 %v1842
          %v2649 = vunpack.c.l.b16 %v1843
          %v2650 = vunpack.c.h.b16 %v1843
          %v2651 = vunpack.c.l.b16 %v1844
          %v2652 = vunpack.c.h.b16 %v1844
          %v2653 = vunpack.c.l.b16 %v1845
          %v2654 = vunpack.c.h.b16 %v1845
          %v2655 = vunpack.c.l.b16 %v1846
          %v2656 = vunpack.c.h.b16 %v1846
          %v2657 = vpack.c.b16 %v2153, %v2145
          %v2658 = vpack.c.b16 %v2154, %v2146
          %v2659 = vpack.c.b16 %v2155, %v2147
          %v2660 = vpack.c.b16 %v2156, %v2148
          %v2661 = vpack.c.b16 %v2157, %v2149
          %v2662 = vpack.c.b16 %v2158, %v2150
          %v2663 = vpack.c.b16 %v2159, %v2151
          %v2664 = vpack.c.b16 %v2160, %v2152
          %v2665 = vpack.c.b16 %v2169, %v2161
          %v2666 = vpack.c.b16 %v2170, %v2162
          %v2667 = vpack.c.b16 %v2171, %v2163
          %v2668 = vpack.c.b16 %v2172, %v2164
          %v2669 = vpack.c.b16 %v2173, %v2165
          %v2670 = vpack.c.b16 %v2174, %v2166
          %v2671 = vpack.c.b16 %v2175, %v2167
          %v2672 = vpack.c.b16 %v2176, %v2168
          %v2673 = vpack.c.b16 %v2185, %v2177
          %v2674 = vpack.c.b16 %v2186, %v2178
          %v2675 = vpack.c.b16 %v2187, %v2179
          %v2676 = vpack.c.b16 %v2188, %v2180
          %v2677 = vpack.c.b16 %v2189, %v2181
          %v2678 = vpack.c.b16 %v2190, %v2182
          %v2679 = vpack.c.b16 %v2191, %v2183
          %v2680 = vpack.c.b16 %v2192, %v2184
          %v2681 = vpack.c.b16 %v2201, %v2193
          %v2682 = vpack.c.b16 %v2202, %v2194
          %v2683 = vpack.c.b16 %v2203, %v2195
          %v2684 = vpack.c.b16 %v2204, %v2196
          %v2685 = vpack.c.b16 %v2205, %v2197
          %v2686 = vpack.c.b16 %v2206, %v2198
          %v2687 = vpack.c.b16 %v2207, %v2199
          %v2688 = vpack.c.b16 %v2208, %v2200
          %v2689 = vpack.c.b16 %v2217, %v2209
          %v2690 = vpack.c.b16 %v2218, %v2210
          %v2691 = vpack.c.b16 %v2219, %v2211
          %v2692 = vpack.c.b16 %v2220, %v2212
          %v2693 = vpack.c.b16 %v2221, %v2213
          %v2694 = vpack.c.b16 %v2222, %v2214
          %v2695 = vpack.c.b16 %v2223, %v2215
          %v2696 = vpack.c.b16 %v2224, %v2216
          %v2697 = vpack.c.b16 %v2233, %v2225
          %v2698 = vpack.c.b16 %v2234, %v2226
          %v2699 = vpack.c.b16 %v2235, %v2227
          %v2700 = vpack.c.b16 %v2236, %v2228
          %v2701 = vpack.c.b16 %v2237, %v2229
          %v2702 = vpack.c.b16 %v2238, %v2230
          %v2703 = vpack.c.b16 %v2239, %v2231
          %v2704 = vpack.c.b16 %v2240, %v2232
          %v2705 = vpack.c.b16 %v2249, %v2241
          %v2706 = vpack.c.b16 %v2250, %v2242
          %v2707 = vpack.c.b16 %v2251, %v2243
          %v2708 = vpack.c.b16 %v2252, %v2244
          %v2709 = vpack.c.b16 %v2253, %v2245
          %v2710 = vpack.c.b16 %v2254, %v2246
          %v2711 = vpack.c.b16 %v2255, %v2247
          %v2712 = vpack.c.b16 %v2256, %v2248
          %v2713 = vpack.c.b16 %v2265, %v2257
          %v2714 = vpack.c.b16 %v2266, %v2258
          %v2715 = vpack.c.b16 %v2267, %v2259
          %v2716 = vpack.c.b16 %v2268, %v2260
          %v2717 = vpack.c.b16 %v2269, %v2261
          %v2718 = vpack.c.b16 %v2270, %v2262
          %v2719 = vpack.c.b16 %v2271, %v2263
          %v2720 = vpack.c.b16 %v2272, %v2264
          %v2721 = vpack.c.b16 %v2281, %v2273
          %v2722 = vpack.c.b16 %v2282, %v2274
          %v2723 = vpack.c.b16 %v2283, %v2275
          %v2724 = vpack.c.b16 %v2284, %v2276
          %v2725 = vpack.c.b16 %v2285, %v2277
          %v2726 = vpack.c.b16 %v2286, %v2278
          %v2727 = vpack.c.b16 %v2287, %v2279
          %v2728 = vpack.c.b16 %v2288, %v2280
          %v2729 = vpack.c.b16 %v2297, %v2289
          %v2730 = vpack.c.b16 %v2298, %v2290
          %v2731 = vpack.c.b16 %v2299, %v2291
          %v2732 = vpack.c.b16 %v2300, %v2292
          %v2733 = vpack.c.b16 %v2301, %v2293
          %v2734 = vpack.c.b16 %v2302, %v2294
          %v2735 = vpack.c.b16 %v2303, %v2295
          %v2736 = vpack.c.b16 %v2304, %v2296
          %v2737 = vpack.c.b16 %v2313, %v2305
          %v2738 = vpack.c.b16 %v2314, %v2306
          %v2739 = vpack.c.b16 %v2315, %v2307
          %v2740 = vpack.c.b16 %v2316, %v2308
          %v2741 = vpack.c.b16 %v2317, %v2309
          %v2742 = vpack.c.b16 %v2318, %v2310
          %v2743 = vpack.c.b16 %v2319, %v2311
          %v2744 = vpack.c.b16 %v2320, %v2312
          %v2745 = vpack.c.b16 %v2329, %v2321
          %v2746 = vpack.c.b16 %v2330, %v2322
          %v2747 = vpack.c.b16 %v2331, %v2323
          %v2748 = vpack.c.b16 %v2332, %v2324
          %v2749 = vpack.c.b16 %v2333, %v2325
          %v2750 = vpack.c.b16 %v2334, %v2326
          %v2751 = vpack.c.b16 %v2335, %v2327
          %v2752 = vpack.c.b16 %v2336, %v2328
          %v2753 = vpack.c.b16 %v2345, %v2337
          %v2754 = vpack.c.b16 %v2346, %v2338
          %v2755 = vpack.c.b16 %v2347, %v2339
          %v2756 = vpack.c.b16 %v2348, %v2340
          %v2757 = vpack.c.b16 %v2349, %v2341
          %v2758 = vpack.c.b16 %v2350, %v2342
          %v2759 = vpack.c.b16 %v2351, %v2343
          %v2760 = vpack.c.b16 %v2352, %v2344
          %v2761 = vpack.c.b16 %v2361, %v2353
          %v2762 = vpack.c.b16 %v2362, %v2354
          %v2763 = vpack.c.b16 %v2363, %v2355
          %v2764 = vpack.c.b16 %v2364, %v2356
          %v2765 = vpack.c.b16 %v2365, %v2357
          %v2766 = vpack.c.b16 %v2366, %v2358
          %v2767 = vpack.c.b16 %v2367, %v2359
          %v2768 = vpack.c.b16 %v2368, %v2360
          %v2769 = vpack.c.b16 %v2377, %v2369
          %v2770 = vpack.c.b16 %v2378, %v2370
          %v2771 = vpack.c.b16 %v2379, %v2371
          %v2772 = vpack.c.b16 %v2380, %v2372
          %v2773 = vpack.c.b16 %v2381, %v2373
          %v2774 = vpack.c.b16 %v2382, %v2374
          %v2775 = vpack.c.b16 %v2383, %v2375
          %v2776 = vpack.c.b16 %v2384, %v2376
          %v2777 = vpack.c.b16 %v2393, %v2385
          %v2778 = vpack.c.b16 %v2394, %v2386
          %v2779 = vpack.c.b16 %v2395, %v2387
          %v2780 = vpack.c.b16 %v2396, %v2388
          %v2781 = vpack.c.b16 %v2397, %v2389
          %v2782 = vpack.c.b16 %v2398, %v2390
          %v2783 = vpack.c.b16 %v2399, %v2391
          %v2784 = vpack.c.b16 %v2400, %v2392
          %v2785 = vpack.c.b16 %v2409, %v2401
          %v2786 = vpack.c.b16 %v2410, %v2402
          %v2787 = vpack.c.b16 %v2411, %v2403
          %v2788 = vpack.c.b16 %v2412, %v2404
          %v2789 = vpack.c.b16 %v2413, %v2405
          %v2790 = vpack.c.b16 %v2414, %v2406
          %v2791 = vpack.c.b16 %v2415, %v2407
          %v2792 = vpack.c.b16 %v2416, %v2408
          %v2793 = vpack.c.b16 %v2425, %v2417
          %v2794 = vpack.c.b16 %v2426, %v2418
          %v2795 = vpack.c.b16 %v2427, %v2419
          %v2796 = vpack.c.b16 %v2428, %v2420
          %v2797 = vpack.c.b16 %v2429, %v2421
          %v2798 = vpack.c.b16 %v2430, %v2422
          %v2799 = vpack.c.b16 %v2431, %v2423
          %v2800 = vpack.c.b16 %v2432, %v2424
          %v2801 = vpack.c.b16 %v2441, %v2433
          %v2802 = vpack.c.b16 %v2442, %v2434
          %v2803 = vpack.c.b16 %v2443, %v2435
          %v2804 = vpack.c.b16 %v2444, %v2436
          %v2805 = vpack.c.b16 %v2445, %v2437
          %v2806 = vpack.c.b16 %v2446, %v2438
          %v2807 = vpack.c.b16 %v2447, %v2439
          %v2808 = vpack.c.b16 %v2448, %v2440
          %v2809 = vpack.c.b16 %v2457, %v2449
          %v2810 = vpack.c.b16 %v2458, %v2450
          %v2811 = vpack.c.b16 %v2459, %v2451
          %v2812 = vpack.c.b16 %v2460, %v2452
          %v2813 = vpack.c.b16 %v2461, %v2453
          %v2814 = vpack.c.b16 %v2462, %v2454
          %v2815 = vpack.c.b16 %v2463, %v2455
          %v2816 = vpack.c.b16 %v2464, %v2456
          %v2817 = vpack.c.b16 %v2473, %v2465
          %v2818 = vpack.c.b16 %v2474, %v2466
          %v2819 = vpack.c.b16 %v2475, %v2467
          %v2820 = vpack.c.b16 %v2476, %v2468
          %v2821 = vpack.c.b16 %v2477, %v2469
          %v2822 = vpack.c.b16 %v2478, %v2470
          %v2823 = vpack.c.b16 %v2479, %v2471
          %v2824 = vpack.c.b16 %v2480, %v2472
          %v2825 = vpack.c.b16 %v2489, %v2481
          %v2826 = vpack.c.b16 %v2490, %v2482
          %v2827 = vpack.c.b16 %v2491, %v2483
          %v2828 = vpack.c.b16 %v2492, %v2484
          %v2829 = vpack.c.b16 %v2493, %v2485
          %v2830 = vpack.c.b16 %v2494, %v2486
          %v2831 = vpack.c.b16 %v2495, %v2487
          %v2832 = vpack.c.b16 %v2496, %v2488
          %v2833 = vpack.c.b16 %v2505, %v2497
          %v2834 = vpack.c.b16 %v2506, %v2498
          %v2835 = vpack.c.b16 %v2507, %v2499
          %v2836 = vpack.c.b16 %v2508, %v2500
          %v2837 = vpack.c.b16 %v2509, %v2501
          %v2838 = vpack.c.b16 %v2510, %v2502
          %v2839 = vpack.c.b16 %v2511, %v2503
          %v2840 = vpack.c.b16 %v2512, %v2504
          %v2841 = vpack.c.b16 %v2521, %v2513
          %v2842 = vpack.c.b16 %v2522, %v2514
          %v2843 = vpack.c.b16 %v2523, %v2515
          %v2844 = vpack.c.b16 %v2524, %v2516
          %v2845 = vpack.c.b16 %v2525, %v2517
          %v2846 = vpack.c.b16 %v2526, %v2518
          %v2847 = vpack.c.b16 %v2527, %v2519
          %v2848 = vpack.c.b16 %v2528, %v2520
          %v2849 = vpack.c.b16 %v2537, %v2529
          %v2850 = vpack.c.b16 %v2538, %v2530
          %v2851 = vpack.c.b16 %v2539, %v2531
          %v2852 = vpack.c.b16 %v2540, %v2532
          %v2853 = vpack.c.b16 %v2541, %v2533
          %v2854 = vpack.c.b16 %v2542, %v2534
          %v2855 = vpack.c.b16 %v2543, %v2535
          %v2856 = vpack.c.b16 %v2544, %v2536
          %v2857 = vpack.c.b16 %v2553, %v2545
          %v2858 = vpack.c.b16 %v2554, %v2546
          %v2859 = vpack.c.b16 %v2555, %v2547
          %v2860 = vpack.c.b16 %v2556, %v2548
          %v2861 = vpack.c.b16 %v2557, %v2549
          %v2862 = vpack.c.b16 %v2558, %v2550
          %v2863 = vpack.c.b16 %v2559, %v2551
          %v2864 = vpack.c.b16 %v2560, %v2552
          %v2865 = vpack.c.b16 %v2569, %v2561
          %v2866 = vpack.c.b16 %v2570, %v2562
          %v2867 = vpack.c.b16 %v2571, %v2563
          %v2868 = vpack.c.b16 %v2572, %v2564
          %v2869 = vpack.c.b16 %v2573, %v2565
          %v2870 = vpack.c.b16 %v2574, %v2566
          %v2871 = vpack.c.b16 %v2575, %v2567
          %v2872 = vpack.c.b16 %v2576, %v2568
          %v2873 = vpack.c.b16 %v2585, %v2577
          %v2874 = vpack.c.b16 %v2586, %v2578
          %v2875 = vpack.c.b16 %v2587, %v2579
          %v2876 = vpack.c.b16 %v2588, %v2580
          %v2877 = vpack.c.b16 %v2589, %v2581
          %v2878 = vpack.c.b16 %v2590, %v2582
          %v2879 = vpack.c.b16 %v2591, %v2583
          %v2880 = vpack.c.b16 %v2592, %v2584
          %v2881 = vpack.c.b16 %v2601, %v2593
          %v2882 = vpack.c.b16 %v2602, %v2594
          %v2883 = vpack.c.b16 %v2603, %v2595
          %v2884 = vpack.c.b16 %v2604, %v2596
          %v2885 = vpack.c.b16 %v2605, %v2597
          %v2886 = vpack.c.b16 %v2606, %v2598
          %v2887 = vpack.c.b16 %v2607, %v2599
          %v2888 = vpack.c.b16 %v2608, %v2600
          %v2889 = vpack.c.b16 %v2617, %v2609
          %v2890 = vpack.c.b16 %v2618, %v2610
          %v2891 = vpack.c.b16 %v2619, %v2611
          %v2892 = vpack.c.b16 %v2620, %v2612
          %v2893 = vpack.c.b16 %v2621, %v2613
          %v2894 = vpack.c.b16 %v2622, %v2614
          %v2895 = vpack.c.b16 %v2623, %v2615
          %v2896 = vpack.c.b16 %v2624, %v2616
          %v2897 = vpack.c.b16 %v2633, %v2625
          %v2898 = vpack.c.b16 %v2634, %v2626
          %v2899 = vpack.c.b16 %v2635, %v2627
          %v2900 = vpack.c.b16 %v2636, %v2628
          %v2901 = vpack.c.b16 %v2637, %v2629
          %v2902 = vpack.c.b16 %v2638, %v2630
          %v2903 = vpack.c.b16 %v2639, %v2631
          %v2904 = vpack.c.b16 %v2640, %v2632
          %v2905 = vpack.c.b16 %v2649, %v2641
          %v2906 = vpack.c.b16 %v2650, %v2642
          %v2907 = vpack.c.b16 %v2651, %v2643
          %v2908 = vpack.c.b16 %v2652, %v2644
          %v2909 = vpack.c.b16 %v2653, %v2645
          %v2910 = vpack.c.b16 %v2654, %v2646
          %v2911 = vpack.c.b16 %v2655, %v2647
          %v2912 = vpack.c.b16 %v2656, %v2648
          %3169 = vmatprep.subr.bf16.mxu0 %v2658
          %3170 = vmatpush1.bf16.msra.mxu0 %v2657
          %3171 = vmatprep.subr.bf16.mxu0 %v2666
          %3172 = vmatpush1.bf16.msra.mxu0 %v2665
          %3173 = vmatprep.subr.bf16.mxu0 %v2674
          %3174 = vmatpush1.bf16.msra.mxu0 %v2673
          %3175 = vmatprep.subr.bf16.mxu0 %v2682
          %3176 = vmatpush1.bf16.msra.mxu0 %v2681
          %3177 = vmatprep.subr.bf16.mxu0 %v2690
          %3178 = vmatpush1.bf16.msra.mxu0 %v2689
          %3179 = vmatprep.subr.bf16.mxu0 %v2698
          %3180 = vmatpush1.bf16.msra.mxu0 %v2697
          %3181 = vmatprep.subr.bf16.mxu0 %v2706
          %3182 = vmatpush1.bf16.msra.mxu0 %v2705
          %3183 = vmatprep.subr.bf16.mxu0 %v2714
          %3184 = vmatpush1.bf16.msra.mxu0 %v2713
          %3185 = vmatprep.subr.bf16.mxu0 %v2722
          %3186 = vmatpush1.bf16.msra.mxu0 %v2721
          %3187 = vmatprep.subr.bf16.mxu0 %v2730
          %3188 = vmatpush1.bf16.msra.mxu0 %v2729
          %3189 = vmatprep.subr.bf16.mxu0 %v2738
          %3190 = vmatpush1.bf16.msra.mxu0 %v2737
          %3191 = vmatprep.subr.bf16.mxu0 %v2746
          %3192 = vmatpush1.bf16.msra.mxu0 %v2745
          %3193 = vmatprep.subr.bf16.mxu0 %v2754
          %3194 = vmatpush1.bf16.msra.mxu0 %v2753
          %3195 = vmatprep.subr.bf16.mxu0 %v2762
          %3196 = vmatpush1.bf16.msra.mxu0 %v2761
          %3197 = vmatprep.subr.bf16.mxu0 %v2770
          %3198 = vmatpush1.bf16.msra.mxu0 %v2769
          %3199 = vmatprep.subr.bf16.mxu0 %v2778
          %3200 = vmatpush1.bf16.msra.mxu0 %v2777
          %3201 = vmatprep.mubr.bf16.mxu0 %v1588
          %3202 = vmatmul.mubr.bf16.gmra.mrb[0].mxu0 %v1587
          %v3203 = vpop.f32.mrb[0].mxu0
          %v3204 = vadd.f32 %v1852, %v3203
          %v3205 = vpop.f32.mrb[0].mxu0
          %v3206 = vadd.f32 %v1856, %v3205
          %v3207 = vpop.f32.mrb[0].mxu0
          %v3208 = vpop.f32.mrb[0].mxu0
          %3209 = vdwg.mxu0
          %3210 = vmatprep.subr.bf16.mxu0 %v2786
          %3211 = vmatpush1.bf16.msra.mxu0 %v2785
          %3212 = vmatprep.subr.bf16.mxu0 %v2794
          %3213 = vmatpush1.bf16.msra.mxu0 %v2793
          %3214 = vmatprep.subr.bf16.mxu0 %v2802
          %3215 = vmatpush1.bf16.msra.mxu0 %v2801
          %3216 = vmatprep.subr.bf16.mxu0 %v2810
          %3217 = vmatpush1.bf16.msra.mxu0 %v2809
          %3218 = vmatprep.subr.bf16.mxu0 %v2818
          %3219 = vmatpush1.bf16.msra.mxu0 %v2817
          %3220 = vmatprep.subr.bf16.mxu0 %v2826
          %3221 = vmatpush1.bf16.msra.mxu0 %v2825
          %3222 = vmatprep.subr.bf16.mxu0 %v2834
          %3223 = vmatpush1.bf16.msra.mxu0 %v2833
          %3224 = vmatprep.subr.bf16.mxu0 %v2842
          %3225 = vmatpush1.bf16.msra.mxu0 %v2841
          %3226 = vmatprep.subr.bf16.mxu0 %v2850
          %3227 = vmatpush1.bf16.msra.mxu0 %v2849
          %3228 = vmatprep.subr.bf16.mxu0 %v2858
          %3229 = vmatpush1.bf16.msra.mxu0 %v2857
          %3230 = vmatprep.subr.bf16.mxu0 %v2866
          %3231 = vmatpush1.bf16.msra.mxu0 %v2865
          %3232 = vmatprep.subr.bf16.mxu0 %v2874
          %3233 = vmatpush1.bf16.msra.mxu0 %v2873
          %3234 = vmatprep.subr.bf16.mxu0 %v2882
          %3235 = vmatpush1.bf16.msra.mxu0 %v2881
          %3236 = vmatprep.subr.bf16.mxu0 %v2890
          %3237 = vmatpush1.bf16.msra.mxu0 %v2889
          %3238 = vmatprep.subr.bf16.mxu0 %v2898
          %3239 = vmatpush1.bf16.msra.mxu0 %v2897
          %3240 = vmatprep.subr.bf16.mxu0 %v2906
          %3241 = vmatpush1.bf16.msra.mxu0 %v2905
          %3242 = vmatprep.mubr.bf16.mxu0 %v1590
          %3243 = vmatmul.mubr.bf16.gmra.mrb[0].mxu0 %v1589
          %v3244 = vpop.f32.mrb[0].mxu0
          %v3245 = vadd.f32 %v3204, %v3244
          %v3246 = vpop.f32.mrb[0].mxu0
          %v3247 = vadd.f32 %v3206, %v3246
          %v3248 = vpop.f32.mrb[0].mxu0
          %v3249 = vpop.f32.mrb[0].mxu0
          %3250 = vdwg.mxu0
          %3251 = vmatprep.subr.bf16.mxu0 %v2660
          %3252 = vmatpush1.bf16.msra.mxu0 %v2659
          %3253 = vmatprep.subr.bf16.mxu0 %v2668
          %3254 = vmatpush1.bf16.msra.mxu0 %v2667
          %3255 = vmatprep.subr.bf16.mxu0 %v2676
          %3256 = vmatpush1.bf16.msra.mxu0 %v2675
          %3257 = vmatprep.subr.bf16.mxu0 %v2684
          %3258 = vmatpush1.bf16.msra.mxu0 %v2683
          %3259 = vmatprep.subr.bf16.mxu0 %v2692
          %3260 = vmatpush1.bf16.msra.mxu0 %v2691
          %3261 = vmatprep.subr.bf16.mxu0 %v2700
          %3262 = vmatpush1.bf16.msra.mxu0 %v2699
          %3263 = vmatprep.subr.bf16.mxu0 %v2708
          %3264 = vmatpush1.bf16.msra.mxu0 %v2707
          %3265 = vmatprep.subr.bf16.mxu0 %v2716
          %3266 = vmatpush1.bf16.msra.mxu0 %v2715
          %3267 = vmatprep.subr.bf16.mxu0 %v2724
          %3268 = vmatpush1.bf16.msra.mxu0 %v2723
          %3269 = vmatprep.subr.bf16.mxu0 %v2732
          %3270 = vmatpush1.bf16.msra.mxu0 %v2731
          %3271 = vmatprep.subr.bf16.mxu0 %v2740
          %3272 = vmatpush1.bf16.msra.mxu0 %v2739
          %3273 = vmatprep.subr.bf16.mxu0 %v2748
          %3274 = vmatpush1.bf16.msra.mxu0 %v2747
          %3275 = vmatprep.subr.bf16.mxu0 %v2756
          %3276 = vmatpush1.bf16.msra.mxu0 %v2755
          %3277 = vmatprep.subr.bf16.mxu0 %v2764
          %3278 = vmatpush1.bf16.msra.mxu0 %v2763
          %3279 = vmatprep.subr.bf16.mxu0 %v2772
          %3280 = vmatpush1.bf16.msra.mxu0 %v2771
          %3281 = vmatprep.subr.bf16.mxu0 %v2780
          %3282 = vmatpush1.bf16.msra.mxu0 %v2779
          %3283 = vmatprep.mubr.bf16.mxu0 %v1588
          %3284 = vmatmul.mubr.bf16.gmra.mrb[0].mxu0 %v1587
          %v3285 = vpop.f32.mrb[0].mxu0
          %v3286 = vadd.f32 %v1860, %v3285
          %v3287 = vpop.f32.mrb[0].mxu0
          %v3288 = vadd.f32 %v1864, %v3287
          %v3289 = vpop.f32.mrb[0].mxu0
          %v3290 = vpop.f32.mrb[0].mxu0
          %3291 = vdwg.mxu0
          %3292 = vmatprep.subr.bf16.mxu0 %v2788
          %3293 = vmatpush1.bf16.msra.mxu0 %v2787
          %3294 = vmatprep.subr.bf16.mxu0 %v2796
          %3295 = vmatpush1.bf16.msra.mxu0 %v2795
          %3296 = vmatprep.subr.bf16.mxu0 %v2804
          %3297 = vmatpush1.bf16.msra.mxu0 %v2803
          %3298 = vmatprep.subr.bf16.mxu0 %v2812
          %3299 = vmatpush1.bf16.msra.mxu0 %v2811
          %3300 = vmatprep.subr.bf16.mxu0 %v2820
          %3301 = vmatpush1.bf16.msra.mxu0 %v2819
          %3302 = vmatprep.subr.bf16.mxu0 %v2828
          %3303 = vmatpush1.bf16.msra.mxu0 %v2827
          %3304 = vmatprep.subr.bf16.mxu0 %v2836
          %3305 = vmatpush1.bf16.msra.mxu0 %v2835
          %3306 = vmatprep.subr.bf16.mxu0 %v2844
          %3307 = vmatpush1.bf16.msra.mxu0 %v2843
          %3308 = vmatprep.subr.bf16.mxu0 %v2852
          %3309 = vmatpush1.bf16.msra.mxu0 %v2851
          %3310 = vmatprep.subr.bf16.mxu0 %v2860
          %3311 = vmatpush1.bf16.msra.mxu0 %v2859
          %3312 = vmatprep.subr.bf16.mxu0 %v2868
          %3313 = vmatpush1.bf16.msra.mxu0 %v2867
          %3314 = vmatprep.subr.bf16.mxu0 %v2876
          %3315 = vmatpush1.bf16.msra.mxu0 %v2875
          %3316 = vmatprep.subr.bf16.mxu0 %v2884
          %3317 = vmatpush1.bf16.msra.mxu0 %v2883
          %3318 = vmatprep.subr.bf16.mxu0 %v2892
          %3319 = vmatpush1.bf16.msra.mxu0 %v2891
          %3320 = vmatprep.subr.bf16.mxu0 %v2900
          %3321 = vmatpush1.bf16.msra.mxu0 %v2899
          %3322 = vmatprep.subr.bf16.mxu0 %v2908
          %3323 = vmatpush1.bf16.msra.mxu0 %v2907
          %3324 = vmatprep.mubr.bf16.mxu0 %v1590
          %3325 = vmatmul.mubr.bf16.gmra.mrb[0].mxu0 %v1589
          %v3326 = vpop.f32.mrb[0].mxu0
          %v3327 = vadd.f32 %v3286, %v3326
          %v3328 = vpop.f32.mrb[0].mxu0
          %v3329 = vadd.f32 %v3288, %v3328
          %v3330 = vpop.f32.mrb[0].mxu0
          %v3331 = vpop.f32.mrb[0].mxu0
          %3332 = vdwg.mxu0
          %3333 = vmatprep.subr.bf16.mxu0 %v2662
          %3334 = vmatpush1.bf16.msra.mxu0 %v2661
          %3335 = vmatprep.subr.bf16.mxu0 %v2670
          %3336 = vmatpush1.bf16.msra.mxu0 %v2669
          %3337 = vmatprep.subr.bf16.mxu0 %v2678
          %3338 = vmatpush1.bf16.msra.mxu0 %v2677
          %3339 = vmatprep.subr.bf16.mxu0 %v2686
          %3340 = vmatpush1.bf16.msra.mxu0 %v2685
          %3341 = vmatprep.subr.bf16.mxu0 %v2694
          %3342 = vmatpush1.bf16.msra.mxu0 %v2693
          %3343 = vmatprep.subr.bf16.mxu0 %v2702
          %3344 = vmatpush1.bf16.msra.mxu0 %v2701
          %3345 = vmatprep.subr.bf16.mxu0 %v2710
          %3346 = vmatpush1.bf16.msra.mxu0 %v2709
          %3347 = vmatprep.subr.bf16.mxu0 %v2718
          %3348 = vmatpush1.bf16.msra.mxu0 %v2717
          %3349 = vmatprep.subr.bf16.mxu0 %v2726
          %3350 = vmatpush1.bf16.msra.mxu0 %v2725
          %3351 = vmatprep.subr.bf16.mxu0 %v2734
          %3352 = vmatpush1.bf16.msra.mxu0 %v2733
          %3353 = vmatprep.subr.bf16.mxu0 %v2742
          %3354 = vmatpush1.bf16.msra.mxu0 %v2741
          %3355 = vmatprep.subr.bf16.mxu0 %v2750
          %3356 = vmatpush1.bf16.msra.mxu0 %v2749
          %3357 = vmatprep.subr.bf16.mxu0 %v2758
          %3358 = vmatpush1.bf16.msra.mxu0 %v2757
          %3359 = vmatprep.subr.bf16.mxu0 %v2766
          %3360 = vmatpush1.bf16.msra.mxu0 %v2765
          %3361 = vmatprep.subr.bf16.mxu0 %v2774
          %3362 = vmatpush1.bf16.msra.mxu0 %v2773
          %3363 = vmatprep.subr.bf16.mxu0 %v2782
          %3364 = vmatpush1.bf16.msra.mxu0 %v2781
          %3365 = vmatprep.mubr.bf16.mxu0 %v1588
          %3366 = vmatmul.mubr.bf16.gmra.mrb[0].mxu0 %v1587
          %v3367 = vpop.f32.mrb[0].mxu0
          %v3368 = vadd.f32 %v1868, %v3367
          %v3369 = vpop.f32.mrb[0].mxu0
          %v3370 = vadd.f32 %v1872, %v3369
          %v3371 = vpop.f32.mrb[0].mxu0
          %v3372 = vpop.f32.mrb[0].mxu0
          %3373 = vdwg.mxu0
          %3374 = vmatprep.subr.bf16.mxu0 %v2790
          %3375 = vmatpush1.bf16.msra.mxu0 %v2789
          %3376 = vmatprep.subr.bf16.mxu0 %v2798
          %3377 = vmatpush1.bf16.msra.mxu0 %v2797
          %3378 = vmatprep.subr.bf16.mxu0 %v2806
          %3379 = vmatpush1.bf16.msra.mxu0 %v2805
          %3380 = vmatprep.subr.bf16.mxu0 %v2814
          %3381 = vmatpush1.bf16.msra.mxu0 %v2813
          %3382 = vmatprep.subr.bf16.mxu0 %v2822
          %3383 = vmatpush1.bf16.msra.mxu0 %v2821
          %3384 = vmatprep.subr.bf16.mxu0 %v2830
          %3385 = vmatpush1.bf16.msra.mxu0 %v2829
          %3386 = vmatprep.subr.bf16.mxu0 %v2838
          %3387 = vmatpush1.bf16.msra.mxu0 %v2837
          %3388 = vmatprep.subr.bf16.mxu0 %v2846
          %3389 = vmatpush1.bf16.msra.mxu0 %v2845
          %3390 = vmatprep.subr.bf16.mxu0 %v2854
          %3391 = vmatpush1.bf16.msra.mxu0 %v2853
          %3392 = vmatprep.subr.bf16.mxu0 %v2862
          %3393 = vmatpush1.bf16.msra.mxu0 %v2861
          %3394 = vmatprep.subr.bf16.mxu0 %v2870
          %3395 = vmatpush1.bf16.msra.mxu0 %v2869
          %3396 = vmatprep.subr.bf16.mxu0 %v2878
          %3397 = vmatpush1.bf16.msra.mxu0 %v2877
          %3398 = vmatprep.subr.bf16.mxu0 %v2886
          %3399 = vmatpush1.bf16.msra.mxu0 %v2885
          %3400 = vmatprep.subr.bf16.mxu0 %v2894
          %3401 = vmatpush1.bf16.msra.mxu0 %v2893
          %3402 = vmatprep.subr.bf16.mxu0 %v2902
          %3403 = vmatpush1.bf16.msra.mxu0 %v2901
          %3404 = vmatprep.subr.bf16.mxu0 %v2910
          %3405 = vmatpush1.bf16.msra.mxu0 %v2909
          %3406 = vmatprep.mubr.bf16.mxu0 %v1590
          %3407 = vmatmul.mubr.bf16.gmra.mrb[0].mxu0 %v1589
          %v3408 = vpop.f32.mrb[0].mxu0
          %v3409 = vadd.f32 %v3368, %v3408
          %v3410 = vpop.f32.mrb[0].mxu0
          %v3411 = vadd.f32 %v3370, %v3410
          %v3412 = vpop.f32.mrb[0].mxu0
          %v3413 = vpop.f32.mrb[0].mxu0
          %3414 = vdwg.mxu0
          %3415 = vmatprep.subr.bf16.mxu0 %v2664
          %3416 = vmatpush1.bf16.msra.mxu0 %v2663
          %3417 = vmatprep.subr.bf16.mxu0 %v2672
          %3418 = vmatpush1.bf16.msra.mxu0 %v2671
          %3419 = vmatprep.subr.bf16.mxu0 %v2680
          %3420 = vmatpush1.bf16.msra.mxu0 %v2679
          %3421 = vmatprep.subr.bf16.mxu0 %v2688
          %3422 = vmatpush1.bf16.msra.mxu0 %v2687
          %3423 = vmatprep.subr.bf16.mxu0 %v2696
          %3424 = vmatpush1.bf16.msra.mxu0 %v2695
          %3425 = vmatprep.subr.bf16.mxu0 %v2704
          %3426 = vmatpush1.bf16.msra.mxu0 %v2703
          %3427 = vmatprep.subr.bf16.mxu0 %v2712
          %3428 = vmatpush1.bf16.msra.mxu0 %v2711
          %3429 = vmatprep.subr.bf16.mxu0 %v2720
          %3430 = vmatpush1.bf16.msra.mxu0 %v2719
          %3431 = vmatprep.subr.bf16.mxu0 %v2728
          %3432 = vmatpush1.bf16.msra.mxu0 %v2727
          %3433 = vmatprep.subr.bf16.mxu0 %v2736
          %3434 = vmatpush1.bf16.msra.mxu0 %v2735
          %3435 = vmatprep.subr.bf16.mxu0 %v2744
          %3436 = vmatpush1.bf16.msra.mxu0 %v2743
          %3437 = vmatprep.subr.bf16.mxu0 %v2752
          %3438 = vmatpush1.bf16.msra.mxu0 %v2751
          %3439 = vmatprep.subr.bf16.mxu0 %v2760
          %3440 = vmatpush1.bf16.msra.mxu0 %v2759
          %3441 = vmatprep.subr.bf16.mxu0 %v2768
          %3442 = vmatpush1.bf16.msra.mxu0 %v2767
          %3443 = vmatprep.subr.bf16.mxu0 %v2776
          %3444 = vmatpush1.bf16.msra.mxu0 %v2775
          %3445 = vmatprep.subr.bf16.mxu0 %v2784
          %3446 = vmatpush1.bf16.msra.mxu0 %v2783
          %3447 = vmatprep.mubr.bf16.mxu0 %v1588
          %3448 = vmatmul.mubr.bf16.gmra.mrb[0].mxu0 %v1587
          %v3449 = vpop.f32.mrb[0].mxu0
          %v3450 = vadd.f32 %v1876, %v3449
          %v3451 = vpop.f32.mrb[0].mxu0
          %v3452 = vadd.f32 %v1880, %v3451
          %v3453 = vpop.f32.mrb[0].mxu0
          %v3454 = vpop.f32.mrb[0].mxu0
          %3455 = vdwg.mxu0
          %3456 = vmatprep.subr.bf16.mxu0 %v2792
          %3457 = vmatpush1.bf16.msra.mxu0 %v2791
          %3458 = vmatprep.subr.bf16.mxu0 %v2800
          %3459 = vmatpush1.bf16.msra.mxu0 %v2799
          %3460 = vmatprep.subr.bf16.mxu0 %v2808
          %3461 = vmatpush1.bf16.msra.mxu0 %v2807
          %3462 = vmatprep.subr.bf16.mxu0 %v2816
          %3463 = vmatpush1.bf16.msra.mxu0 %v2815
          %3464 = vmatprep.subr.bf16.mxu0 %v2824
          %3465 = vmatpush1.bf16.msra.mxu0 %v2823
          %3466 = vmatprep.subr.bf16.mxu0 %v2832
          %3467 = vmatpush1.bf16.msra.mxu0 %v2831
          %3468 = vmatprep.subr.bf16.mxu0 %v2840
          %3469 = vmatpush1.bf16.msra.mxu0 %v2839
          %3470 = vmatprep.subr.bf16.mxu0 %v2848
          %3471 = vmatpush1.bf16.msra.mxu0 %v2847
          %3472 = vmatprep.subr.bf16.mxu0 %v2856
          %3473 = vmatpush1.bf16.msra.mxu0 %v2855
          %3474 = vmatprep.subr.bf16.mxu0 %v2864
          %3475 = vmatpush1.bf16.msra.mxu0 %v2863
          %3476 = vmatprep.subr.bf16.mxu0 %v2872
          %3477 = vmatpush1.bf16.msra.mxu0 %v2871
          %3478 = vmatprep.subr.bf16.mxu0 %v2880
          %3479 = vmatpush1.bf16.msra.mxu0 %v2879
          %3480 = vmatprep.subr.bf16.mxu0 %v2888
          %3481 = vmatpush1.bf16.msra.mxu0 %v2887
          %3482 = vmatprep.subr.bf16.mxu0 %v2896
          %3483 = vmatpush1.bf16.msra.mxu0 %v2895
          %3484 = vmatprep.subr.bf16.mxu0 %v2904
          %3485 = vmatpush1.bf16.msra.mxu0 %v2903
          %3486 = vmatprep.subr.bf16.mxu0 %v2912
          %3487 = vmatpush1.bf16.msra.mxu0 %v2911
          %3488 = vmatprep.mubr.bf16.mxu0 %v1590
          %3489 = vmatmul.mubr.bf16.gmra.mrb[0].mxu0 %v1589
          %v3490 = vpop.f32.mrb[0].mxu0
          %v3491 = vadd.f32 %v3450, %v3490
          %v3492 = vpop.f32.mrb[0].mxu0
          %v3493 = vadd.f32 %v3452, %v3492
          %v3494 = vpop.f32.mrb[0].mxu0
          %v3495 = vpop.f32.mrb[0].mxu0
          %3496 = vdwg.mxu0
          %v3497 = vsel %vm871, %v3245, 0.0
          %v3498 = vrot.slane %v3497, 4
          %v3499 = vadd.f32 %v3497, %v3498
          %v3500 = vrot.slane %v3499, 2
          %v3501 = vadd.f32 %v3499, %v3500
          %v3502 = vrot.slane %v3501, 1
          %v3503 = vadd.f32 %v3501, %v3502
          %v3504 = vsel %vm871, %v3247, 0.0
          %v3505 = vrot.slane %v3504, 4
          %v3506 = vadd.f32 %v3504, %v3505
          %v3507 = vrot.slane %v3506, 2
          %v3508 = vadd.f32 %v3506, %v3507
          %v3509 = vrot.slane %v3508, 1
          %v3510 = vadd.f32 %v3508, %v3509
          %v3511 = vsel %vm871, %v3327, 0.0
          %v3512 = vrot.slane %v3511, 4
          %v3513 = vadd.f32 %v3511, %v3512
          %v3514 = vrot.slane %v3513, 2
          %v3515 = vadd.f32 %v3513, %v3514
          %v3516 = vrot.slane %v3515, 1
          %v3517 = vadd.f32 %v3515, %v3516
          %v3518 = vsel %vm871, %v3329, 0.0
          %v3519 = vrot.slane %v3518, 4
          %v3520 = vadd.f32 %v3518, %v3519
          %v3521 = vrot.slane %v3520, 2
          %v3522 = vadd.f32 %v3520, %v3521
          %v3523 = vrot.slane %v3522, 1
          %v3524 = vadd.f32 %v3522, %v3523
          %v3525 = vsel %vm871, %v3409, 0.0
          %v3526 = vrot.slane %v3525, 4
          %v3527 = vadd.f32 %v3525, %v3526
          %v3528 = vrot.slane %v3527, 2
          %v3529 = vadd.f32 %v3527, %v3528
          %v3530 = vrot.slane %v3529, 1
          %v3531 = vadd.f32 %v3529, %v3530
          %v3532 = vsel %vm871, %v3411, 0.0
          %v3533 = vrot.slane %v3532, 4
          %v3534 = vadd.f32 %v3532, %v3533
          %v3535 = vrot.slane %v3534, 2
          %v3536 = vadd.f32 %v3534, %v3535
          %v3537 = vrot.slane %v3536, 1
          %v3538 = vadd.f32 %v3536, %v3537
          %v3539 = vsel %vm871, %v3491, 0.0
          %v3540 = vrot.slane %v3539, 4
          %v3541 = vadd.f32 %v3539, %v3540
          %v3542 = vrot.slane %v3541, 2
          %v3543 = vadd.f32 %v3541, %v3542
          %v3544 = vrot.slane %v3543, 1
          %v3545 = vadd.f32 %v3543, %v3544
          %v3546 = vsel %vm871, %v3493, 0.0
          %v3547 = vrot.slane %v3546, 4
          %v3548 = vadd.f32 %v3546, %v3547
          %v3549 = vrot.slane %v3548, 2
          %v3550 = vadd.f32 %v3548, %v3549
          %v3551 = vrot.slane %v3550, 1
          %v3552 = vadd.f32 %v3550, %v3551
          %v3553 = vmul.f32 %v3503, %v886
          %v3554 = vmul.f32 %v3510, %v886
          %v3555 = vmul.f32 %v3517, %v886
          %v3556 = vmul.f32 %v3524, %v886
          %v3557 = vmul.f32 %v3531, %v886
          %v3558 = vmul.f32 %v3538, %v886
          %v3559 = vmul.f32 %v3545, %v886
          %v3560 = vmul.f32 %v3552, %v886
          %v3561 = vsub.f32 %v3245, %v3553
          %v3562 = vsub.f32 %v3247, %v3554
          %v3563 = vsub.f32 %v3327, %v3555
          %v3564 = vsub.f32 %v3329, %v3556
          %v3565 = vsub.f32 %v3409, %v3557
          %v3566 = vsub.f32 %v3411, %v3558
          %v3567 = vsub.f32 %v3491, %v3559
          %v3568 = vsub.f32 %v3493, %v3560
          %v3569 = vmul.f32 %v3561, %v3561
          %v3570 = vmul.f32 %v3562, %v3562
          %v3571 = vmul.f32 %v3563, %v3563
          %v3572 = vmul.f32 %v3564, %v3564
          %v3573 = vmul.f32 %v3565, %v3565
          %v3574 = vmul.f32 %v3566, %v3566
          %v3575 = vmul.f32 %v3567, %v3567
          %v3576 = vmul.f32 %v3568, %v3568
          %v3577 = vsel %vm871, %v3569, 0.0
          %v3578 = vrot.slane %v3577, 4
          %v3579 = vadd.f32 %v3577, %v3578
          %v3580 = vrot.slane %v3579, 2
          %v3581 = vadd.f32 %v3579, %v3580
          %v3582 = vrot.slane %v3581, 1
          %v3583 = vadd.f32 %v3581, %v3582
          %v3584 = vsel %vm871, %v3570, 0.0
          %v3585 = vrot.slane %v3584, 4
          %v3586 = vadd.f32 %v3584, %v3585
          %v3587 = vrot.slane %v3586, 2
          %v3588 = vadd.f32 %v3586, %v3587
          %v3589 = vrot.slane %v3588, 1
          %v3590 = vadd.f32 %v3588, %v3589
          %v3591 = vsel %vm871, %v3571, 0.0
          %v3592 = vrot.slane %v3591, 4
          %v3593 = vadd.f32 %v3591, %v3592
          %v3594 = vrot.slane %v3593, 2
          %v3595 = vadd.f32 %v3593, %v3594
          %v3596 = vrot.slane %v3595, 1
          %v3597 = vadd.f32 %v3595, %v3596
          %v3598 = vsel %vm871, %v3572, 0.0
          %v3599 = vrot.slane %v3598, 4
          %v3600 = vadd.f32 %v3598, %v3599
          %v3601 = vrot.slane %v3600, 2
          %v3602 = vadd.f32 %v3600, %v3601
          %v3603 = vrot.slane %v3602, 1
          %v3604 = vadd.f32 %v3602, %v3603
          %v3605 = vsel %vm871, %v3573, 0.0
          %v3606 = vrot.slane %v3605, 4
          %v3607 = vadd.f32 %v3605, %v3606
          %v3608 = vrot.slane %v3607, 2
          %v3609 = vadd.f32 %v3607, %v3608
          %v3610 = vrot.slane %v3609, 1
          %v3611 = vadd.f32 %v3609, %v3610
          %v3612 = vsel %vm871, %v3574, 0.0
          %v3613 = vrot.slane %v3612, 4
          %v3614 = vadd.f32 %v3612, %v3613
          %v3615 = vrot.slane %v3614, 2
          %v3616 = vadd.f32 %v3614, %v3615
          %v3617 = vrot.slane %v3616, 1
          %v3618 = vadd.f32 %v3616, %v3617
          %v3619 = vsel %vm871, %v3575, 0.0
          %v3620 = vrot.slane %v3619, 4
          %v3621 = vadd.f32 %v3619, %v3620
          %v3622 = vrot.slane %v3621, 2
          %v3623 = vadd.f32 %v3621, %v3622
          %v3624 = vrot.slane %v3623, 1
          %v3625 = vadd.f32 %v3623, %v3624
          %v3626 = vsel %vm871, %v3576, 0.0
          %v3627 = vrot.slane %v3626, 4
          %v3628 = vadd.f32 %v3626, %v3627
          %v3629 = vrot.slane %v3628, 2
          %v3630 = vadd.f32 %v3628, %v3629
          %v3631 = vrot.slane %v3630, 1
          %v3632 = vadd.f32 %v3630, %v3631
          %v3633 = vmul.f32 %v3583, %v886
          %v3634 = vmul.f32 %v3590, %v886
          %v3635 = vmul.f32 %v3597, %v886
          %v3636 = vmul.f32 %v3604, %v886
          %v3637 = vmul.f32 %v3611, %v886
          %v3638 = vmul.f32 %v3618, %v886
          %v3639 = vmul.f32 %v3625, %v886
          %v3640 = vmul.f32 %v3632, %v886
          %v3641 = vadd.f32 %v3633, 1e-05
          %v3642 = vadd.f32 %v3634, 1e-05
          %v3643 = vadd.f32 %v3635, 1e-05
          %v3644 = vadd.f32 %v3636, 1e-05
          %v3645 = vadd.f32 %v3637, 1e-05
          %v3646 = vadd.f32 %v3638, 1e-05
          %v3647 = vadd.f32 %v3639, 1e-05
          %v3648 = vadd.f32 %v3640, 1e-05
          %v3649 = vrsqrt.pop %v3641
          %v3650 = vrsqrt.pop %v3642
          %v3651 = vrsqrt.pop %v3643
          %v3652 = vrsqrt.pop %v3644
          %v3653 = vrsqrt.pop %v3645
          %v3654 = vrsqrt.pop %v3646
          %v3655 = vrsqrt.pop %v3647
          %v3656 = vrsqrt.pop %v3648
          %v3657 = vmul.f32 %v3561, %v3649
          %v3658 = vmul.f32 %v3562, %v3650
          %v3659 = vmul.f32 %v3563, %v3651
          %v3660 = vmul.f32 %v3564, %v3652
          %v3661 = vmul.f32 %v3565, %v3653
          %v3662 = vmul.f32 %v3566, %v3654
          %v3663 = vmul.f32 %v3567, %v3655
          %v3664 = vmul.f32 %v3568, %v3656
          %v3665 = vld [vmem:[#allocation20] sm:$0xff]
          %v3667 = vlaneseq
          %v3668 = vshrl.u32 %v3667, 7
          %v3669 = vsub.s32 0, %v3668
          %v3670 = vrot.slane %v3665, %v3669
          %v3671 = vlaneseq
          %v3672 = vshrl.u32 %v3671, 7
          %v3673 = vsub.s32 1, %v3672
          %v3674 = vrot.slane %v3665, %v3673
          %v3675 = vlaneseq
          %v3676 = vshrl.u32 %v3675, 7
          %v3677 = vsub.s32 2, %v3676
          %v3678 = vrot.slane %v3665, %v3677
          %v3679 = vlaneseq
          %v3680 = vshrl.u32 %v3679, 7
          %v3681 = vsub.s32 3, %v3680
          %v3682 = vrot.slane %v3665, %v3681
          %v3683 = vlaneseq
          %v3684 = vshrl.u32 %v3683, 7
          %v3685 = vsub.s32 4, %v3684
          %v3686 = vrot.slane %v3665, %v3685
          %v3687 = vlaneseq
          %v3688 = vshrl.u32 %v3687, 7
          %v3689 = vsub.s32 5, %v3688
          %v3690 = vrot.slane %v3665, %v3689
          %v3691 = vlaneseq
          %v3692 = vshrl.u32 %v3691, 7
          %v3693 = vsub.s32 6, %v3692
          %v3694 = vrot.slane %v3665, %v3693
          %v3695 = vlaneseq
          %v3696 = vshrl.u32 %v3695, 7
          %v3697 = vsub.s32 7, %v3696
          %v3698 = vrot.slane %v3665, %v3697
          %v3707 = vmul.f32 %v3657, %v3670
          %v3708 = vmul.f32 %v3658, %v3674
          %v3709 = vmul.f32 %v3659, %v3678
          %v3710 = vmul.f32 %v3660, %v3682
          %v3711 = vmul.f32 %v3661, %v3686
          %v3712 = vmul.f32 %v3662, %v3690
          %v3713 = vmul.f32 %v3663, %v3694
          %v3714 = vmul.f32 %v3664, %v3698
          %v3715 = vld [vmem:[#allocation22] sm:$0xff]
          %v3717 = vlaneseq
          %v3718 = vshrl.u32 %v3717, 7
          %v3719 = vsub.s32 0, %v3718
          %v3720 = vrot.slane %v3715, %v3719
          %v3721 = vlaneseq
          %v3722 = vshrl.u32 %v3721, 7
          %v3723 = vsub.s32 1, %v3722
          %v3724 = vrot.slane %v3715, %v3723
          %v3725 = vlaneseq
          %v3726 = vshrl.u32 %v3725, 7
          %v3727 = vsub.s32 2, %v3726
          %v3728 = vrot.slane %v3715, %v3727
          %v3729 = vlaneseq
          %v3730 = vshrl.u32 %v3729, 7
          %v3731 = vsub.s32 3, %v3730
          %v3732 = vrot.slane %v3715, %v3731
          %v3733 = vlaneseq
          %v3734 = vshrl.u32 %v3733, 7
          %v3735 = vsub.s32 4, %v3734
          %v3736 = vrot.slane %v3715, %v3735
          %v3737 = vlaneseq
          %v3738 = vshrl.u32 %v3737, 7
          %v3739 = vsub.s32 5, %v3738
          %v3740 = vrot.slane %v3715, %v3739
          %v3741 = vlaneseq
          %v3742 = vshrl.u32 %v3741, 7
          %v3743 = vsub.s32 6, %v3742
          %v3744 = vrot.slane %v3715, %v3743
          %v3745 = vlaneseq
          %v3746 = vshrl.u32 %v3745, 7
          %v3747 = vsub.s32 7, %v3746
          %v3748 = vrot.slane %v3715, %v3747
          %v3757 = vadd.f32 %v3707, %v3720
          %v3758 = vadd.f32 %v3708, %v3724
          %v3759 = vadd.f32 %v3709, %v3728
          %v3760 = vadd.f32 %v3710, %v3732
          %v3761 = vadd.f32 %v3711, %v3736
          %v3762 = vadd.f32 %v3712, %v3740
          %v3763 = vadd.f32 %v3713, %v3744
          %v3764 = vadd.f32 %v3714, %v3748
          %vm3765 = vcmp.gt.f32.partialorder %v3757, 0.0
          %vm3766 = vcmp.gt.f32.partialorder %v3758, 0.0
          %vm3767 = vcmp.gt.f32.partialorder %v3759, 0.0
          %vm3768 = vcmp.gt.f32.partialorder %v3760, 0.0
          %vm3769 = vcmp.gt.f32.partialorder %v3761, 0.0
          %vm3770 = vcmp.gt.f32.partialorder %v3762, 0.0
          %vm3771 = vcmp.gt.f32.partialorder %v3763, 0.0
          %vm3772 = vcmp.gt.f32.partialorder %v3764, 0.0
          %v3773 = vmul.f32 %v3757, 0.2
          %v3774 = vmul.f32 %v3758, 0.2
          %v3775 = vmul.f32 %v3759, 0.2
          %v3776 = vmul.f32 %v3760, 0.2
          %v3777 = vmul.f32 %v3761, 0.2
          %v3778 = vmul.f32 %v3762, 0.2
          %v3779 = vmul.f32 %v3763, 0.2
          %v3780 = vmul.f32 %v3764, 0.2
          %v3781 = vsel %vm3765, %v3757, %v3773
          %v3782 = vsel %vm3766, %v3758, %v3774
          %v3783 = vsel %vm3767, %v3759, %v3775
          %v3784 = vsel %vm3768, %v3760, %v3776
          %v3785 = vsel %vm3769, %v3761, %v3777
          %v3786 = vsel %vm3770, %v3762, %v3778
          %v3787 = vsel %vm3771, %v3763, %v3779
          %v3788 = vsel %vm3772, %v3764, %v3780
          %v3789 = vpack.c.bf16 %v3781, %v3781
          %v3790 = vpack.c.bf16 %v3782, %v3782
          %v3791 = vpack.c.bf16 %v3783, %v3783
          %v3792 = vpack.c.bf16 %v3784, %v3784
          %v3793 = vpack.c.bf16 %v3785, %v3785
          %v3794 = vpack.c.bf16 %v3786, %v3786
          %v3795 = vpack.c.bf16 %v3787, %v3787
          %v3796 = vpack.c.bf16 %v3788, %v3788
          %v3805 = vcombine.low %v3789, %v3790
          %v3806 = vcombine.low %v3791, %v3792
          %v3808 = vunpack.c.l.s4 1983009808
          %v3809 = vunpack.c.0.s8 %v3808
          %v3810 = vlaneseq
          %v3811 = vshrl.u32 %v3810, 7
          %v3812 = vsub.s32 %v3809, %v3811
          %v3813 = vrot.slane %v3805, %v3812
          %v3815 = vunpack.c.l.s4 1983009808
          %v3816 = vunpack.c.0.s8 %v3815
          %v3817 = vlaneseq
          %v3818 = vshrl.u32 %v3817, 7
          %v3819 = vsub.s32 %v3816, %v3818
          %v3820 = vrot.slane %v3806, %v3819
          %v3821 = vcombine.low %v3813, %v3820
          %v3822 = vcombine.low %v3793, %v3794
          %v3823 = vcombine.low %v3795, %v3796
          %v3825 = vunpack.c.l.s4 1983009808
          %v3826 = vunpack.c.0.s8 %v3825
          %v3827 = vlaneseq
          %v3828 = vshrl.u32 %v3827, 7
          %v3829 = vsub.s32 %v3826, %v3828
          %v3830 = vrot.slane %v3822, %v3829
          %v3832 = vunpack.c.l.s4 1983009808
          %v3833 = vunpack.c.0.s8 %v3832
          %v3834 = vlaneseq
          %v3835 = vshrl.u32 %v3834, 7
          %v3836 = vsub.s32 %v3833, %v3835
          %v3837 = vrot.slane %v3823, %v3836
          %v3838 = vcombine.low %v3830, %v3837
          %3841 = vst [vmem:[#allocation2] sm:$0xff] %v3821
          %3842 = vst [vmem:[#allocation2 + $0x8] sm:$0xff] %v3838
        $region144: #{generator_forward.1} parent=79 // pred_fallthru
          _
        %v3843 = vld [vmem:[#allocation2] sm:$0xff]
        %v3844 = vld [vmem:[#allocation2 + $0x8] sm:$0xff]
        %v3845 = vld [vmem:[%s653] sm:$0xff]
        %v3846 = vld [vmem:[%s653 + $0x8] sm:$0xff]
        %v3847 = vld [vmem:[%s653 + $0x10] sm:$0xff]
        %v3848 = vld [vmem:[%s653 + $0x18] sm:$0xff]
        %v3849 = vld [vmem:[%s653 + $0x20] sm:$0xff]
        %v3850 = vld [vmem:[%s653 + $0x28] sm:$0xff]
        %v3851 = vld [vmem:[%s653 + $0x30] sm:$0xff]
        %v3852 = vld [vmem:[%s653 + $0x38] sm:$0xff]
        %v3853 = vld [vmem:[%s653 + $0x40] sm:$0xff]
        %v3854 = vld [vmem:[%s653 + $0x48] sm:$0xff]
        %v3855 = vld [vmem:[%s653 + $0x50] sm:$0xff]
        %v3856 = vld [vmem:[%s653 + $0x58] sm:$0xff]
        %v3857 = vld [vmem:[%s653 + $0x60] sm:$0xff]
        %v3858 = vld [vmem:[%s653 + $0x68] sm:$0xff]
        %v3859 = vld [vmem:[%s653 + $0x70] sm:$0xff]
        %v3860 = vld [vmem:[%s653 + $0x78] sm:$0xff]
        %v3861 = vld [vmem:[%s653 + $0x80] sm:$0xff]
        %v3862 = vld [vmem:[%s653 + $0x88] sm:$0xff]
        %v3863 = vld [vmem:[%s653 + $0x90] sm:$0xff]
        %v3864 = vld [vmem:[%s653 + $0x98] sm:$0xff]
        %v3865 = vld [vmem:[%s653 + $0xa0] sm:$0xff]
        %v3866 = vld [vmem:[%s653 + $0xa8] sm:$0xff]
        %v3867 = vld [vmem:[%s653 + $0xb0] sm:$0xff]
        %v3868 = vld [vmem:[%s653 + $0xb8] sm:$0xff]
        %v3869 = vld [vmem:[%s653 + $0xc0] sm:$0xff]
        %v3870 = vld [vmem:[%s653 + $0xc8] sm:$0xff]
        %v3871 = vld [vmem:[%s653 + $0xd0] sm:$0xff]
        %v3872 = vld [vmem:[%s653 + $0xd8] sm:$0xff]
        %v3873 = vld [vmem:[%s653 + $0xe0] sm:$0xff]
        %v3874 = vld [vmem:[%s653 + $0xe8] sm:$0xff]
        %v3875 = vld [vmem:[%s653 + $0xf0] sm:$0xff]
        %v3876 = vld [vmem:[%s653 + $0xf8] sm:$0xff]
        %v3877 = vld [vmem:[%s653 + $0x100] sm:$0xff]
        %v3878 = vld [vmem:[%s653 + $0x108] sm:$0xff]
        %v3879 = vld [vmem:[%s653 + $0x110] sm:$0xff]
        %v3880 = vld [vmem:[%s653 + $0x118] sm:$0xff]
        %v3881 = vld [vmem:[%s653 + $0x120] sm:$0xff]
        %v3882 = vld [vmem:[%s653 + $0x128] sm:$0xff]
        %v3883 = vld [vmem:[%s653 + $0x130] sm:$0xff]
        %v3884 = vld [vmem:[%s653 + $0x138] sm:$0xff]
        %v3885 = vld [vmem:[%s653 + $0x140] sm:$0xff]
        %v3886 = vld [vmem:[%s653 + $0x148] sm:$0xff]
        %v3887 = vld [vmem:[%s653 + $0x150] sm:$0xff]
        %v3888 = vld [vmem:[%s653 + $0x158] sm:$0xff]
        %v3889 = vld [vmem:[%s653 + $0x160] sm:$0xff]
        %v3890 = vld [vmem:[%s653 + $0x168] sm:$0xff]
        %v3891 = vld [vmem:[%s653 + $0x170] sm:$0xff]
        %v3892 = vld [vmem:[%s653 + $0x178] sm:$0xff]
        %v3893 = vld [vmem:[%s653 + $0x180] sm:$0xff]
        %v3894 = vld [vmem:[%s653 + $0x188] sm:$0xff]
        %v3895 = vld [vmem:[%s653 + $0x190] sm:$0xff]
        %v3896 = vld [vmem:[%s653 + $0x198] sm:$0xff]
        %v3897 = vld [vmem:[%s653 + $0x1a0] sm:$0xff]
        %v3898 = vld [vmem:[%s653 + $0x1a8] sm:$0xff]
        %v3899 = vld [vmem:[%s653 + $0x1b0] sm:$0xff]
        %v3900 = vld [vmem:[%s653 + $0x1b8] sm:$0xff]
        %v3901 = vld [vmem:[%s653 + $0x1c0] sm:$0xff]
        %v3902 = vld [vmem:[%s653 + $0x1c8] sm:$0xff]
        %v3903 = vld [vmem:[%s653 + $0x1d0] sm:$0xff]
        %v3904 = vld [vmem:[%s653 + $0x1d8] sm:$0xff]
        %v3905 = vld [vmem:[%s653 + $0x1e0] sm:$0xff]
        %v3906 = vld [vmem:[%s653 + $0x1e8] sm:$0xff]
        %v3907 = vld [vmem:[%s653 + $0x1f0] sm:$0xff]
        %v3908 = vld [vmem:[%s653 + $0x1f8] sm:$0xff]
        %v3909 = vld [vmem:[%s653 + $0x200] sm:$0xff]
        %v3910 = vld [vmem:[%s653 + $0x208] sm:$0xff]
        %v3911 = vld [vmem:[%s653 + $0x210] sm:$0xff]
        %v3912 = vld [vmem:[%s653 + $0x218] sm:$0xff]
        %v3913 = vld [vmem:[%s653 + $0x220] sm:$0xff]
        %v3914 = vld [vmem:[%s653 + $0x228] sm:$0xff]
        %v3915 = vld [vmem:[%s653 + $0x230] sm:$0xff]
        %v3916 = vld [vmem:[%s653 + $0x238] sm:$0xff]
        %v3917 = vld [vmem:[%s653 + $0x240] sm:$0xff]
        %v3918 = vld [vmem:[%s653 + $0x248] sm:$0xff]
        %v3919 = vld [vmem:[%s653 + $0x250] sm:$0xff]
        %v3920 = vld [vmem:[%s653 + $0x258] sm:$0xff]
        %v3921 = vld [vmem:[%s653 + $0x260] sm:$0xff]
        %v3922 = vld [vmem:[%s653 + $0x268] sm:$0xff]
        %v3923 = vld [vmem:[%s653 + $0x270] sm:$0xff]
        %v3924 = vld [vmem:[%s653 + $0x278] sm:$0xff]
        %v3925 = vld [vmem:[%s653 + $0x280] sm:$0xff]
        %v3926 = vld [vmem:[%s653 + $0x288] sm:$0xff]
        %v3927 = vld [vmem:[%s653 + $0x290] sm:$0xff]
        %v3928 = vld [vmem:[%s653 + $0x298] sm:$0xff]
        %v3929 = vld [vmem:[%s653 + $0x2a0] sm:$0xff]
        %v3930 = vld [vmem:[%s653 + $0x2a8] sm:$0xff]
        %v3931 = vld [vmem:[%s653 + $0x2b0] sm:$0xff]
        %v3932 = vld [vmem:[%s653 + $0x2b8] sm:$0xff]
        %v3933 = vld [vmem:[%s653 + $0x2c0] sm:$0xff]
        %v3934 = vld [vmem:[%s653 + $0x2c8] sm:$0xff]
        %v3935 = vld [vmem:[%s653 + $0x2d0] sm:$0xff]
        %v3936 = vld [vmem:[%s653 + $0x2d8] sm:$0xff]
        %v3937 = vld [vmem:[%s653 + $0x2e0] sm:$0xff]
        %v3938 = vld [vmem:[%s653 + $0x2e8] sm:$0xff]
        %v3939 = vld [vmem:[%s653 + $0x2f0] sm:$0xff]
        %v3940 = vld [vmem:[%s653 + $0x2f8] sm:$0xff]
        %v3941 = vld [vmem:[%s653 + $0x300] sm:$0xff]
        %v3942 = vld [vmem:[%s653 + $0x308] sm:$0xff]
        %v3943 = vld [vmem:[%s653 + $0x310] sm:$0xff]
        %v3944 = vld [vmem:[%s653 + $0x318] sm:$0xff]
        %v3945 = vld [vmem:[%s653 + $0x320] sm:$0xff]
        %v3946 = vld [vmem:[%s653 + $0x328] sm:$0xff]
        %v3947 = vld [vmem:[%s653 + $0x330] sm:$0xff]
        %v3948 = vld [vmem:[%s653 + $0x338] sm:$0xff]
        %v3949 = vld [vmem:[%s653 + $0x340] sm:$0xff]
        %v3950 = vld [vmem:[%s653 + $0x348] sm:$0xff]
        %v3951 = vld [vmem:[%s653 + $0x350] sm:$0xff]
        %v3952 = vld [vmem:[%s653 + $0x358] sm:$0xff]
        %v3953 = vld [vmem:[%s653 + $0x360] sm:$0xff]
        %v3954 = vld [vmem:[%s653 + $0x368] sm:$0xff]
        %v3955 = vld [vmem:[%s653 + $0x370] sm:$0xff]
        %v3956 = vld [vmem:[%s653 + $0x378] sm:$0xff]
        %v3957 = vld [vmem:[%s653 + $0x380] sm:$0xff]
        %v3958 = vld [vmem:[%s653 + $0x388] sm:$0xff]
        %v3959 = vld [vmem:[%s653 + $0x390] sm:$0xff]
        %v3960 = vld [vmem:[%s653 + $0x398] sm:$0xff]
        %v3961 = vld [vmem:[%s653 + $0x3a0] sm:$0xff]
        %v3962 = vld [vmem:[%s653 + $0x3a8] sm:$0xff]
        %v3963 = vld [vmem:[%s653 + $0x3b0] sm:$0xff]
        %v3964 = vld [vmem:[%s653 + $0x3b8] sm:$0xff]
        %v3965 = vld [vmem:[%s653 + $0x3c0] sm:$0xff]
        %v3966 = vld [vmem:[%s653 + $0x3c8] sm:$0xff]
        %v3967 = vld [vmem:[%s653 + $0x3d0] sm:$0xff]
        %v3968 = vld [vmem:[%s653 + $0x3d8] sm:$0xff]
        %v3969 = vld [vmem:[%s653 + $0x3e0] sm:$0xff]
        %v3970 = vld [vmem:[%s653 + $0x3e8] sm:$0xff]
        %v3971 = vld [vmem:[%s653 + $0x3f0] sm:$0xff]
        %v3972 = vld [vmem:[%s653 + $0x3f8] sm:$0xff]
        %v3973 = vld [vmem:[%s653 + $0x400] sm:$0xff]
        %v3974 = vld [vmem:[%s653 + $0x408] sm:$0xff]
        %v3975 = vld [vmem:[%s653 + $0x410] sm:$0xff]
        %v3976 = vld [vmem:[%s653 + $0x418] sm:$0xff]
        %v3977 = vld [vmem:[%s653 + $0x420] sm:$0xff]
        %v3978 = vld [vmem:[%s653 + $0x428] sm:$0xff]
        %v3979 = vld [vmem:[%s653 + $0x430] sm:$0xff]
        %v3980 = vld [vmem:[%s653 + $0x438] sm:$0xff]
        %v3981 = vld [vmem:[%s653 + $0x440] sm:$0xff]
        %v3982 = vld [vmem:[%s653 + $0x448] sm:$0xff]
        %v3983 = vld [vmem:[%s653 + $0x450] sm:$0xff]
        %v3984 = vld [vmem:[%s653 + $0x458] sm:$0xff]
        %v3985 = vld [vmem:[%s653 + $0x460] sm:$0xff]
        %v3986 = vld [vmem:[%s653 + $0x468] sm:$0xff]
        %v3987 = vld [vmem:[%s653 + $0x470] sm:$0xff]
        %v3988 = vld [vmem:[%s653 + $0x478] sm:$0xff]
        %v3989 = vld [vmem:[%s653 + $0x480] sm:$0xff]
        %v3990 = vld [vmem:[%s653 + $0x488] sm:$0xff]
        %v3991 = vld [vmem:[%s653 + $0x490] sm:$0xff]
        %v3992 = vld [vmem:[%s653 + $0x498] sm:$0xff]
        %v3993 = vld [vmem:[%s653 + $0x4a0] sm:$0xff]
        %v3994 = vld [vmem:[%s653 + $0x4a8] sm:$0xff]
        %v3995 = vld [vmem:[%s653 + $0x4b0] sm:$0xff]
        %v3996 = vld [vmem:[%s653 + $0x4b8] sm:$0xff]
        %v3997 = vld [vmem:[%s653 + $0x4c0] sm:$0xff]
        %v3998 = vld [vmem:[%s653 + $0x4c8] sm:$0xff]
        %v3999 = vld [vmem:[%s653 + $0x4d0] sm:$0xff]
        %v4000 = vld [vmem:[%s653 + $0x4d8] sm:$0xff]
        %v4001 = vld [vmem:[%s653 + $0x4e0] sm:$0xff]
        %v4002 = vld [vmem:[%s653 + $0x4e8] sm:$0xff]
        %v4003 = vld [vmem:[%s653 + $0x4f0] sm:$0xff]
        %v4004 = vld [vmem:[%s653 + $0x4f8] sm:$0xff]
        %v4005 = vld [vmem:[%s653 + $0x500] sm:$0xff]
        %v4006 = vld [vmem:[%s653 + $0x508] sm:$0xff]
        %v4007 = vld [vmem:[%s653 + $0x510] sm:$0xff]
        %v4008 = vld [vmem:[%s653 + $0x518] sm:$0xff]
        %v4009 = vld [vmem:[%s653 + $0x520] sm:$0xff]
        %v4010 = vld [vmem:[%s653 + $0x528] sm:$0xff]
        %v4011 = vld [vmem:[%s653 + $0x530] sm:$0xff]
        %v4012 = vld [vmem:[%s653 + $0x538] sm:$0xff]
        %v4013 = vld [vmem:[%s653 + $0x540] sm:$0xff]
        %v4014 = vld [vmem:[%s653 + $0x548] sm:$0xff]
        %v4015 = vld [vmem:[%s653 + $0x550] sm:$0xff]
        %v4016 = vld [vmem:[%s653 + $0x558] sm:$0xff]
        %v4017 = vld [vmem:[%s653 + $0x560] sm:$0xff]
        %v4018 = vld [vmem:[%s653 + $0x568] sm:$0xff]
        %v4019 = vld [vmem:[%s653 + $0x570] sm:$0xff]
        %v4020 = vld [vmem:[%s653 + $0x578] sm:$0xff]
        %v4021 = vld [vmem:[%s653 + $0x580] sm:$0xff]
        %v4022 = vld [vmem:[%s653 + $0x588] sm:$0xff]
        %v4023 = vld [vmem:[%s653 + $0x590] sm:$0xff]
        %v4024 = vld [vmem:[%s653 + $0x598] sm:$0xff]
        %v4025 = vld [vmem:[%s653 + $0x5a0] sm:$0xff]
        %v4026 = vld [vmem:[%s653 + $0x5a8] sm:$0xff]
        %v4027 = vld [vmem:[%s653 + $0x5b0] sm:$0xff]
        %v4028 = vld [vmem:[%s653 + $0x5b8] sm:$0xff]
        %v4029 = vld [vmem:[%s653 + $0x5c0] sm:$0xff]
        %v4030 = vld [vmem:[%s653 + $0x5c8] sm:$0xff]
        %v4031 = vld [vmem:[%s653 + $0x5d0] sm:$0xff]
        %v4032 = vld [vmem:[%s653 + $0x5d8] sm:$0xff]
        %v4033 = vld [vmem:[%s653 + $0x5e0] sm:$0xff]
        %v4034 = vld [vmem:[%s653 + $0x5e8] sm:$0xff]
        %v4035 = vld [vmem:[%s653 + $0x5f0] sm:$0xff]
        %v4036 = vld [vmem:[%s653 + $0x5f8] sm:$0xff]
        %v4037 = vld [vmem:[%s653 + $0x600] sm:$0xff]
        %v4038 = vld [vmem:[%s653 + $0x608] sm:$0xff]
        %v4039 = vld [vmem:[%s653 + $0x610] sm:$0xff]
        %v4040 = vld [vmem:[%s653 + $0x618] sm:$0xff]
        %v4041 = vld [vmem:[%s653 + $0x620] sm:$0xff]
        %v4042 = vld [vmem:[%s653 + $0x628] sm:$0xff]
        %v4043 = vld [vmem:[%s653 + $0x630] sm:$0xff]
        %v4044 = vld [vmem:[%s653 + $0x638] sm:$0xff]
        %v4045 = vld [vmem:[%s653 + $0x640] sm:$0xff]
        %v4046 = vld [vmem:[%s653 + $0x648] sm:$0xff]
        %v4047 = vld [vmem:[%s653 + $0x650] sm:$0xff]
        %v4048 = vld [vmem:[%s653 + $0x658] sm:$0xff]
        %v4049 = vld [vmem:[%s653 + $0x660] sm:$0xff]
        %v4050 = vld [vmem:[%s653 + $0x668] sm:$0xff]
        %v4051 = vld [vmem:[%s653 + $0x670] sm:$0xff]
        %v4052 = vld [vmem:[%s653 + $0x678] sm:$0xff]
        %v4053 = vld [vmem:[%s653 + $0x680] sm:$0xff]
        %v4054 = vld [vmem:[%s653 + $0x688] sm:$0xff]
        %v4055 = vld [vmem:[%s653 + $0x690] sm:$0xff]
        %v4056 = vld [vmem:[%s653 + $0x698] sm:$0xff]
        %v4057 = vld [vmem:[%s653 + $0x6a0] sm:$0xff]
        %v4058 = vld [vmem:[%s653 + $0x6a8] sm:$0xff]
        %v4059 = vld [vmem:[%s653 + $0x6b0] sm:$0xff]
        %v4060 = vld [vmem:[%s653 + $0x6b8] sm:$0xff]
        %v4061 = vld [vmem:[%s653 + $0x6c0] sm:$0xff]
        %v4062 = vld [vmem:[%s653 + $0x6c8] sm:$0xff]
        %v4063 = vld [vmem:[%s653 + $0x6d0] sm:$0xff]
        %v4064 = vld [vmem:[%s653 + $0x6d8] sm:$0xff]
        %v4065 = vld [vmem:[%s653 + $0x6e0] sm:$0xff]
        %v4066 = vld [vmem:[%s653 + $0x6e8] sm:$0xff]
        %v4067 = vld [vmem:[%s653 + $0x6f0] sm:$0xff]
        %v4068 = vld [vmem:[%s653 + $0x6f8] sm:$0xff]
        %v4069 = vld [vmem:[%s653 + $0x700] sm:$0xff]
        %v4070 = vld [vmem:[%s653 + $0x708] sm:$0xff]
        %v4071 = vld [vmem:[%s653 + $0x710] sm:$0xff]
        %v4072 = vld [vmem:[%s653 + $0x718] sm:$0xff]
        %v4073 = vld [vmem:[%s653 + $0x720] sm:$0xff]
        %v4074 = vld [vmem:[%s653 + $0x728] sm:$0xff]
        %v4075 = vld [vmem:[%s653 + $0x730] sm:$0xff]
        %v4076 = vld [vmem:[%s653 + $0x738] sm:$0xff]
        %v4077 = vld [vmem:[%s653 + $0x740] sm:$0xff]
        %v4078 = vld [vmem:[%s653 + $0x748] sm:$0xff]
        %v4079 = vld [vmem:[%s653 + $0x750] sm:$0xff]
        %v4080 = vld [vmem:[%s653 + $0x758] sm:$0xff]
        %v4081 = vld [vmem:[%s653 + $0x760] sm:$0xff]
        %v4082 = vld [vmem:[%s653 + $0x768] sm:$0xff]
        %v4083 = vld [vmem:[%s653 + $0x770] sm:$0xff]
        %v4084 = vld [vmem:[%s653 + $0x778] sm:$0xff]
        %v4085 = vld [vmem:[%s653 + $0x780] sm:$0xff]
        %v4086 = vld [vmem:[%s653 + $0x788] sm:$0xff]
        %v4087 = vld [vmem:[%s653 + $0x790] sm:$0xff]
        %v4088 = vld [vmem:[%s653 + $0x798] sm:$0xff]
        %v4089 = vld [vmem:[%s653 + $0x7a0] sm:$0xff]
        %v4090 = vld [vmem:[%s653 + $0x7a8] sm:$0xff]
        %v4091 = vld [vmem:[%s653 + $0x7b0] sm:$0xff]
        %v4092 = vld [vmem:[%s653 + $0x7b8] sm:$0xff]
        %v4093 = vld [vmem:[%s653 + $0x7c0] sm:$0xff]
        %v4094 = vld [vmem:[%s653 + $0x7c8] sm:$0xff]
        %v4095 = vld [vmem:[%s653 + $0x7d0] sm:$0xff]
        %v4096 = vld [vmem:[%s653 + $0x7d8] sm:$0xff]
        %v4097 = vld [vmem:[%s653 + $0x7e0] sm:$0xff]
        %v4098 = vld [vmem:[%s653 + $0x7e8] sm:$0xff]
        %v4099 = vld [vmem:[%s653 + $0x7f0] sm:$0xff]
        %v4100 = vld [vmem:[%s653 + $0x7f8] sm:$0xff]
        %v4101 = vld [vmem:[%s653 + $0x800] sm:$0xff]
        %v4102 = vld [vmem:[%s653 + $0x808] sm:$0xff]
        %v4103 = vld [vmem:[%s653 + $0x810] sm:$0xff]
        %v4104 = vld [vmem:[%s653 + $0x818] sm:$0xff]
        %v4105 = vld [vmem:[%s653 + $0x820] sm:$0xff]
        %v4106 = vld [vmem:[%s653 + $0x828] sm:$0xff]
        %v4107 = vld [vmem:[%s653 + $0x830] sm:$0xff]
        %v4108 = vld [vmem:[%s653 + $0x838] sm:$0xff]
        %v4109 = vld [vmem:[%s653 + $0x840] sm:$0xff]
        %v4110 = vld [vmem:[%s653 + $0x848] sm:$0xff]
        %v4111 = vld [vmem:[%s653 + $0x850] sm:$0xff]
        %v4112 = vld [vmem:[%s653 + $0x858] sm:$0xff]
        %v4113 = vld [vmem:[%s653 + $0x860] sm:$0xff]
        %v4114 = vld [vmem:[%s653 + $0x868] sm:$0xff]
        %v4115 = vld [vmem:[%s653 + $0x870] sm:$0xff]
        %v4116 = vld [vmem:[%s653 + $0x878] sm:$0xff]
        %v4117 = vld [vmem:[%s653 + $0x880] sm:$0xff]
        %v4118 = vld [vmem:[%s653 + $0x888] sm:$0xff]
        %v4119 = vld [vmem:[%s653 + $0x890] sm:$0xff]
        %v4120 = vld [vmem:[%s653 + $0x898] sm:$0xff]
        %v4121 = vld [vmem:[%s653 + $0x8a0] sm:$0xff]
        %v4122 = vld [vmem:[%s653 + $0x8a8] sm:$0xff]
        %v4123 = vld [vmem:[%s653 + $0x8b0] sm:$0xff]
        %v4124 = vld [vmem:[%s653 + $0x8b8] sm:$0xff]
        %v4125 = vld [vmem:[%s653 + $0x8c0] sm:$0xff]
        %v4126 = vld [vmem:[%s653 + $0x8c8] sm:$0xff]
        %v4127 = vld [vmem:[%s653 + $0x8d0] sm:$0xff]
        %v4128 = vld [vmem:[%s653 + $0x8d8] sm:$0xff]
        %v4129 = vld [vmem:[%s653 + $0x8e0] sm:$0xff]
        %v4130 = vld [vmem:[%s653 + $0x8e8] sm:$0xff]
        %v4131 = vld [vmem:[%s653 + $0x8f0] sm:$0xff]
        %v4132 = vld [vmem:[%s653 + $0x8f8] sm:$0xff]
        %v4133 = vld [vmem:[%s653 + $0x900] sm:$0xff]
        %v4134 = vld [vmem:[%s653 + $0x908] sm:$0xff]
        %v4135 = vld [vmem:[%s653 + $0x910] sm:$0xff]
        %v4136 = vld [vmem:[%s653 + $0x918] sm:$0xff]
        %v4137 = vld [vmem:[%s653 + $0x920] sm:$0xff]
        %v4138 = vld [vmem:[%s653 + $0x928] sm:$0xff]
        %v4139 = vld [vmem:[%s653 + $0x930] sm:$0xff]
        %v4140 = vld [vmem:[%s653 + $0x938] sm:$0xff]
        %v4141 = vld [vmem:[%s653 + $0x940] sm:$0xff]
        %v4142 = vld [vmem:[%s653 + $0x948] sm:$0xff]
        %v4143 = vld [vmem:[%s653 + $0x950] sm:$0xff]
        %v4144 = vld [vmem:[%s653 + $0x958] sm:$0xff]
        %v4145 = vld [vmem:[%s653 + $0x960] sm:$0xff]
        %v4146 = vld [vmem:[%s653 + $0x968] sm:$0xff]
        %v4147 = vld [vmem:[%s653 + $0x970] sm:$0xff]
        %v4148 = vld [vmem:[%s653 + $0x978] sm:$0xff]
        %v4149 = vld [vmem:[%s653 + $0x980] sm:$0xff]
        %v4150 = vld [vmem:[%s653 + $0x988] sm:$0xff]
        %v4151 = vld [vmem:[%s653 + $0x990] sm:$0xff]
        %v4152 = vld [vmem:[%s653 + $0x998] sm:$0xff]
        %v4153 = vld [vmem:[%s653 + $0x9a0] sm:$0xff]
        %v4154 = vld [vmem:[%s653 + $0x9a8] sm:$0xff]
        %v4155 = vld [vmem:[%s653 + $0x9b0] sm:$0xff]
        %v4156 = vld [vmem:[%s653 + $0x9b8] sm:$0xff]
        %v4157 = vld [vmem:[%s653 + $0x9c0] sm:$0xff]
        %v4158 = vld [vmem:[%s653 + $0x9c8] sm:$0xff]
        %v4159 = vld [vmem:[%s653 + $0x9d0] sm:$0xff]
        %v4160 = vld [vmem:[%s653 + $0x9d8] sm:$0xff]
        %v4161 = vld [vmem:[%s653 + $0x9e0] sm:$0xff]
        %v4162 = vld [vmem:[%s653 + $0x9e8] sm:$0xff]
        %v4163 = vld [vmem:[%s653 + $0x9f0] sm:$0xff]
        %v4164 = vld [vmem:[%s653 + $0x9f8] sm:$0xff]
        %v4165 = vld [vmem:[%s653 + $0xa00] sm:$0xff]
        %v4166 = vld [vmem:[%s653 + $0xa08] sm:$0xff]
        %v4167 = vld [vmem:[%s653 + $0xa10] sm:$0xff]
        %v4168 = vld [vmem:[%s653 + $0xa18] sm:$0xff]
        %v4169 = vld [vmem:[%s653 + $0xa20] sm:$0xff]
        %v4170 = vld [vmem:[%s653 + $0xa28] sm:$0xff]
        %v4171 = vld [vmem:[%s653 + $0xa30] sm:$0xff]
        %v4172 = vld [vmem:[%s653 + $0xa38] sm:$0xff]
        %v4173 = vld [vmem:[%s653 + $0xa40] sm:$0xff]
        %v4174 = vld [vmem:[%s653 + $0xa48] sm:$0xff]
        %v4175 = vld [vmem:[%s653 + $0xa50] sm:$0xff]
        %v4176 = vld [vmem:[%s653 + $0xa58] sm:$0xff]
        %v4177 = vld [vmem:[%s653 + $0xa60] sm:$0xff]
        %v4178 = vld [vmem:[%s653 + $0xa68] sm:$0xff]
        %v4179 = vld [vmem:[%s653 + $0xa70] sm:$0xff]
        %v4180 = vld [vmem:[%s653 + $0xa78] sm:$0xff]
        %v4181 = vld [vmem:[%s653 + $0xa80] sm:$0xff]
        %v4182 = vld [vmem:[%s653 + $0xa88] sm:$0xff]
        %v4183 = vld [vmem:[%s653 + $0xa90] sm:$0xff]
        %v4184 = vld [vmem:[%s653 + $0xa98] sm:$0xff]
        %v4185 = vld [vmem:[%s653 + $0xaa0] sm:$0xff]
        %v4186 = vld [vmem:[%s653 + $0xaa8] sm:$0xff]
        %v4187 = vld [vmem:[%s653 + $0xab0] sm:$0xff]
        %v4188 = vld [vmem:[%s653 + $0xab8] sm:$0xff]
        %v4189 = vld [vmem:[%s653 + $0xac0] sm:$0xff]
        %v4190 = vld [vmem:[%s653 + $0xac8] sm:$0xff]
        %v4191 = vld [vmem:[%s653 + $0xad0] sm:$0xff]
        %v4192 = vld [vmem:[%s653 + $0xad8] sm:$0xff]
        %v4193 = vld [vmem:[%s653 + $0xae0] sm:$0xff]
        %v4194 = vld [vmem:[%s653 + $0xae8] sm:$0xff]
        %v4195 = vld [vmem:[%s653 + $0xaf0] sm:$0xff]
        %v4196 = vld [vmem:[%s653 + $0xaf8] sm:$0xff]
        %v4197 = vld [vmem:[%s653 + $0xb00] sm:$0xff]
        %v4198 = vld [vmem:[%s653 + $0xb08] sm:$0xff]
        %v4199 = vld [vmem:[%s653 + $0xb10] sm:$0xff]
        %v4200 = vld [vmem:[%s653 + $0xb18] sm:$0xff]
        %v4201 = vld [vmem:[%s653 + $0xb20] sm:$0xff]
        %v4202 = vld [vmem:[%s653 + $0xb28] sm:$0xff]
        %v4203 = vld [vmem:[%s653 + $0xb30] sm:$0xff]
        %v4204 = vld [vmem:[%s653 + $0xb38] sm:$0xff]
        %v4205 = vld [vmem:[%s653 + $0xb40] sm:$0xff]
        %v4206 = vld [vmem:[%s653 + $0xb48] sm:$0xff]
        %v4207 = vld [vmem:[%s653 + $0xb50] sm:$0xff]
        %v4208 = vld [vmem:[%s653 + $0xb58] sm:$0xff]
        %v4209 = vld [vmem:[%s653 + $0xb60] sm:$0xff]
        %v4210 = vld [vmem:[%s653 + $0xb68] sm:$0xff]
        %v4211 = vld [vmem:[%s653 + $0xb70] sm:$0xff]
        %v4212 = vld [vmem:[%s653 + $0xb78] sm:$0xff]
        %v4213 = vld [vmem:[%s653 + $0xb80] sm:$0xff]
        %v4214 = vld [vmem:[%s653 + $0xb88] sm:$0xff]
        %v4215 = vld [vmem:[%s653 + $0xb90] sm:$0xff]
        %v4216 = vld [vmem:[%s653 + $0xb98] sm:$0xff]
        %v4217 = vld [vmem:[%s653 + $0xba0] sm:$0xff]
        %v4218 = vld [vmem:[%s653 + $0xba8] sm:$0xff]
        %v4219 = vld [vmem:[%s653 + $0xbb0] sm:$0xff]
        %v4220 = vld [vmem:[%s653 + $0xbb8] sm:$0xff]
        %v4221 = vld [vmem:[%s653 + $0xbc0] sm:$0xff]
        %v4222 = vld [vmem:[%s653 + $0xbc8] sm:$0xff]
        %v4223 = vld [vmem:[%s653 + $0xbd0] sm:$0xff]
        %v4224 = vld [vmem:[%s653 + $0xbd8] sm:$0xff]
        %v4225 = vld [vmem:[%s653 + $0xbe0] sm:$0xff]
        %v4226 = vld [vmem:[%s653 + $0xbe8] sm:$0xff]
        %v4227 = vld [vmem:[%s653 + $0xbf0] sm:$0xff]
        %v4228 = vld [vmem:[%s653 + $0xbf8] sm:$0xff]
        %v4229 = vld [vmem:[%s653 + $0xc00] sm:$0xff]
        %v4230 = vld [vmem:[%s653 + $0xc08] sm:$0xff]
        %v4231 = vld [vmem:[%s653 + $0xc10] sm:$0xff]
        %v4232 = vld [vmem:[%s653 + $0xc18] sm:$0xff]
        %v4233 = vld [vmem:[%s653 + $0xc20] sm:$0xff]
        %v4234 = vld [vmem:[%s653 + $0xc28] sm:$0xff]
        %v4235 = vld [vmem:[%s653 + $0xc30] sm:$0xff]
        %v4236 = vld [vmem:[%s653 + $0xc38] sm:$0xff]
        %v4237 = vld [vmem:[%s653 + $0xc40] sm:$0xff]
        %v4238 = vld [vmem:[%s653 + $0xc48] sm:$0xff]
        %v4239 = vld [vmem:[%s653 + $0xc50] sm:$0xff]
        %v4240 = vld [vmem:[%s653 + $0xc58] sm:$0xff]
        %v4241 = vld [vmem:[%s653 + $0xc60] sm:$0xff]
        %v4242 = vld [vmem:[%s653 + $0xc68] sm:$0xff]
        %v4243 = vld [vmem:[%s653 + $0xc70] sm:$0xff]
        %v4244 = vld [vmem:[%s653 + $0xc78] sm:$0xff]
        %v4245 = vld [vmem:[%s653 + $0xc80] sm:$0xff]
        %v4246 = vld [vmem:[%s653 + $0xc88] sm:$0xff]
        %v4247 = vld [vmem:[%s653 + $0xc90] sm:$0xff]
        %v4248 = vld [vmem:[%s653 + $0xc98] sm:$0xff]
        %v4249 = vld [vmem:[%s653 + $0xca0] sm:$0xff]
        %v4250 = vld [vmem:[%s653 + $0xca8] sm:$0xff]
        %v4251 = vld [vmem:[%s653 + $0xcb0] sm:$0xff]
        %v4252 = vld [vmem:[%s653 + $0xcb8] sm:$0xff]
        %v4253 = vld [vmem:[%s653 + $0xcc0] sm:$0xff]
        %v4254 = vld [vmem:[%s653 + $0xcc8] sm:$0xff]
        %v4255 = vld [vmem:[%s653 + $0xcd0] sm:$0xff]
        %v4256 = vld [vmem:[%s653 + $0xcd8] sm:$0xff]
        %v4257 = vld [vmem:[%s653 + $0xce0] sm:$0xff]
        %v4258 = vld [vmem:[%s653 + $0xce8] sm:$0xff]
        %v4259 = vld [vmem:[%s653 + $0xcf0] sm:$0xff]
        %v4260 = vld [vmem:[%s653 + $0xcf8] sm:$0xff]
        %v4261 = vld [vmem:[%s653 + $0xd00] sm:$0xff]
        %v4262 = vld [vmem:[%s653 + $0xd08] sm:$0xff]
        %v4263 = vld [vmem:[%s653 + $0xd10] sm:$0xff]
        %v4264 = vld [vmem:[%s653 + $0xd18] sm:$0xff]
        %v4265 = vld [vmem:[%s653 + $0xd20] sm:$0xff]
        %v4266 = vld [vmem:[%s653 + $0xd28] sm:$0xff]
        %v4267 = vld [vmem:[%s653 + $0xd30] sm:$0xff]
        %v4268 = vld [vmem:[%s653 + $0xd38] sm:$0xff]
        %v4269 = vld [vmem:[%s653 + $0xd40] sm:$0xff]
        %v4270 = vld [vmem:[%s653 + $0xd48] sm:$0xff]
        %v4271 = vld [vmem:[%s653 + $0xd50] sm:$0xff]
        %v4272 = vld [vmem:[%s653 + $0xd58] sm:$0xff]
        %v4273 = vld [vmem:[%s653 + $0xd60] sm:$0xff]
        %v4274 = vld [vmem:[%s653 + $0xd68] sm:$0xff]
        %v4275 = vld [vmem:[%s653 + $0xd70] sm:$0xff]
        %v4276 = vld [vmem:[%s653 + $0xd78] sm:$0xff]
        %v4277 = vld [vmem:[%s653 + $0xd80] sm:$0xff]
        %v4278 = vld [vmem:[%s653 + $0xd88] sm:$0xff]
        %v4279 = vld [vmem:[%s653 + $0xd90] sm:$0xff]
        %v4280 = vld [vmem:[%s653 + $0xd98] sm:$0xff]
        %v4281 = vld [vmem:[%s653 + $0xda0] sm:$0xff]
        %v4282 = vld [vmem:[%s653 + $0xda8] sm:$0xff]
        %v4283 = vld [vmem:[%s653 + $0xdb0] sm:$0xff]
        %v4284 = vld [vmem:[%s653 + $0xdb8] sm:$0xff]
        %v4285 = vld [vmem:[%s653 + $0xdc0] sm:$0xff]
        %v4286 = vld [vmem:[%s653 + $0xdc8] sm:$0xff]
        %v4287 = vld [vmem:[%s653 + $0xdd0] sm:$0xff]
        %v4288 = vld [vmem:[%s653 + $0xdd8] sm:$0xff]
        %v4289 = vld [vmem:[%s653 + $0xde0] sm:$0xff]
        %v4290 = vld [vmem:[%s653 + $0xde8] sm:$0xff]
        %v4291 = vld [vmem:[%s653 + $0xdf0] sm:$0xff]
        %v4292 = vld [vmem:[%s653 + $0xdf8] sm:$0xff]
        %v4293 = vld [vmem:[%s653 + $0xe00] sm:$0xff]
        %v4294 = vld [vmem:[%s653 + $0xe08] sm:$0xff]
        %v4295 = vld [vmem:[%s653 + $0xe10] sm:$0xff]
        %v4296 = vld [vmem:[%s653 + $0xe18] sm:$0xff]
        %v4297 = vld [vmem:[%s653 + $0xe20] sm:$0xff]
        %v4298 = vld [vmem:[%s653 + $0xe28] sm:$0xff]
        %v4299 = vld [vmem:[%s653 + $0xe30] sm:$0xff]
        %v4300 = vld [vmem:[%s653 + $0xe38] sm:$0xff]
        %v4301 = vld [vmem:[%s653 + $0xe40] sm:$0xff]
        %v4302 = vld [vmem:[%s653 + $0xe48] sm:$0xff]
        %v4303 = vld [vmem:[%s653 + $0xe50] sm:$0xff]
        %v4304 = vld [vmem:[%s653 + $0xe58] sm:$0xff]
        %v4305 = vld [vmem:[%s653 + $0xe60] sm:$0xff]
        %v4306 = vld [vmem:[%s653 + $0xe68] sm:$0xff]
        %v4307 = vld [vmem:[%s653 + $0xe70] sm:$0xff]
        %v4308 = vld [vmem:[%s653 + $0xe78] sm:$0xff]
        %v4309 = vld [vmem:[%s653 + $0xe80] sm:$0xff]
        %v4310 = vld [vmem:[%s653 + $0xe88] sm:$0xff]
        %v4311 = vld [vmem:[%s653 + $0xe90] sm:$0xff]
        %v4312 = vld [vmem:[%s653 + $0xe98] sm:$0xff]
        %v4313 = vld [vmem:[%s653 + $0xea0] sm:$0xff]
        %v4314 = vld [vmem:[%s653 + $0xea8] sm:$0xff]
        %v4315 = vld [vmem:[%s653 + $0xeb0] sm:$0xff]
        %v4316 = vld [vmem:[%s653 + $0xeb8] sm:$0xff]
        %v4317 = vld [vmem:[%s653 + $0xec0] sm:$0xff]
        %v4318 = vld [vmem:[%s653 + $0xec8] sm:$0xff]
        %v4319 = vld [vmem:[%s653 + $0xed0] sm:$0xff]
        %v4320 = vld [vmem:[%s653 + $0xed8] sm:$0xff]
        %v4321 = vld [vmem:[%s653 + $0xee0] sm:$0xff]
        %v4322 = vld [vmem:[%s653 + $0xee8] sm:$0xff]
        %v4323 = vld [vmem:[%s653 + $0xef0] sm:$0xff]
        %v4324 = vld [vmem:[%s653 + $0xef8] sm:$0xff]
        %v4325 = vld [vmem:[%s653 + $0xf00] sm:$0xff]
        %v4326 = vld [vmem:[%s653 + $0xf08] sm:$0xff]
        %v4327 = vld [vmem:[%s653 + $0xf10] sm:$0xff]
        %v4328 = vld [vmem:[%s653 + $0xf18] sm:$0xff]
        %v4329 = vld [vmem:[%s653 + $0xf20] sm:$0xff]
        %v4330 = vld [vmem:[%s653 + $0xf28] sm:$0xff]
        %v4331 = vld [vmem:[%s653 + $0xf30] sm:$0xff]
        %v4332 = vld [vmem:[%s653 + $0xf38] sm:$0xff]
        %v4333 = vld [vmem:[%s653 + $0xf40] sm:$0xff]
        %v4334 = vld [vmem:[%s653 + $0xf48] sm:$0xff]
        %v4335 = vld [vmem:[%s653 + $0xf50] sm:$0xff]
        %v4336 = vld [vmem:[%s653 + $0xf58] sm:$0xff]
        %v4337 = vld [vmem:[%s653 + $0xf60] sm:$0xff]
        %v4338 = vld [vmem:[%s653 + $0xf68] sm:$0xff]
        %v4339 = vld [vmem:[%s653 + $0xf70] sm:$0xff]
        %v4340 = vld [vmem:[%s653 + $0xf78] sm:$0xff]
        %v4341 = vld [vmem:[%s653 + $0xf80] sm:$0xff]
        %v4342 = vld [vmem:[%s653 + $0xf88] sm:$0xff]
        %v4343 = vld [vmem:[%s653 + $0xf90] sm:$0xff]
        %v4344 = vld [vmem:[%s653 + $0xf98] sm:$0xff]
        %v4345 = vld [vmem:[%s653 + $0xfa0] sm:$0xff]
        %v4346 = vld [vmem:[%s653 + $0xfa8] sm:$0xff]
        %v4347 = vld [vmem:[%s653 + $0xfb0] sm:$0xff]
        %v4348 = vld [vmem:[%s653 + $0xfb8] sm:$0xff]
        %v4349 = vld [vmem:[%s653 + $0xfc0] sm:$0xff]
        %v4350 = vld [vmem:[%s653 + $0xfc8] sm:$0xff]
        %v4351 = vld [vmem:[%s653 + $0xfd0] sm:$0xff]
        %v4352 = vld [vmem:[%s653 + $0xfd8] sm:$0xff]
        %v4353 = vld [vmem:[%s653 + $0xfe0] sm:$0xff]
        %v4354 = vld [vmem:[%s653 + $0xfe8] sm:$0xff]
        %v4355 = vld [vmem:[%s653 + $0xff0] sm:$0xff]
        %v4356 = vld [vmem:[%s653 + $0xff8] sm:$0xff]
        %v4357 = vld [vmem:[%s653 + $0x1000] sm:$0xff]
        %v4358 = vld [vmem:[%s653 + $0x1008] sm:$0xff]
        %v4359 = vld [vmem:[%s653 + $0x1010] sm:$0xff]
        %v4360 = vld [vmem:[%s653 + $0x1018] sm:$0xff]
        %v4361 = vld [vmem:[%s653 + $0x1020] sm:$0xff]
        %v4362 = vld [vmem:[%s653 + $0x1028] sm:$0xff]
        %v4363 = vld [vmem:[%s653 + $0x1030] sm:$0xff]
        %v4364 = vld [vmem:[%s653 + $0x1038] sm:$0xff]
        %v4365 = vld [vmem:[%s653 + $0x1040] sm:$0xff]
        %v4366 = vld [vmem:[%s653 + $0x1048] sm:$0xff]
        %v4367 = vld [vmem:[%s653 + $0x1050] sm:$0xff]
        %v4368 = vld [vmem:[%s653 + $0x1058] sm:$0xff]
        %v4369 = vld [vmem:[%s653 + $0x1060] sm:$0xff]
        %v4370 = vld [vmem:[%s653 + $0x1068] sm:$0xff]
        %v4371 = vld [vmem:[%s653 + $0x1070] sm:$0xff]
        %v4372 = vld [vmem:[%s653 + $0x1078] sm:$0xff]
        %v4373 = vld [vmem:[%s653 + $0x1080] sm:$0xff]
        %v4374 = vld [vmem:[%s653 + $0x1088] sm:$0xff]
        %v4375 = vld [vmem:[%s653 + $0x1090] sm:$0xff]
        %v4376 = vld [vmem:[%s653 + $0x1098] sm:$0xff]
        %v4377 = vld [vmem:[%s653 + $0x10a0] sm:$0xff]
        %v4378 = vld [vmem:[%s653 + $0x10a8] sm:$0xff]
        %v4379 = vld [vmem:[%s653 + $0x10b0] sm:$0xff]
        %v4380 = vld [vmem:[%s653 + $0x10b8] sm:$0xff]
        %v4381 = vld [vmem:[%s653 + $0x10c0] sm:$0xff]
        %v4382 = vld [vmem:[%s653 + $0x10c8] sm:$0xff]
        %v4383 = vld [vmem:[%s653 + $0x10d0] sm:$0xff]
        %v4384 = vld [vmem:[%s653 + $0x10d8] sm:$0xff]
        %v4385 = vld [vmem:[%s653 + $0x10e0] sm:$0xff]
        %v4386 = vld [vmem:[%s653 + $0x10e8] sm:$0xff]
        %v4387 = vld [vmem:[%s653 + $0x10f0] sm:$0xff]
        %v4388 = vld [vmem:[%s653 + $0x10f8] sm:$0xff]
        %v4389 = vld [vmem:[%s653 + $0x1100] sm:$0xff]
        %v4390 = vld [vmem:[%s653 + $0x1108] sm:$0xff]
        %v4391 = vld [vmem:[%s653 + $0x1110] sm:$0xff]
        %v4392 = vld [vmem:[%s653 + $0x1118] sm:$0xff]
        %v4393 = vld [vmem:[%s653 + $0x1120] sm:$0xff]
        %v4394 = vld [vmem:[%s653 + $0x1128] sm:$0xff]
        %v4395 = vld [vmem:[%s653 + $0x1130] sm:$0xff]
        %v4396 = vld [vmem:[%s653 + $0x1138] sm:$0xff]
        %v4397 = vld [vmem:[%s653 + $0x1140] sm:$0xff]
        %v4398 = vld [vmem:[%s653 + $0x1148] sm:$0xff]
        %v4399 = vld [vmem:[%s653 + $0x1150] sm:$0xff]
        %v4400 = vld [vmem:[%s653 + $0x1158] sm:$0xff]
        %v4401 = vld [vmem:[%s653 + $0x1160] sm:$0xff]
        %v4402 = vld [vmem:[%s653 + $0x1168] sm:$0xff]
        %v4403 = vld [vmem:[%s653 + $0x1170] sm:$0xff]
        %v4404 = vld [vmem:[%s653 + $0x1178] sm:$0xff]
        %v4405 = vld [vmem:[%s653 + $0x1180] sm:$0xff]
        %v4406 = vld [vmem:[%s653 + $0x1188] sm:$0xff]
        %v4407 = vld [vmem:[%s653 + $0x1190] sm:$0xff]
        %v4408 = vld [vmem:[%s653 + $0x1198] sm:$0xff]
        %v4409 = vld [vmem:[%s653 + $0x11a0] sm:$0xff]
        %v4410 = vld [vmem:[%s653 + $0x11a8] sm:$0xff]
        %v4411 = vld [vmem:[%s653 + $0x11b0] sm:$0xff]
        %v4412 = vld [vmem:[%s653 + $0x11b8] sm:$0xff]
        %v4413 = vld [vmem:[%s653 + $0x11c0] sm:$0xff]
        %v4414 = vld [vmem:[%s653 + $0x11c8] sm:$0xff]
        %v4415 = vld [vmem:[%s653 + $0x11d0] sm:$0xff]
        %v4416 = vld [vmem:[%s653 + $0x11d8] sm:$0xff]
        %v4417 = vld [vmem:[%s653 + $0x11e0] sm:$0xff]
        %v4418 = vld [vmem:[%s653 + $0x11e8] sm:$0xff]
        %v4419 = vld [vmem:[%s653 + $0x11f0] sm:$0xff]
        %v4420 = vld [vmem:[%s653 + $0x11f8] sm:$0xff]
        %v4421 = vld [vmem:[%s653 + $0x1200] sm:$0xff]
        %v4422 = vld [vmem:[%s653 + $0x1208] sm:$0xff]
        %v4423 = vld [vmem:[%s653 + $0x1210] sm:$0xff]
        %v4424 = vld [vmem:[%s653 + $0x1218] sm:$0xff]
        %v4425 = vld [vmem:[%s653 + $0x1220] sm:$0xff]
        %v4426 = vld [vmem:[%s653 + $0x1228] sm:$0xff]
        %v4427 = vld [vmem:[%s653 + $0x1230] sm:$0xff]
        %v4428 = vld [vmem:[%s653 + $0x1238] sm:$0xff]
        %v4429 = vld [vmem:[%s653 + $0x1240] sm:$0xff]
        %v4430 = vld [vmem:[%s653 + $0x1248] sm:$0xff]
        %v4431 = vld [vmem:[%s653 + $0x1250] sm:$0xff]
        %v4432 = vld [vmem:[%s653 + $0x1258] sm:$0xff]
        %v4433 = vld [vmem:[%s653 + $0x1260] sm:$0xff]
        %v4434 = vld [vmem:[%s653 + $0x1268] sm:$0xff]
        %v4435 = vld [vmem:[%s653 + $0x1270] sm:$0xff]
        %v4436 = vld [vmem:[%s653 + $0x1278] sm:$0xff]
        %v4437 = vld [vmem:[%s653 + $0x1280] sm:$0xff]
        %v4438 = vld [vmem:[%s653 + $0x1288] sm:$0xff]
        %v4439 = vld [vmem:[%s653 + $0x1290] sm:$0xff]
        %v4440 = vld [vmem:[%s653 + $0x1298] sm:$0xff]
        %v4441 = vld [vmem:[%s653 + $0x12a0] sm:$0xff]
        %v4442 = vld [vmem:[%s653 + $0x12a8] sm:$0xff]
        %v4443 = vld [vmem:[%s653 + $0x12b0] sm:$0xff]
        %v4444 = vld [vmem:[%s653 + $0x12b8] sm:$0xff]
        %v4445 = vld [vmem:[%s653 + $0x12c0] sm:$0xff]
        %v4446 = vld [vmem:[%s653 + $0x12c8] sm:$0xff]
        %v4447 = vld [vmem:[%s653 + $0x12d0] sm:$0xff]
        %v4448 = vld [vmem:[%s653 + $0x12d8] sm:$0xff]
        %v4449 = vld [vmem:[%s653 + $0x12e0] sm:$0xff]
        %v4450 = vld [vmem:[%s653 + $0x12e8] sm:$0xff]
        %v4451 = vld [vmem:[%s653 + $0x12f0] sm:$0xff]
        %v4452 = vld [vmem:[%s653 + $0x12f8] sm:$0xff]
        %v4453 = vld [vmem:[%s653 + $0x1300] sm:$0xff]
        %v4454 = vld [vmem:[%s653 + $0x1308] sm:$0xff]
        %v4455 = vld [vmem:[%s653 + $0x1310] sm:$0xff]
        %v4456 = vld [vmem:[%s653 + $0x1318] sm:$0xff]
        %v4457 = vld [vmem:[%s653 + $0x1320] sm:$0xff]
        %v4458 = vld [vmem:[%s653 + $0x1328] sm:$0xff]
        %v4459 = vld [vmem:[%s653 + $0x1330] sm:$0xff]
        %v4460 = vld [vmem:[%s653 + $0x1338] sm:$0xff]
        %v4461 = vld [vmem:[%s653 + $0x1340] sm:$0xff]
        %v4462 = vld [vmem:[%s653 + $0x1348] sm:$0xff]
        %v4463 = vld [vmem:[%s653 + $0x1350] sm:$0xff]
        %v4464 = vld [vmem:[%s653 + $0x1358] sm:$0xff]
        %v4465 = vld [vmem:[%s653 + $0x1360] sm:$0xff]
        %v4466 = vld [vmem:[%s653 + $0x1368] sm:$0xff]
        %v4467 = vld [vmem:[%s653 + $0x1370] sm:$0xff]
        %v4468 = vld [vmem:[%s653 + $0x1378] sm:$0xff]
        %v4469 = vld [vmem:[%s653 + $0x1380] sm:$0xff]
        %v4470 = vld [vmem:[%s653 + $0x1388] sm:$0xff]
        %v4471 = vld [vmem:[%s653 + $0x1390] sm:$0xff]
        %v4472 = vld [vmem:[%s653 + $0x1398] sm:$0xff]
        %v4473 = vld [vmem:[%s653 + $0x13a0] sm:$0xff]
        %v4474 = vld [vmem:[%s653 + $0x13a8] sm:$0xff]
        %v4475 = vld [vmem:[%s653 + $0x13b0] sm:$0xff]
        %v4476 = vld [vmem:[%s653 + $0x13b8] sm:$0xff]
        %v4477 = vld [vmem:[%s653 + $0x13c0] sm:$0xff]
        %v4478 = vld [vmem:[%s653 + $0x13c8] sm:$0xff]
        %v4479 = vld [vmem:[%s653 + $0x13d0] sm:$0xff]
        %v4480 = vld [vmem:[%s653 + $0x13d8] sm:$0xff]
        %v4481 = vld [vmem:[%s653 + $0x13e0] sm:$0xff]
        %v4482 = vld [vmem:[%s653 + $0x13e8] sm:$0xff]
        %v4483 = vld [vmem:[%s653 + $0x13f0] sm:$0xff]
        %v4484 = vld [vmem:[%s653 + $0x13f8] sm:$0xff]
        %v4485 = vld [vmem:[%s653 + $0x1400] sm:$0xff]
        %v4486 = vld [vmem:[%s653 + $0x1408] sm:$0xff]
        %v4487 = vld [vmem:[%s653 + $0x1410] sm:$0xff]
        %v4488 = vld [vmem:[%s653 + $0x1418] sm:$0xff]
        %v4489 = vld [vmem:[%s653 + $0x1420] sm:$0xff]
        %v4490 = vld [vmem:[%s653 + $0x1428] sm:$0xff]
        %v4491 = vld [vmem:[%s653 + $0x1430] sm:$0xff]
        %v4492 = vld [vmem:[%s653 + $0x1438] sm:$0xff]
        %v4493 = vld [vmem:[%s653 + $0x1440] sm:$0xff]
        %v4494 = vld [vmem:[%s653 + $0x1448] sm:$0xff]
        %v4495 = vld [vmem:[%s653 + $0x1450] sm:$0xff]
        %v4496 = vld [vmem:[%s653 + $0x1458] sm:$0xff]
        %v4497 = vld [vmem:[%s653 + $0x1460] sm:$0xff]
        %v4498 = vld [vmem:[%s653 + $0x1468] sm:$0xff]
        %v4499 = vld [vmem:[%s653 + $0x1470] sm:$0xff]
        %v4500 = vld [vmem:[%s653 + $0x1478] sm:$0xff]
        %v4501 = vld [vmem:[%s653 + $0x1480] sm:$0xff]
        %v4502 = vld [vmem:[%s653 + $0x1488] sm:$0xff]
        %v4503 = vld [vmem:[%s653 + $0x1490] sm:$0xff]
        %v4504 = vld [vmem:[%s653 + $0x1498] sm:$0xff]
        %v4505 = vld [vmem:[%s653 + $0x14a0] sm:$0xff]
        %v4506 = vld [vmem:[%s653 + $0x14a8] sm:$0xff]
        %v4507 = vld [vmem:[%s653 + $0x14b0] sm:$0xff]
        %v4508 = vld [vmem:[%s653 + $0x14b8] sm:$0xff]
        %v4509 = vld [vmem:[%s653 + $0x14c0] sm:$0xff]
        %v4510 = vld [vmem:[%s653 + $0x14c8] sm:$0xff]
        %v4511 = vld [vmem:[%s653 + $0x14d0] sm:$0xff]
        %v4512 = vld [vmem:[%s653 + $0x14d8] sm:$0xff]
        %v4513 = vld [vmem:[%s653 + $0x14e0] sm:$0xff]
        %v4514 = vld [vmem:[%s653 + $0x14e8] sm:$0xff]
        %v4515 = vld [vmem:[%s653 + $0x14f0] sm:$0xff]
        %v4516 = vld [vmem:[%s653 + $0x14f8] sm:$0xff]
        %v4517 = vld [vmem:[%s653 + $0x1500] sm:$0xff]
        %v4518 = vld [vmem:[%s653 + $0x1508] sm:$0xff]
        %v4519 = vld [vmem:[%s653 + $0x1510] sm:$0xff]
        %v4520 = vld [vmem:[%s653 + $0x1518] sm:$0xff]
        %v4521 = vld [vmem:[%s653 + $0x1520] sm:$0xff]
        %v4522 = vld [vmem:[%s653 + $0x1528] sm:$0xff]
        %v4523 = vld [vmem:[%s653 + $0x1530] sm:$0xff]
        %v4524 = vld [vmem:[%s653 + $0x1538] sm:$0xff]
        %v4525 = vld [vmem:[%s653 + $0x1540] sm:$0xff]
        %v4526 = vld [vmem:[%s653 + $0x1548] sm:$0xff]
        %v4527 = vld [vmem:[%s653 + $0x1550] sm:$0xff]
        %v4528 = vld [vmem:[%s653 + $0x1558] sm:$0xff]
        %v4529 = vld [vmem:[%s653 + $0x1560] sm:$0xff]
        %v4530 = vld [vmem:[%s653 + $0x1568] sm:$0xff]
        %v4531 = vld [vmem:[%s653 + $0x1570] sm:$0xff]
        %v4532 = vld [vmem:[%s653 + $0x1578] sm:$0xff]
        %v4533 = vld [vmem:[%s653 + $0x1580] sm:$0xff]
        %v4534 = vld [vmem:[%s653 + $0x1588] sm:$0xff]
        %v4535 = vld [vmem:[%s653 + $0x1590] sm:$0xff]
        %v4536 = vld [vmem:[%s653 + $0x1598] sm:$0xff]
        %v4537 = vld [vmem:[%s653 + $0x15a0] sm:$0xff]
        %v4538 = vld [vmem:[%s653 + $0x15a8] sm:$0xff]
        %v4539 = vld [vmem:[%s653 + $0x15b0] sm:$0xff]
        %v4540 = vld [vmem:[%s653 + $0x15b8] sm:$0xff]
        %v4541 = vld [vmem:[%s653 + $0x15c0] sm:$0xff]
        %v4542 = vld [vmem:[%s653 + $0x15c8] sm:$0xff]
        %v4543 = vld [vmem:[%s653 + $0x15d0] sm:$0xff]
        %v4544 = vld [vmem:[%s653 + $0x15d8] sm:$0xff]
        %v4545 = vld [vmem:[%s653 + $0x15e0] sm:$0xff]
        %v4546 = vld [vmem:[%s653 + $0x15e8] sm:$0xff]
        %v4547 = vld [vmem:[%s653 + $0x15f0] sm:$0xff]
        %v4548 = vld [vmem:[%s653 + $0x15f8] sm:$0xff]
        %v4549 = vld [vmem:[%s653 + $0x1600] sm:$0xff]
        %v4550 = vld [vmem:[%s653 + $0x1608] sm:$0xff]
        %v4551 = vld [vmem:[%s653 + $0x1610] sm:$0xff]
        %v4552 = vld [vmem:[%s653 + $0x1618] sm:$0xff]
        %v4553 = vld [vmem:[%s653 + $0x1620] sm:$0xff]
        %v4554 = vld [vmem:[%s653 + $0x1628] sm:$0xff]
        %v4555 = vld [vmem:[%s653 + $0x1630] sm:$0xff]
        %v4556 = vld [vmem:[%s653 + $0x1638] sm:$0xff]
        %v4557 = vld [vmem:[%s653 + $0x1640] sm:$0xff]
        %v4558 = vld [vmem:[%s653 + $0x1648] sm:$0xff]
        %v4559 = vld [vmem:[%s653 + $0x1650] sm:$0xff]
        %v4560 = vld [vmem:[%s653 + $0x1658] sm:$0xff]
        %v4561 = vld [vmem:[%s653 + $0x1660] sm:$0xff]
        %v4562 = vld [vmem:[%s653 + $0x1668] sm:$0xff]
        %v4563 = vld [vmem:[%s653 + $0x1670] sm:$0xff]
        %v4564 = vld [vmem:[%s653 + $0x1678] sm:$0xff]
        %v4565 = vld [vmem:[%s653 + $0x1680] sm:$0xff]
        %v4566 = vld [vmem:[%s653 + $0x1688] sm:$0xff]
        %v4567 = vld [vmem:[%s653 + $0x1690] sm:$0xff]
        %v4568 = vld [vmem:[%s653 + $0x1698] sm:$0xff]
        %v4569 = vld [vmem:[%s653 + $0x16a0] sm:$0xff]
        %v4570 = vld [vmem:[%s653 + $0x16a8] sm:$0xff]
        %v4571 = vld [vmem:[%s653 + $0x16b0] sm:$0xff]
        %v4572 = vld [vmem:[%s653 + $0x16b8] sm:$0xff]
        %v4573 = vld [vmem:[%s653 + $0x16c0] sm:$0xff]
        %v4574 = vld [vmem:[%s653 + $0x16c8] sm:$0xff]
        %v4575 = vld [vmem:[%s653 + $0x16d0] sm:$0xff]
        %v4576 = vld [vmem:[%s653 + $0x16d8] sm:$0xff]
        %v4577 = vld [vmem:[%s653 + $0x16e0] sm:$0xff]
        %v4578 = vld [vmem:[%s653 + $0x16e8] sm:$0xff]
        %v4579 = vld [vmem:[%s653 + $0x16f0] sm:$0xff]
        %v4580 = vld [vmem:[%s653 + $0x16f8] sm:$0xff]
        %v4581 = vld [vmem:[%s653 + $0x1700] sm:$0xff]
        %v4582 = vld [vmem:[%s653 + $0x1708] sm:$0xff]
        %v4583 = vld [vmem:[%s653 + $0x1710] sm:$0xff]
        %v4584 = vld [vmem:[%s653 + $0x1718] sm:$0xff]
        %v4585 = vld [vmem:[%s653 + $0x1720] sm:$0xff]
        %v4586 = vld [vmem:[%s653 + $0x1728] sm:$0xff]
        %v4587 = vld [vmem:[%s653 + $0x1730] sm:$0xff]
        %v4588 = vld [vmem:[%s653 + $0x1738] sm:$0xff]
        %v4589 = vld [vmem:[%s653 + $0x1740] sm:$0xff]
        %v4590 = vld [vmem:[%s653 + $0x1748] sm:$0xff]
        %v4591 = vld [vmem:[%s653 + $0x1750] sm:$0xff]
        %v4592 = vld [vmem:[%s653 + $0x1758] sm:$0xff]
        %v4593 = vld [vmem:[%s653 + $0x1760] sm:$0xff]
        %v4594 = vld [vmem:[%s653 + $0x1768] sm:$0xff]
        %v4595 = vld [vmem:[%s653 + $0x1770] sm:$0xff]
        %v4596 = vld [vmem:[%s653 + $0x1778] sm:$0xff]
        %v4597 = vld [vmem:[%s653 + $0x1780] sm:$0xff]
        %v4598 = vld [vmem:[%s653 + $0x1788] sm:$0xff]
        %v4599 = vld [vmem:[%s653 + $0x1790] sm:$0xff]
        %v4600 = vld [vmem:[%s653 + $0x1798] sm:$0xff]
        %v4601 = vld [vmem:[%s653 + $0x17a0] sm:$0xff]
        %v4602 = vld [vmem:[%s653 + $0x17a8] sm:$0xff]
        %v4603 = vld [vmem:[%s653 + $0x17b0] sm:$0xff]
        %v4604 = vld [vmem:[%s653 + $0x17b8] sm:$0xff]
        %v4605 = vld [vmem:[%s653 + $0x17c0] sm:$0xff]
        %v4606 = vld [vmem:[%s653 + $0x17c8] sm:$0xff]
        %v4607 = vld [vmem:[%s653 + $0x17d0] sm:$0xff]
        %v4608 = vld [vmem:[%s653 + $0x17d8] sm:$0xff]
        %v4609 = vld [vmem:[%s653 + $0x17e0] sm:$0xff]
        %v4610 = vld [vmem:[%s653 + $0x17e8] sm:$0xff]
        %v4611 = vld [vmem:[%s653 + $0x17f0] sm:$0xff]
        %v4612 = vld [vmem:[%s653 + $0x17f8] sm:$0xff]
        %v4613 = vld [vmem:[%s653 + $0x1800] sm:$0xff]
        %v4614 = vld [vmem:[%s653 + $0x1808] sm:$0xff]
        %v4615 = vld [vmem:[%s653 + $0x1810] sm:$0xff]
        %v4616 = vld [vmem:[%s653 + $0x1818] sm:$0xff]
        %v4617 = vld [vmem:[%s653 + $0x1820] sm:$0xff]
        %v4618 = vld [vmem:[%s653 + $0x1828] sm:$0xff]
        %v4619 = vld [vmem:[%s653 + $0x1830] sm:$0xff]
        %v4620 = vld [vmem:[%s653 + $0x1838] sm:$0xff]
        %v4621 = vld [vmem:[%s653 + $0x1840] sm:$0xff]
        %v4622 = vld [vmem:[%s653 + $0x1848] sm:$0xff]
        %v4623 = vld [vmem:[%s653 + $0x1850] sm:$0xff]
        %v4624 = vld [vmem:[%s653 + $0x1858] sm:$0xff]
        %v4625 = vld [vmem:[%s653 + $0x1860] sm:$0xff]
        %v4626 = vld [vmem:[%s653 + $0x1868] sm:$0xff]
        %v4627 = vld [vmem:[%s653 + $0x1870] sm:$0xff]
        %v4628 = vld [vmem:[%s653 + $0x1878] sm:$0xff]
        %v4629 = vld [vmem:[%s653 + $0x1880] sm:$0xff]
        %v4630 = vld [vmem:[%s653 + $0x1888] sm:$0xff]
        %v4631 = vld [vmem:[%s653 + $0x1890] sm:$0xff]
        %v4632 = vld [vmem:[%s653 + $0x1898] sm:$0xff]
        %v4633 = vld [vmem:[%s653 + $0x18a0] sm:$0xff]
        %v4634 = vld [vmem:[%s653 + $0x18a8] sm:$0xff]
        %v4635 = vld [vmem:[%s653 + $0x18b0] sm:$0xff]
        %v4636 = vld [vmem:[%s653 + $0x18b8] sm:$0xff]
        %v4637 = vld [vmem:[%s653 + $0x18c0] sm:$0xff]
        %v4638 = vld [vmem:[%s653 + $0x18c8] sm:$0xff]
        %v4639 = vld [vmem:[%s653 + $0x18d0] sm:$0xff]
        %v4640 = vld [vmem:[%s653 + $0x18d8] sm:$0xff]
        %v4641 = vld [vmem:[%s653 + $0x18e0] sm:$0xff]
        %v4642 = vld [vmem:[%s653 + $0x18e8] sm:$0xff]
        %v4643 = vld [vmem:[%s653 + $0x18f0] sm:$0xff]
        %v4644 = vld [vmem:[%s653 + $0x18f8] sm:$0xff]
        %v4645 = vld [vmem:[%s653 + $0x1900] sm:$0xff]
        %v4646 = vld [vmem:[%s653 + $0x1908] sm:$0xff]
        %v4647 = vld [vmem:[%s653 + $0x1910] sm:$0xff]
        %v4648 = vld [vmem:[%s653 + $0x1918] sm:$0xff]
        %v4649 = vld [vmem:[%s653 + $0x1920] sm:$0xff]
        %v4650 = vld [vmem:[%s653 + $0x1928] sm:$0xff]
        %v4651 = vld [vmem:[%s653 + $0x1930] sm:$0xff]
        %v4652 = vld [vmem:[%s653 + $0x1938] sm:$0xff]
        %v4653 = vld [vmem:[%s653 + $0x1940] sm:$0xff]
        %v4654 = vld [vmem:[%s653 + $0x1948] sm:$0xff]
        %v4655 = vld [vmem:[%s653 + $0x1950] sm:$0xff]
        %v4656 = vld [vmem:[%s653 + $0x1958] sm:$0xff]
        %v4657 = vld [vmem:[%s653 + $0x1960] sm:$0xff]
        %v4658 = vld [vmem:[%s653 + $0x1968] sm:$0xff]
        %v4659 = vld [vmem:[%s653 + $0x1970] sm:$0xff]
        %v4660 = vld [vmem:[%s653 + $0x1978] sm:$0xff]
        %v4661 = vld [vmem:[%s653 + $0x1980] sm:$0xff]
        %v4662 = vld [vmem:[%s653 + $0x1988] sm:$0xff]
        %v4663 = vld [vmem:[%s653 + $0x1990] sm:$0xff]
        %v4664 = vld [vmem:[%s653 + $0x1998] sm:$0xff]
        %v4665 = vld [vmem:[%s653 + $0x19a0] sm:$0xff]
        %v4666 = vld [vmem:[%s653 + $0x19a8] sm:$0xff]
        %v4667 = vld [vmem:[%s653 + $0x19b0] sm:$0xff]
        %v4668 = vld [vmem:[%s653 + $0x19b8] sm:$0xff]
        %v4669 = vld [vmem:[%s653 + $0x19c0] sm:$0xff]
        %v4670 = vld [vmem:[%s653 + $0x19c8] sm:$0xff]
        %v4671 = vld [vmem:[%s653 + $0x19d0] sm:$0xff]
        %v4672 = vld [vmem:[%s653 + $0x19d8] sm:$0xff]
        %v4673 = vld [vmem:[%s653 + $0x19e0] sm:$0xff]
        %v4674 = vld [vmem:[%s653 + $0x19e8] sm:$0xff]
        %v4675 = vld [vmem:[%s653 + $0x19f0] sm:$0xff]
        %v4676 = vld [vmem:[%s653 + $0x19f8] sm:$0xff]
        %v4677 = vld [vmem:[%s653 + $0x1a00] sm:$0xff]
        %v4678 = vld [vmem:[%s653 + $0x1a08] sm:$0xff]
        %v4679 = vld [vmem:[%s653 + $0x1a10] sm:$0xff]
        %v4680 = vld [vmem:[%s653 + $0x1a18] sm:$0xff]
        %v4681 = vld [vmem:[%s653 + $0x1a20] sm:$0xff]
        %v4682 = vld [vmem:[%s653 + $0x1a28] sm:$0xff]
        %v4683 = vld [vmem:[%s653 + $0x1a30] sm:$0xff]
        %v4684 = vld [vmem:[%s653 + $0x1a38] sm:$0xff]
        %v4685 = vld [vmem:[%s653 + $0x1a40] sm:$0xff]
        %v4686 = vld [vmem:[%s653 + $0x1a48] sm:$0xff]
        %v4687 = vld [vmem:[%s653 + $0x1a50] sm:$0xff]
        %v4688 = vld [vmem:[%s653 + $0x1a58] sm:$0xff]
        %v4689 = vld [vmem:[%s653 + $0x1a60] sm:$0xff]
        %v4690 = vld [vmem:[%s653 + $0x1a68] sm:$0xff]
        %v4691 = vld [vmem:[%s653 + $0x1a70] sm:$0xff]
        %v4692 = vld [vmem:[%s653 + $0x1a78] sm:$0xff]
        %v4693 = vld [vmem:[%s653 + $0x1a80] sm:$0xff]
        %v4694 = vld [vmem:[%s653 + $0x1a88] sm:$0xff]
        %v4695 = vld [vmem:[%s653 + $0x1a90] sm:$0xff]
        %v4696 = vld [vmem:[%s653 + $0x1a98] sm:$0xff]
        %v4697 = vld [vmem:[%s653 + $0x1aa0] sm:$0xff]
        %v4698 = vld [vmem:[%s653 + $0x1aa8] sm:$0xff]
        %v4699 = vld [vmem:[%s653 + $0x1ab0] sm:$0xff]
        %v4700 = vld [vmem:[%s653 + $0x1ab8] sm:$0xff]
        %v4701 = vld [vmem:[%s653 + $0x1ac0] sm:$0xff]
        %v4702 = vld [vmem:[%s653 + $0x1ac8] sm:$0xff]
        %v4703 = vld [vmem:[%s653 + $0x1ad0] sm:$0xff]
        %v4704 = vld [vmem:[%s653 + $0x1ad8] sm:$0xff]
        %v4705 = vld [vmem:[%s653 + $0x1ae0] sm:$0xff]
        %v4706 = vld [vmem:[%s653 + $0x1ae8] sm:$0xff]
        %v4707 = vld [vmem:[%s653 + $0x1af0] sm:$0xff]
        %v4708 = vld [vmem:[%s653 + $0x1af8] sm:$0xff]
        %v4709 = vld [vmem:[%s653 + $0x1b00] sm:$0xff]
        %v4710 = vld [vmem:[%s653 + $0x1b08] sm:$0xff]
        %v4711 = vld [vmem:[%s653 + $0x1b10] sm:$0xff]
        %v4712 = vld [vmem:[%s653 + $0x1b18] sm:$0xff]
        %v4713 = vld [vmem:[%s653 + $0x1b20] sm:$0xff]
        %v4714 = vld [vmem:[%s653 + $0x1b28] sm:$0xff]
        %v4715 = vld [vmem:[%s653 + $0x1b30] sm:$0xff]
        %v4716 = vld [vmem:[%s653 + $0x1b38] sm:$0xff]
        %v4717 = vld [vmem:[%s653 + $0x1b40] sm:$0xff]
        %v4718 = vld [vmem:[%s653 + $0x1b48] sm:$0xff]
        %v4719 = vld [vmem:[%s653 + $0x1b50] sm:$0xff]
        %v4720 = vld [vmem:[%s653 + $0x1b58] sm:$0xff]
        %v4721 = vld [vmem:[%s653 + $0x1b60] sm:$0xff]
        %v4722 = vld [vmem:[%s653 + $0x1b68] sm:$0xff]
        %v4723 = vld [vmem:[%s653 + $0x1b70] sm:$0xff]
        %v4724 = vld [vmem:[%s653 + $0x1b78] sm:$0xff]
        %v4725 = vld [vmem:[%s653 + $0x1b80] sm:$0xff]
        %v4726 = vld [vmem:[%s653 + $0x1b88] sm:$0xff]
        %v4727 = vld [vmem:[%s653 + $0x1b90] sm:$0xff]
        %v4728 = vld [vmem:[%s653 + $0x1b98] sm:$0xff]
        %v4729 = vld [vmem:[%s653 + $0x1ba0] sm:$0xff]
        %v4730 = vld [vmem:[%s653 + $0x1ba8] sm:$0xff]
        %v4731 = vld [vmem:[%s653 + $0x1bb0] sm:$0xff]
        %v4732 = vld [vmem:[%s653 + $0x1bb8] sm:$0xff]
        %v4733 = vld [vmem:[%s653 + $0x1bc0] sm:$0xff]
        %v4734 = vld [vmem:[%s653 + $0x1bc8] sm:$0xff]
        %v4735 = vld [vmem:[%s653 + $0x1bd0] sm:$0xff]
        %v4736 = vld [vmem:[%s653 + $0x1bd8] sm:$0xff]
        %v4737 = vld [vmem:[%s653 + $0x1be0] sm:$0xff]
        %v4738 = vld [vmem:[%s653 + $0x1be8] sm:$0xff]
        %v4739 = vld [vmem:[%s653 + $0x1bf0] sm:$0xff]
        %v4740 = vld [vmem:[%s653 + $0x1bf8] sm:$0xff]
        %v4741 = vld [vmem:[%s653 + $0x1c00] sm:$0xff]
        %v4742 = vld [vmem:[%s653 + $0x1c08] sm:$0xff]
        %v4743 = vld [vmem:[%s653 + $0x1c10] sm:$0xff]
        %v4744 = vld [vmem:[%s653 + $0x1c18] sm:$0xff]
        %v4745 = vld [vmem:[%s653 + $0x1c20] sm:$0xff]
        %v4746 = vld [vmem:[%s653 + $0x1c28] sm:$0xff]
        %v4747 = vld [vmem:[%s653 + $0x1c30] sm:$0xff]
        %v4748 = vld [vmem:[%s653 + $0x1c38] sm:$0xff]
        %v4749 = vld [vmem:[%s653 + $0x1c40] sm:$0xff]
        %v4750 = vld [vmem:[%s653 + $0x1c48] sm:$0xff]
        %v4751 = vld [vmem:[%s653 + $0x1c50] sm:$0xff]
        %v4752 = vld [vmem:[%s653 + $0x1c58] sm:$0xff]
        %v4753 = vld [vmem:[%s653 + $0x1c60] sm:$0xff]
        %v4754 = vld [vmem:[%s653 + $0x1c68] sm:$0xff]
        %v4755 = vld [vmem:[%s653 + $0x1c70] sm:$0xff]
        %v4756 = vld [vmem:[%s653 + $0x1c78] sm:$0xff]
        %v4757 = vld [vmem:[%s653 + $0x1c80] sm:$0xff]
        %v4758 = vld [vmem:[%s653 + $0x1c88] sm:$0xff]
        %v4759 = vld [vmem:[%s653 + $0x1c90] sm:$0xff]
        %v4760 = vld [vmem:[%s653 + $0x1c98] sm:$0xff]
        %v4761 = vld [vmem:[%s653 + $0x1ca0] sm:$0xff]
        %v4762 = vld [vmem:[%s653 + $0x1ca8] sm:$0xff]
        %v4763 = vld [vmem:[%s653 + $0x1cb0] sm:$0xff]
        %v4764 = vld [vmem:[%s653 + $0x1cb8] sm:$0xff]
        %v4765 = vld [vmem:[%s653 + $0x1cc0] sm:$0xff]
        %v4766 = vld [vmem:[%s653 + $0x1cc8] sm:$0xff]
        %v4767 = vld [vmem:[%s653 + $0x1cd0] sm:$0xff]
        %v4768 = vld [vmem:[%s653 + $0x1cd8] sm:$0xff]
        %v4769 = vld [vmem:[%s653 + $0x1ce0] sm:$0xff]
        %v4770 = vld [vmem:[%s653 + $0x1ce8] sm:$0xff]
        %v4771 = vld [vmem:[%s653 + $0x1cf0] sm:$0xff]
        %v4772 = vld [vmem:[%s653 + $0x1cf8] sm:$0xff]
        %v4773 = vld [vmem:[%s653 + $0x1d00] sm:$0xff]
        %v4774 = vld [vmem:[%s653 + $0x1d08] sm:$0xff]
        %v4775 = vld [vmem:[%s653 + $0x1d10] sm:$0xff]
        %v4776 = vld [vmem:[%s653 + $0x1d18] sm:$0xff]
        %v4777 = vld [vmem:[%s653 + $0x1d20] sm:$0xff]
        %v4778 = vld [vmem:[%s653 + $0x1d28] sm:$0xff]
        %v4779 = vld [vmem:[%s653 + $0x1d30] sm:$0xff]
        %v4780 = vld [vmem:[%s653 + $0x1d38] sm:$0xff]
        %v4781 = vld [vmem:[%s653 + $0x1d40] sm:$0xff]
        %v4782 = vld [vmem:[%s653 + $0x1d48] sm:$0xff]
        %v4783 = vld [vmem:[%s653 + $0x1d50] sm:$0xff]
        %v4784 = vld [vmem:[%s653 + $0x1d58] sm:$0xff]
        %v4785 = vld [vmem:[%s653 + $0x1d60] sm:$0xff]
        %v4786 = vld [vmem:[%s653 + $0x1d68] sm:$0xff]
        %v4787 = vld [vmem:[%s653 + $0x1d70] sm:$0xff]
        %v4788 = vld [vmem:[%s653 + $0x1d78] sm:$0xff]
        %v4789 = vld [vmem:[%s653 + $0x1d80] sm:$0xff]
        %v4790 = vld [vmem:[%s653 + $0x1d88] sm:$0xff]
        %v4791 = vld [vmem:[%s653 + $0x1d90] sm:$0xff]
        %v4792 = vld [vmem:[%s653 + $0x1d98] sm:$0xff]
        %v4793 = vld [vmem:[%s653 + $0x1da0] sm:$0xff]
        %v4794 = vld [vmem:[%s653 + $0x1da8] sm:$0xff]
        %v4795 = vld [vmem:[%s653 + $0x1db0] sm:$0xff]
        %v4796 = vld [vmem:[%s653 + $0x1db8] sm:$0xff]
        %v4797 = vld [vmem:[%s653 + $0x1dc0] sm:$0xff]
        %v4798 = vld [vmem:[%s653 + $0x1dc8] sm:$0xff]
        %v4799 = vld [vmem:[%s653 + $0x1dd0] sm:$0xff]
        %v4800 = vld [vmem:[%s653 + $0x1dd8] sm:$0xff]
        %v4801 = vld [vmem:[%s653 + $0x1de0] sm:$0xff]
        %v4802 = vld [vmem:[%s653 + $0x1de8] sm:$0xff]
        %v4803 = vld [vmem:[%s653 + $0x1df0] sm:$0xff]
        %v4804 = vld [vmem:[%s653 + $0x1df8] sm:$0xff]
        %v4805 = vld [vmem:[%s653 + $0x1e00] sm:$0xff]
        %v4806 = vld [vmem:[%s653 + $0x1e08] sm:$0xff]
        %v4807 = vld [vmem:[%s653 + $0x1e10] sm:$0xff]
        %v4808 = vld [vmem:[%s653 + $0x1e18] sm:$0xff]
        %v4809 = vld [vmem:[%s653 + $0x1e20] sm:$0xff]
        %v4810 = vld [vmem:[%s653 + $0x1e28] sm:$0xff]
        %v4811 = vld [vmem:[%s653 + $0x1e30] sm:$0xff]
        %v4812 = vld [vmem:[%s653 + $0x1e38] sm:$0xff]
        %v4813 = vld [vmem:[%s653 + $0x1e40] sm:$0xff]
        %v4814 = vld [vmem:[%s653 + $0x1e48] sm:$0xff]
        %v4815 = vld [vmem:[%s653 + $0x1e50] sm:$0xff]
        %v4816 = vld [vmem:[%s653 + $0x1e58] sm:$0xff]
        %v4817 = vld [vmem:[%s653 + $0x1e60] sm:$0xff]
        %v4818 = vld [vmem:[%s653 + $0x1e68] sm:$0xff]
        %v4819 = vld [vmem:[%s653 + $0x1e70] sm:$0xff]
        %v4820 = vld [vmem:[%s653 + $0x1e78] sm:$0xff]
        %v4821 = vld [vmem:[%s653 + $0x1e80] sm:$0xff]
        %v4822 = vld [vmem:[%s653 + $0x1e88] sm:$0xff]
        %v4823 = vld [vmem:[%s653 + $0x1e90] sm:$0xff]
        %v4824 = vld [vmem:[%s653 + $0x1e98] sm:$0xff]
        %v4825 = vld [vmem:[%s653 + $0x1ea0] sm:$0xff]
        %v4826 = vld [vmem:[%s653 + $0x1ea8] sm:$0xff]
        %v4827 = vld [vmem:[%s653 + $0x1eb0] sm:$0xff]
        %v4828 = vld [vmem:[%s653 + $0x1eb8] sm:$0xff]
        %v4829 = vld [vmem:[%s653 + $0x1ec0] sm:$0xff]
        %v4830 = vld [vmem:[%s653 + $0x1ec8] sm:$0xff]
        %v4831 = vld [vmem:[%s653 + $0x1ed0] sm:$0xff]
        %v4832 = vld [vmem:[%s653 + $0x1ed8] sm:$0xff]
        %v4833 = vld [vmem:[%s653 + $0x1ee0] sm:$0xff]
        %v4834 = vld [vmem:[%s653 + $0x1ee8] sm:$0xff]
        %v4835 = vld [vmem:[%s653 + $0x1ef0] sm:$0xff]
        %v4836 = vld [vmem:[%s653 + $0x1ef8] sm:$0xff]
        %v4837 = vld [vmem:[%s653 + $0x1f00] sm:$0xff]
        %v4838 = vld [vmem:[%s653 + $0x1f08] sm:$0xff]
        %v4839 = vld [vmem:[%s653 + $0x1f10] sm:$0xff]
        %v4840 = vld [vmem:[%s653 + $0x1f18] sm:$0xff]
        %v4841 = vld [vmem:[%s653 + $0x1f20] sm:$0xff]
        %v4842 = vld [vmem:[%s653 + $0x1f28] sm:$0xff]
        %v4843 = vld [vmem:[%s653 + $0x1f30] sm:$0xff]
        %v4844 = vld [vmem:[%s653 + $0x1f38] sm:$0xff]
        %v4845 = vld [vmem:[%s653 + $0x1f40] sm:$0xff]
        %v4846 = vld [vmem:[%s653 + $0x1f48] sm:$0xff]
        %v4847 = vld [vmem:[%s653 + $0x1f50] sm:$0xff]
        %v4848 = vld [vmem:[%s653 + $0x1f58] sm:$0xff]
        %v4849 = vld [vmem:[%s653 + $0x1f60] sm:$0xff]
        %v4850 = vld [vmem:[%s653 + $0x1f68] sm:$0xff]
        %v4851 = vld [vmem:[%s653 + $0x1f70] sm:$0xff]
        %v4852 = vld [vmem:[%s653 + $0x1f78] sm:$0xff]
        %v4853 = vld [vmem:[%s653 + $0x1f80] sm:$0xff]
        %v4854 = vld [vmem:[%s653 + $0x1f88] sm:$0xff]
        %v4855 = vld [vmem:[%s653 + $0x1f90] sm:$0xff]
        %v4856 = vld [vmem:[%s653 + $0x1f98] sm:$0xff]
        %v4857 = vld [vmem:[%s653 + $0x1fa0] sm:$0xff]
        %v4858 = vld [vmem:[%s653 + $0x1fa8] sm:$0xff]
        %v4859 = vld [vmem:[%s653 + $0x1fb0] sm:$0xff]
        %v4860 = vld [vmem:[%s653 + $0x1fb8] sm:$0xff]
        %v4861 = vld [vmem:[%s653 + $0x1fc0] sm:$0xff]
        %v4862 = vld [vmem:[%s653 + $0x1fc8] sm:$0xff]
        %v4863 = vld [vmem:[%s653 + $0x1fd0] sm:$0xff]
        %v4864 = vld [vmem:[%s653 + $0x1fd8] sm:$0xff]
        %v4865 = vld [vmem:[%s653 + $0x1fe0] sm:$0xff]
        %v4866 = vld [vmem:[%s653 + $0x1fe8] sm:$0xff]
        %v4867 = vld [vmem:[%s653 + $0x1ff0] sm:$0xff]
        %v4868 = vld [vmem:[%s653 + $0x1ff8] sm:$0xff]
        %v4869 = vld [vmem:[%s662] sm:$0xff]
        %v4870 = vld [vmem:[%s662 + $0x8] sm:$0xff]
        %v4873 = vlaneseq
        %v4874 = vshrl.u32 %v4873, 7
        %v4875 = vsub.s32 0, %v4874
        %v4876 = vrot.slane %v4869, %v4875
        %v4877 = vlaneseq
        %v4878 = vshrl.u32 %v4877, 7
        %v4879 = vsub.s32 1, %v4878
        %v4880 = vrot.slane %v4869, %v4879
        %v4881 = vlaneseq
        %v4882 = vshrl.u32 %v4881, 7
        %v4883 = vsub.s32 2, %v4882
        %v4884 = vrot.slane %v4869, %v4883
        %v4885 = vlaneseq
        %v4886 = vshrl.u32 %v4885, 7
        %v4887 = vsub.s32 3, %v4886
        %v4888 = vrot.slane %v4869, %v4887
        %v4889 = vlaneseq
        %v4890 = vshrl.u32 %v4889, 7
        %v4891 = vsub.s32 4, %v4890
        %v4892 = vrot.slane %v4869, %v4891
        %v4893 = vlaneseq
        %v4894 = vshrl.u32 %v4893, 7
        %v4895 = vsub.s32 5, %v4894
        %v4896 = vrot.slane %v4869, %v4895
        %v4897 = vlaneseq
        %v4898 = vshrl.u32 %v4897, 7
        %v4899 = vsub.s32 6, %v4898
        %v4900 = vrot.slane %v4869, %v4899
        %v4901 = vlaneseq
        %v4902 = vshrl.u32 %v4901, 7
        %v4903 = vsub.s32 7, %v4902
        %v4904 = vrot.slane %v4869, %v4903
        %v4905 = vlaneseq
        %v4906 = vshrl.u32 %v4905, 7
        %v4907 = vsub.s32 0, %v4906
        %v4908 = vrot.slane %v4870, %v4907
        %v4909 = vlaneseq
        %v4910 = vshrl.u32 %v4909, 7
        %v4911 = vsub.s32 1, %v4910
        %v4912 = vrot.slane %v4870, %v4911
        %v4913 = vlaneseq
        %v4914 = vshrl.u32 %v4913, 7
        %v4915 = vsub.s32 2, %v4914
        %v4916 = vrot.slane %v4870, %v4915
        %v4917 = vlaneseq
        %v4918 = vshrl.u32 %v4917, 7
        %v4919 = vsub.s32 3, %v4918
        %v4920 = vrot.slane %v4870, %v4919
        %v4921 = vlaneseq
        %v4922 = vshrl.u32 %v4921, 7
        %v4923 = vsub.s32 4, %v4922
        %v4924 = vrot.slane %v4870, %v4923
        %v4925 = vlaneseq
        %v4926 = vshrl.u32 %v4925, 7
        %v4927 = vsub.s32 5, %v4926
        %v4928 = vrot.slane %v4870, %v4927
        %v4929 = vlaneseq
        %v4930 = vshrl.u32 %v4929, 7
        %v4931 = vsub.s32 6, %v4930
        %v4932 = vrot.slane %v4870, %v4931
        %v4933 = vlaneseq
        %v4934 = vshrl.u32 %v4933, 7
        %v4935 = vsub.s32 7, %v4934
        %v4936 = vrot.slane %v4870, %v4935
        %v4955 = vcombine.high %v3843, %v3843
        %v4957 = vunpack.c.l.s4 1983009808
        %v4958 = vunpack.c.0.s8 %v4957
        %v4959 = vlaneseq
        %v4960 = vshrl.u32 %v4959, 7
        %v4961 = vsub.s32 %v4958, %v4960
        %v4962 = vrot.slane %v3843, %v4961
        %v4964 = vunpack.c.l.s4 1983009808
        %v4965 = vunpack.c.0.s8 %v4964
        %v4966 = vlaneseq
        %v4967 = vshrl.u32 %v4966, 7
        %v4968 = vsub.s32 %v4965, %v4967
        %v4969 = vrot.slane %v4955, %v4968
        %v4970 = vcombine.high %v4962, %v4962
        %v4971 = vcombine.high %v4969, %v4969
        %v4972 = vcombine.high %v3844, %v3844
        %v4974 = vunpack.c.l.s4 1983009808
        %v4975 = vunpack.c.0.s8 %v4974
        %v4976 = vlaneseq
        %v4977 = vshrl.u32 %v4976, 7
        %v4978 = vsub.s32 %v4975, %v4977
        %v4979 = vrot.slane %v3844, %v4978
        %v4981 = vunpack.c.l.s4 1983009808
        %v4982 = vunpack.c.0.s8 %v4981
        %v4983 = vlaneseq
        %v4984 = vshrl.u32 %v4983, 7
        %v4985 = vsub.s32 %v4982, %v4984
        %v4986 = vrot.slane %v4972, %v4985
        %v4987 = vcombine.high %v4979, %v4979
        %v4988 = vcombine.high %v4986, %v4986
        %v6021 = vunpack.c.l.b16 %v3845
        %v6022 = vunpack.c.h.b16 %v3845
        %v6023 = vunpack.c.l.b16 %v3846
        %v6024 = vunpack.c.h.b16 %v3846
        %v6025 = vunpack.c.l.b16 %v3847
        %v6026 = vunpack.c.h.b16 %v3847
        %v6027 = vunpack.c.l.b16 %v3848
        %v6028 = vunpack.c.h.b16 %v3848
        %v6029 = vunpack.c.l.b16 %v3849
        %v6030 = vunpack.c.h.b16 %v3849
        %v6031 = vunpack.c.l.b16 %v3850
        %v6032 = vunpack.c.h.b16 %v3850
        %v6033 = vunpack.c.l.b16 %v3851
        %v6034 = vunpack.c.h.b16 %v3851
        %v6035 = vunpack.c.l.b16 %v3852
        %v6036 = vunpack.c.h.b16 %v3852
        %v6037 = vunpack.c.l.b16 %v3853
        %v6038 = vunpack.c.h.b16 %v3853
        %v6039 = vunpack.c.l.b16 %v3854
        %v6040 = vunpack.c.h.b16 %v3854
        %v6041 = vunpack.c.l.b16 %v3855
        %v6042 = vunpack.c.h.b16 %v3855
        %v6043 = vunpack.c.l.b16 %v3856
        %v6044 = vunpack.c.h.b16 %v3856
        %v6045 = vunpack.c.l.b16 %v3857
        %v6046 = vunpack.c.h.b16 %v3857
        %v6047 = vunpack.c.l.b16 %v3858
        %v6048 = vunpack.c.h.b16 %v3858
        %v6049 = vunpack.c.l.b16 %v3859
        %v6050 = vunpack.c.h.b16 %v3859
        %v6051 = vunpack.c.l.b16 %v3860
        %v6052 = vunpack.c.h.b16 %v3860
        %v6053 = vunpack.c.l.b16 %v3861
        %v6054 = vunpack.c.h.b16 %v3861
        %v6055 = vunpack.c.l.b16 %v3862
        %v6056 = vunpack.c.h.b16 %v3862
        %v6057 = vunpack.c.l.b16 %v3863
        %v6058 = vunpack.c.h.b16 %v3863
        %v6059 = vunpack.c.l.b16 %v3864
        %v6060 = vunpack.c.h.b16 %v3864
        %v6061 = vunpack.c.l.b16 %v3865
        %v6062 = vunpack.c.h.b16 %v3865
        %v6063 = vunpack.c.l.b16 %v3866
        %v6064 = vunpack.c.h.b16 %v3866
        %v6065 = vunpack.c.l.b16 %v3867
        %v6066 = vunpack.c.h.b16 %v3867
        %v6067 = vunpack.c.l.b16 %v3868
        %v6068 = vunpack.c.h.b16 %v3868
        %v6069 = vunpack.c.l.b16 %v3869
        %v6070 = vunpack.c.h.b16 %v3869
        %v6071 = vunpack.c.l.b16 %v3870
        %v6072 = vunpack.c.h.b16 %v3870
        %v6073 = vunpack.c.l.b16 %v3871
        %v6074 = vunpack.c.h.b16 %v3871
        %v6075 = vunpack.c.l.b16 %v3872
        %v6076 = vunpack.c.h.b16 %v3872
        %v6077 = vunpack.c.l.b16 %v3873
        %v6078 = vunpack.c.h.b16 %v3873
        %v6079 = vunpack.c.l.b16 %v3874
        %v6080 = vunpack.c.h.b16 %v3874
        %v6081 = vunpack.c.l.b16 %v3875
        %v6082 = vunpack.c.h.b16 %v3875
        %v6083 = vunpack.c.l.b16 %v3876
        %v6084 = vunpack.c.h.b16 %v3876
        %v6085 = vunpack.c.l.b16 %v3877
        %v6086 = vunpack.c.h.b16 %v3877
        %v6087 = vunpack.c.l.b16 %v3878
        %v6088 = vunpack.c.h.b16 %v3878
        %v6089 = vunpack.c.l.b16 %v3879
        %v6090 = vunpack.c.h.b16 %v3879
        %v6091 = vunpack.c.l.b16 %v3880
        %v6092 = vunpack.c.h.b16 %v3880
        %v6093 = vunpack.c.l.b16 %v3881
        %v6094 = vunpack.c.h.b16 %v3881
        %v6095 = vunpack.c.l.b16 %v3882
        %v6096 = vunpack.c.h.b16 %v3882
        %v6097 = vunpack.c.l.b16 %v3883
        %v6098 = vunpack.c.h.b16 %v3883
        %v6099 = vunpack.c.l.b16 %v3884
        %v6100 = vunpack.c.h.b16 %v3884
        %v6101 = vunpack.c.l.b16 %v3885
        %v6102 = vunpack.c.h.b16 %v3885
        %v6103 = vunpack.c.l.b16 %v3886
        %v6104 = vunpack.c.h.b16 %v3886
        %v6105 = vunpack.c.l.b16 %v3887
        %v6106 = vunpack.c.h.b16 %v3887
        %v6107 = vunpack.c.l.b16 %v3888
        %v6108 = vunpack.c.h.b16 %v3888
        %v6109 = vunpack.c.l.b16 %v3889
        %v6110 = vunpack.c.h.b16 %v3889
        %v6111 = vunpack.c.l.b16 %v3890
        %v6112 = vunpack.c.h.b16 %v3890
        %v6113 = vunpack.c.l.b16 %v3891
        %v6114 = vunpack.c.h.b16 %v3891
        %v6115 = vunpack.c.l.b16 %v3892
        %v6116 = vunpack.c.h.b16 %v3892
        %v6117 = vunpack.c.l.b16 %v3893
        %v6118 = vunpack.c.h.b16 %v3893
        %v6119 = vunpack.c.l.b16 %v3894
        %v6120 = vunpack.c.h.b16 %v3894
        %v6121 = vunpack.c.l.b16 %v3895
        %v6122 = vunpack.c.h.b16 %v3895
        %v6123 = vunpack.c.l.b16 %v3896
        %v6124 = vunpack.c.h.b16 %v3896
        %v6125 = vunpack.c.l.b16 %v3897
        %v6126 = vunpack.c.h.b16 %v3897
        %v6127 = vunpack.c.l.b16 %v3898
        %v6128 = vunpack.c.h.b16 %v3898
        %v6129 = vunpack.c.l.b16 %v3899
        %v6130 = vunpack.c.h.b16 %v3899
        %v6131 = vunpack.c.l.b16 %v3900
        %v6132 = vunpack.c.h.b16 %v3900
        %v6133 = vunpack.c.l.b16 %v3901
        %v6134 = vunpack.c.h.b16 %v3901
        %v6135 = vunpack.c.l.b16 %v3902
        %v6136 = vunpack.c.h.b16 %v3902
        %v6137 = vunpack.c.l.b16 %v3903
        %v6138 = vunpack.c.h.b16 %v3903
        %v6139 = vunpack.c.l.b16 %v3904
        %v6140 = vunpack.c.h.b16 %v3904
        %v6141 = vunpack.c.l.b16 %v3905
        %v6142 = vunpack.c.h.b16 %v3905
        %v6143 = vunpack.c.l.b16 %v3906
        %v6144 = vunpack.c.h.b16 %v3906
        %v6145 = vunpack.c.l.b16 %v3907
        %v6146 = vunpack.c.h.b16 %v3907
        %v6147 = vunpack.c.l.b16 %v3908
        %v6148 = vunpack.c.h.b16 %v3908
        %v6149 = vunpack.c.l.b16 %v3909
        %v6150 = vunpack.c.h.b16 %v3909
        %v6151 = vunpack.c.l.b16 %v3910
        %v6152 = vunpack.c.h.b16 %v3910
        %v6153 = vunpack.c.l.b16 %v3911
        %v6154 = vunpack.c.h.b16 %v3911
        %v6155 = vunpack.c.l.b16 %v3912
        %v6156 = vunpack.c.h.b16 %v3912
        %v6157 = vunpack.c.l.b16 %v3913
        %v6158 = vunpack.c.h.b16 %v3913
        %v6159 = vunpack.c.l.b16 %v3914
        %v6160 = vunpack.c.h.b16 %v3914
        %v6161 = vunpack.c.l.b16 %v3915
        %v6162 = vunpack.c.h.b16 %v3915
        %v6163 = vunpack.c.l.b16 %v3916
        %v6164 = vunpack.c.h.b16 %v3916
        %v6165 = vunpack.c.l.b16 %v3917
        %v6166 = vunpack.c.h.b16 %v3917
        %v6167 = vunpack.c.l.b16 %v3918
        %v6168 = vunpack.c.h.b16 %v3918
        %v6169 = vunpack.c.l.b16 %v3919
        %v6170 = vunpack.c.h.b16 %v3919
        %v6171 = vunpack.c.l.b16 %v3920
        %v6172 = vunpack.c.h.b16 %v3920
        %v6173 = vunpack.c.l.b16 %v3921
        %v6174 = vunpack.c.h.b16 %v3921
        %v6175 = vunpack.c.l.b16 %v3922
        %v6176 = vunpack.c.h.b16 %v3922
        %v6177 = vunpack.c.l.b16 %v3923
        %v6178 = vunpack.c.h.b16 %v3923
        %v6179 = vunpack.c.l.b16 %v3924
        %v6180 = vunpack.c.h.b16 %v3924
        %v6181 = vunpack.c.l.b16 %v3925
        %v6182 = vunpack.c.h.b16 %v3925
        %v6183 = vunpack.c.l.b16 %v3926
        %v6184 = vunpack.c.h.b16 %v3926
        %v6185 = vunpack.c.l.b16 %v3927
        %v6186 = vunpack.c.h.b16 %v3927
        %v6187 = vunpack.c.l.b16 %v3928
        %v6188 = vunpack.c.h.b16 %v3928
        %v6189 = vunpack.c.l.b16 %v3929
        %v6190 = vunpack.c.h.b16 %v3929
        %v6191 = vunpack.c.l.b16 %v3930
        %v6192 = vunpack.c.h.b16 %v3930
        %v6193 = vunpack.c.l.b16 %v3931
        %v6194 = vunpack.c.h.b16 %v3931
        %v6195 = vunpack.c.l.b16 %v3932
        %v6196 = vunpack.c.h.b16 %v3932
        %v6197 = vunpack.c.l.b16 %v3933
        %v6198 = vunpack.c.h.b16 %v3933
        %v6199 = vunpack.c.l.b16 %v3934
        %v6200 = vunpack.c.h.b16 %v3934
        %v6201 = vunpack.c.l.b16 %v3935
        %v6202 = vunpack.c.h.b16 %v3935
        %v6203 = vunpack.c.l.b16 %v3936
        %v6204 = vunpack.c.h.b16 %v3936
        %v6205 = vunpack.c.l.b16 %v3937
        %v6206 = vunpack.c.h.b16 %v3937
        %v6207 = vunpack.c.l.b16 %v3938
        %v6208 = vunpack.c.h.b16 %v3938
        %v6209 = vunpack.c.l.b16 %v3939
        %v6210 = vunpack.c.h.b16 %v3939
        %v6211 = vunpack.c.l.b16 %v3940
        %v6212 = vunpack.c.h.b16 %v3940
        %v6213 = vunpack.c.l.b16 %v3941
        %v6214 = vunpack.c.h.b16 %v3941
        %v6215 = vunpack.c.l.b16 %v3942
        %v6216 = vunpack.c.h.b16 %v3942
        %v6217 = vunpack.c.l.b16 %v3943
        %v6218 = vunpack.c.h.b16 %v3943
        %v6219 = vunpack.c.l.b16 %v3944
        %v6220 = vunpack.c.h.b16 %v3944
        %v6221 = vunpack.c.l.b16 %v3945
        %v6222 = vunpack.c.h.b16 %v3945
        %v6223 = vunpack.c.l.b16 %v3946
        %v6224 = vunpack.c.h.b16 %v3946
        %v6225 = vunpack.c.l.b16 %v3947
        %v6226 = vunpack.c.h.b16 %v3947
        %v6227 = vunpack.c.l.b16 %v3948
        %v6228 = vunpack.c.h.b16 %v3948
        %v6229 = vunpack.c.l.b16 %v3949
        %v6230 = vunpack.c.h.b16 %v3949
        %v6231 = vunpack.c.l.b16 %v3950
        %v6232 = vunpack.c.h.b16 %v3950
        %v6233 = vunpack.c.l.b16 %v3951
        %v6234 = vunpack.c.h.b16 %v3951
        %v6235 = vunpack.c.l.b16 %v3952
        %v6236 = vunpack.c.h.b16 %v3952
        %v6237 = vunpack.c.l.b16 %v3953
        %v6238 = vunpack.c.h.b16 %v3953
        %v6239 = vunpack.c.l.b16 %v3954
        %v6240 = vunpack.c.h.b16 %v3954
        %v6241 = vunpack.c.l.b16 %v3955
        %v6242 = vunpack.c.h.b16 %v3955
        %v6243 = vunpack.c.l.b16 %v3956
        %v6244 = vunpack.c.h.b16 %v3956
        %v6245 = vunpack.c.l.b16 %v3957
        %v6246 = vunpack.c.h.b16 %v3957
        %v6247 = vunpack.c.l.b16 %v3958
        %v6248 = vunpack.c.h.b16 %v3958
        %v6249 = vunpack.c.l.b16 %v3959
        %v6250 = vunpack.c.h.b16 %v3959
        %v6251 = vunpack.c.l.b16 %v3960
        %v6252 = vunpack.c.h.b16 %v3960
        %v6253 = vunpack.c.l.b16 %v3961
        %v6254 = vunpack.c.h.b16 %v3961
        %v6255 = vunpack.c.l.b16 %v3962
        %v6256 = vunpack.c.h.b16 %v3962
        %v6257 = vunpack.c.l.b16 %v3963
        %v6258 = vunpack.c.h.b16 %v3963
        %v6259 = vunpack.c.l.b16 %v3964
        %v6260 = vunpack.c.h.b16 %v3964
        %v6261 = vunpack.c.l.b16 %v3965
        %v6262 = vunpack.c.h.b16 %v3965
        %v6263 = vunpack.c.l.b16 %v3966
        %v6264 = vunpack.c.h.b16 %v3966
        %v6265 = vunpack.c.l.b16 %v3967
        %v6266 = vunpack.c.h.b16 %v3967
        %v6267 = vunpack.c.l.b16 %v3968
        %v6268 = vunpack.c.h.b16 %v3968
        %v6269 = vunpack.c.l.b16 %v3969
        %v6270 = vunpack.c.h.b16 %v3969
        %v6271 = vunpack.c.l.b16 %v3970
        %v6272 = vunpack.c.h.b16 %v3970
        %v6273 = vunpack.c.l.b16 %v3971
        %v6274 = vunpack.c.h.b16 %v3971
        %v6275 = vunpack.c.l.b16 %v3972
        %v6276 = vunpack.c.h.b16 %v3972
        %v6277 = vunpack.c.l.b16 %v3973
        %v6278 = vunpack.c.h.b16 %v3973
        %v6279 = vunpack.c.l.b16 %v3974
        %v6280 = vunpack.c.h.b16 %v3974
        %v6281 = vunpack.c.l.b16 %v3975
        %v6282 = vunpack.c.h.b16 %v3975
        %v6283 = vunpack.c.l.b16 %v3976
        %v6284 = vunpack.c.h.b16 %v3976
        %v6285 = vunpack.c.l.b16 %v3977
        %v6286 = vunpack.c.h.b16 %v3977
        %v6287 = vunpack.c.l.b16 %v3978
        %v6288 = vunpack.c.h.b16 %v3978
        %v6289 = vunpack.c.l.b16 %v3979
        %v6290 = vunpack.c.h.b16 %v3979
        %v6291 = vunpack.c.l.b16 %v3980
        %v6292 = vunpack.c.h.b16 %v3980
        %v6293 = vunpack.c.l.b16 %v3981
        %v6294 = vunpack.c.h.b16 %v3981
        %v6295 = vunpack.c.l.b16 %v3982
        %v6296 = vunpack.c.h.b16 %v3982
        %v6297 = vunpack.c.l.b16 %v3983
        %v6298 = vunpack.c.h.b16 %v3983
        %v6299 = vunpack.c.l.b16 %v3984
        %v6300 = vunpack.c.h.b16 %v3984
        %v6301 = vunpack.c.l.b16 %v3985
        %v6302 = vunpack.c.h.b16 %v3985
        %v6303 = vunpack.c.l.b16 %v3986
        %v6304 = vunpack.c.h.b16 %v3986
        %v6305 = vunpack.c.l.b16 %v3987
        %v6306 = vunpack.c.h.b16 %v3987
        %v6307 = vunpack.c.l.b16 %v3988
        %v6308 = vunpack.c.h.b16 %v3988
        %v6309 = vunpack.c.l.b16 %v3989
        %v6310 = vunpack.c.h.b16 %v3989
        %v6311 = vunpack.c.l.b16 %v3990
        %v6312 = vunpack.c.h.b16 %v3990
        %v6313 = vunpack.c.l.b16 %v3991
        %v6314 = vunpack.c.h.b16 %v3991
        %v6315 = vunpack.c.l.b16 %v3992
        %v6316 = vunpack.c.h.b16 %v3992
        %v6317 = vunpack.c.l.b16 %v3993
        %v6318 = vunpack.c.h.b16 %v3993
        %v6319 = vunpack.c.l.b16 %v3994
        %v6320 = vunpack.c.h.b16 %v3994
        %v6321 = vunpack.c.l.b16 %v3995
        %v6322 = vunpack.c.h.b16 %v3995
        %v6323 = vunpack.c.l.b16 %v3996
        %v6324 = vunpack.c.h.b16 %v3996
        %v6325 = vunpack.c.l.b16 %v3997
        %v6326 = vunpack.c.h.b16 %v3997
        %v6327 = vunpack.c.l.b16 %v3998
        %v6328 = vunpack.c.h.b16 %v3998
        %v6329 = vunpack.c.l.b16 %v3999
        %v6330 = vunpack.c.h.b16 %v3999
        %v6331 = vunpack.c.l.b16 %v4000
        %v6332 = vunpack.c.h.b16 %v4000
        %v6333 = vunpack.c.l.b16 %v4001
        %v6334 = vunpack.c.h.b16 %v4001
        %v6335 = vunpack.c.l.b16 %v4002
        %v6336 = vunpack.c.h.b16 %v4002
        %v6337 = vunpack.c.l.b16 %v4003
        %v6338 = vunpack.c.h.b16 %v4003
        %v6339 = vunpack.c.l.b16 %v4004
        %v6340 = vunpack.c.h.b16 %v4004
        %v6341 = vunpack.c.l.b16 %v4005
        %v6342 = vunpack.c.h.b16 %v4005
        %v6343 = vunpack.c.l.b16 %v4006
        %v6344 = vunpack.c.h.b16 %v4006
        %v6345 = vunpack.c.l.b16 %v4007
        %v6346 = vunpack.c.h.b16 %v4007
        %v6347 = vunpack.c.l.b16 %v4008
        %v6348 = vunpack.c.h.b16 %v4008
        %v6349 = vunpack.c.l.b16 %v4009
        %v6350 = vunpack.c.h.b16 %v4009
        %v6351 = vunpack.c.l.b16 %v4010
        %v6352 = vunpack.c.h.b16 %v4010
        %v6353 = vunpack.c.l.b16 %v4011
        %v6354 = vunpack.c.h.b16 %v4011
        %v6355 = vunpack.c.l.b16 %v4012
        %v6356 = vunpack.c.h.b16 %v4012
        %v6357 = vunpack.c.l.b16 %v4013
        %v6358 = vunpack.c.h.b16 %v4013
        %v6359 = vunpack.c.l.b16 %v4014
        %v6360 = vunpack.c.h.b16 %v4014
        %v6361 = vunpack.c.l.b16 %v4015
        %v6362 = vunpack.c.h.b16 %v4015
        %v6363 = vunpack.c.l.b16 %v4016
        %v6364 = vunpack.c.h.b16 %v4016
        %v6365 = vunpack.c.l.b16 %v4017
        %v6366 = vunpack.c.h.b16 %v4017
        %v6367 = vunpack.c.l.b16 %v4018
        %v6368 = vunpack.c.h.b16 %v4018
        %v6369 = vunpack.c.l.b16 %v4019
        %v6370 = vunpack.c.h.b16 %v4019
        %v6371 = vunpack.c.l.b16 %v4020
        %v6372 = vunpack.c.h.b16 %v4020
        %v6373 = vunpack.c.l.b16 %v4021
        %v6374 = vunpack.c.h.b16 %v4021
        %v6375 = vunpack.c.l.b16 %v4022
        %v6376 = vunpack.c.h.b16 %v4022
        %v6377 = vunpack.c.l.b16 %v4023
        %v6378 = vunpack.c.h.b16 %v4023
        %v6379 = vunpack.c.l.b16 %v4024
        %v6380 = vunpack.c.h.b16 %v4024
        %v6381 = vunpack.c.l.b16 %v4025
        %v6382 = vunpack.c.h.b16 %v4025
        %v6383 = vunpack.c.l.b16 %v4026
        %v6384 = vunpack.c.h.b16 %v4026
        %v6385 = vunpack.c.l.b16 %v4027
        %v6386 = vunpack.c.h.b16 %v4027
        %v6387 = vunpack.c.l.b16 %v4028
        %v6388 = vunpack.c.h.b16 %v4028
        %v6389 = vunpack.c.l.b16 %v4029
        %v6390 = vunpack.c.h.b16 %v4029
        %v6391 = vunpack.c.l.b16 %v4030
        %v6392 = vunpack.c.h.b16 %v4030
        %v6393 = vunpack.c.l.b16 %v4031
        %v6394 = vunpack.c.h.b16 %v4031
        %v6395 = vunpack.c.l.b16 %v4032
        %v6396 = vunpack.c.h.b16 %v4032
        %v6397 = vunpack.c.l.b16 %v4033
        %v6398 = vunpack.c.h.b16 %v4033
        %v6399 = vunpack.c.l.b16 %v4034
        %v6400 = vunpack.c.h.b16 %v4034
        %v6401 = vunpack.c.l.b16 %v4035
        %v6402 = vunpack.c.h.b16 %v4035
        %v6403 = vunpack.c.l.b16 %v4036
        %v6404 = vunpack.c.h.b16 %v4036
        %v6405 = vunpack.c.l.b16 %v4037
        %v6406 = vunpack.c.h.b16 %v4037
        %v6407 = vunpack.c.l.b16 %v4038
        %v6408 = vunpack.c.h.b16 %v4038
        %v6409 = vunpack.c.l.b16 %v4039
        %v6410 = vunpack.c.h.b16 %v4039
        %v6411 = vunpack.c.l.b16 %v4040
        %v6412 = vunpack.c.h.b16 %v4040
        %v6413 = vunpack.c.l.b16 %v4041
        %v6414 = vunpack.c.h.b16 %v4041
        %v6415 = vunpack.c.l.b16 %v4042
        %v6416 = vunpack.c.h.b16 %v4042
        %v6417 = vunpack.c.l.b16 %v4043
        %v6418 = vunpack.c.h.b16 %v4043
        %v6419 = vunpack.c.l.b16 %v4044
        %v6420 = vunpack.c.h.b16 %v4044
        %v6421 = vunpack.c.l.b16 %v4045
        %v6422 = vunpack.c.h.b16 %v4045
        %v6423 = vunpack.c.l.b16 %v4046
        %v6424 = vunpack.c.h.b16 %v4046
        %v6425 = vunpack.c.l.b16 %v4047
        %v6426 = vunpack.c.h.b16 %v4047
        %v6427 = vunpack.c.l.b16 %v4048
        %v6428 = vunpack.c.h.b16 %v4048
        %v6429 = vunpack.c.l.b16 %v4049
        %v6430 = vunpack.c.h.b16 %v4049
        %v6431 = vunpack.c.l.b16 %v4050
        %v6432 = vunpack.c.h.b16 %v4050
        %v6433 = vunpack.c.l.b16 %v4051
        %v6434 = vunpack.c.h.b16 %v4051
        %v6435 = vunpack.c.l.b16 %v4052
        %v6436 = vunpack.c.h.b16 %v4052
        %v6437 = vunpack.c.l.b16 %v4053
        %v6438 = vunpack.c.h.b16 %v4053
        %v6439 = vunpack.c.l.b16 %v4054
        %v6440 = vunpack.c.h.b16 %v4054
        %v6441 = vunpack.c.l.b16 %v4055
        %v6442 = vunpack.c.h.b16 %v4055
        %v6443 = vunpack.c.l.b16 %v4056
        %v6444 = vunpack.c.h.b16 %v4056
        %v6445 = vunpack.c.l.b16 %v4057
        %v6446 = vunpack.c.h.b16 %v4057
        %v6447 = vunpack.c.l.b16 %v4058
        %v6448 = vunpack.c.h.b16 %v4058
        %v6449 = vunpack.c.l.b16 %v4059
        %v6450 = vunpack.c.h.b16 %v4059
        %v6451 = vunpack.c.l.b16 %v4060
        %v6452 = vunpack.c.h.b16 %v4060
        %v6453 = vunpack.c.l.b16 %v4061
        %v6454 = vunpack.c.h.b16 %v4061
        %v6455 = vunpack.c.l.b16 %v4062
        %v6456 = vunpack.c.h.b16 %v4062
        %v6457 = vunpack.c.l.b16 %v4063
        %v6458 = vunpack.c.h.b16 %v4063
        %v6459 = vunpack.c.l.b16 %v4064
        %v6460 = vunpack.c.h.b16 %v4064
        %v6461 = vunpack.c.l.b16 %v4065
        %v6462 = vunpack.c.h.b16 %v4065
        %v6463 = vunpack.c.l.b16 %v4066
        %v6464 = vunpack.c.h.b16 %v4066
        %v6465 = vunpack.c.l.b16 %v4067
        %v6466 = vunpack.c.h.b16 %v4067
        %v6467 = vunpack.c.l.b16 %v4068
        %v6468 = vunpack.c.h.b16 %v4068
        %v6469 = vunpack.c.l.b16 %v4069
        %v6470 = vunpack.c.h.b16 %v4069
        %v6471 = vunpack.c.l.b16 %v4070
        %v6472 = vunpack.c.h.b16 %v4070
        %v6473 = vunpack.c.l.b16 %v4071
        %v6474 = vunpack.c.h.b16 %v4071
        %v6475 = vunpack.c.l.b16 %v4072
        %v6476 = vunpack.c.h.b16 %v4072
        %v6477 = vunpack.c.l.b16 %v4073
        %v6478 = vunpack.c.h.b16 %v4073
        %v6479 = vunpack.c.l.b16 %v4074
        %v6480 = vunpack.c.h.b16 %v4074
        %v6481 = vunpack.c.l.b16 %v4075
        %v6482 = vunpack.c.h.b16 %v4075
        %v6483 = vunpack.c.l.b16 %v4076
        %v6484 = vunpack.c.h.b16 %v4076
        %v6485 = vunpack.c.l.b16 %v4077
        %v6486 = vunpack.c.h.b16 %v4077
        %v6487 = vunpack.c.l.b16 %v4078
        %v6488 = vunpack.c.h.b16 %v4078
        %v6489 = vunpack.c.l.b16 %v4079
        %v6490 = vunpack.c.h.b16 %v4079
        %v6491 = vunpack.c.l.b16 %v4080
        %v6492 = vunpack.c.h.b16 %v4080
        %v6493 = vunpack.c.l.b16 %v4081
        %v6494 = vunpack.c.h.b16 %v4081
        %v6495 = vunpack.c.l.b16 %v4082
        %v6496 = vunpack.c.h.b16 %v4082
        %v6497 = vunpack.c.l.b16 %v4083
        %v6498 = vunpack.c.h.b16 %v4083
        %v6499 = vunpack.c.l.b16 %v4084
        %v6500 = vunpack.c.h.b16 %v4084
        %v6501 = vunpack.c.l.b16 %v4085
        %v6502 = vunpack.c.h.b16 %v4085
        %v6503 = vunpack.c.l.b16 %v4086
        %v6504 = vunpack.c.h.b16 %v4086
        %v6505 = vunpack.c.l.b16 %v4087
        %v6506 = vunpack.c.h.b16 %v4087
        %v6507 = vunpack.c.l.b16 %v4088
        %v6508 = vunpack.c.h.b16 %v4088
        %v6509 = vunpack.c.l.b16 %v4089
        %v6510 = vunpack.c.h.b16 %v4089
        %v6511 = vunpack.c.l.b16 %v4090
        %v6512 = vunpack.c.h.b16 %v4090
        %v6513 = vunpack.c.l.b16 %v4091
        %v6514 = vunpack.c.h.b16 %v4091
        %v6515 = vunpack.c.l.b16 %v4092
        %v6516 = vunpack.c.h.b16 %v4092
        %v6517 = vunpack.c.l.b16 %v4093
        %v6518 = vunpack.c.h.b16 %v4093
        %v6519 = vunpack.c.l.b16 %v4094
        %v6520 = vunpack.c.h.b16 %v4094
        %v6521 = vunpack.c.l.b16 %v4095
        %v6522 = vunpack.c.h.b16 %v4095
        %v6523 = vunpack.c.l.b16 %v4096
        %v6524 = vunpack.c.h.b16 %v4096
        %v6525 = vunpack.c.l.b16 %v4097
        %v6526 = vunpack.c.h.b16 %v4097
        %v6527 = vunpack.c.l.b16 %v4098
        %v6528 = vunpack.c.h.b16 %v4098
        %v6529 = vunpack.c.l.b16 %v4099
        %v6530 = vunpack.c.h.b16 %v4099
        %v6531 = vunpack.c.l.b16 %v4100
        %v6532 = vunpack.c.h.b16 %v4100
        %v6533 = vunpack.c.l.b16 %v4101
        %v6534 = vunpack.c.h.b16 %v4101
        %v6535 = vunpack.c.l.b16 %v4102
        %v6536 = vunpack.c.h.b16 %v4102
        %v6537 = vunpack.c.l.b16 %v4103
        %v6538 = vunpack.c.h.b16 %v4103
        %v6539 = vunpack.c.l.b16 %v4104
        %v6540 = vunpack.c.h.b16 %v4104
        %v6541 = vunpack.c.l.b16 %v4105
        %v6542 = vunpack.c.h.b16 %v4105
        %v6543 = vunpack.c.l.b16 %v4106
        %v6544 = vunpack.c.h.b16 %v4106
        %v6545 = vunpack.c.l.b16 %v4107
        %v6546 = vunpack.c.h.b16 %v4107
        %v6547 = vunpack.c.l.b16 %v4108
        %v6548 = vunpack.c.h.b16 %v4108
        %v6549 = vunpack.c.l.b16 %v4109
        %v6550 = vunpack.c.h.b16 %v4109
        %v6551 = vunpack.c.l.b16 %v4110
        %v6552 = vunpack.c.h.b16 %v4110
        %v6553 = vunpack.c.l.b16 %v4111
        %v6554 = vunpack.c.h.b16 %v4111
        %v6555 = vunpack.c.l.b16 %v4112
        %v6556 = vunpack.c.h.b16 %v4112
        %v6557 = vunpack.c.l.b16 %v4113
        %v6558 = vunpack.c.h.b16 %v4113
        %v6559 = vunpack.c.l.b16 %v4114
        %v6560 = vunpack.c.h.b16 %v4114
        %v6561 = vunpack.c.l.b16 %v4115
        %v6562 = vunpack.c.h.b16 %v4115
        %v6563 = vunpack.c.l.b16 %v4116
        %v6564 = vunpack.c.h.b16 %v4116
        %v6565 = vunpack.c.l.b16 %v4117
        %v6566 = vunpack.c.h.b16 %v4117
        %v6567 = vunpack.c.l.b16 %v4118
        %v6568 = vunpack.c.h.b16 %v4118
        %v6569 = vunpack.c.l.b16 %v4119
        %v6570 = vunpack.c.h.b16 %v4119
        %v6571 = vunpack.c.l.b16 %v4120
        %v6572 = vunpack.c.h.b16 %v4120
        %v6573 = vunpack.c.l.b16 %v4121
        %v6574 = vunpack.c.h.b16 %v4121
        %v6575 = vunpack.c.l.b16 %v4122
        %v6576 = vunpack.c.h.b16 %v4122
        %v6577 = vunpack.c.l.b16 %v4123
        %v6578 = vunpack.c.h.b16 %v4123
        %v6579 = vunpack.c.l.b16 %v4124
        %v6580 = vunpack.c.h.b16 %v4124
        %v6581 = vunpack.c.l.b16 %v4125
        %v6582 = vunpack.c.h.b16 %v4125
        %v6583 = vunpack.c.l.b16 %v4126
        %v6584 = vunpack.c.h.b16 %v4126
        %v6585 = vunpack.c.l.b16 %v4127
        %v6586 = vunpack.c.h.b16 %v4127
        %v6587 = vunpack.c.l.b16 %v4128
        %v6588 = vunpack.c.h.b16 %v4128
        %v6589 = vunpack.c.l.b16 %v4129
        %v6590 = vunpack.c.h.b16 %v4129
        %v6591 = vunpack.c.l.b16 %v4130
        %v6592 = vunpack.c.h.b16 %v4130
        %v6593 = vunpack.c.l.b16 %v4131
        %v6594 = vunpack.c.h.b16 %v4131
        %v6595 = vunpack.c.l.b16 %v4132
        %v6596 = vunpack.c.h.b16 %v4132
        %v6597 = vunpack.c.l.b16 %v4133
        %v6598 = vunpack.c.h.b16 %v4133
        %v6599 = vunpack.c.l.b16 %v4134
        %v6600 = vunpack.c.h.b16 %v4134
        %v6601 = vunpack.c.l.b16 %v4135
        %v6602 = vunpack.c.h.b16 %v4135
        %v6603 = vunpack.c.l.b16 %v4136
        %v6604 = vunpack.c.h.b16 %v4136
        %v6605 = vunpack.c.l.b16 %v4137
        %v6606 = vunpack.c.h.b16 %v4137
        %v6607 = vunpack.c.l.b16 %v4138
        %v6608 = vunpack.c.h.b16 %v4138
        %v6609 = vunpack.c.l.b16 %v4139
        %v6610 = vunpack.c.h.b16 %v4139
        %v6611 = vunpack.c.l.b16 %v4140
        %v6612 = vunpack.c.h.b16 %v4140
        %v6613 = vunpack.c.l.b16 %v4141
        %v6614 = vunpack.c.h.b16 %v4141
        %v6615 = vunpack.c.l.b16 %v4142
        %v6616 = vunpack.c.h.b16 %v4142
        %v6617 = vunpack.c.l.b16 %v4143
        %v6618 = vunpack.c.h.b16 %v4143
        %v6619 = vunpack.c.l.b16 %v4144
        %v6620 = vunpack.c.h.b16 %v4144
        %v6621 = vunpack.c.l.b16 %v4145
        %v6622 = vunpack.c.h.b16 %v4145
        %v6623 = vunpack.c.l.b16 %v4146
        %v6624 = vunpack.c.h.b16 %v4146
        %v6625 = vunpack.c.l.b16 %v4147
        %v6626 = vunpack.c.h.b16 %v4147
        %v6627 = vunpack.c.l.b16 %v4148
        %v6628 = vunpack.c.h.b16 %v4148
        %v6629 = vunpack.c.l.b16 %v4149
        %v6630 = vunpack.c.h.b16 %v4149
        %v6631 = vunpack.c.l.b16 %v4150
        %v6632 = vunpack.c.h.b16 %v4150
        %v6633 = vunpack.c.l.b16 %v4151
        %v6634 = vunpack.c.h.b16 %v4151
        %v6635 = vunpack.c.l.b16 %v4152
        %v6636 = vunpack.c.h.b16 %v4152
        %v6637 = vunpack.c.l.b16 %v4153
        %v6638 = vunpack.c.h.b16 %v4153
        %v6639 = vunpack.c.l.b16 %v4154
        %v6640 = vunpack.c.h.b16 %v4154
        %v6641 = vunpack.c.l.b16 %v4155
        %v6642 = vunpack.c.h.b16 %v4155
        %v6643 = vunpack.c.l.b16 %v4156
        %v6644 = vunpack.c.h.b16 %v4156
        %v6645 = vunpack.c.l.b16 %v4157
        %v6646 = vunpack.c.h.b16 %v4157
        %v6647 = vunpack.c.l.b16 %v4158
        %v6648 = vunpack.c.h.b16 %v4158
        %v6649 = vunpack.c.l.b16 %v4159
        %v6650 = vunpack.c.h.b16 %v4159
        %v6651 = vunpack.c.l.b16 %v4160
        %v6652 = vunpack.c.h.b16 %v4160
        %v6653 = vunpack.c.l.b16 %v4161
        %v6654 = vunpack.c.h.b16 %v4161
        %v6655 = vunpack.c.l.b16 %v4162
        %v6656 = vunpack.c.h.b16 %v4162
        %v6657 = vunpack.c.l.b16 %v4163
        %v6658 = vunpack.c.h.b16 %v4163
        %v6659 = vunpack.c.l.b16 %v4164
        %v6660 = vunpack.c.h.b16 %v4164
        %v6661 = vunpack.c.l.b16 %v4165
        %v6662 = vunpack.c.h.b16 %v4165
        %v6663 = vunpack.c.l.b16 %v4166
        %v6664 = vunpack.c.h.b16 %v4166
        %v6665 = vunpack.c.l.b16 %v4167
        %v6666 = vunpack.c.h.b16 %v4167
        %v6667 = vunpack.c.l.b16 %v4168
        %v6668 = vunpack.c.h.b16 %v4168
        %v6669 = vunpack.c.l.b16 %v4169
        %v6670 = vunpack.c.h.b16 %v4169
        %v6671 = vunpack.c.l.b16 %v4170
        %v6672 = vunpack.c.h.b16 %v4170
        %v6673 = vunpack.c.l.b16 %v4171
        %v6674 = vunpack.c.h.b16 %v4171
        %v6675 = vunpack.c.l.b16 %v4172
        %v6676 = vunpack.c.h.b16 %v4172
        %v6677 = vunpack.c.l.b16 %v4173
        %v6678 = vunpack.c.h.b16 %v4173
        %v6679 = vunpack.c.l.b16 %v4174
        %v6680 = vunpack.c.h.b16 %v4174
        %v6681 = vunpack.c.l.b16 %v4175
        %v6682 = vunpack.c.h.b16 %v4175
        %v6683 = vunpack.c.l.b16 %v4176
        %v6684 = vunpack.c.h.b16 %v4176
        %v6685 = vunpack.c.l.b16 %v4177
        %v6686 = vunpack.c.h.b16 %v4177
        %v6687 = vunpack.c.l.b16 %v4178
        %v6688 = vunpack.c.h.b16 %v4178
        %v6689 = vunpack.c.l.b16 %v4179
        %v6690 = vunpack.c.h.b16 %v4179
        %v6691 = vunpack.c.l.b16 %v4180
        %v6692 = vunpack.c.h.b16 %v4180
        %v6693 = vunpack.c.l.b16 %v4181
        %v6694 = vunpack.c.h.b16 %v4181
        %v6695 = vunpack.c.l.b16 %v4182
        %v6696 = vunpack.c.h.b16 %v4182
        %v6697 = vunpack.c.l.b16 %v4183
        %v6698 = vunpack.c.h.b16 %v4183
        %v6699 = vunpack.c.l.b16 %v4184
        %v6700 = vunpack.c.h.b16 %v4184
        %v6701 = vunpack.c.l.b16 %v4185
        %v6702 = vunpack.c.h.b16 %v4185
        %v6703 = vunpack.c.l.b16 %v4186
        %v6704 = vunpack.c.h.b16 %v4186
        %v6705 = vunpack.c.l.b16 %v4187
        %v6706 = vunpack.c.h.b16 %v4187
        %v6707 = vunpack.c.l.b16 %v4188
        %v6708 = vunpack.c.h.b16 %v4188
        %v6709 = vunpack.c.l.b16 %v4189
        %v6710 = vunpack.c.h.b16 %v4189
        %v6711 = vunpack.c.l.b16 %v4190
        %v6712 = vunpack.c.h.b16 %v4190
        %v6713 = vunpack.c.l.b16 %v4191
        %v6714 = vunpack.c.h.b16 %v4191
        %v6715 = vunpack.c.l.b16 %v4192
        %v6716 = vunpack.c.h.b16 %v4192
        %v6717 = vunpack.c.l.b16 %v4193
        %v6718 = vunpack.c.h.b16 %v4193
        %v6719 = vunpack.c.l.b16 %v4194
        %v6720 = vunpack.c.h.b16 %v4194
        %v6721 = vunpack.c.l.b16 %v4195
        %v6722 = vunpack.c.h.b16 %v4195
        %v6723 = vunpack.c.l.b16 %v4196
        %v6724 = vunpack.c.h.b16 %v4196
        %v6725 = vunpack.c.l.b16 %v4197
        %v6726 = vunpack.c.h.b16 %v4197
        %v6727 = vunpack.c.l.b16 %v4198
        %v6728 = vunpack.c.h.b16 %v4198
        %v6729 = vunpack.c.l.b16 %v4199
        %v6730 = vunpack.c.h.b16 %v4199
        %v6731 = vunpack.c.l.b16 %v4200
        %v6732 = vunpack.c.h.b16 %v4200
        %v6733 = vunpack.c.l.b16 %v4201
        %v6734 = vunpack.c.h.b16 %v4201
        %v6735 = vunpack.c.l.b16 %v4202
        %v6736 = vunpack.c.h.b16 %v4202
        %v6737 = vunpack.c.l.b16 %v4203
        %v6738 = vunpack.c.h.b16 %v4203
        %v6739 = vunpack.c.l.b16 %v4204
        %v6740 = vunpack.c.h.b16 %v4204
        %v6741 = vunpack.c.l.b16 %v4205
        %v6742 = vunpack.c.h.b16 %v4205
        %v6743 = vunpack.c.l.b16 %v4206
        %v6744 = vunpack.c.h.b16 %v4206
        %v6745 = vunpack.c.l.b16 %v4207
        %v6746 = vunpack.c.h.b16 %v4207
        %v6747 = vunpack.c.l.b16 %v4208
        %v6748 = vunpack.c.h.b16 %v4208
        %v6749 = vunpack.c.l.b16 %v4209
        %v6750 = vunpack.c.h.b16 %v4209
        %v6751 = vunpack.c.l.b16 %v4210
        %v6752 = vunpack.c.h.b16 %v4210
        %v6753 = vunpack.c.l.b16 %v4211
        %v6754 = vunpack.c.h.b16 %v4211
        %v6755 = vunpack.c.l.b16 %v4212
        %v6756 = vunpack.c.h.b16 %v4212
        %v6757 = vunpack.c.l.b16 %v4213
        %v6758 = vunpack.c.h.b16 %v4213
        %v6759 = vunpack.c.l.b16 %v4214
        %v6760 = vunpack.c.h.b16 %v4214
        %v6761 = vunpack.c.l.b16 %v4215
        %v6762 = vunpack.c.h.b16 %v4215
        %v6763 = vunpack.c.l.b16 %v4216
        %v6764 = vunpack.c.h.b16 %v4216
        %v6765 = vunpack.c.l.b16 %v4217
        %v6766 = vunpack.c.h.b16 %v4217
        %v6767 = vunpack.c.l.b16 %v4218
        %v6768 = vunpack.c.h.b16 %v4218
        %v6769 = vunpack.c.l.b16 %v4219
        %v6770 = vunpack.c.h.b16 %v4219
        %v6771 = vunpack.c.l.b16 %v4220
        %v6772 = vunpack.c.h.b16 %v4220
        %v6773 = vunpack.c.l.b16 %v4221
        %v6774 = vunpack.c.h.b16 %v4221
        %v6775 = vunpack.c.l.b16 %v4222
        %v6776 = vunpack.c.h.b16 %v4222
        %v6777 = vunpack.c.l.b16 %v4223
        %v6778 = vunpack.c.h.b16 %v4223
        %v6779 = vunpack.c.l.b16 %v4224
        %v6780 = vunpack.c.h.b16 %v4224
        %v6781 = vunpack.c.l.b16 %v4225
        %v6782 = vunpack.c.h.b16 %v4225
        %v6783 = vunpack.c.l.b16 %v4226
        %v6784 = vunpack.c.h.b16 %v4226
        %v6785 = vunpack.c.l.b16 %v4227
        %v6786 = vunpack.c.h.b16 %v4227
        %v6787 = vunpack.c.l.b16 %v4228
        %v6788 = vunpack.c.h.b16 %v4228
        %v6789 = vunpack.c.l.b16 %v4229
        %v6790 = vunpack.c.h.b16 %v4229
        %v6791 = vunpack.c.l.b16 %v4230
        %v6792 = vunpack.c.h.b16 %v4230
        %v6793 = vunpack.c.l.b16 %v4231
        %v6794 = vunpack.c.h.b16 %v4231
        %v6795 = vunpack.c.l.b16 %v4232
        %v6796 = vunpack.c.h.b16 %v4232
        %v6797 = vunpack.c.l.b16 %v4233
        %v6798 = vunpack.c.h.b16 %v4233
        %v6799 = vunpack.c.l.b16 %v4234
        %v6800 = vunpack.c.h.b16 %v4234
        %v6801 = vunpack.c.l.b16 %v4235
        %v6802 = vunpack.c.h.b16 %v4235
        %v6803 = vunpack.c.l.b16 %v4236
        %v6804 = vunpack.c.h.b16 %v4236
        %v6805 = vunpack.c.l.b16 %v4237
        %v6806 = vunpack.c.h.b16 %v4237
        %v6807 = vunpack.c.l.b16 %v4238
        %v6808 = vunpack.c.h.b16 %v4238
        %v6809 = vunpack.c.l.b16 %v4239
        %v6810 = vunpack.c.h.b16 %v4239
        %v6811 = vunpack.c.l.b16 %v4240
        %v6812 = vunpack.c.h.b16 %v4240
        %v6813 = vunpack.c.l.b16 %v4241
        %v6814 = vunpack.c.h.b16 %v4241
        %v6815 = vunpack.c.l.b16 %v4242
        %v6816 = vunpack.c.h.b16 %v4242
        %v6817 = vunpack.c.l.b16 %v4243
        %v6818 = vunpack.c.h.b16 %v4243
        %v6819 = vunpack.c.l.b16 %v4244
        %v6820 = vunpack.c.h.b16 %v4244
        %v6821 = vunpack.c.l.b16 %v4245
        %v6822 = vunpack.c.h.b16 %v4245
        %v6823 = vunpack.c.l.b16 %v4246
        %v6824 = vunpack.c.h.b16 %v4246
        %v6825 = vunpack.c.l.b16 %v4247
        %v6826 = vunpack.c.h.b16 %v4247
        %v6827 = vunpack.c.l.b16 %v4248
        %v6828 = vunpack.c.h.b16 %v4248
        %v6829 = vunpack.c.l.b16 %v4249
        %v6830 = vunpack.c.h.b16 %v4249
        %v6831 = vunpack.c.l.b16 %v4250
        %v6832 = vunpack.c.h.b16 %v4250
        %v6833 = vunpack.c.l.b16 %v4251
        %v6834 = vunpack.c.h.b16 %v4251
        %v6835 = vunpack.c.l.b16 %v4252
        %v6836 = vunpack.c.h.b16 %v4252
        %v6837 = vunpack.c.l.b16 %v4253
        %v6838 = vunpack.c.h.b16 %v4253
        %v6839 = vunpack.c.l.b16 %v4254
        %v6840 = vunpack.c.h.b16 %v4254
        %v6841 = vunpack.c.l.b16 %v4255
        %v6842 = vunpack.c.h.b16 %v4255
        %v6843 = vunpack.c.l.b16 %v4256
        %v6844 = vunpack.c.h.b16 %v4256
        %v6845 = vunpack.c.l.b16 %v4257
        %v6846 = vunpack.c.h.b16 %v4257
        %v6847 = vunpack.c.l.b16 %v4258
        %v6848 = vunpack.c.h.b16 %v4258
        %v6849 = vunpack.c.l.b16 %v4259
        %v6850 = vunpack.c.h.b16 %v4259
        %v6851 = vunpack.c.l.b16 %v4260
        %v6852 = vunpack.c.h.b16 %v4260
        %v6853 = vunpack.c.l.b16 %v4261
        %v6854 = vunpack.c.h.b16 %v4261
        %v6855 = vunpack.c.l.b16 %v4262
        %v6856 = vunpack.c.h.b16 %v4262
        %v6857 = vunpack.c.l.b16 %v4263
        %v6858 = vunpack.c.h.b16 %v4263
        %v6859 = vunpack.c.l.b16 %v4264
        %v6860 = vunpack.c.h.b16 %v4264
        %v6861 = vunpack.c.l.b16 %v4265
        %v6862 = vunpack.c.h.b16 %v4265
        %v6863 = vunpack.c.l.b16 %v4266
        %v6864 = vunpack.c.h.b16 %v4266
        %v6865 = vunpack.c.l.b16 %v4267
        %v6866 = vunpack.c.h.b16 %v4267
        %v6867 = vunpack.c.l.b16 %v4268
        %v6868 = vunpack.c.h.b16 %v4268
        %v6869 = vunpack.c.l.b16 %v4269
        %v6870 = vunpack.c.h.b16 %v4269
        %v6871 = vunpack.c.l.b16 %v4270
        %v6872 = vunpack.c.h.b16 %v4270
        %v6873 = vunpack.c.l.b16 %v4271
        %v6874 = vunpack.c.h.b16 %v4271
        %v6875 = vunpack.c.l.b16 %v4272
        %v6876 = vunpack.c.h.b16 %v4272
        %v6877 = vunpack.c.l.b16 %v4273
        %v6878 = vunpack.c.h.b16 %v4273
        %v6879 = vunpack.c.l.b16 %v4274
        %v6880 = vunpack.c.h.b16 %v4274
        %v6881 = vunpack.c.l.b16 %v4275
        %v6882 = vunpack.c.h.b16 %v4275
        %v6883 = vunpack.c.l.b16 %v4276
        %v6884 = vunpack.c.h.b16 %v4276
        %v6885 = vunpack.c.l.b16 %v4277
        %v6886 = vunpack.c.h.b16 %v4277
        %v6887 = vunpack.c.l.b16 %v4278
        %v6888 = vunpack.c.h.b16 %v4278
        %v6889 = vunpack.c.l.b16 %v4279
        %v6890 = vunpack.c.h.b16 %v4279
        %v6891 = vunpack.c.l.b16 %v4280
        %v6892 = vunpack.c.h.b16 %v4280
        %v6893 = vunpack.c.l.b16 %v4281
        %v6894 = vunpack.c.h.b16 %v4281
        %v6895 = vunpack.c.l.b16 %v4282
        %v6896 = vunpack.c.h.b16 %v4282
        %v6897 = vunpack.c.l.b16 %v4283
        %v6898 = vunpack.c.h.b16 %v4283
        %v6899 = vunpack.c.l.b16 %v4284
        %v6900 = vunpack.c.h.b16 %v4284
        %v6901 = vunpack.c.l.b16 %v4285
        %v6902 = vunpack.c.h.b16 %v4285
        %v6903 = vunpack.c.l.b16 %v4286
        %v6904 = vunpack.c.h.b16 %v4286
        %v6905 = vunpack.c.l.b16 %v4287
        %v6906 = vunpack.c.h.b16 %v4287
        %v6907 = vunpack.c.l.b16 %v4288
        %v6908 = vunpack.c.h.b16 %v4288
        %v6909 = vunpack.c.l.b16 %v4289
        %v6910 = vunpack.c.h.b16 %v4289
        %v6911 = vunpack.c.l.b16 %v4290
        %v6912 = vunpack.c.h.b16 %v4290
        %v6913 = vunpack.c.l.b16 %v4291
        %v6914 = vunpack.c.h.b16 %v4291
        %v6915 = vunpack.c.l.b16 %v4292
        %v6916 = vunpack.c.h.b16 %v4292
        %v6917 = vunpack.c.l.b16 %v4293
        %v6918 = vunpack.c.h.b16 %v4293
        %v6919 = vunpack.c.l.b16 %v4294
        %v6920 = vunpack.c.h.b16 %v4294
        %v6921 = vunpack.c.l.b16 %v4295
        %v6922 = vunpack.c.h.b16 %v4295
        %v6923 = vunpack.c.l.b16 %v4296
        %v6924 = vunpack.c.h.b16 %v4296
        %v6925 = vunpack.c.l.b16 %v4297
        %v6926 = vunpack.c.h.b16 %v4297
        %v6927 = vunpack.c.l.b16 %v4298
        %v6928 = vunpack.c.h.b16 %v4298
        %v6929 = vunpack.c.l.b16 %v4299
        %v6930 = vunpack.c.h.b16 %v4299
        %v6931 = vunpack.c.l.b16 %v4300
        %v6932 = vunpack.c.h.b16 %v4300
        %v6933 = vunpack.c.l.b16 %v4301
        %v6934 = vunpack.c.h.b16 %v4301
        %v6935 = vunpack.c.l.b16 %v4302
        %v6936 = vunpack.c.h.b16 %v4302
        %v6937 = vunpack.c.l.b16 %v4303
        %v6938 = vunpack.c.h.b16 %v4303
        %v6939 = vunpack.c.l.b16 %v4304
        %v6940 = vunpack.c.h.b16 %v4304
        %v6941 = vunpack.c.l.b16 %v4305
        %v6942 = vunpack.c.h.b16 %v4305
        %v6943 = vunpack.c.l.b16 %v4306
        %v6944 = vunpack.c.h.b16 %v4306
        %v6945 = vunpack.c.l.b16 %v4307
        %v6946 = vunpack.c.h.b16 %v4307
        %v6947 = vunpack.c.l.b16 %v4308
        %v6948 = vunpack.c.h.b16 %v4308
        %v6949 = vunpack.c.l.b16 %v4309
        %v6950 = vunpack.c.h.b16 %v4309
        %v6951 = vunpack.c.l.b16 %v4310
        %v6952 = vunpack.c.h.b16 %v4310
        %v6953 = vunpack.c.l.b16 %v4311
        %v6954 = vunpack.c.h.b16 %v4311
        %v6955 = vunpack.c.l.b16 %v4312
        %v6956 = vunpack.c.h.b16 %v4312
        %v6957 = vunpack.c.l.b16 %v4313
        %v6958 = vunpack.c.h.b16 %v4313
        %v6959 = vunpack.c.l.b16 %v4314
        %v6960 = vunpack.c.h.b16 %v4314
        %v6961 = vunpack.c.l.b16 %v4315
        %v6962 = vunpack.c.h.b16 %v4315
        %v6963 = vunpack.c.l.b16 %v4316
        %v6964 = vunpack.c.h.b16 %v4316
        %v6965 = vunpack.c.l.b16 %v4317
        %v6966 = vunpack.c.h.b16 %v4317
        %v6967 = vunpack.c.l.b16 %v4318
        %v6968 = vunpack.c.h.b16 %v4318
        %v6969 = vunpack.c.l.b16 %v4319
        %v6970 = vunpack.c.h.b16 %v4319
        %v6971 = vunpack.c.l.b16 %v4320
        %v6972 = vunpack.c.h.b16 %v4320
        %v6973 = vunpack.c.l.b16 %v4321
        %v6974 = vunpack.c.h.b16 %v4321
        %v6975 = vunpack.c.l.b16 %v4322
        %v6976 = vunpack.c.h.b16 %v4322
        %v6977 = vunpack.c.l.b16 %v4323
        %v6978 = vunpack.c.h.b16 %v4323
        %v6979 = vunpack.c.l.b16 %v4324
        %v6980 = vunpack.c.h.b16 %v4324
        %v6981 = vunpack.c.l.b16 %v4325
        %v6982 = vunpack.c.h.b16 %v4325
        %v6983 = vunpack.c.l.b16 %v4326
        %v6984 = vunpack.c.h.b16 %v4326
        %v6985 = vunpack.c.l.b16 %v4327
        %v6986 = vunpack.c.h.b16 %v4327
        %v6987 = vunpack.c.l.b16 %v4328
        %v6988 = vunpack.c.h.b16 %v4328
        %v6989 = vunpack.c.l.b16 %v4329
        %v6990 = vunpack.c.h.b16 %v4329
        %v6991 = vunpack.c.l.b16 %v4330
        %v6992 = vunpack.c.h.b16 %v4330
        %v6993 = vunpack.c.l.b16 %v4331
        %v6994 = vunpack.c.h.b16 %v4331
        %v6995 = vunpack.c.l.b16 %v4332
        %v6996 = vunpack.c.h.b16 %v4332
        %v6997 = vunpack.c.l.b16 %v4333
        %v6998 = vunpack.c.h.b16 %v4333
        %v6999 = vunpack.c.l.b16 %v4334
        %v7000 = vunpack.c.h.b16 %v4334
        %v7001 = vunpack.c.l.b16 %v4335
        %v7002 = vunpack.c.h.b16 %v4335
        %v7003 = vunpack.c.l.b16 %v4336
        %v7004 = vunpack.c.h.b16 %v4336
        %v7005 = vunpack.c.l.b16 %v4337
        %v7006 = vunpack.c.h.b16 %v4337
        %v7007 = vunpack.c.l.b16 %v4338
        %v7008 = vunpack.c.h.b16 %v4338
        %v7009 = vunpack.c.l.b16 %v4339
        %v7010 = vunpack.c.h.b16 %v4339
        %v7011 = vunpack.c.l.b16 %v4340
        %v7012 = vunpack.c.h.b16 %v4340
        %v7013 = vunpack.c.l.b16 %v4341
        %v7014 = vunpack.c.h.b16 %v4341
        %v7015 = vunpack.c.l.b16 %v4342
        %v7016 = vunpack.c.h.b16 %v4342
        %v7017 = vunpack.c.l.b16 %v4343
        %v7018 = vunpack.c.h.b16 %v4343
        %v7019 = vunpack.c.l.b16 %v4344
        %v7020 = vunpack.c.h.b16 %v4344
        %v7021 = vunpack.c.l.b16 %v4345
        %v7022 = vunpack.c.h.b16 %v4345
        %v7023 = vunpack.c.l.b16 %v4346
        %v7024 = vunpack.c.h.b16 %v4346
        %v7025 = vunpack.c.l.b16 %v4347
        %v7026 = vunpack.c.h.b16 %v4347
        %v7027 = vunpack.c.l.b16 %v4348
        %v7028 = vunpack.c.h.b16 %v4348
        %v7029 = vunpack.c.l.b16 %v4349
        %v7030 = vunpack.c.h.b16 %v4349
        %v7031 = vunpack.c.l.b16 %v4350
        %v7032 = vunpack.c.h.b16 %v4350
        %v7033 = vunpack.c.l.b16 %v4351
        %v7034 = vunpack.c.h.b16 %v4351
        %v7035 = vunpack.c.l.b16 %v4352
        %v7036 = vunpack.c.h.b16 %v4352
        %v7037 = vunpack.c.l.b16 %v4353
        %v7038 = vunpack.c.h.b16 %v4353
        %v7039 = vunpack.c.l.b16 %v4354
        %v7040 = vunpack.c.h.b16 %v4354
        %v7041 = vunpack.c.l.b16 %v4355
        %v7042 = vunpack.c.h.b16 %v4355
        %v7043 = vunpack.c.l.b16 %v4356
        %v7044 = vunpack.c.h.b16 %v4356
        %v7045 = vunpack.c.l.b16 %v4357
        %v7046 = vunpack.c.h.b16 %v4357
        %v7047 = vunpack.c.l.b16 %v4358
        %v7048 = vunpack.c.h.b16 %v4358
        %v7049 = vunpack.c.l.b16 %v4359
        %v7050 = vunpack.c.h.b16 %v4359
        %v7051 = vunpack.c.l.b16 %v4360
        %v7052 = vunpack.c.h.b16 %v4360
        %v7053 = vunpack.c.l.b16 %v4361
        %v7054 = vunpack.c.h.b16 %v4361
        %v7055 = vunpack.c.l.b16 %v4362
        %v7056 = vunpack.c.h.b16 %v4362
        %v7057 = vunpack.c.l.b16 %v4363
        %v7058 = vunpack.c.h.b16 %v4363
        %v7059 = vunpack.c.l.b16 %v4364
        %v7060 = vunpack.c.h.b16 %v4364
        %v7061 = vunpack.c.l.b16 %v4365
        %v7062 = vunpack.c.h.b16 %v4365
        %v7063 = vunpack.c.l.b16 %v4366
        %v7064 = vunpack.c.h.b16 %v4366
        %v7065 = vunpack.c.l.b16 %v4367
        %v7066 = vunpack.c.h.b16 %v4367
        %v7067 = vunpack.c.l.b16 %v4368
        %v7068 = vunpack.c.h.b16 %v4368
        %v7069 = vunpack.c.l.b16 %v4369
        %v7070 = vunpack.c.h.b16 %v4369
        %v7071 = vunpack.c.l.b16 %v4370
        %v7072 = vunpack.c.h.b16 %v4370
        %v7073 = vunpack.c.l.b16 %v4371
        %v7074 = vunpack.c.h.b16 %v4371
        %v7075 = vunpack.c.l.b16 %v4372
        %v7076 = vunpack.c.h.b16 %v4372
        %v7077 = vunpack.c.l.b16 %v4373
        %v7078 = vunpack.c.h.b16 %v4373
        %v7079 = vunpack.c.l.b16 %v4374
        %v7080 = vunpack.c.h.b16 %v4374
        %v7081 = vunpack.c.l.b16 %v4375
        %v7082 = vunpack.c.h.b16 %v4375
        %v7083 = vunpack.c.l.b16 %v4376
        %v7084 = vunpack.c.h.b16 %v4376
        %v7085 = vunpack.c.l.b16 %v4377
        %v7086 = vunpack.c.h.b16 %v4377
        %v7087 = vunpack.c.l.b16 %v4378
        %v7088 = vunpack.c.h.b16 %v4378
        %v7089 = vunpack.c.l.b16 %v4379
        %v7090 = vunpack.c.h.b16 %v4379
        %v7091 = vunpack.c.l.b16 %v4380
        %v7092 = vunpack.c.h.b16 %v4380
        %v7093 = vunpack.c.l.b16 %v4381
        %v7094 = vunpack.c.h.b16 %v4381
        %v7095 = vunpack.c.l.b16 %v4382
        %v7096 = vunpack.c.h.b16 %v4382
        %v7097 = vunpack.c.l.b16 %v4383
        %v7098 = vunpack.c.h.b16 %v4383
        %v7099 = vunpack.c.l.b16 %v4384
        %v7100 = vunpack.c.h.b16 %v4384
        %v7101 = vunpack.c.l.b16 %v4385
        %v7102 = vunpack.c.h.b16 %v4385
        %v7103 = vunpack.c.l.b16 %v4386
        %v7104 = vunpack.c.h.b16 %v4386
        %v7105 = vunpack.c.l.b16 %v4387
        %v7106 = vunpack.c.h.b16 %v4387
        %v7107 = vunpack.c.l.b16 %v4388
        %v7108 = vunpack.c.h.b16 %v4388
        %v7109 = vunpack.c.l.b16 %v4389
        %v7110 = vunpack.c.h.b16 %v4389
        %v7111 = vunpack.c.l.b16 %v4390
        %v7112 = vunpack.c.h.b16 %v4390
        %v7113 = vunpack.c.l.b16 %v4391
        %v7114 = vunpack.c.h.b16 %v4391
        %v7115 = vunpack.c.l.b16 %v4392
        %v7116 = vunpack.c.h.b16 %v4392
        %v7117 = vunpack.c.l.b16 %v4393
        %v7118 = vunpack.c.h.b16 %v4393
        %v7119 = vunpack.c.l.b16 %v4394
        %v7120 = vunpack.c.h.b16 %v4394
        %v7121 = vunpack.c.l.b16 %v4395
        %v7122 = vunpack.c.h.b16 %v4395
        %v7123 = vunpack.c.l.b16 %v4396
        %v7124 = vunpack.c.h.b16 %v4396
        %v7125 = vunpack.c.l.b16 %v4397
        %v7126 = vunpack.c.h.b16 %v4397
        %v7127 = vunpack.c.l.b16 %v4398
        %v7128 = vunpack.c.h.b16 %v4398
        %v7129 = vunpack.c.l.b16 %v4399
        %v7130 = vunpack.c.h.b16 %v4399
        %v7131 = vunpack.c.l.b16 %v4400
        %v7132 = vunpack.c.h.b16 %v4400
        %v7133 = vunpack.c.l.b16 %v4401
        %v7134 = vunpack.c.h.b16 %v4401
        %v7135 = vunpack.c.l.b16 %v4402
        %v7136 = vunpack.c.h.b16 %v4402
        %v7137 = vunpack.c.l.b16 %v4403
        %v7138 = vunpack.c.h.b16 %v4403
        %v7139 = vunpack.c.l.b16 %v4404
        %v7140 = vunpack.c.h.b16 %v4404
        %v7141 = vunpack.c.l.b16 %v4405
        %v7142 = vunpack.c.h.b16 %v4405
        %v7143 = vunpack.c.l.b16 %v4406
        %v7144 = vunpack.c.h.b16 %v4406
        %v7145 = vunpack.c.l.b16 %v4407
        %v7146 = vunpack.c.h.b16 %v4407
        %v7147 = vunpack.c.l.b16 %v4408
        %v7148 = vunpack.c.h.b16 %v4408
        %v7149 = vunpack.c.l.b16 %v4409
        %v7150 = vunpack.c.h.b16 %v4409
        %v7151 = vunpack.c.l.b16 %v4410
        %v7152 = vunpack.c.h.b16 %v4410
        %v7153 = vunpack.c.l.b16 %v4411
        %v7154 = vunpack.c.h.b16 %v4411
        %v7155 = vunpack.c.l.b16 %v4412
        %v7156 = vunpack.c.h.b16 %v4412
        %v7157 = vunpack.c.l.b16 %v4413
        %v7158 = vunpack.c.h.b16 %v4413
        %v7159 = vunpack.c.l.b16 %v4414
        %v7160 = vunpack.c.h.b16 %v4414
        %v7161 = vunpack.c.l.b16 %v4415
        %v7162 = vunpack.c.h.b16 %v4415
        %v7163 = vunpack.c.l.b16 %v4416
        %v7164 = vunpack.c.h.b16 %v4416
        %v7165 = vunpack.c.l.b16 %v4417
        %v7166 = vunpack.c.h.b16 %v4417
        %v7167 = vunpack.c.l.b16 %v4418
        %v7168 = vunpack.c.h.b16 %v4418
        %v7169 = vunpack.c.l.b16 %v4419
        %v7170 = vunpack.c.h.b16 %v4419
        %v7171 = vunpack.c.l.b16 %v4420
        %v7172 = vunpack.c.h.b16 %v4420
        %v7173 = vunpack.c.l.b16 %v4421
        %v7174 = vunpack.c.h.b16 %v4421
        %v7175 = vunpack.c.l.b16 %v4422
        %v7176 = vunpack.c.h.b16 %v4422
        %v7177 = vunpack.c.l.b16 %v4423
        %v7178 = vunpack.c.h.b16 %v4423
        %v7179 = vunpack.c.l.b16 %v4424
        %v7180 = vunpack.c.h.b16 %v4424
        %v7181 = vunpack.c.l.b16 %v4425
        %v7182 = vunpack.c.h.b16 %v4425
        %v7183 = vunpack.c.l.b16 %v4426
        %v7184 = vunpack.c.h.b16 %v4426
        %v7185 = vunpack.c.l.b16 %v4427
        %v7186 = vunpack.c.h.b16 %v4427
        %v7187 = vunpack.c.l.b16 %v4428
        %v7188 = vunpack.c.h.b16 %v4428
        %v7189 = vunpack.c.l.b16 %v4429
        %v7190 = vunpack.c.h.b16 %v4429
        %v7191 = vunpack.c.l.b16 %v4430
        %v7192 = vunpack.c.h.b16 %v4430
        %v7193 = vunpack.c.l.b16 %v4431
        %v7194 = vunpack.c.h.b16 %v4431
        %v7195 = vunpack.c.l.b16 %v4432
        %v7196 = vunpack.c.h.b16 %v4432
        %v7197 = vunpack.c.l.b16 %v4433
        %v7198 = vunpack.c.h.b16 %v4433
        %v7199 = vunpack.c.l.b16 %v4434
        %v7200 = vunpack.c.h.b16 %v4434
        %v7201 = vunpack.c.l.b16 %v4435
        %v7202 = vunpack.c.h.b16 %v4435
        %v7203 = vunpack.c.l.b16 %v4436
        %v7204 = vunpack.c.h.b16 %v4436
        %v7205 = vunpack.c.l.b16 %v4437
        %v7206 = vunpack.c.h.b16 %v4437
        %v7207 = vunpack.c.l.b16 %v4438
        %v7208 = vunpack.c.h.b16 %v4438
        %v7209 = vunpack.c.l.b16 %v4439
        %v7210 = vunpack.c.h.b16 %v4439
        %v7211 = vunpack.c.l.b16 %v4440
        %v7212 = vunpack.c.h.b16 %v4440
        %v7213 = vunpack.c.l.b16 %v4441
        %v7214 = vunpack.c.h.b16 %v4441
        %v7215 = vunpack.c.l.b16 %v4442
        %v7216 = vunpack.c.h.b16 %v4442
        %v7217 = vunpack.c.l.b16 %v4443
        %v7218 = vunpack.c.h.b16 %v4443
        %v7219 = vunpack.c.l.b16 %v4444
        %v7220 = vunpack.c.h.b16 %v4444
        %v7221 = vunpack.c.l.b16 %v4445
        %v7222 = vunpack.c.h.b16 %v4445
        %v7223 = vunpack.c.l.b16 %v4446
        %v7224 = vunpack.c.h.b16 %v4446
        %v7225 = vunpack.c.l.b16 %v4447
        %v7226 = vunpack.c.h.b16 %v4447
        %v7227 = vunpack.c.l.b16 %v4448
        %v7228 = vunpack.c.h.b16 %v4448
        %v7229 = vunpack.c.l.b16 %v4449
        %v7230 = vunpack.c.h.b16 %v4449
        %v7231 = vunpack.c.l.b16 %v4450
        %v7232 = vunpack.c.h.b16 %v4450
        %v7233 = vunpack.c.l.b16 %v4451
        %v7234 = vunpack.c.h.b16 %v4451
        %v7235 = vunpack.c.l.b16 %v4452
        %v7236 = vunpack.c.h.b16 %v4452
        %v7237 = vunpack.c.l.b16 %v4453
        %v7238 = vunpack.c.h.b16 %v4453
        %v7239 = vunpack.c.l.b16 %v4454
        %v7240 = vunpack.c.h.b16 %v4454
        %v7241 = vunpack.c.l.b16 %v4455
        %v7242 = vunpack.c.h.b16 %v4455
        %v7243 = vunpack.c.l.b16 %v4456
        %v7244 = vunpack.c.h.b16 %v4456
        %v7245 = vunpack.c.l.b16 %v4457
        %v7246 = vunpack.c.h.b16 %v4457
        %v7247 = vunpack.c.l.b16 %v4458
        %v7248 = vunpack.c.h.b16 %v4458
        %v7249 = vunpack.c.l.b16 %v4459
        %v7250 = vunpack.c.h.b16 %v4459
        %v7251 = vunpack.c.l.b16 %v4460
        %v7252 = vunpack.c.h.b16 %v4460
        %v7253 = vunpack.c.l.b16 %v4461
        %v7254 = vunpack.c.h.b16 %v4461
        %v7255 = vunpack.c.l.b16 %v4462
        %v7256 = vunpack.c.h.b16 %v4462
        %v7257 = vunpack.c.l.b16 %v4463
        %v7258 = vunpack.c.h.b16 %v4463
        %v7259 = vunpack.c.l.b16 %v4464
        %v7260 = vunpack.c.h.b16 %v4464
        %v7261 = vunpack.c.l.b16 %v4465
        %v7262 = vunpack.c.h.b16 %v4465
        %v7263 = vunpack.c.l.b16 %v4466
        %v7264 = vunpack.c.h.b16 %v4466
        %v7265 = vunpack.c.l.b16 %v4467
        %v7266 = vunpack.c.h.b16 %v4467
        %v7267 = vunpack.c.l.b16 %v4468
        %v7268 = vunpack.c.h.b16 %v4468
        %v7269 = vunpack.c.l.b16 %v4469
        %v7270 = vunpack.c.h.b16 %v4469
        %v7271 = vunpack.c.l.b16 %v4470
        %v7272 = vunpack.c.h.b16 %v4470
        %v7273 = vunpack.c.l.b16 %v4471
        %v7274 = vunpack.c.h.b16 %v4471
        %v7275 = vunpack.c.l.b16 %v4472
        %v7276 = vunpack.c.h.b16 %v4472
        %v7277 = vunpack.c.l.b16 %v4473
        %v7278 = vunpack.c.h.b16 %v4473
        %v7279 = vunpack.c.l.b16 %v4474
        %v7280 = vunpack.c.h.b16 %v4474
        %v7281 = vunpack.c.l.b16 %v4475
        %v7282 = vunpack.c.h.b16 %v4475
        %v7283 = vunpack.c.l.b16 %v4476
        %v7284 = vunpack.c.h.b16 %v4476
        %v7285 = vunpack.c.l.b16 %v4477
        %v7286 = vunpack.c.h.b16 %v4477
        %v7287 = vunpack.c.l.b16 %v4478
        %v7288 = vunpack.c.h.b16 %v4478
        %v7289 = vunpack.c.l.b16 %v4479
        %v7290 = vunpack.c.h.b16 %v4479
        %v7291 = vunpack.c.l.b16 %v4480
        %v7292 = vunpack.c.h.b16 %v4480
        %v7293 = vunpack.c.l.b16 %v4481
        %v7294 = vunpack.c.h.b16 %v4481
        %v7295 = vunpack.c.l.b16 %v4482
        %v7296 = vunpack.c.h.b16 %v4482
        %v7297 = vunpack.c.l.b16 %v4483
        %v7298 = vunpack.c.h.b16 %v4483
        %v7299 = vunpack.c.l.b16 %v4484
        %v7300 = vunpack.c.h.b16 %v4484
        %v7301 = vunpack.c.l.b16 %v4485
        %v7302 = vunpack.c.h.b16 %v4485
        %v7303 = vunpack.c.l.b16 %v4486
        %v7304 = vunpack.c.h.b16 %v4486
        %v7305 = vunpack.c.l.b16 %v4487
        %v7306 = vunpack.c.h.b16 %v4487
        %v7307 = vunpack.c.l.b16 %v4488
        %v7308 = vunpack.c.h.b16 %v4488
        %v7309 = vunpack.c.l.b16 %v4489
        %v7310 = vunpack.c.h.b16 %v4489
        %v7311 = vunpack.c.l.b16 %v4490
        %v7312 = vunpack.c.h.b16 %v4490
        %v7313 = vunpack.c.l.b16 %v4491
        %v7314 = vunpack.c.h.b16 %v4491
        %v7315 = vunpack.c.l.b16 %v4492
        %v7316 = vunpack.c.h.b16 %v4492
        %v7317 = vunpack.c.l.b16 %v4493
        %v7318 = vunpack.c.h.b16 %v4493
        %v7319 = vunpack.c.l.b16 %v4494
        %v7320 = vunpack.c.h.b16 %v4494
        %v7321 = vunpack.c.l.b16 %v4495
        %v7322 = vunpack.c.h.b16 %v4495
        %v7323 = vunpack.c.l.b16 %v4496
        %v7324 = vunpack.c.h.b16 %v4496
        %v7325 = vunpack.c.l.b16 %v4497
        %v7326 = vunpack.c.h.b16 %v4497
        %v7327 = vunpack.c.l.b16 %v4498
        %v7328 = vunpack.c.h.b16 %v4498
        %v7329 = vunpack.c.l.b16 %v4499
        %v7330 = vunpack.c.h.b16 %v4499
        %v7331 = vunpack.c.l.b16 %v4500
        %v7332 = vunpack.c.h.b16 %v4500
        %v7333 = vunpack.c.l.b16 %v4501
        %v7334 = vunpack.c.h.b16 %v4501
        %v7335 = vunpack.c.l.b16 %v4502
        %v7336 = vunpack.c.h.b16 %v4502
        %v7337 = vunpack.c.l.b16 %v4503
        %v7338 = vunpack.c.h.b16 %v4503
        %v7339 = vunpack.c.l.b16 %v4504
        %v7340 = vunpack.c.h.b16 %v4504
        %v7341 = vunpack.c.l.b16 %v4505
        %v7342 = vunpack.c.h.b16 %v4505
        %v7343 = vunpack.c.l.b16 %v4506
        %v7344 = vunpack.c.h.b16 %v4506
        %v7345 = vunpack.c.l.b16 %v4507
        %v7346 = vunpack.c.h.b16 %v4507
        %v7347 = vunpack.c.l.b16 %v4508
        %v7348 = vunpack.c.h.b16 %v4508
        %v7349 = vunpack.c.l.b16 %v4509
        %v7350 = vunpack.c.h.b16 %v4509
        %v7351 = vunpack.c.l.b16 %v4510
        %v7352 = vunpack.c.h.b16 %v4510
        %v7353 = vunpack.c.l.b16 %v4511
        %v7354 = vunpack.c.h.b16 %v4511
        %v7355 = vunpack.c.l.b16 %v4512
        %v7356 = vunpack.c.h.b16 %v4512
        %v7357 = vunpack.c.l.b16 %v4513
        %v7358 = vunpack.c.h.b16 %v4513
        %v7359 = vunpack.c.l.b16 %v4514
        %v7360 = vunpack.c.h.b16 %v4514
        %v7361 = vunpack.c.l.b16 %v4515
        %v7362 = vunpack.c.h.b16 %v4515
        %v7363 = vunpack.c.l.b16 %v4516
        %v7364 = vunpack.c.h.b16 %v4516
        %v7365 = vunpack.c.l.b16 %v4517
        %v7366 = vunpack.c.h.b16 %v4517
        %v7367 = vunpack.c.l.b16 %v4518
        %v7368 = vunpack.c.h.b16 %v4518
        %v7369 = vunpack.c.l.b16 %v4519
        %v7370 = vunpack.c.h.b16 %v4519
        %v7371 = vunpack.c.l.b16 %v4520
        %v7372 = vunpack.c.h.b16 %v4520
        %v7373 = vunpack.c.l.b16 %v4521
        %v7374 = vunpack.c.h.b16 %v4521
        %v7375 = vunpack.c.l.b16 %v4522
        %v7376 = vunpack.c.h.b16 %v4522
        %v7377 = vunpack.c.l.b16 %v4523
        %v7378 = vunpack.c.h.b16 %v4523
        %v7379 = vunpack.c.l.b16 %v4524
        %v7380 = vunpack.c.h.b16 %v4524
        %v7381 = vunpack.c.l.b16 %v4525
        %v7382 = vunpack.c.h.b16 %v4525
        %v7383 = vunpack.c.l.b16 %v4526
        %v7384 = vunpack.c.h.b16 %v4526
        %v7385 = vunpack.c.l.b16 %v4527
        %v7386 = vunpack.c.h.b16 %v4527
        %v7387 = vunpack.c.l.b16 %v4528
        %v7388 = vunpack.c.h.b16 %v4528
        %v7389 = vunpack.c.l.b16 %v4529
        %v7390 = vunpack.c.h.b16 %v4529
        %v7391 = vunpack.c.l.b16 %v4530
        %v7392 = vunpack.c.h.b16 %v4530
        %v7393 = vunpack.c.l.b16 %v4531
        %v7394 = vunpack.c.h.b16 %v4531
        %v7395 = vunpack.c.l.b16 %v4532
        %v7396 = vunpack.c.h.b16 %v4532
        %v7397 = vunpack.c.l.b16 %v4533
        %v7398 = vunpack.c.h.b16 %v4533
        %v7399 = vunpack.c.l.b16 %v4534
        %v7400 = vunpack.c.h.b16 %v4534
        %v7401 = vunpack.c.l.b16 %v4535
        %v7402 = vunpack.c.h.b16 %v4535
        %v7403 = vunpack.c.l.b16 %v4536
        %v7404 = vunpack.c.h.b16 %v4536
        %v7405 = vunpack.c.l.b16 %v4537
        %v7406 = vunpack.c.h.b16 %v4537
        %v7407 = vunpack.c.l.b16 %v4538
        %v7408 = vunpack.c.h.b16 %v4538
        %v7409 = vunpack.c.l.b16 %v4539
        %v7410 = vunpack.c.h.b16 %v4539
        %v7411 = vunpack.c.l.b16 %v4540
        %v7412 = vunpack.c.h.b16 %v4540
        %v7413 = vunpack.c.l.b16 %v4541
        %v7414 = vunpack.c.h.b16 %v4541
        %v7415 = vunpack.c.l.b16 %v4542
        %v7416 = vunpack.c.h.b16 %v4542
        %v7417 = vunpack.c.l.b16 %v4543
        %v7418 = vunpack.c.h.b16 %v4543
        %v7419 = vunpack.c.l.b16 %v4544
        %v7420 = vunpack.c.h.b16 %v4544
        %v7421 = vunpack.c.l.b16 %v4545
        %v7422 = vunpack.c.h.b16 %v4545
        %v7423 = vunpack.c.l.b16 %v4546
        %v7424 = vunpack.c.h.b16 %v4546
        %v7425 = vunpack.c.l.b16 %v4547
        %v7426 = vunpack.c.h.b16 %v4547
        %v7427 = vunpack.c.l.b16 %v4548
        %v7428 = vunpack.c.h.b16 %v4548
        %v7429 = vunpack.c.l.b16 %v4549
        %v7430 = vunpack.c.h.b16 %v4549
        %v7431 = vunpack.c.l.b16 %v4550
        %v7432 = vunpack.c.h.b16 %v4550
        %v7433 = vunpack.c.l.b16 %v4551
        %v7434 = vunpack.c.h.b16 %v4551
        %v7435 = vunpack.c.l.b16 %v4552
        %v7436 = vunpack.c.h.b16 %v4552
        %v7437 = vunpack.c.l.b16 %v4553
        %v7438 = vunpack.c.h.b16 %v4553
        %v7439 = vunpack.c.l.b16 %v4554
        %v7440 = vunpack.c.h.b16 %v4554
        %v7441 = vunpack.c.l.b16 %v4555
        %v7442 = vunpack.c.h.b16 %v4555
        %v7443 = vunpack.c.l.b16 %v4556
        %v7444 = vunpack.c.h.b16 %v4556
        %v7445 = vunpack.c.l.b16 %v4557
        %v7446 = vunpack.c.h.b16 %v4557
        %v7447 = vunpack.c.l.b16 %v4558
        %v7448 = vunpack.c.h.b16 %v4558
        %v7449 = vunpack.c.l.b16 %v4559
        %v7450 = vunpack.c.h.b16 %v4559
        %v7451 = vunpack.c.l.b16 %v4560
        %v7452 = vunpack.c.h.b16 %v4560
        %v7453 = vunpack.c.l.b16 %v4561
        %v7454 = vunpack.c.h.b16 %v4561
        %v7455 = vunpack.c.l.b16 %v4562
        %v7456 = vunpack.c.h.b16 %v4562
        %v7457 = vunpack.c.l.b16 %v4563
        %v7458 = vunpack.c.h.b16 %v4563
        %v7459 = vunpack.c.l.b16 %v4564
        %v7460 = vunpack.c.h.b16 %v4564
        %v7461 = vunpack.c.l.b16 %v4565
        %v7462 = vunpack.c.h.b16 %v4565
        %v7463 = vunpack.c.l.b16 %v4566
        %v7464 = vunpack.c.h.b16 %v4566
        %v7465 = vunpack.c.l.b16 %v4567
        %v7466 = vunpack.c.h.b16 %v4567
        %v7467 = vunpack.c.l.b16 %v4568
        %v7468 = vunpack.c.h.b16 %v4568
        %v7469 = vunpack.c.l.b16 %v4569
        %v7470 = vunpack.c.h.b16 %v4569
        %v7471 = vunpack.c.l.b16 %v4570
        %v7472 = vunpack.c.h.b16 %v4570
        %v7473 = vunpack.c.l.b16 %v4571
        %v7474 = vunpack.c.h.b16 %v4571
        %v7475 = vunpack.c.l.b16 %v4572
        %v7476 = vunpack.c.h.b16 %v4572
        %v7477 = vunpack.c.l.b16 %v4573
        %v7478 = vunpack.c.h.b16 %v4573
        %v7479 = vunpack.c.l.b16 %v4574
        %v7480 = vunpack.c.h.b16 %v4574
        %v7481 = vunpack.c.l.b16 %v4575
        %v7482 = vunpack.c.h.b16 %v4575
        %v7483 = vunpack.c.l.b16 %v4576
        %v7484 = vunpack.c.h.b16 %v4576
        %v7485 = vunpack.c.l.b16 %v4577
        %v7486 = vunpack.c.h.b16 %v4577
        %v7487 = vunpack.c.l.b16 %v4578
        %v7488 = vunpack.c.h.b16 %v4578
        %v7489 = vunpack.c.l.b16 %v4579
        %v7490 = vunpack.c.h.b16 %v4579
        %v7491 = vunpack.c.l.b16 %v4580
        %v7492 = vunpack.c.h.b16 %v4580
        %v7493 = vunpack.c.l.b16 %v4581
        %v7494 = vunpack.c.h.b16 %v4581
        %v7495 = vunpack.c.l.b16 %v4582
        %v7496 = vunpack.c.h.b16 %v4582
        %v7497 = vunpack.c.l.b16 %v4583
        %v7498 = vunpack.c.h.b16 %v4583
        %v7499 = vunpack.c.l.b16 %v4584
        %v7500 = vunpack.c.h.b16 %v4584
        %v7501 = vunpack.c.l.b16 %v4585
        %v7502 = vunpack.c.h.b16 %v4585
        %v7503 = vunpack.c.l.b16 %v4586
        %v7504 = vunpack.c.h.b16 %v4586
        %v7505 = vunpack.c.l.b16 %v4587
        %v7506 = vunpack.c.h.b16 %v4587
        %v7507 = vunpack.c.l.b16 %v4588
        %v7508 = vunpack.c.h.b16 %v4588
        %v7509 = vunpack.c.l.b16 %v4589
        %v7510 = vunpack.c.h.b16 %v4589
        %v7511 = vunpack.c.l.b16 %v4590
        %v7512 = vunpack.c.h.b16 %v4590
        %v7513 = vunpack.c.l.b16 %v4591
        %v7514 = vunpack.c.h.b16 %v4591
        %v7515 = vunpack.c.l.b16 %v4592
        %v7516 = vunpack.c.h.b16 %v4592
        %v7517 = vunpack.c.l.b16 %v4593
        %v7518 = vunpack.c.h.b16 %v4593
        %v7519 = vunpack.c.l.b16 %v4594
        %v7520 = vunpack.c.h.b16 %v4594
        %v7521 = vunpack.c.l.b16 %v4595
        %v7522 = vunpack.c.h.b16 %v4595
        %v7523 = vunpack.c.l.b16 %v4596
        %v7524 = vunpack.c.h.b16 %v4596
        %v7525 = vunpack.c.l.b16 %v4597
        %v7526 = vunpack.c.h.b16 %v4597
        %v7527 = vunpack.c.l.b16 %v4598
        %v7528 = vunpack.c.h.b16 %v4598
        %v7529 = vunpack.c.l.b16 %v4599
        %v7530 = vunpack.c.h.b16 %v4599
        %v7531 = vunpack.c.l.b16 %v4600
        %v7532 = vunpack.c.h.b16 %v4600
        %v7533 = vunpack.c.l.b16 %v4601
        %v7534 = vunpack.c.h.b16 %v4601
        %v7535 = vunpack.c.l.b16 %v4602
        %v7536 = vunpack.c.h.b16 %v4602
        %v7537 = vunpack.c.l.b16 %v4603
        %v7538 = vunpack.c.h.b16 %v4603
        %v7539 = vunpack.c.l.b16 %v4604
        %v7540 = vunpack.c.h.b16 %v4604
        %v7541 = vunpack.c.l.b16 %v4605
        %v7542 = vunpack.c.h.b16 %v4605
        %v7543 = vunpack.c.l.b16 %v4606
        %v7544 = vunpack.c.h.b16 %v4606
        %v7545 = vunpack.c.l.b16 %v4607
        %v7546 = vunpack.c.h.b16 %v4607
        %v7547 = vunpack.c.l.b16 %v4608
        %v7548 = vunpack.c.h.b16 %v4608
        %v7549 = vunpack.c.l.b16 %v4609
        %v7550 = vunpack.c.h.b16 %v4609
        %v7551 = vunpack.c.l.b16 %v4610
        %v7552 = vunpack.c.h.b16 %v4610
        %v7553 = vunpack.c.l.b16 %v4611
        %v7554 = vunpack.c.h.b16 %v4611
        %v7555 = vunpack.c.l.b16 %v4612
        %v7556 = vunpack.c.h.b16 %v4612
        %v7557 = vunpack.c.l.b16 %v4613
        %v7558 = vunpack.c.h.b16 %v4613
        %v7559 = vunpack.c.l.b16 %v4614
        %v7560 = vunpack.c.h.b16 %v4614
        %v7561 = vunpack.c.l.b16 %v4615
        %v7562 = vunpack.c.h.b16 %v4615
        %v7563 = vunpack.c.l.b16 %v4616
        %v7564 = vunpack.c.h.b16 %v4616
        %v7565 = vunpack.c.l.b16 %v4617
        %v7566 = vunpack.c.h.b16 %v4617
        %v7567 = vunpack.c.l.b16 %v4618
        %v7568 = vunpack.c.h.b16 %v4618
        %v7569 = vunpack.c.l.b16 %v4619
        %v7570 = vunpack.c.h.b16 %v4619
        %v7571 = vunpack.c.l.b16 %v4620
        %v7572 = vunpack.c.h.b16 %v4620
        %v7573 = vunpack.c.l.b16 %v4621
        %v7574 = vunpack.c.h.b16 %v4621
        %v7575 = vunpack.c.l.b16 %v4622
        %v7576 = vunpack.c.h.b16 %v4622
        %v7577 = vunpack.c.l.b16 %v4623
        %v7578 = vunpack.c.h.b16 %v4623
        %v7579 = vunpack.c.l.b16 %v4624
        %v7580 = vunpack.c.h.b16 %v4624
        %v7581 = vunpack.c.l.b16 %v4625
        %v7582 = vunpack.c.h.b16 %v4625
        %v7583 = vunpack.c.l.b16 %v4626
        %v7584 = vunpack.c.h.b16 %v4626
        %v7585 = vunpack.c.l.b16 %v4627
        %v7586 = vunpack.c.h.b16 %v4627
        %v7587 = vunpack.c.l.b16 %v4628
        %v7588 = vunpack.c.h.b16 %v4628
        %v7589 = vunpack.c.l.b16 %v4629
        %v7590 = vunpack.c.h.b16 %v4629
        %v7591 = vunpack.c.l.b16 %v4630
        %v7592 = vunpack.c.h.b16 %v4630
        %v7593 = vunpack.c.l.b16 %v4631
        %v7594 = vunpack.c.h.b16 %v4631
        %v7595 = vunpack.c.l.b16 %v4632
        %v7596 = vunpack.c.h.b16 %v4632
        %v7597 = vunpack.c.l.b16 %v4633
        %v7598 = vunpack.c.h.b16 %v4633
        %v7599 = vunpack.c.l.b16 %v4634
        %v7600 = vunpack.c.h.b16 %v4634
        %v7601 = vunpack.c.l.b16 %v4635
        %v7602 = vunpack.c.h.b16 %v4635
        %v7603 = vunpack.c.l.b16 %v4636
        %v7604 = vunpack.c.h.b16 %v4636
        %v7605 = vunpack.c.l.b16 %v4637
        %v7606 = vunpack.c.h.b16 %v4637
        %v7607 = vunpack.c.l.b16 %v4638
        %v7608 = vunpack.c.h.b16 %v4638
        %v7609 = vunpack.c.l.b16 %v4639
        %v7610 = vunpack.c.h.b16 %v4639
        %v7611 = vunpack.c.l.b16 %v4640
        %v7612 = vunpack.c.h.b16 %v4640
        %v7613 = vunpack.c.l.b16 %v4641
        %v7614 = vunpack.c.h.b16 %v4641
        %v7615 = vunpack.c.l.b16 %v4642
        %v7616 = vunpack.c.h.b16 %v4642
        %v7617 = vunpack.c.l.b16 %v4643
        %v7618 = vunpack.c.h.b16 %v4643
        %v7619 = vunpack.c.l.b16 %v4644
        %v7620 = vunpack.c.h.b16 %v4644
        %v7621 = vunpack.c.l.b16 %v4645
        %v7622 = vunpack.c.h.b16 %v4645
        %v7623 = vunpack.c.l.b16 %v4646
        %v7624 = vunpack.c.h.b16 %v4646
        %v7625 = vunpack.c.l.b16 %v4647
        %v7626 = vunpack.c.h.b16 %v4647
        %v7627 = vunpack.c.l.b16 %v4648
        %v7628 = vunpack.c.h.b16 %v4648
        %v7629 = vunpack.c.l.b16 %v4649
        %v7630 = vunpack.c.h.b16 %v4649
        %v7631 = vunpack.c.l.b16 %v4650
        %v7632 = vunpack.c.h.b16 %v4650
        %v7633 = vunpack.c.l.b16 %v4651
        %v7634 = vunpack.c.h.b16 %v4651
        %v7635 = vunpack.c.l.b16 %v4652
        %v7636 = vunpack.c.h.b16 %v4652
        %v7637 = vunpack.c.l.b16 %v4653
        %v7638 = vunpack.c.h.b16 %v4653
        %v7639 = vunpack.c.l.b16 %v4654
        %v7640 = vunpack.c.h.b16 %v4654
        %v7641 = vunpack.c.l.b16 %v4655
        %v7642 = vunpack.c.h.b16 %v4655
        %v7643 = vunpack.c.l.b16 %v4656
        %v7644 = vunpack.c.h.b16 %v4656
        %v7645 = vunpack.c.l.b16 %v4657
        %v7646 = vunpack.c.h.b16 %v4657
        %v7647 = vunpack.c.l.b16 %v4658
        %v7648 = vunpack.c.h.b16 %v4658
        %v7649 = vunpack.c.l.b16 %v4659
        %v7650 = vunpack.c.h.b16 %v4659
        %v7651 = vunpack.c.l.b16 %v4660
        %v7652 = vunpack.c.h.b16 %v4660
        %v7653 = vunpack.c.l.b16 %v4661
        %v7654 = vunpack.c.h.b16 %v4661
        %v7655 = vunpack.c.l.b16 %v4662
        %v7656 = vunpack.c.h.b16 %v4662
        %v7657 = vunpack.c.l.b16 %v4663
        %v7658 = vunpack.c.h.b16 %v4663
        %v7659 = vunpack.c.l.b16 %v4664
        %v7660 = vunpack.c.h.b16 %v4664
        %v7661 = vunpack.c.l.b16 %v4665
        %v7662 = vunpack.c.h.b16 %v4665
        %v7663 = vunpack.c.l.b16 %v4666
        %v7664 = vunpack.c.h.b16 %v4666
        %v7665 = vunpack.c.l.b16 %v4667
        %v7666 = vunpack.c.h.b16 %v4667
        %v7667 = vunpack.c.l.b16 %v4668
        %v7668 = vunpack.c.h.b16 %v4668
        %v7669 = vunpack.c.l.b16 %v4669
        %v7670 = vunpack.c.h.b16 %v4669
        %v7671 = vunpack.c.l.b16 %v4670
        %v7672 = vunpack.c.h.b16 %v4670
        %v7673 = vunpack.c.l.b16 %v4671
        %v7674 = vunpack.c.h.b16 %v4671
        %v7675 = vunpack.c.l.b16 %v4672
        %v7676 = vunpack.c.h.b16 %v4672
        %v7677 = vunpack.c.l.b16 %v4673
        %v7678 = vunpack.c.h.b16 %v4673
        %v7679 = vunpack.c.l.b16 %v4674
        %v7680 = vunpack.c.h.b16 %v4674
        %v7681 = vunpack.c.l.b16 %v4675
        %v7682 = vunpack.c.h.b16 %v4675
        %v7683 = vunpack.c.l.b16 %v4676
        %v7684 = vunpack.c.h.b16 %v4676
        %v7685 = vunpack.c.l.b16 %v4677
        %v7686 = vunpack.c.h.b16 %v4677
        %v7687 = vunpack.c.l.b16 %v4678
        %v7688 = vunpack.c.h.b16 %v4678
        %v7689 = vunpack.c.l.b16 %v4679
        %v7690 = vunpack.c.h.b16 %v4679
        %v7691 = vunpack.c.l.b16 %v4680
        %v7692 = vunpack.c.h.b16 %v4680
        %v7693 = vunpack.c.l.b16 %v4681
        %v7694 = vunpack.c.h.b16 %v4681
        %v7695 = vunpack.c.l.b16 %v4682
        %v7696 = vunpack.c.h.b16 %v4682
        %v7697 = vunpack.c.l.b16 %v4683
        %v7698 = vunpack.c.h.b16 %v4683
        %v7699 = vunpack.c.l.b16 %v4684
        %v7700 = vunpack.c.h.b16 %v4684
        %v7701 = vunpack.c.l.b16 %v4685
        %v7702 = vunpack.c.h.b16 %v4685
        %v7703 = vunpack.c.l.b16 %v4686
        %v7704 = vunpack.c.h.b16 %v4686
        %v7705 = vunpack.c.l.b16 %v4687
        %v7706 = vunpack.c.h.b16 %v4687
        %v7707 = vunpack.c.l.b16 %v4688
        %v7708 = vunpack.c.h.b16 %v4688
        %v7709 = vunpack.c.l.b16 %v4689
        %v7710 = vunpack.c.h.b16 %v4689
        %v7711 = vunpack.c.l.b16 %v4690
        %v7712 = vunpack.c.h.b16 %v4690
        %v7713 = vunpack.c.l.b16 %v4691
        %v7714 = vunpack.c.h.b16 %v4691
        %v7715 = vunpack.c.l.b16 %v4692
        %v7716 = vunpack.c.h.b16 %v4692
        %v7717 = vunpack.c.l.b16 %v4693
        %v7718 = vunpack.c.h.b16 %v4693
        %v7719 = vunpack.c.l.b16 %v4694
        %v7720 = vunpack.c.h.b16 %v4694
        %v7721 = vunpack.c.l.b16 %v4695
        %v7722 = vunpack.c.h.b16 %v4695
        %v7723 = vunpack.c.l.b16 %v4696
        %v7724 = vunpack.c.h.b16 %v4696
        %v7725 = vunpack.c.l.b16 %v4697
        %v7726 = vunpack.c.h.b16 %v4697
        %v7727 = vunpack.c.l.b16 %v4698
        %v7728 = vunpack.c.h.b16 %v4698
        %v7729 = vunpack.c.l.b16 %v4699
        %v7730 = vunpack.c.h.b16 %v4699
        %v7731 = vunpack.c.l.b16 %v4700
        %v7732 = vunpack.c.h.b16 %v4700
        %v7733 = vunpack.c.l.b16 %v4701
        %v7734 = vunpack.c.h.b16 %v4701
        %v7735 = vunpack.c.l.b16 %v4702
        %v7736 = vunpack.c.h.b16 %v4702
        %v7737 = vunpack.c.l.b16 %v4703
        %v7738 = vunpack.c.h.b16 %v4703
        %v7739 = vunpack.c.l.b16 %v4704
        %v7740 = vunpack.c.h.b16 %v4704
        %v7741 = vunpack.c.l.b16 %v4705
        %v7742 = vunpack.c.h.b16 %v4705
        %v7743 = vunpack.c.l.b16 %v4706
        %v7744 = vunpack.c.h.b16 %v4706
        %v7745 = vunpack.c.l.b16 %v4707
        %v7746 = vunpack.c.h.b16 %v4707
        %v7747 = vunpack.c.l.b16 %v4708
        %v7748 = vunpack.c.h.b16 %v4708
        %v7749 = vunpack.c.l.b16 %v4709
        %v7750 = vunpack.c.h.b16 %v4709
        %v7751 = vunpack.c.l.b16 %v4710
        %v7752 = vunpack.c.h.b16 %v4710
        %v7753 = vunpack.c.l.b16 %v4711
        %v7754 = vunpack.c.h.b16 %v4711
        %v7755 = vunpack.c.l.b16 %v4712
        %v7756 = vunpack.c.h.b16 %v4712
        %v7757 = vunpack.c.l.b16 %v4713
        %v7758 = vunpack.c.h.b16 %v4713
        %v7759 = vunpack.c.l.b16 %v4714
        %v7760 = vunpack.c.h.b16 %v4714
        %v7761 = vunpack.c.l.b16 %v4715
        %v7762 = vunpack.c.h.b16 %v4715
        %v7763 = vunpack.c.l.b16 %v4716
        %v7764 = vunpack.c.h.b16 %v4716
        %v7765 = vunpack.c.l.b16 %v4717
        %v7766 = vunpack.c.h.b16 %v4717
        %v7767 = vunpack.c.l.b16 %v4718
        %v7768 = vunpack.c.h.b16 %v4718
        %v7769 = vunpack.c.l.b16 %v4719
        %v7770 = vunpack.c.h.b16 %v4719
        %v7771 = vunpack.c.l.b16 %v4720
        %v7772 = vunpack.c.h.b16 %v4720
        %v7773 = vunpack.c.l.b16 %v4721
        %v7774 = vunpack.c.h.b16 %v4721
        %v7775 = vunpack.c.l.b16 %v4722
        %v7776 = vunpack.c.h.b16 %v4722
        %v7777 = vunpack.c.l.b16 %v4723
        %v7778 = vunpack.c.h.b16 %v4723
        %v7779 = vunpack.c.l.b16 %v4724
        %v7780 = vunpack.c.h.b16 %v4724
        %v7781 = vunpack.c.l.b16 %v4725
        %v7782 = vunpack.c.h.b16 %v4725
        %v7783 = vunpack.c.l.b16 %v4726
        %v7784 = vunpack.c.h.b16 %v4726
        %v7785 = vunpack.c.l.b16 %v4727
        %v7786 = vunpack.c.h.b16 %v4727
        %v7787 = vunpack.c.l.b16 %v4728
        %v7788 = vunpack.c.h.b16 %v4728
        %v7789 = vunpack.c.l.b16 %v4729
        %v7790 = vunpack.c.h.b16 %v4729
        %v7791 = vunpack.c.l.b16 %v4730
        %v7792 = vunpack.c.h.b16 %v4730
        %v7793 = vunpack.c.l.b16 %v4731
        %v7794 = vunpack.c.h.b16 %v4731
        %v7795 = vunpack.c.l.b16 %v4732
        %v7796 = vunpack.c.h.b16 %v4732
        %v7797 = vunpack.c.l.b16 %v4733
        %v7798 = vunpack.c.h.b16 %v4733
        %v7799 = vunpack.c.l.b16 %v4734
        %v7800 = vunpack.c.h.b16 %v4734
        %v7801 = vunpack.c.l.b16 %v4735
        %v7802 = vunpack.c.h.b16 %v4735
        %v7803 = vunpack.c.l.b16 %v4736
        %v7804 = vunpack.c.h.b16 %v4736
        %v7805 = vunpack.c.l.b16 %v4737
        %v7806 = vunpack.c.h.b16 %v4737
        %v7807 = vunpack.c.l.b16 %v4738
        %v7808 = vunpack.c.h.b16 %v4738
        %v7809 = vunpack.c.l.b16 %v4739
        %v7810 = vunpack.c.h.b16 %v4739
        %v7811 = vunpack.c.l.b16 %v4740
        %v7812 = vunpack.c.h.b16 %v4740
        %v7813 = vunpack.c.l.b16 %v4741
        %v7814 = vunpack.c.h.b16 %v4741
        %v7815 = vunpack.c.l.b16 %v4742
        %v7816 = vunpack.c.h.b16 %v4742
        %v7817 = vunpack.c.l.b16 %v4743
        %v7818 = vunpack.c.h.b16 %v4743
        %v7819 = vunpack.c.l.b16 %v4744
        %v7820 = vunpack.c.h.b16 %v4744
        %v7821 = vunpack.c.l.b16 %v4745
        %v7822 = vunpack.c.h.b16 %v4745
        %v7823 = vunpack.c.l.b16 %v4746
        %v7824 = vunpack.c.h.b16 %v4746
        %v7825 = vunpack.c.l.b16 %v4747
        %v7826 = vunpack.c.h.b16 %v4747
        %v7827 = vunpack.c.l.b16 %v4748
        %v7828 = vunpack.c.h.b16 %v4748
        %v7829 = vunpack.c.l.b16 %v4749
        %v7830 = vunpack.c.h.b16 %v4749
        %v7831 = vunpack.c.l.b16 %v4750
        %v7832 = vunpack.c.h.b16 %v4750
        %v7833 = vunpack.c.l.b16 %v4751
        %v7834 = vunpack.c.h.b16 %v4751
        %v7835 = vunpack.c.l.b16 %v4752
        %v7836 = vunpack.c.h.b16 %v4752
        %v7837 = vunpack.c.l.b16 %v4753
        %v7838 = vunpack.c.h.b16 %v4753
        %v7839 = vunpack.c.l.b16 %v4754
        %v7840 = vunpack.c.h.b16 %v4754
        %v7841 = vunpack.c.l.b16 %v4755
        %v7842 = vunpack.c.h.b16 %v4755
        %v7843 = vunpack.c.l.b16 %v4756
        %v7844 = vunpack.c.h.b16 %v4756
        %v7845 = vunpack.c.l.b16 %v4757
        %v7846 = vunpack.c.h.b16 %v4757
        %v7847 = vunpack.c.l.b16 %v4758
        %v7848 = vunpack.c.h.b16 %v4758
        %v7849 = vunpack.c.l.b16 %v4759
        %v7850 = vunpack.c.h.b16 %v4759
        %v7851 = vunpack.c.l.b16 %v4760
        %v7852 = vunpack.c.h.b16 %v4760
        %v7853 = vunpack.c.l.b16 %v4761
        %v7854 = vunpack.c.h.b16 %v4761
        %v7855 = vunpack.c.l.b16 %v4762
        %v7856 = vunpack.c.h.b16 %v4762
        %v7857 = vunpack.c.l.b16 %v4763
        %v7858 = vunpack.c.h.b16 %v4763
        %v7859 = vunpack.c.l.b16 %v4764
        %v7860 = vunpack.c.h.b16 %v4764
        %v7861 = vunpack.c.l.b16 %v4765
        %v7862 = vunpack.c.h.b16 %v4765
        %v7863 = vunpack.c.l.b16 %v4766
        %v7864 = vunpack.c.h.b16 %v4766
        %v7865 = vunpack.c.l.b16 %v4767
        %v7866 = vunpack.c.h.b16 %v4767
        %v7867 = vunpack.c.l.b16 %v4768
        %v7868 = vunpack.c.h.b16 %v4768
        %v7869 = vunpack.c.l.b16 %v4769
        %v7870 = vunpack.c.h.b16 %v4769
        %v7871 = vunpack.c.l.b16 %v4770
        %v7872 = vunpack.c.h.b16 %v4770
        %v7873 = vunpack.c.l.b16 %v4771
        %v7874 = vunpack.c.h.b16 %v4771
        %v7875 = vunpack.c.l.b16 %v4772
        %v7876 = vunpack.c.h.b16 %v4772
        %v7877 = vunpack.c.l.b16 %v4773
        %v7878 = vunpack.c.h.b16 %v4773
        %v7879 = vunpack.c.l.b16 %v4774
        %v7880 = vunpack.c.h.b16 %v4774
        %v7881 = vunpack.c.l.b16 %v4775
        %v7882 = vunpack.c.h.b16 %v4775
        %v7883 = vunpack.c.l.b16 %v4776
        %v7884 = vunpack.c.h.b16 %v4776
        %v7885 = vunpack.c.l.b16 %v4777
        %v7886 = vunpack.c.h.b16 %v4777
        %v7887 = vunpack.c.l.b16 %v4778
        %v7888 = vunpack.c.h.b16 %v4778
        %v7889 = vunpack.c.l.b16 %v4779
        %v7890 = vunpack.c.h.b16 %v4779
        %v7891 = vunpack.c.l.b16 %v4780
        %v7892 = vunpack.c.h.b16 %v4780
        %v7893 = vunpack.c.l.b16 %v4781
        %v7894 = vunpack.c.h.b16 %v4781
        %v7895 = vunpack.c.l.b16 %v4782
        %v7896 = vunpack.c.h.b16 %v4782
        %v7897 = vunpack.c.l.b16 %v4783
        %v7898 = vunpack.c.h.b16 %v4783
        %v7899 = vunpack.c.l.b16 %v4784
        %v7900 = vunpack.c.h.b16 %v4784
        %v7901 = vunpack.c.l.b16 %v4785
        %v7902 = vunpack.c.h.b16 %v4785
        %v7903 = vunpack.c.l.b16 %v4786
        %v7904 = vunpack.c.h.b16 %v4786
        %v7905 = vunpack.c.l.b16 %v4787
        %v7906 = vunpack.c.h.b16 %v4787
        %v7907 = vunpack.c.l.b16 %v4788
        %v7908 = vunpack.c.h.b16 %v4788
        %v7909 = vunpack.c.l.b16 %v4789
        %v7910 = vunpack.c.h.b16 %v4789
        %v7911 = vunpack.c.l.b16 %v4790
        %v7912 = vunpack.c.h.b16 %v4790
        %v7913 = vunpack.c.l.b16 %v4791
        %v7914 = vunpack.c.h.b16 %v4791
        %v7915 = vunpack.c.l.b16 %v4792
        %v7916 = vunpack.c.h.b16 %v4792
        %v7917 = vunpack.c.l.b16 %v4793
        %v7918 = vunpack.c.h.b16 %v4793
        %v7919 = vunpack.c.l.b16 %v4794
        %v7920 = vunpack.c.h.b16 %v4794
        %v7921 = vunpack.c.l.b16 %v4795
        %v7922 = vunpack.c.h.b16 %v4795
        %v7923 = vunpack.c.l.b16 %v4796
        %v7924 = vunpack.c.h.b16 %v4796
        %v7925 = vunpack.c.l.b16 %v4797
        %v7926 = vunpack.c.h.b16 %v4797
        %v7927 = vunpack.c.l.b16 %v4798
        %v7928 = vunpack.c.h.b16 %v4798
        %v7929 = vunpack.c.l.b16 %v4799
        %v7930 = vunpack.c.h.b16 %v4799
        %v7931 = vunpack.c.l.b16 %v4800
        %v7932 = vunpack.c.h.b16 %v4800
        %v7933 = vunpack.c.l.b16 %v4801
        %v7934 = vunpack.c.h.b16 %v4801
        %v7935 = vunpack.c.l.b16 %v4802
        %v7936 = vunpack.c.h.b16 %v4802
        %v7937 = vunpack.c.l.b16 %v4803
        %v7938 = vunpack.c.h.b16 %v4803
        %v7939 = vunpack.c.l.b16 %v4804
        %v7940 = vunpack.c.h.b16 %v4804
        %v7941 = vunpack.c.l.b16 %v4805
        %v7942 = vunpack.c.h.b16 %v4805
        %v7943 = vunpack.c.l.b16 %v4806
        %v7944 = vunpack.c.h.b16 %v4806
        %v7945 = vunpack.c.l.b16 %v4807
        %v7946 = vunpack.c.h.b16 %v4807
        %v7947 = vunpack.c.l.b16 %v4808
        %v7948 = vunpack.c.h.b16 %v4808
        %v7949 = vunpack.c.l.b16 %v4809
        %v7950 = vunpack.c.h.b16 %v4809
        %v7951 = vunpack.c.l.b16 %v4810
        %v7952 = vunpack.c.h.b16 %v4810
        %v7953 = vunpack.c.l.b16 %v4811
        %v7954 = vunpack.c.h.b16 %v4811
        %v7955 = vunpack.c.l.b16 %v4812
        %v7956 = vunpack.c.h.b16 %v4812
        %v7957 = vunpack.c.l.b16 %v4813
        %v7958 = vunpack.c.h.b16 %v4813
        %v7959 = vunpack.c.l.b16 %v4814
        %v7960 = vunpack.c.h.b16 %v4814
        %v7961 = vunpack.c.l.b16 %v4815
        %v7962 = vunpack.c.h.b16 %v4815
        %v7963 = vunpack.c.l.b16 %v4816
        %v7964 = vunpack.c.h.b16 %v4816
        %v7965 = vunpack.c.l.b16 %v4817
        %v7966 = vunpack.c.h.b16 %v4817
        %v7967 = vunpack.c.l.b16 %v4818
        %v7968 = vunpack.c.h.b16 %v4818
        %v7969 = vunpack.c.l.b16 %v4819
        %v7970 = vunpack.c.h.b16 %v4819
        %v7971 = vunpack.c.l.b16 %v4820
        %v7972 = vunpack.c.h.b16 %v4820
        %v7973 = vunpack.c.l.b16 %v4821
        %v7974 = vunpack.c.h.b16 %v4821
        %v7975 = vunpack.c.l.b16 %v4822
        %v7976 = vunpack.c.h.b16 %v4822
        %v7977 = vunpack.c.l.b16 %v4823
        %v7978 = vunpack.c.h.b16 %v4823
        %v7979 = vunpack.c.l.b16 %v4824
        %v7980 = vunpack.c.h.b16 %v4824
        %v7981 = vunpack.c.l.b16 %v4825
        %v7982 = vunpack.c.h.b16 %v4825
        %v7983 = vunpack.c.l.b16 %v4826
        %v7984 = vunpack.c.h.b16 %v4826
        %v7985 = vunpack.c.l.b16 %v4827
        %v7986 = vunpack.c.h.b16 %v4827
        %v7987 = vunpack.c.l.b16 %v4828
        %v7988 = vunpack.c.h.b16 %v4828
        %v7989 = vunpack.c.l.b16 %v4829
        %v7990 = vunpack.c.h.b16 %v4829
        %v7991 = vunpack.c.l.b16 %v4830
        %v7992 = vunpack.c.h.b16 %v4830
        %v7993 = vunpack.c.l.b16 %v4831
        %v7994 = vunpack.c.h.b16 %v4831
        %v7995 = vunpack.c.l.b16 %v4832
        %v7996 = vunpack.c.h.b16 %v4832
        %v7997 = vunpack.c.l.b16 %v4833
        %v7998 = vunpack.c.h.b16 %v4833
        %v7999 = vunpack.c.l.b16 %v4834
        %v8000 = vunpack.c.h.b16 %v4834
        %v8001 = vunpack.c.l.b16 %v4835
        %v8002 = vunpack.c.h.b16 %v4835
        %v8003 = vunpack.c.l.b16 %v4836
        %v8004 = vunpack.c.h.b16 %v4836
        %v8005 = vunpack.c.l.b16 %v4837
        %v8006 = vunpack.c.h.b16 %v4837
        %v8007 = vunpack.c.l.b16 %v4838
        %v8008 = vunpack.c.h.b16 %v4838
        %v8009 = vunpack.c.l.b16 %v4839
        %v8010 = vunpack.c.h.b16 %v4839
        %v8011 = vunpack.c.l.b16 %v4840
        %v8012 = vunpack.c.h.b16 %v4840
        %v8013 = vunpack.c.l.b16 %v4841
        %v8014 = vunpack.c.h.b16 %v4841
        %v8015 = vunpack.c.l.b16 %v4842
        %v8016 = vunpack.c.h.b16 %v4842
        %v8017 = vunpack.c.l.b16 %v4843
        %v8018 = vunpack.c.h.b16 %v4843
        %v8019 = vunpack.c.l.b16 %v4844
        %v8020 = vunpack.c.h.b16 %v4844
        %v8021 = vunpack.c.l.b16 %v4845
        %v8022 = vunpack.c.h.b16 %v4845
        %v8023 = vunpack.c.l.b16 %v4846
        %v8024 = vunpack.c.h.b16 %v4846
        %v8025 = vunpack.c.l.b16 %v4847
        %v8026 = vunpack.c.h.b16 %v4847
        %v8027 = vunpack.c.l.b16 %v4848
        %v8028 = vunpack.c.h.b16 %v4848
        %v8029 = vunpack.c.l.b16 %v4849
        %v8030 = vunpack.c.h.b16 %v4849
        %v8031 = vunpack.c.l.b16 %v4850
        %v8032 = vunpack.c.h.b16 %v4850
        %v8033 = vunpack.c.l.b16 %v4851
        %v8034 = vunpack.c.h.b16 %v4851
        %v8035 = vunpack.c.l.b16 %v4852
        %v8036 = vunpack.c.h.b16 %v4852
        %v8037 = vunpack.c.l.b16 %v4853
        %v8038 = vunpack.c.h.b16 %v4853
        %v8039 = vunpack.c.l.b16 %v4854
        %v8040 = vunpack.c.h.b16 %v4854
        %v8041 = vunpack.c.l.b16 %v4855
        %v8042 = vunpack.c.h.b16 %v4855
        %v8043 = vunpack.c.l.b16 %v4856
        %v8044 = vunpack.c.h.b16 %v4856
        %v8045 = vunpack.c.l.b16 %v4857
        %v8046 = vunpack.c.h.b16 %v4857
        %v8047 = vunpack.c.l.b16 %v4858
        %v8048 = vunpack.c.h.b16 %v4858
        %v8049 = vunpack.c.l.b16 %v4859
        %v8050 = vunpack.c.h.b16 %v4859
        %v8051 = vunpack.c.l.b16 %v4860
        %v8052 = vunpack.c.h.b16 %v4860
        %v8053 = vunpack.c.l.b16 %v4861
        %v8054 = vunpack.c.h.b16 %v4861
        %v8055 = vunpack.c.l.b16 %v4862
        %v8056 = vunpack.c.h.b16 %v4862
        %v8057 = vunpack.c.l.b16 %v4863
        %v8058 = vunpack.c.h.b16 %v4863
        %v8059 = vunpack.c.l.b16 %v4864
        %v8060 = vunpack.c.h.b16 %v4864
        %v8061 = vunpack.c.l.b16 %v4865
        %v8062 = vunpack.c.h.b16 %v4865
        %v8063 = vunpack.c.l.b16 %v4866
        %v8064 = vunpack.c.h.b16 %v4866
        %v8065 = vunpack.c.l.b16 %v4867
        %v8066 = vunpack.c.h.b16 %v4867
        %v8067 = vunpack.c.l.b16 %v4868
        %v8068 = vunpack.c.h.b16 %v4868
        %v8069 = vpack.c.b16 %v6037, %v6021
        %v8070 = vpack.c.b16 %v6038, %v6022
        %v8071 = vpack.c.b16 %v6039, %v6023
        %v8072 = vpack.c.b16 %v6040, %v6024
        %v8073 = vpack.c.b16 %v6041, %v6025
        %v8074 = vpack.c.b16 %v6042, %v6026
        %v8075 = vpack.c.b16 %v6043, %v6027
        %v8076 = vpack.c.b16 %v6044, %v6028
        %v8077 = vpack.c.b16 %v6045, %v6029
        %v8078 = vpack.c.b16 %v6046, %v6030
        %v8079 = vpack.c.b16 %v6047, %v6031
        %v8080 = vpack.c.b16 %v6048, %v6032
        %v8081 = vpack.c.b16 %v6049, %v6033
        %v8082 = vpack.c.b16 %v6050, %v6034
        %v8083 = vpack.c.b16 %v6051, %v6035
        %v8084 = vpack.c.b16 %v6052, %v6036
        %v8085 = vpack.c.b16 %v6069, %v6053
        %v8086 = vpack.c.b16 %v6070, %v6054
        %v8087 = vpack.c.b16 %v6071, %v6055
        %v8088 = vpack.c.b16 %v6072, %v6056
        %v8089 = vpack.c.b16 %v6073, %v6057
        %v8090 = vpack.c.b16 %v6074, %v6058
        %v8091 = vpack.c.b16 %v6075, %v6059
        %v8092 = vpack.c.b16 %v6076, %v6060
        %v8093 = vpack.c.b16 %v6077, %v6061
        %v8094 = vpack.c.b16 %v6078, %v6062
        %v8095 = vpack.c.b16 %v6079, %v6063
        %v8096 = vpack.c.b16 %v6080, %v6064
        %v8097 = vpack.c.b16 %v6081, %v6065
        %v8098 = vpack.c.b16 %v6082, %v6066
        %v8099 = vpack.c.b16 %v6083, %v6067
        %v8100 = vpack.c.b16 %v6084, %v6068
        %v8101 = vpack.c.b16 %v6101, %v6085
        %v8102 = vpack.c.b16 %v6102, %v6086
        %v8103 = vpack.c.b16 %v6103, %v6087
        %v8104 = vpack.c.b16 %v6104, %v6088
        %v8105 = vpack.c.b16 %v6105, %v6089
        %v8106 = vpack.c.b16 %v6106, %v6090
        %v8107 = vpack.c.b16 %v6107, %v6091
        %v8108 = vpack.c.b16 %v6108, %v6092
        %v8109 = vpack.c.b16 %v6109, %v6093
        %v8110 = vpack.c.b16 %v6110, %v6094
        %v8111 = vpack.c.b16 %v6111, %v6095
        %v8112 = vpack.c.b16 %v6112, %v6096
        %v8113 = vpack.c.b16 %v6113, %v6097
        %v8114 = vpack.c.b16 %v6114, %v6098
        %v8115 = vpack.c.b16 %v6115, %v6099
        %v8116 = vpack.c.b16 %v6116, %v6100
        %v8117 = vpack.c.b16 %v6133, %v6117
        %v8118 = vpack.c.b16 %v6134, %v6118
        %v8119 = vpack.c.b16 %v6135, %v6119
        %v8120 = vpack.c.b16 %v6136, %v6120
        %v8121 = vpack.c.b16 %v6137, %v6121
        %v8122 = vpack.c.b16 %v6138, %v6122
        %v8123 = vpack.c.b16 %v6139, %v6123
        %v8124 = vpack.c.b16 %v6140, %v6124
        %v8125 = vpack.c.b16 %v6141, %v6125
        %v8126 = vpack.c.b16 %v6142, %v6126
        %v8127 = vpack.c.b16 %v6143, %v6127
        %v8128 = vpack.c.b16 %v6144, %v6128
        %v8129 = vpack.c.b16 %v6145, %v6129
        %v8130 = vpack.c.b16 %v6146, %v6130
        %v8131 = vpack.c.b16 %v6147, %v6131
        %v8132 = vpack.c.b16 %v6148, %v6132
        %v8133 = vpack.c.b16 %v6165, %v6149
        %v8134 = vpack.c.b16 %v6166, %v6150
        %v8135 = vpack.c.b16 %v6167, %v6151
        %v8136 = vpack.c.b16 %v6168, %v6152
        %v8137 = vpack.c.b16 %v6169, %v6153
        %v8138 = vpack.c.b16 %v6170, %v6154
        %v8139 = vpack.c.b16 %v6171, %v6155
        %v8140 = vpack.c.b16 %v6172, %v6156
        %v8141 = vpack.c.b16 %v6173, %v6157
        %v8142 = vpack.c.b16 %v6174, %v6158
        %v8143 = vpack.c.b16 %v6175, %v6159
        %v8144 = vpack.c.b16 %v6176, %v6160
        %v8145 = vpack.c.b16 %v6177, %v6161
        %v8146 = vpack.c.b16 %v6178, %v6162
        %v8147 = vpack.c.b16 %v6179, %v6163
        %v8148 = vpack.c.b16 %v6180, %v6164
        %v8149 = vpack.c.b16 %v6197, %v6181
        %v8150 = vpack.c.b16 %v6198, %v6182
        %v8151 = vpack.c.b16 %v6199, %v6183
        %v8152 = vpack.c.b16 %v6200, %v6184
        %v8153 = vpack.c.b16 %v6201, %v6185
        %v8154 = vpack.c.b16 %v6202, %v6186
        %v8155 = vpack.c.b16 %v6203, %v6187
        %v8156 = vpack.c.b16 %v6204, %v6188
        %v8157 = vpack.c.b16 %v6205, %v6189
        %v8158 = vpack.c.b16 %v6206, %v6190
        %v8159 = vpack.c.b16 %v6207, %v6191
        %v8160 = vpack.c.b16 %v6208, %v6192
        %v8161 = vpack.c.b16 %v6209, %v6193
        %v8162 = vpack.c.b16 %v6210, %v6194
        %v8163 = vpack.c.b16 %v6211, %v6195
        %v8164 = vpack.c.b16 %v6212, %v6196
        %v8165 = vpack.c.b16 %v6229, %v6213
        %v8166 = vpack.c.b16 %v6230, %v6214
        %v8167 = vpack.c.b16 %v6231, %v6215
        %v8168 = vpack.c.b16 %v6232, %v6216
        %v8169 = vpack.c.b16 %v6233, %v6217
        %v8170 = vpack.c.b16 %v6234, %v6218
        %v8171 = vpack.c.b16 %v6235, %v6219
        %v8172 = vpack.c.b16 %v6236, %v6220
        %v8173 = vpack.c.b16 %v6237, %v6221
        %v8174 = vpack.c.b16 %v6238, %v6222
        %v8175 = vpack.c.b16 %v6239, %v6223
        %v8176 = vpack.c.b16 %v6240, %v6224
        %v8177 = vpack.c.b16 %v6241, %v6225
        %v8178 = vpack.c.b16 %v6242, %v6226
        %v8179 = vpack.c.b16 %v6243, %v6227
        %v8180 = vpack.c.b16 %v6244, %v6228
        %v8181 = vpack.c.b16 %v6261, %v6245
        %v8182 = vpack.c.b16 %v6262, %v6246
        %v8183 = vpack.c.b16 %v6263, %v6247
        %v8184 = vpack.c.b16 %v6264, %v6248
        %v8185 = vpack.c.b16 %v6265, %v6249
        %v8186 = vpack.c.b16 %v6266, %v6250
        %v8187 = vpack.c.b16 %v6267, %v6251
        %v8188 = vpack.c.b16 %v6268, %v6252
        %v8189 = vpack.c.b16 %v6269, %v6253
        %v8190 = vpack.c.b16 %v6270, %v6254
        %v8191 = vpack.c.b16 %v6271, %v6255
        %v8192 = vpack.c.b16 %v6272, %v6256
        %v8193 = vpack.c.b16 %v6273, %v6257
        %v8194 = vpack.c.b16 %v6274, %v6258
        %v8195 = vpack.c.b16 %v6275, %v6259
        %v8196 = vpack.c.b16 %v6276, %v6260
        %v8197 = vpack.c.b16 %v6293, %v6277
        %v8198 = vpack.c.b16 %v6294, %v6278
        %v8199 = vpack.c.b16 %v6295, %v6279
        %v8200 = vpack.c.b16 %v6296, %v6280
        %v8201 = vpack.c.b16 %v6297, %v6281
        %v8202 = vpack.c.b16 %v6298, %v6282
        %v8203 = vpack.c.b16 %v6299, %v6283
        %v8204 = vpack.c.b16 %v6300, %v6284
        %v8205 = vpack.c.b16 %v6301, %v6285
        %v8206 = vpack.c.b16 %v6302, %v6286
        %v8207 = vpack.c.b16 %v6303, %v6287
        %v8208 = vpack.c.b16 %v6304, %v6288
        %v8209 = vpack.c.b16 %v6305, %v6289
        %v8210 = vpack.c.b16 %v6306, %v6290
        %v8211 = vpack.c.b16 %v6307, %v6291
        %v8212 = vpack.c.b16 %v6308, %v6292
        %v8213 = vpack.c.b16 %v6325, %v6309
        %v8214 = vpack.c.b16 %v6326, %v6310
        %v8215 = vpack.c.b16 %v6327, %v6311
        %v8216 = vpack.c.b16 %v6328, %v6312
        %v8217 = vpack.c.b16 %v6329, %v6313
        %v8218 = vpack.c.b16 %v6330, %v6314
        %v8219 = vpack.c.b16 %v6331, %v6315
        %v8220 = vpack.c.b16 %v6332, %v6316
        %v8221 = vpack.c.b16 %v6333, %v6317
        %v8222 = vpack.c.b16 %v6334, %v6318
        %v8223 = vpack.c.b16 %v6335, %v6319
        %v8224 = vpack.c.b16 %v6336, %v6320
        %v8225 = vpack.c.b16 %v6337, %v6321
        %v8226 = vpack.c.b16 %v6338, %v6322
        %v8227 = vpack.c.b16 %v6339, %v6323
        %v8228 = vpack.c.b16 %v6340, %v6324
        %v8229 = vpack.c.b16 %v6357, %v6341
        %v8230 = vpack.c.b16 %v6358, %v6342
        %v8231 = vpack.c.b16 %v6359, %v6343
        %v8232 = vpack.c.b16 %v6360, %v6344
        %v8233 = vpack.c.b16 %v6361, %v6345
        %v8234 = vpack.c.b16 %v6362, %v6346
        %v8235 = vpack.c.b16 %v6363, %v6347
        %v8236 = vpack.c.b16 %v6364, %v6348
        %v8237 = vpack.c.b16 %v6365, %v6349
        %v8238 = vpack.c.b16 %v6366, %v6350
        %v8239 = vpack.c.b16 %v6367, %v6351
        %v8240 = vpack.c.b16 %v6368, %v6352
        %v8241 = vpack.c.b16 %v6369, %v6353
        %v8242 = vpack.c.b16 %v6370, %v6354
        %v8243 = vpack.c.b16 %v6371, %v6355
        %v8244 = vpack.c.b16 %v6372, %v6356
        %v8245 = vpack.c.b16 %v6389, %v6373
        %v8246 = vpack.c.b16 %v6390, %v6374
        %v8247 = vpack.c.b16 %v6391, %v6375
        %v8248 = vpack.c.b16 %v6392, %v6376
        %v8249 = vpack.c.b16 %v6393, %v6377
        %v8250 = vpack.c.b16 %v6394, %v6378
        %v8251 = vpack.c.b16 %v6395, %v6379
        %v8252 = vpack.c.b16 %v6396, %v6380
        %v8253 = vpack.c.b16 %v6397, %v6381
        %v8254 = vpack.c.b16 %v6398, %v6382
        %v8255 = vpack.c.b16 %v6399, %v6383
        %v8256 = vpack.c.b16 %v6400, %v6384
        %v8257 = vpack.c.b16 %v6401, %v6385
        %v8258 = vpack.c.b16 %v6402, %v6386
        %v8259 = vpack.c.b16 %v6403, %v6387
        %v8260 = vpack.c.b16 %v6404, %v6388
        %v8261 = vpack.c.b16 %v6421, %v6405
        %v8262 = vpack.c.b16 %v6422, %v6406
        %v8263 = vpack.c.b16 %v6423, %v6407
        %v8264 = vpack.c.b16 %v6424, %v6408
        %v8265 = vpack.c.b16 %v6425, %v6409
        %v8266 = vpack.c.b16 %v6426, %v6410
        %v8267 = vpack.c.b16 %v6427, %v6411
        %v8268 = vpack.c.b16 %v6428, %v6412
        %v8269 = vpack.c.b16 %v6429, %v6413
        %v8270 = vpack.c.b16 %v6430, %v6414
        %v8271 = vpack.c.b16 %v6431, %v6415
        %v8272 = vpack.c.b16 %v6432, %v6416
        %v8273 = vpack.c.b16 %v6433, %v6417
        %v8274 = vpack.c.b16 %v6434, %v6418
        %v8275 = vpack.c.b16 %v6435, %v6419
        %v8276 = vpack.c.b16 %v6436, %v6420
        %v8277 = vpack.c.b16 %v6453, %v6437
        %v8278 = vpack.c.b16 %v6454, %v6438
        %v8279 = vpack.c.b16 %v6455, %v6439
        %v8280 = vpack.c.b16 %v6456, %v6440
        %v8281 = vpack.c.b16 %v6457, %v6441
        %v8282 = vpack.c.b16 %v6458, %v6442
        %v8283 = vpack.c.b16 %v6459, %v6443
        %v8284 = vpack.c.b16 %v6460, %v6444
        %v8285 = vpack.c.b16 %v6461, %v6445
        %v8286 = vpack.c.b16 %v6462, %v6446
        %v8287 = vpack.c.b16 %v6463, %v6447
        %v8288 = vpack.c.b16 %v6464, %v6448
        %v8289 = vpack.c.b16 %v6465, %v6449
        %v8290 = vpack.c.b16 %v6466, %v6450
        %v8291 = vpack.c.b16 %v6467, %v6451
        %v8292 = vpack.c.b16 %v6468, %v6452
        %v8293 = vpack.c.b16 %v6485, %v6469
        %v8294 = vpack.c.b16 %v6486, %v6470
        %v8295 = vpack.c.b16 %v6487, %v6471
        %v8296 = vpack.c.b16 %v6488, %v6472
        %v8297 = vpack.c.b16 %v6489, %v6473
        %v8298 = vpack.c.b16 %v6490, %v6474
        %v8299 = vpack.c.b16 %v6491, %v6475
        %v8300 = vpack.c.b16 %v6492, %v6476
        %v8301 = vpack.c.b16 %v6493, %v6477
        %v8302 = vpack.c.b16 %v6494, %v6478
        %v8303 = vpack.c.b16 %v6495, %v6479
        %v8304 = vpack.c.b16 %v6496, %v6480
        %v8305 = vpack.c.b16 %v6497, %v6481
        %v8306 = vpack.c.b16 %v6498, %v6482
        %v8307 = vpack.c.b16 %v6499, %v6483
        %v8308 = vpack.c.b16 %v6500, %v6484
        %v8309 = vpack.c.b16 %v6517, %v6501
        %v8310 = vpack.c.b16 %v6518, %v6502
        %v8311 = vpack.c.b16 %v6519, %v6503
        %v8312 = vpack.c.b16 %v6520, %v6504
        %v8313 = vpack.c.b16 %v6521, %v6505
        %v8314 = vpack.c.b16 %v6522, %v6506
        %v8315 = vpack.c.b16 %v6523, %v6507
        %v8316 = vpack.c.b16 %v6524, %v6508
        %v8317 = vpack.c.b16 %v6525, %v6509
        %v8318 = vpack.c.b16 %v6526, %v6510
        %v8319 = vpack.c.b16 %v6527, %v6511
        %v8320 = vpack.c.b16 %v6528, %v6512
        %v8321 = vpack.c.b16 %v6529, %v6513
        %v8322 = vpack.c.b16 %v6530, %v6514
        %v8323 = vpack.c.b16 %v6531, %v6515
        %v8324 = vpack.c.b16 %v6532, %v6516
        %v8325 = vpack.c.b16 %v6549, %v6533
        %v8326 = vpack.c.b16 %v6550, %v6534
        %v8327 = vpack.c.b16 %v6551, %v6535
        %v8328 = vpack.c.b16 %v6552, %v6536
        %v8329 = vpack.c.b16 %v6553, %v6537
        %v8330 = vpack.c.b16 %v6554, %v6538
        %v8331 = vpack.c.b16 %v6555, %v6539
        %v8332 = vpack.c.b16 %v6556, %v6540
        %v8333 = vpack.c.b16 %v6557, %v6541
        %v8334 = vpack.c.b16 %v6558, %v6542
        %v8335 = vpack.c.b16 %v6559, %v6543
        %v8336 = vpack.c.b16 %v6560, %v6544
        %v8337 = vpack.c.b16 %v6561, %v6545
        %v8338 = vpack.c.b16 %v6562, %v6546
        %v8339 = vpack.c.b16 %v6563, %v6547
        %v8340 = vpack.c.b16 %v6564, %v6548
        %v8341 = vpack.c.b16 %v6581, %v6565
        %v8342 = vpack.c.b16 %v6582, %v6566
        %v8343 = vpack.c.b16 %v6583, %v6567
        %v8344 = vpack.c.b16 %v6584, %v6568
        %v8345 = vpack.c.b16 %v6585, %v6569
        %v8346 = vpack.c.b16 %v6586, %v6570
        %v8347 = vpack.c.b16 %v6587, %v6571
        %v8348 = vpack.c.b16 %v6588, %v6572
        %v8349 = vpack.c.b16 %v6589, %v6573
        %v8350 = vpack.c.b16 %v6590, %v6574
        %v8351 = vpack.c.b16 %v6591, %v6575
        %v8352 = vpack.c.b16 %v6592, %v6576
        %v8353 = vpack.c.b16 %v6593, %v6577
        %v8354 = vpack.c.b16 %v6594, %v6578
        %v8355 = vpack.c.b16 %v6595, %v6579
        %v8356 = vpack.c.b16 %v6596, %v6580
        %v8357 = vpack.c.b16 %v6613, %v6597
        %v8358 = vpack.c.b16 %v6614, %v6598
        %v8359 = vpack.c.b16 %v6615, %v6599
        %v8360 = vpack.c.b16 %v6616, %v6600
        %v8361 = vpack.c.b16 %v6617, %v6601
        %v8362 = vpack.c.b16 %v6618, %v6602
        %v8363 = vpack.c.b16 %v6619, %v6603
        %v8364 = vpack.c.b16 %v6620, %v6604
        %v8365 = vpack.c.b16 %v6621, %v6605
        %v8366 = vpack.c.b16 %v6622, %v6606
        %v8367 = vpack.c.b16 %v6623, %v6607
        %v8368 = vpack.c.b16 %v6624, %v6608
        %v8369 = vpack.c.b16 %v6625, %v6609
        %v8370 = vpack.c.b16 %v6626, %v6610
        %v8371 = vpack.c.b16 %v6627, %v6611
        %v8372 = vpack.c.b16 %v6628, %v6612
        %v8373 = vpack.c.b16 %v6645, %v6629
        %v8374 = vpack.c.b16 %v6646, %v6630
        %v8375 = vpack.c.b16 %v6647, %v6631
        %v8376 = vpack.c.b16 %v6648, %v6632
        %v8377 = vpack.c.b16 %v6649, %v6633
        %v8378 = vpack.c.b16 %v6650, %v6634
        %v8379 = vpack.c.b16 %v6651, %v6635
        %v8380 = vpack.c.b16 %v6652, %v6636
        %v8381 = vpack.c.b16 %v6653, %v6637
        %v8382 = vpack.c.b16 %v6654, %v6638
        %v8383 = vpack.c.b16 %v6655, %v6639
        %v8384 = vpack.c.b16 %v6656, %v6640
        %v8385 = vpack.c.b16 %v6657, %v6641
        %v8386 = vpack.c.b16 %v6658, %v6642
        %v8387 = vpack.c.b16 %v6659, %v6643
        %v8388 = vpack.c.b16 %v6660, %v6644
        %v8389 = vpack.c.b16 %v6677, %v6661
        %v8390 = vpack.c.b16 %v6678, %v6662
        %v8391 = vpack.c.b16 %v6679, %v6663
        %v8392 = vpack.c.b16 %v6680, %v6664
        %v8393 = vpack.c.b16 %v6681, %v6665
        %v8394 = vpack.c.b16 %v6682, %v6666
        %v8395 = vpack.c.b16 %v6683, %v6667
        %v8396 = vpack.c.b16 %v6684, %v6668
        %v8397 = vpack.c.b16 %v6685, %v6669
        %v8398 = vpack.c.b16 %v6686, %v6670
        %v8399 = vpack.c.b16 %v6687, %v6671
        %v8400 = vpack.c.b16 %v6688, %v6672
        %v8401 = vpack.c.b16 %v6689, %v6673
        %v8402 = vpack.c.b16 %v6690, %v6674
        %v8403 = vpack.c.b16 %v6691, %v6675
        %v8404 = vpack.c.b16 %v6692, %v6676
        %v8405 = vpack.c.b16 %v6709, %v6693
        %v8406 = vpack.c.b16 %v6710, %v6694
        %v8407 = vpack.c.b16 %v6711, %v6695
        %v8408 = vpack.c.b16 %v6712, %v6696
        %v8409 = vpack.c.b16 %v6713, %v6697
        %v8410 = vpack.c.b16 %v6714, %v6698
        %v8411 = vpack.c.b16 %v6715, %v6699
        %v8412 = vpack.c.b16 %v6716, %v6700
        %v8413 = vpack.c.b16 %v6717, %v6701
        %v8414 = vpack.c.b16 %v6718, %v6702
        %v8415 = vpack.c.b16 %v6719, %v6703
        %v8416 = vpack.c.b16 %v6720, %v6704
        %v8417 = vpack.c.b16 %v6721, %v6705
        %v8418 = vpack.c.b16 %v6722, %v6706
        %v8419 = vpack.c.b16 %v6723, %v6707
        %v8420 = vpack.c.b16 %v6724, %v6708
        %v8421 = vpack.c.b16 %v6741, %v6725
        %v8422 = vpack.c.b16 %v6742, %v6726
        %v8423 = vpack.c.b16 %v6743, %v6727
        %v8424 = vpack.c.b16 %v6744, %v6728
        %v8425 = vpack.c.b16 %v6745, %v6729
        %v8426 = vpack.c.b16 %v6746, %v6730
        %v8427 = vpack.c.b16 %v6747, %v6731
        %v8428 = vpack.c.b16 %v6748, %v6732
        %v8429 = vpack.c.b16 %v6749, %v6733
        %v8430 = vpack.c.b16 %v6750, %v6734
        %v8431 = vpack.c.b16 %v6751, %v6735
        %v8432 = vpack.c.b16 %v6752, %v6736
        %v8433 = vpack.c.b16 %v6753, %v6737
        %v8434 = vpack.c.b16 %v6754, %v6738
        %v8435 = vpack.c.b16 %v6755, %v6739
        %v8436 = vpack.c.b16 %v6756, %v6740
        %v8437 = vpack.c.b16 %v6773, %v6757
        %v8438 = vpack.c.b16 %v6774, %v6758
        %v8439 = vpack.c.b16 %v6775, %v6759
        %v8440 = vpack.c.b16 %v6776, %v6760
        %v8441 = vpack.c.b16 %v6777, %v6761
        %v8442 = vpack.c.b16 %v6778, %v6762
        %v8443 = vpack.c.b16 %v6779, %v6763
        %v8444 = vpack.c.b16 %v6780, %v6764
        %v8445 = vpack.c.b16 %v6781, %v6765
        %v8446 = vpack.c.b16 %v6782, %v6766
        %v8447 = vpack.c.b16 %v6783, %v6767
        %v8448 = vpack.c.b16 %v6784, %v6768
        %v8449 = vpack.c.b16 %v6785, %v6769
        %v8450 = vpack.c.b16 %v6786, %v6770
        %v8451 = vpack.c.b16 %v6787, %v6771
        %v8452 = vpack.c.b16 %v6788, %v6772
        %v8453 = vpack.c.b16 %v6805, %v6789
        %v8454 = vpack.c.b16 %v6806, %v6790
        %v8455 = vpack.c.b16 %v6807, %v6791
        %v8456 = vpack.c.b16 %v6808, %v6792
        %v8457 = vpack.c.b16 %v6809, %v6793
        %v8458 = vpack.c.b16 %v6810, %v6794
        %v8459 = vpack.c.b16 %v6811, %v6795
        %v8460 = vpack.c.b16 %v6812, %v6796
        %v8461 = vpack.c.b16 %v6813, %v6797
        %v8462 = vpack.c.b16 %v6814, %v6798
        %v8463 = vpack.c.b16 %v6815, %v6799
        %v8464 = vpack.c.b16 %v6816, %v6800
        %v8465 = vpack.c.b16 %v6817, %v6801
        %v8466 = vpack.c.b16 %v6818, %v6802
        %v8467 = vpack.c.b16 %v6819, %v6803
        %v8468 = vpack.c.b16 %v6820, %v6804
        %v8469 = vpack.c.b16 %v6837, %v6821
        %v8470 = vpack.c.b16 %v6838, %v6822
        %v8471 = vpack.c.b16 %v6839, %v6823
        %v8472 = vpack.c.b16 %v6840, %v6824
        %v8473 = vpack.c.b16 %v6841, %v6825
        %v8474 = vpack.c.b16 %v6842, %v6826
        %v8475 = vpack.c.b16 %v6843, %v6827
        %v8476 = vpack.c.b16 %v6844, %v6828
        %v8477 = vpack.c.b16 %v6845, %v6829
        %v8478 = vpack.c.b16 %v6846, %v6830
        %v8479 = vpack.c.b16 %v6847, %v6831
        %v8480 = vpack.c.b16 %v6848, %v6832
        %v8481 = vpack.c.b16 %v6849, %v6833
        %v8482 = vpack.c.b16 %v6850, %v6834
        %v8483 = vpack.c.b16 %v6851, %v6835
        %v8484 = vpack.c.b16 %v6852, %v6836
        %v8485 = vpack.c.b16 %v6869, %v6853
        %v8486 = vpack.c.b16 %v6870, %v6854
        %v8487 = vpack.c.b16 %v6871, %v6855
        %v8488 = vpack.c.b16 %v6872, %v6856
        %v8489 = vpack.c.b16 %v6873, %v6857
        %v8490 = vpack.c.b16 %v6874, %v6858
        %v8491 = vpack.c.b16 %v6875, %v6859
        %v8492 = vpack.c.b16 %v6876, %v6860
        %v8493 = vpack.c.b16 %v6877, %v6861
        %v8494 = vpack.c.b16 %v6878, %v6862
        %v8495 = vpack.c.b16 %v6879, %v6863
        %v8496 = vpack.c.b16 %v6880, %v6864
        %v8497 = vpack.c.b16 %v6881, %v6865
        %v8498 = vpack.c.b16 %v6882, %v6866
        %v8499 = vpack.c.b16 %v6883, %v6867
        %v8500 = vpack.c.b16 %v6884, %v6868
        %v8501 = vpack.c.b16 %v6901, %v6885
        %v8502 = vpack.c.b16 %v6902, %v6886
        %v8503 = vpack.c.b16 %v6903, %v6887
        %v8504 = vpack.c.b16 %v6904, %v6888
        %v8505 = vpack.c.b16 %v6905, %v6889
        %v8506 = vpack.c.b16 %v6906, %v6890
        %v8507 = vpack.c.b16 %v6907, %v6891
        %v8508 = vpack.c.b16 %v6908, %v6892
        %v8509 = vpack.c.b16 %v6909, %v6893
        %v8510 = vpack.c.b16 %v6910, %v6894
        %v8511 = vpack.c.b16 %v6911, %v6895
        %v8512 = vpack.c.b16 %v6912, %v6896
        %v8513 = vpack.c.b16 %v6913, %v6897
        %v8514 = vpack.c.b16 %v6914, %v6898
        %v8515 = vpack.c.b16 %v6915, %v6899
        %v8516 = vpack.c.b16 %v6916, %v6900
        %v8517 = vpack.c.b16 %v6933, %v6917
        %v8518 = vpack.c.b16 %v6934, %v6918
        %v8519 = vpack.c.b16 %v6935, %v6919
        %v8520 = vpack.c.b16 %v6936, %v6920
        %v8521 = vpack.c.b16 %v6937, %v6921
        %v8522 = vpack.c.b16 %v6938, %v6922
        %v8523 = vpack.c.b16 %v6939, %v6923
        %v8524 = vpack.c.b16 %v6940, %v6924
        %v8525 = vpack.c.b16 %v6941, %v6925
        %v8526 = vpack.c.b16 %v6942, %v6926
        %v8527 = vpack.c.b16 %v6943, %v6927
        %v8528 = vpack.c.b16 %v6944, %v6928
        %v8529 = vpack.c.b16 %v6945, %v6929
        %v8530 = vpack.c.b16 %v6946, %v6930
        %v8531 = vpack.c.b16 %v6947, %v6931
        %v8532 = vpack.c.b16 %v6948, %v6932
        %v8533 = vpack.c.b16 %v6965, %v6949
        %v8534 = vpack.c.b16 %v6966, %v6950
        %v8535 = vpack.c.b16 %v6967, %v6951
        %v8536 = vpack.c.b16 %v6968, %v6952
        %v8537 = vpack.c.b16 %v6969, %v6953
        %v8538 = vpack.c.b16 %v6970, %v6954
        %v8539 = vpack.c.b16 %v6971, %v6955
        %v8540 = vpack.c.b16 %v6972, %v6956
        %v8541 = vpack.c.b16 %v6973, %v6957
        %v8542 = vpack.c.b16 %v6974, %v6958
        %v8543 = vpack.c.b16 %v6975, %v6959
        %v8544 = vpack.c.b16 %v6976, %v6960
        %v8545 = vpack.c.b16 %v6977, %v6961
        %v8546 = vpack.c.b16 %v6978, %v6962
        %v8547 = vpack.c.b16 %v6979, %v6963
        %v8548 = vpack.c.b16 %v6980, %v6964
        %v8549 = vpack.c.b16 %v6997, %v6981
        %v8550 = vpack.c.b16 %v6998, %v6982
        %v8551 = vpack.c.b16 %v6999, %v6983
        %v8552 = vpack.c.b16 %v7000, %v6984
        %v8553 = vpack.c.b16 %v7001, %v6985
        %v8554 = vpack.c.b16 %v7002, %v6986
        %v8555 = vpack.c.b16 %v7003, %v6987
        %v8556 = vpack.c.b16 %v7004, %v6988
        %v8557 = vpack.c.b16 %v7005, %v6989
        %v8558 = vpack.c.b16 %v7006, %v6990
        %v8559 = vpack.c.b16 %v7007, %v6991
        %v8560 = vpack.c.b16 %v7008, %v6992
        %v8561 = vpack.c.b16 %v7009, %v6993
        %v8562 = vpack.c.b16 %v7010, %v6994
        %v8563 = vpack.c.b16 %v7011, %v6995
        %v8564 = vpack.c.b16 %v7012, %v6996
        %v8565 = vpack.c.b16 %v7029, %v7013
        %v8566 = vpack.c.b16 %v7030, %v7014
        %v8567 = vpack.c.b16 %v7031, %v7015
        %v8568 = vpack.c.b16 %v7032, %v7016
        %v8569 = vpack.c.b16 %v7033, %v7017
        %v8570 = vpack.c.b16 %v7034, %v7018
        %v8571 = vpack.c.b16 %v7035, %v7019
        %v8572 = vpack.c.b16 %v7036, %v7020
        %v8573 = vpack.c.b16 %v7037, %v7021
        %v8574 = vpack.c.b16 %v7038, %v7022
        %v8575 = vpack.c.b16 %v7039, %v7023
        %v8576 = vpack.c.b16 %v7040, %v7024
        %v8577 = vpack.c.b16 %v7041, %v7025
        %v8578 = vpack.c.b16 %v7042, %v7026
        %v8579 = vpack.c.b16 %v7043, %v7027
        %v8580 = vpack.c.b16 %v7044, %v7028
        %v8581 = vpack.c.b16 %v7061, %v7045
        %v8582 = vpack.c.b16 %v7062, %v7046
        %v8583 = vpack.c.b16 %v7063, %v7047
        %v8584 = vpack.c.b16 %v7064, %v7048
        %v8585 = vpack.c.b16 %v7065, %v7049
        %v8586 = vpack.c.b16 %v7066, %v7050
        %v8587 = vpack.c.b16 %v7067, %v7051
        %v8588 = vpack.c.b16 %v7068, %v7052
        %v8589 = vpack.c.b16 %v7069, %v7053
        %v8590 = vpack.c.b16 %v7070, %v7054
        %v8591 = vpack.c.b16 %v7071, %v7055
        %v8592 = vpack.c.b16 %v7072, %v7056
        %v8593 = vpack.c.b16 %v7073, %v7057
        %v8594 = vpack.c.b16 %v7074, %v7058
        %v8595 = vpack.c.b16 %v7075, %v7059
        %v8596 = vpack.c.b16 %v7076, %v7060
        %v8597 = vpack.c.b16 %v7093, %v7077
        %v8598 = vpack.c.b16 %v7094, %v7078
        %v8599 = vpack.c.b16 %v7095, %v7079
        %v8600 = vpack.c.b16 %v7096, %v7080
        %v8601 = vpack.c.b16 %v7097, %v7081
        %v8602 = vpack.c.b16 %v7098, %v7082
        %v8603 = vpack.c.b16 %v7099, %v7083
        %v8604 = vpack.c.b16 %v7100, %v7084
        %v8605 = vpack.c.b16 %v7101, %v7085
        %v8606 = vpack.c.b16 %v7102, %v7086
        %v8607 = vpack.c.b16 %v7103, %v7087
        %v8608 = vpack.c.b16 %v7104, %v7088
        %v8609 = vpack.c.b16 %v7105, %v7089
        %v8610 = vpack.c.b16 %v7106, %v7090
        %v8611 = vpack.c.b16 %v7107, %v7091
        %v8612 = vpack.c.b16 %v7108, %v7092
        %v8613 = vpack.c.b16 %v7125, %v7109
        %v8614 = vpack.c.b16 %v7126, %v7110
        %v8615 = vpack.c.b16 %v7127, %v7111
        %v8616 = vpack.c.b16 %v7128, %v7112
        %v8617 = vpack.c.b16 %v7129, %v7113
        %v8618 = vpack.c.b16 %v7130, %v7114
        %v8619 = vpack.c.b16 %v7131, %v7115
        %v8620 = vpack.c.b16 %v7132, %v7116
        %v8621 = vpack.c.b16 %v7133, %v7117
        %v8622 = vpack.c.b16 %v7134, %v7118
        %v8623 = vpack.c.b16 %v7135, %v7119
        %v8624 = vpack.c.b16 %v7136, %v7120
        %v8625 = vpack.c.b16 %v7137, %v7121
        %v8626 = vpack.c.b16 %v7138, %v7122
        %v8627 = vpack.c.b16 %v7139, %v7123
        %v8628 = vpack.c.b16 %v7140, %v7124
        %v8629 = vpack.c.b16 %v7157, %v7141
        %v8630 = vpack.c.b16 %v7158, %v7142
        %v8631 = vpack.c.b16 %v7159, %v7143
        %v8632 = vpack.c.b16 %v7160, %v7144
        %v8633 = vpack.c.b16 %v7161, %v7145
        %v8634 = vpack.c.b16 %v7162, %v7146
        %v8635 = vpack.c.b16 %v7163, %v7147
        %v8636 = vpack.c.b16 %v7164, %v7148
        %v8637 = vpack.c.b16 %v7165, %v7149
        %v8638 = vpack.c.b16 %v7166, %v7150
        %v8639 = vpack.c.b16 %v7167, %v7151
        %v8640 = vpack.c.b16 %v7168, %v7152
        %v8641 = vpack.c.b16 %v7169, %v7153
        %v8642 = vpack.c.b16 %v7170, %v7154
        %v8643 = vpack.c.b16 %v7171, %v7155
        %v8644 = vpack.c.b16 %v7172, %v7156
        %v8645 = vpack.c.b16 %v7189, %v7173
        %v8646 = vpack.c.b16 %v7190, %v7174
        %v8647 = vpack.c.b16 %v7191, %v7175
        %v8648 = vpack.c.b16 %v7192, %v7176
        %v8649 = vpack.c.b16 %v7193, %v7177
        %v8650 = vpack.c.b16 %v7194, %v7178
        %v8651 = vpack.c.b16 %v7195, %v7179
        %v8652 = vpack.c.b16 %v7196, %v7180
        %v8653 = vpack.c.b16 %v7197, %v7181
        %v8654 = vpack.c.b16 %v7198, %v7182
        %v8655 = vpack.c.b16 %v7199, %v7183
        %v8656 = vpack.c.b16 %v7200, %v7184
        %v8657 = vpack.c.b16 %v7201, %v7185
        %v8658 = vpack.c.b16 %v7202, %v7186
        %v8659 = vpack.c.b16 %v7203, %v7187
        %v8660 = vpack.c.b16 %v7204, %v7188
        %v8661 = vpack.c.b16 %v7221, %v7205
        %v8662 = vpack.c.b16 %v7222, %v7206
        %v8663 = vpack.c.b16 %v7223, %v7207
        %v8664 = vpack.c.b16 %v7224, %v7208
        %v8665 = vpack.c.b16 %v7225, %v7209
        %v8666 = vpack.c.b16 %v7226, %v7210
        %v8667 = vpack.c.b16 %v7227, %v7211
        %v8668 = vpack.c.b16 %v7228, %v7212
        %v8669 = vpack.c.b16 %v7229, %v7213
        %v8670 = vpack.c.b16 %v7230, %v7214
        %v8671 = vpack.c.b16 %v7231, %v7215
        %v8672 = vpack.c.b16 %v7232, %v7216
        %v8673 = vpack.c.b16 %v7233, %v7217
        %v8674 = vpack.c.b16 %v7234, %v7218
        %v8675 = vpack.c.b16 %v7235, %v7219
        %v8676 = vpack.c.b16 %v7236, %v7220
        %v8677 = vpack.c.b16 %v7253, %v7237
        %v8678 = vpack.c.b16 %v7254, %v7238
        %v8679 = vpack.c.b16 %v7255, %v7239
        %v8680 = vpack.c.b16 %v7256, %v7240
        %v8681 = vpack.c.b16 %v7257, %v7241
        %v8682 = vpack.c.b16 %v7258, %v7242
        %v8683 = vpack.c.b16 %v7259, %v7243
        %v8684 = vpack.c.b16 %v7260, %v7244
        %v8685 = vpack.c.b16 %v7261, %v7245
        %v8686 = vpack.c.b16 %v7262, %v7246
        %v8687 = vpack.c.b16 %v7263, %v7247
        %v8688 = vpack.c.b16 %v7264, %v7248
        %v8689 = vpack.c.b16 %v7265, %v7249
        %v8690 = vpack.c.b16 %v7266, %v7250
        %v8691 = vpack.c.b16 %v7267, %v7251
        %v8692 = vpack.c.b16 %v7268, %v7252
        %v8693 = vpack.c.b16 %v7285, %v7269
        %v8694 = vpack.c.b16 %v7286, %v7270
        %v8695 = vpack.c.b16 %v7287, %v7271
        %v8696 = vpack.c.b16 %v7288, %v7272
        %v8697 = vpack.c.b16 %v7289, %v7273
        %v8698 = vpack.c.b16 %v7290, %v7274
        %v8699 = vpack.c.b16 %v7291, %v7275
        %v8700 = vpack.c.b16 %v7292, %v7276
        %v8701 = vpack.c.b16 %v7293, %v7277
        %v8702 = vpack.c.b16 %v7294, %v7278
        %v8703 = vpack.c.b16 %v7295, %v7279
        %v8704 = vpack.c.b16 %v7296, %v7280
        %v8705 = vpack.c.b16 %v7297, %v7281
        %v8706 = vpack.c.b16 %v7298, %v7282
        %v8707 = vpack.c.b16 %v7299, %v7283
        %v8708 = vpack.c.b16 %v7300, %v7284
        %v8709 = vpack.c.b16 %v7317, %v7301
        %v8710 = vpack.c.b16 %v7318, %v7302
        %v8711 = vpack.c.b16 %v7319, %v7303
        %v8712 = vpack.c.b16 %v7320, %v7304
        %v8713 = vpack.c.b16 %v7321, %v7305
        %v8714 = vpack.c.b16 %v7322, %v7306
        %v8715 = vpack.c.b16 %v7323, %v7307
        %v8716 = vpack.c.b16 %v7324, %v7308
        %v8717 = vpack.c.b16 %v7325, %v7309
        %v8718 = vpack.c.b16 %v7326, %v7310
        %v8719 = vpack.c.b16 %v7327, %v7311
        %v8720 = vpack.c.b16 %v7328, %v7312
        %v8721 = vpack.c.b16 %v7329, %v7313
        %v8722 = vpack.c.b16 %v7330, %v7314
        %v8723 = vpack.c.b16 %v7331, %v7315
        %v8724 = vpack.c.b16 %v7332, %v7316
        %v8725 = vpack.c.b16 %v7349, %v7333
        %v8726 = vpack.c.b16 %v7350, %v7334
        %v8727 = vpack.c.b16 %v7351, %v7335
        %v8728 = vpack.c.b16 %v7352, %v7336
        %v8729 = vpack.c.b16 %v7353, %v7337
        %v8730 = vpack.c.b16 %v7354, %v7338
        %v8731 = vpack.c.b16 %v7355, %v7339
        %v8732 = vpack.c.b16 %v7356, %v7340
        %v8733 = vpack.c.b16 %v7357, %v7341
        %v8734 = vpack.c.b16 %v7358, %v7342
        %v8735 = vpack.c.b16 %v7359, %v7343
        %v8736 = vpack.c.b16 %v7360, %v7344
        %v8737 = vpack.c.b16 %v7361, %v7345
        %v8738 = vpack.c.b16 %v7362, %v7346
        %v8739 = vpack.c.b16 %v7363, %v7347
        %v8740 = vpack.c.b16 %v7364, %v7348
        %v8741 = vpack.c.b16 %v7381, %v7365
        %v8742 = vpack.c.b16 %v7382, %v7366
        %v8743 = vpack.c.b16 %v7383, %v7367
        %v8744 = vpack.c.b16 %v7384, %v7368
        %v8745 = vpack.c.b16 %v7385, %v7369
        %v8746 = vpack.c.b16 %v7386, %v7370
        %v8747 = vpack.c.b16 %v7387, %v7371
        %v8748 = vpack.c.b16 %v7388, %v7372
        %v8749 = vpack.c.b16 %v7389, %v7373
        %v8750 = vpack.c.b16 %v7390, %v7374
        %v8751 = vpack.c.b16 %v7391, %v7375
        %v8752 = vpack.c.b16 %v7392, %v7376
        %v8753 = vpack.c.b16 %v7393, %v7377
        %v8754 = vpack.c.b16 %v7394, %v7378
        %v8755 = vpack.c.b16 %v7395, %v7379
        %v8756 = vpack.c.b16 %v7396, %v7380
        %v8757 = vpack.c.b16 %v7413, %v7397
        %v8758 = vpack.c.b16 %v7414, %v7398
        %v8759 = vpack.c.b16 %v7415, %v7399
        %v8760 = vpack.c.b16 %v7416, %v7400
        %v8761 = vpack.c.b16 %v7417, %v7401
        %v8762 = vpack.c.b16 %v7418, %v7402
        %v8763 = vpack.c.b16 %v7419, %v7403
        %v8764 = vpack.c.b16 %v7420, %v7404
        %v8765 = vpack.c.b16 %v7421, %v7405
        %v8766 = vpack.c.b16 %v7422, %v7406
        %v8767 = vpack.c.b16 %v7423, %v7407
        %v8768 = vpack.c.b16 %v7424, %v7408
        %v8769 = vpack.c.b16 %v7425, %v7409
        %v8770 = vpack.c.b16 %v7426, %v7410
        %v8771 = vpack.c.b16 %v7427, %v7411
        %v8772 = vpack.c.b16 %v7428, %v7412
        %v8773 = vpack.c.b16 %v7445, %v7429
        %v8774 = vpack.c.b16 %v7446, %v7430
        %v8775 = vpack.c.b16 %v7447, %v7431
        %v8776 = vpack.c.b16 %v7448, %v7432
        %v8777 = vpack.c.b16 %v7449, %v7433
        %v8778 = vpack.c.b16 %v7450, %v7434
        %v8779 = vpack.c.b16 %v7451, %v7435
        %v8780 = vpack.c.b16 %v7452, %v7436
        %v8781 = vpack.c.b16 %v7453, %v7437
        %v8782 = vpack.c.b16 %v7454, %v7438
        %v8783 = vpack.c.b16 %v7455, %v7439
        %v8784 = vpack.c.b16 %v7456, %v7440
        %v8785 = vpack.c.b16 %v7457, %v7441
        %v8786 = vpack.c.b16 %v7458, %v7442
        %v8787 = vpack.c.b16 %v7459, %v7443
        %v8788 = vpack.c.b16 %v7460, %v7444
        %v8789 = vpack.c.b16 %v7477, %v7461
        %v8790 = vpack.c.b16 %v7478, %v7462
        %v8791 = vpack.c.b16 %v7479, %v7463
        %v8792 = vpack.c.b16 %v7480, %v7464
        %v8793 = vpack.c.b16 %v7481, %v7465
        %v8794 = vpack.c.b16 %v7482, %v7466
        %v8795 = vpack.c.b16 %v7483, %v7467
        %v8796 = vpack.c.b16 %v7484, %v7468
        %v8797 = vpack.c.b16 %v7485, %v7469
        %v8798 = vpack.c.b16 %v7486, %v7470
        %v8799 = vpack.c.b16 %v7487, %v7471
        %v8800 = vpack.c.b16 %v7488, %v7472
        %v8801 = vpack.c.b16 %v7489, %v7473
        %v8802 = vpack.c.b16 %v7490, %v7474
        %v8803 = vpack.c.b16 %v7491, %v7475
        %v8804 = vpack.c.b16 %v7492, %v7476
        %v8805 = vpack.c.b16 %v7509, %v7493
        %v8806 = vpack.c.b16 %v7510, %v7494
        %v8807 = vpack.c.b16 %v7511, %v7495
        %v8808 = vpack.c.b16 %v7512, %v7496
        %v8809 = vpack.c.b16 %v7513, %v7497
        %v8810 = vpack.c.b16 %v7514, %v7498
        %v8811 = vpack.c.b16 %v7515, %v7499
        %v8812 = vpack.c.b16 %v7516, %v7500
        %v8813 = vpack.c.b16 %v7517, %v7501
        %v8814 = vpack.c.b16 %v7518, %v7502
        %v8815 = vpack.c.b16 %v7519, %v7503
        %v8816 = vpack.c.b16 %v7520, %v7504
        %v8817 = vpack.c.b16 %v7521, %v7505
        %v8818 = vpack.c.b16 %v7522, %v7506
        %v8819 = vpack.c.b16 %v7523, %v7507
        %v8820 = vpack.c.b16 %v7524, %v7508
        %v8821 = vpack.c.b16 %v7541, %v7525
        %v8822 = vpack.c.b16 %v7542, %v7526
        %v8823 = vpack.c.b16 %v7543, %v7527
        %v8824 = vpack.c.b16 %v7544, %v7528
        %v8825 = vpack.c.b16 %v7545, %v7529
        %v8826 = vpack.c.b16 %v7546, %v7530
        %v8827 = vpack.c.b16 %v7547, %v7531
        %v8828 = vpack.c.b16 %v7548, %v7532
        %v8829 = vpack.c.b16 %v7549, %v7533
        %v8830 = vpack.c.b16 %v7550, %v7534
        %v8831 = vpack.c.b16 %v7551, %v7535
        %v8832 = vpack.c.b16 %v7552, %v7536
        %v8833 = vpack.c.b16 %v7553, %v7537
        %v8834 = vpack.c.b16 %v7554, %v7538
        %v8835 = vpack.c.b16 %v7555, %v7539
        %v8836 = vpack.c.b16 %v7556, %v7540
        %v8837 = vpack.c.b16 %v7573, %v7557
        %v8838 = vpack.c.b16 %v7574, %v7558
        %v8839 = vpack.c.b16 %v7575, %v7559
        %v8840 = vpack.c.b16 %v7576, %v7560
        %v8841 = vpack.c.b16 %v7577, %v7561
        %v8842 = vpack.c.b16 %v7578, %v7562
        %v8843 = vpack.c.b16 %v7579, %v7563
        %v8844 = vpack.c.b16 %v7580, %v7564
        %v8845 = vpack.c.b16 %v7581, %v7565
        %v8846 = vpack.c.b16 %v7582, %v7566
        %v8847 = vpack.c.b16 %v7583, %v7567
        %v8848 = vpack.c.b16 %v7584, %v7568
        %v8849 = vpack.c.b16 %v7585, %v7569
        %v8850 = vpack.c.b16 %v7586, %v7570
        %v8851 = vpack.c.b16 %v7587, %v7571
        %v8852 = vpack.c.b16 %v7588, %v7572
        %v8853 = vpack.c.b16 %v7605, %v7589
        %v8854 = vpack.c.b16 %v7606, %v7590
        %v8855 = vpack.c.b16 %v7607, %v7591
        %v8856 = vpack.c.b16 %v7608, %v7592
        %v8857 = vpack.c.b16 %v7609, %v7593
        %v8858 = vpack.c.b16 %v7610, %v7594
        %v8859 = vpack.c.b16 %v7611, %v7595
        %v8860 = vpack.c.b16 %v7612, %v7596
        %v8861 = vpack.c.b16 %v7613, %v7597
        %v8862 = vpack.c.b16 %v7614, %v7598
        %v8863 = vpack.c.b16 %v7615, %v7599
        %v8864 = vpack.c.b16 %v7616, %v7600
        %v8865 = vpack.c.b16 %v7617, %v7601
        %v8866 = vpack.c.b16 %v7618, %v7602
        %v8867 = vpack.c.b16 %v7619, %v7603
        %v8868 = vpack.c.b16 %v7620, %v7604
        %v8869 = vpack.c.b16 %v7637, %v7621
        %v8870 = vpack.c.b16 %v7638, %v7622
        %v8871 = vpack.c.b16 %v7639, %v7623
        %v8872 = vpack.c.b16 %v7640, %v7624
        %v8873 = vpack.c.b16 %v7641, %v7625
        %v8874 = vpack.c.b16 %v7642, %v7626
        %v8875 = vpack.c.b16 %v7643, %v7627
        %v8876 = vpack.c.b16 %v7644, %v7628
        %v8877 = vpack.c.b16 %v7645, %v7629
        %v8878 = vpack.c.b16 %v7646, %v7630
        %v8879 = vpack.c.b16 %v7647, %v7631
        %v8880 = vpack.c.b16 %v7648, %v7632
        %v8881 = vpack.c.b16 %v7649, %v7633
        %v8882 = vpack.c.b16 %v7650, %v7634
        %v8883 = vpack.c.b16 %v7651, %v7635
        %v8884 = vpack.c.b16 %v7652, %v7636
        %v8885 = vpack.c.b16 %v7669, %v7653
        %v8886 = vpack.c.b16 %v7670, %v7654
        %v8887 = vpack.c.b16 %v7671, %v7655
        %v8888 = vpack.c.b16 %v7672, %v7656
        %v8889 = vpack.c.b16 %v7673, %v7657
        %v8890 = vpack.c.b16 %v7674, %v7658
        %v8891 = vpack.c.b16 %v7675, %v7659
        %v8892 = vpack.c.b16 %v7676, %v7660
        %v8893 = vpack.c.b16 %v7677, %v7661
        %v8894 = vpack.c.b16 %v7678, %v7662
        %v8895 = vpack.c.b16 %v7679, %v7663
        %v8896 = vpack.c.b16 %v7680, %v7664
        %v8897 = vpack.c.b16 %v7681, %v7665
        %v8898 = vpack.c.b16 %v7682, %v7666
        %v8899 = vpack.c.b16 %v7683, %v7667
        %v8900 = vpack.c.b16 %v7684, %v7668
        %v8901 = vpack.c.b16 %v7701, %v7685
        %v8902 = vpack.c.b16 %v7702, %v7686
        %v8903 = vpack.c.b16 %v7703, %v7687
        %v8904 = vpack.c.b16 %v7704, %v7688
        %v8905 = vpack.c.b16 %v7705, %v7689
        %v8906 = vpack.c.b16 %v7706, %v7690
        %v8907 = vpack.c.b16 %v7707, %v7691
        %v8908 = vpack.c.b16 %v7708, %v7692
        %v8909 = vpack.c.b16 %v7709, %v7693
        %v8910 = vpack.c.b16 %v7710, %v7694
        %v8911 = vpack.c.b16 %v7711, %v7695
        %v8912 = vpack.c.b16 %v7712, %v7696
        %v8913 = vpack.c.b16 %v7713, %v7697
        %v8914 = vpack.c.b16 %v7714, %v7698
        %v8915 = vpack.c.b16 %v7715, %v7699
        %v8916 = vpack.c.b16 %v7716, %v7700
        %v8917 = vpack.c.b16 %v7733, %v7717
        %v8918 = vpack.c.b16 %v7734, %v7718
        %v8919 = vpack.c.b16 %v7735, %v7719
        %v8920 = vpack.c.b16 %v7736, %v7720
        %v8921 = vpack.c.b16 %v7737, %v7721
        %v8922 = vpack.c.b16 %v7738, %v7722
        %v8923 = vpack.c.b16 %v7739, %v7723
        %v8924 = vpack.c.b16 %v7740, %v7724
        %v8925 = vpack.c.b16 %v7741, %v7725
        %v8926 = vpack.c.b16 %v7742, %v7726
        %v8927 = vpack.c.b16 %v7743, %v7727
        %v8928 = vpack.c.b16 %v7744, %v7728
        %v8929 = vpack.c.b16 %v7745, %v7729
        %v8930 = vpack.c.b16 %v7746, %v7730
        %v8931 = vpack.c.b16 %v7747, %v7731
        %v8932 = vpack.c.b16 %v7748, %v7732
        %v8933 = vpack.c.b16 %v7765, %v7749
        %v8934 = vpack.c.b16 %v7766, %v7750
        %v8935 = vpack.c.b16 %v7767, %v7751
        %v8936 = vpack.c.b16 %v7768, %v7752
        %v8937 = vpack.c.b16 %v7769, %v7753
        %v8938 = vpack.c.b16 %v7770, %v7754
        %v8939 = vpack.c.b16 %v7771, %v7755
        %v8940 = vpack.c.b16 %v7772, %v7756
        %v8941 = vpack.c.b16 %v7773, %v7757
        %v8942 = vpack.c.b16 %v7774, %v7758
        %v8943 = vpack.c.b16 %v7775, %v7759
        %v8944 = vpack.c.b16 %v7776, %v7760
        %v8945 = vpack.c.b16 %v7777, %v7761
        %v8946 = vpack.c.b16 %v7778, %v7762
        %v8947 = vpack.c.b16 %v7779, %v7763
        %v8948 = vpack.c.b16 %v7780, %v7764
        %v8949 = vpack.c.b16 %v7797, %v7781
        %v8950 = vpack.c.b16 %v7798, %v7782
        %v8951 = vpack.c.b16 %v7799, %v7783
        %v8952 = vpack.c.b16 %v7800, %v7784
        %v8953 = vpack.c.b16 %v7801, %v7785
        %v8954 = vpack.c.b16 %v7802, %v7786
        %v8955 = vpack.c.b16 %v7803, %v7787
        %v8956 = vpack.c.b16 %v7804, %v7788
        %v8957 = vpack.c.b16 %v7805, %v7789
        %v8958 = vpack.c.b16 %v7806, %v7790
        %v8959 = vpack.c.b16 %v7807, %v7791
        %v8960 = vpack.c.b16 %v7808, %v7792
        %v8961 = vpack.c.b16 %v7809, %v7793
        %v8962 = vpack.c.b16 %v7810, %v7794
        %v8963 = vpack.c.b16 %v7811, %v7795
        %v8964 = vpack.c.b16 %v7812, %v7796
        %v8965 = vpack.c.b16 %v7829, %v7813
        %v8966 = vpack.c.b16 %v7830, %v7814
        %v8967 = vpack.c.b16 %v7831, %v7815
        %v8968 = vpack.c.b16 %v7832, %v7816
        %v8969 = vpack.c.b16 %v7833, %v7817
        %v8970 = vpack.c.b16 %v7834, %v7818
        %v8971 = vpack.c.b16 %v7835, %v7819
        %v8972 = vpack.c.b16 %v7836, %v7820
        %v8973 = vpack.c.b16 %v7837, %v7821
        %v8974 = vpack.c.b16 %v7838, %v7822
        %v8975 = vpack.c.b16 %v7839, %v7823
        %v8976 = vpack.c.b16 %v7840, %v7824
        %v8977 = vpack.c.b16 %v7841, %v7825
        %v8978 = vpack.c.b16 %v7842, %v7826
        %v8979 = vpack.c.b16 %v7843, %v7827
        %v8980 = vpack.c.b16 %v7844, %v7828
        %v8981 = vpack.c.b16 %v7861, %v7845
        %v8982 = vpack.c.b16 %v7862, %v7846
        %v8983 = vpack.c.b16 %v7863, %v7847
        %v8984 = vpack.c.b16 %v7864, %v7848
        %v8985 = vpack.c.b16 %v7865, %v7849
        %v8986 = vpack.c.b16 %v7866, %v7850
        %v8987 = vpack.c.b16 %v7867, %v7851
        %v8988 = vpack.c.b16 %v7868, %v7852
        %v8989 = vpack.c.b16 %v7869, %v7853
        %v8990 = vpack.c.b16 %v7870, %v7854
        %v8991 = vpack.c.b16 %v7871, %v7855
        %v8992 = vpack.c.b16 %v7872, %v7856
        %v8993 = vpack.c.b16 %v7873, %v7857
        %v8994 = vpack.c.b16 %v7874, %v7858
        %v8995 = vpack.c.b16 %v7875, %v7859
        %v8996 = vpack.c.b16 %v7876, %v7860
        %v8997 = vpack.c.b16 %v7893, %v7877
        %v8998 = vpack.c.b16 %v7894, %v7878
        %v8999 = vpack.c.b16 %v7895, %v7879
        %v9000 = vpack.c.b16 %v7896, %v7880
        %v9001 = vpack.c.b16 %v7897, %v7881
        %v9002 = vpack.c.b16 %v7898, %v7882
        %v9003 = vpack.c.b16 %v7899, %v7883
        %v9004 = vpack.c.b16 %v7900, %v7884
        %v9005 = vpack.c.b16 %v7901, %v7885
        %v9006 = vpack.c.b16 %v7902, %v7886
        %v9007 = vpack.c.b16 %v7903, %v7887
        %v9008 = vpack.c.b16 %v7904, %v7888
        %v9009 = vpack.c.b16 %v7905, %v7889
        %v9010 = vpack.c.b16 %v7906, %v7890
        %v9011 = vpack.c.b16 %v7907, %v7891
        %v9012 = vpack.c.b16 %v7908, %v7892
        %v9013 = vpack.c.b16 %v7925, %v7909
        %v9014 = vpack.c.b16 %v7926, %v7910
        %v9015 = vpack.c.b16 %v7927, %v7911
        %v9016 = vpack.c.b16 %v7928, %v7912
        %v9017 = vpack.c.b16 %v7929, %v7913
        %v9018 = vpack.c.b16 %v7930, %v7914
        %v9019 = vpack.c.b16 %v7931, %v7915
        %v9020 = vpack.c.b16 %v7932, %v7916
        %v9021 = vpack.c.b16 %v7933, %v7917
        %v9022 = vpack.c.b16 %v7934, %v7918
        %v9023 = vpack.c.b16 %v7935, %v7919
        %v9024 = vpack.c.b16 %v7936, %v7920
        %v9025 = vpack.c.b16 %v7937, %v7921
        %v9026 = vpack.c.b16 %v7938, %v7922
        %v9027 = vpack.c.b16 %v7939, %v7923
        %v9028 = vpack.c.b16 %v7940, %v7924
        %v9029 = vpack.c.b16 %v7957, %v7941
        %v9030 = vpack.c.b16 %v7958, %v7942
        %v9031 = vpack.c.b16 %v7959, %v7943
        %v9032 = vpack.c.b16 %v7960, %v7944
        %v9033 = vpack.c.b16 %v7961, %v7945
        %v9034 = vpack.c.b16 %v7962, %v7946
        %v9035 = vpack.c.b16 %v7963, %v7947
        %v9036 = vpack.c.b16 %v7964, %v7948
        %v9037 = vpack.c.b16 %v7965, %v7949
        %v9038 = vpack.c.b16 %v7966, %v7950
        %v9039 = vpack.c.b16 %v7967, %v7951
        %v9040 = vpack.c.b16 %v7968, %v7952
        %v9041 = vpack.c.b16 %v7969, %v7953
        %v9042 = vpack.c.b16 %v7970, %v7954
        %v9043 = vpack.c.b16 %v7971, %v7955
        %v9044 = vpack.c.b16 %v7972, %v7956
        %v9045 = vpack.c.b16 %v7989, %v7973
        %v9046 = vpack.c.b16 %v7990, %v7974
        %v9047 = vpack.c.b16 %v7991, %v7975
        %v9048 = vpack.c.b16 %v7992, %v7976
        %v9049 = vpack.c.b16 %v7993, %v7977
        %v9050 = vpack.c.b16 %v7994, %v7978
        %v9051 = vpack.c.b16 %v7995, %v7979
        %v9052 = vpack.c.b16 %v7996, %v7980
        %v9053 = vpack.c.b16 %v7997, %v7981
        %v9054 = vpack.c.b16 %v7998, %v7982
        %v9055 = vpack.c.b16 %v7999, %v7983
        %v9056 = vpack.c.b16 %v8000, %v7984
        %v9057 = vpack.c.b16 %v8001, %v7985
        %v9058 = vpack.c.b16 %v8002, %v7986
        %v9059 = vpack.c.b16 %v8003, %v7987
        %v9060 = vpack.c.b16 %v8004, %v7988
        %v9061 = vpack.c.b16 %v8021, %v8005
        %v9062 = vpack.c.b16 %v8022, %v8006
        %v9063 = vpack.c.b16 %v8023, %v8007
        %v9064 = vpack.c.b16 %v8024, %v8008
        %v9065 = vpack.c.b16 %v8025, %v8009
        %v9066 = vpack.c.b16 %v8026, %v8010
        %v9067 = vpack.c.b16 %v8027, %v8011
        %v9068 = vpack.c.b16 %v8028, %v8012
        %v9069 = vpack.c.b16 %v8029, %v8013
        %v9070 = vpack.c.b16 %v8030, %v8014
        %v9071 = vpack.c.b16 %v8031, %v8015
        %v9072 = vpack.c.b16 %v8032, %v8016
        %v9073 = vpack.c.b16 %v8033, %v8017
        %v9074 = vpack.c.b16 %v8034, %v8018
        %v9075 = vpack.c.b16 %v8035, %v8019
        %v9076 = vpack.c.b16 %v8036, %v8020
        %v9077 = vpack.c.b16 %v8053, %v8037
        %v9078 = vpack.c.b16 %v8054, %v8038
        %v9079 = vpack.c.b16 %v8055, %v8039
        %v9080 = vpack.c.b16 %v8056, %v8040
        %v9081 = vpack.c.b16 %v8057, %v8041
        %v9082 = vpack.c.b16 %v8058, %v8042
        %v9083 = vpack.c.b16 %v8059, %v8043
        %v9084 = vpack.c.b16 %v8060, %v8044
        %v9085 = vpack.c.b16 %v8061, %v8045
        %v9086 = vpack.c.b16 %v8062, %v8046
        %v9087 = vpack.c.b16 %v8063, %v8047
        %v9088 = vpack.c.b16 %v8064, %v8048
        %v9089 = vpack.c.b16 %v8065, %v8049
        %v9090 = vpack.c.b16 %v8066, %v8050
        %v9091 = vpack.c.b16 %v8067, %v8051
        %v9092 = vpack.c.b16 %v8068, %v8052
        %10117 = vmatprep.subr.bf16.mxu0 %v8070
        %10118 = vmatpush1.bf16.msra.mxu0 %v8069
        %10119 = vmatprep.subr.bf16.mxu0 %v8086
        %10120 = vmatpush1.bf16.msra.mxu0 %v8085
        %10121 = vmatprep.subr.bf16.mxu0 %v8102
        %10122 = vmatpush1.bf16.msra.mxu0 %v8101
        %10123 = vmatprep.subr.bf16.mxu0 %v8118
        %10124 = vmatpush1.bf16.msra.mxu0 %v8117
        %10125 = vmatprep.subr.bf16.mxu0 %v8134
        %10126 = vmatpush1.bf16.msra.mxu0 %v8133
        %10127 = vmatprep.subr.bf16.mxu0 %v8150
        %10128 = vmatpush1.bf16.msra.mxu0 %v8149
        %10129 = vmatprep.subr.bf16.mxu0 %v8166
        %10130 = vmatpush1.bf16.msra.mxu0 %v8165
        %10131 = vmatprep.subr.bf16.mxu0 %v8182
        %10132 = vmatpush1.bf16.msra.mxu0 %v8181
        %10133 = vmatprep.subr.bf16.mxu0 %v8198
        %10134 = vmatpush1.bf16.msra.mxu0 %v8197
        %10135 = vmatprep.subr.bf16.mxu0 %v8214
        %10136 = vmatpush1.bf16.msra.mxu0 %v8213
        %10137 = vmatprep.subr.bf16.mxu0 %v8230
        %10138 = vmatpush1.bf16.msra.mxu0 %v8229
        %10139 = vmatprep.subr.bf16.mxu0 %v8246
        %10140 = vmatpush1.bf16.msra.mxu0 %v8245
        %10141 = vmatprep.subr.bf16.mxu0 %v8262
        %10142 = vmatpush1.bf16.msra.mxu0 %v8261
        %10143 = vmatprep.subr.bf16.mxu0 %v8278
        %10144 = vmatpush1.bf16.msra.mxu0 %v8277
        %10145 = vmatprep.subr.bf16.mxu0 %v8294
        %10146 = vmatpush1.bf16.msra.mxu0 %v8293
        %10147 = vmatprep.subr.bf16.mxu0 %v8310
        %10148 = vmatpush1.bf16.msra.mxu0 %v8309
        %10149 = vmatprep.mubr.bf16.mxu0 %v4970
        %10150 = vmatmul.mubr.bf16.gmra.mrb[0].mxu0 %v4962
        %v10151 = vpop.f32.mrb[0].mxu0
        %v10152 = vadd.f32 %v4876, %v10151
        %v10153 = vpop.f32.mrb[0].mxu0
        %v10154 = vadd.f32 %v4880, %v10153
        %v10155 = vpop.f32.mrb[0].mxu0
        %v10156 = vpop.f32.mrb[0].mxu0
        %10157 = vdwg.mxu0
        %10158 = vmatprep.subr.bf16.mxu0 %v8326
        %10159 = vmatpush1.bf16.msra.mxu0 %v8325
        %10160 = vmatprep.subr.bf16.mxu0 %v8342
        %10161 = vmatpush1.bf16.msra.mxu0 %v8341
        %10162 = vmatprep.subr.bf16.mxu0 %v8358
        %10163 = vmatpush1.bf16.msra.mxu0 %v8357
        %10164 = vmatprep.subr.bf16.mxu0 %v8374
        %10165 = vmatpush1.bf16.msra.mxu0 %v8373
        %10166 = vmatprep.subr.bf16.mxu0 %v8390
        %10167 = vmatpush1.bf16.msra.mxu0 %v8389
        %10168 = vmatprep.subr.bf16.mxu0 %v8406
        %10169 = vmatpush1.bf16.msra.mxu0 %v8405
        %10170 = vmatprep.subr.bf16.mxu0 %v8422
        %10171 = vmatpush1.bf16.msra.mxu0 %v8421
        %10172 = vmatprep.subr.bf16.mxu0 %v8438
        %10173 = vmatpush1.bf16.msra.mxu0 %v8437
        %10174 = vmatprep.subr.bf16.mxu0 %v8454
        %10175 = vmatpush1.bf16.msra.mxu0 %v8453
        %10176 = vmatprep.subr.bf16.mxu0 %v8470
        %10177 = vmatpush1.bf16.msra.mxu0 %v8469
        %10178 = vmatprep.subr.bf16.mxu0 %v8486
        %10179 = vmatpush1.bf16.msra.mxu0 %v8485
        %10180 = vmatprep.subr.bf16.mxu0 %v8502
        %10181 = vmatpush1.bf16.msra.mxu0 %v8501
        %10182 = vmatprep.subr.bf16.mxu0 %v8518
        %10183 = vmatpush1.bf16.msra.mxu0 %v8517
        %10184 = vmatprep.subr.bf16.mxu0 %v8534
        %10185 = vmatpush1.bf16.msra.mxu0 %v8533
        %10186 = vmatprep.subr.bf16.mxu0 %v8550
        %10187 = vmatpush1.bf16.msra.mxu0 %v8549
        %10188 = vmatprep.subr.bf16.mxu0 %v8566
        %10189 = vmatpush1.bf16.msra.mxu0 %v8565
        %10190 = vmatprep.mubr.bf16.mxu0 %v4971
        %10191 = vmatmul.mubr.bf16.gmra.mrb[0].mxu0 %v4969
        %v10192 = vpop.f32.mrb[0].mxu0
        %v10193 = vadd.f32 %v10152, %v10192
        %v10194 = vpop.f32.mrb[0].mxu0
        %v10195 = vadd.f32 %v10154, %v10194
        %v10196 = vpop.f32.mrb[0].mxu0
        %v10197 = vpop.f32.mrb[0].mxu0
        %10198 = vdwg.mxu0
        %10199 = vmatprep.subr.bf16.mxu0 %v8582
        %10200 = vmatpush1.bf16.msra.mxu0 %v8581
        %10201 = vmatprep.subr.bf16.mxu0 %v8598
        %10202 = vmatpush1.bf16.msra.mxu0 %v8597
        %10203 = vmatprep.subr.bf16.mxu0 %v8614
        %10204 = vmatpush1.bf16.msra.mxu0 %v8613
        %10205 = vmatprep.subr.bf16.mxu0 %v8630
        %10206 = vmatpush1.bf16.msra.mxu0 %v8629
        %10207 = vmatprep.subr.bf16.mxu0 %v8646
        %10208 = vmatpush1.bf16.msra.mxu0 %v8645
        %10209 = vmatprep.subr.bf16.mxu0 %v8662
        %10210 = vmatpush1.bf16.msra.mxu0 %v8661
        %10211 = vmatprep.subr.bf16.mxu0 %v8678
        %10212 = vmatpush1.bf16.msra.mxu0 %v8677
        %10213 = vmatprep.subr.bf16.mxu0 %v8694
        %10214 = vmatpush1.bf16.msra.mxu0 %v8693
        %10215 = vmatprep.subr.bf16.mxu0 %v8710
        %10216 = vmatpush1.bf16.msra.mxu0 %v8709
        %10217 = vmatprep.subr.bf16.mxu0 %v8726
        %10218 = vmatpush1.bf16.msra.mxu0 %v8725
        %10219 = vmatprep.subr.bf16.mxu0 %v8742
        %10220 = vmatpush1.bf16.msra.mxu0 %v8741
        %10221 = vmatprep.subr.bf16.mxu0 %v8758
        %10222 = vmatpush1.bf16.msra.mxu0 %v8757
        %10223 = vmatprep.subr.bf16.mxu0 %v8774
        %10224 = vmatpush1.bf16.msra.mxu0 %v8773
        %10225 = vmatprep.subr.bf16.mxu0 %v8790
        %10226 = vmatpush1.bf16.msra.mxu0 %v8789
        %10227 = vmatprep.subr.bf16.mxu0 %v8806
        %10228 = vmatpush1.bf16.msra.mxu0 %v8805
        %10229 = vmatprep.subr.bf16.mxu0 %v8822
        %10230 = vmatpush1.bf16.msra.mxu0 %v8821
        %10231 = vmatprep.mubr.bf16.mxu0 %v4987
        %10232 = vmatmul.mubr.bf16.gmra.mrb[0].mxu0 %v4979
        %v10233 = vpop.f32.mrb[0].mxu0
        %v10234 = vadd.f32 %v10193, %v10233
        %v10235 = vpop.f32.mrb[0].mxu0
        %v10236 = vadd.f32 %v10195, %v10235
        %v10237 = vpop.f32.mrb[0].mxu0
        %v10238 = vpop.f32.mrb[0].mxu0
        %10239 = vdwg.mxu0
        %10240 = vmatprep.subr.bf16.mxu0 %v8838
        %10241 = vmatpush1.bf16.msra.mxu0 %v8837
        %10242 = vmatprep.subr.bf16.mxu0 %v8854
        %10243 = vmatpush1.bf16.msra.mxu0 %v8853
        %10244 = vmatprep.subr.bf16.mxu0 %v8870
        %10245 = vmatpush1.bf16.msra.mxu0 %v8869
        %10246 = vmatprep.subr.bf16.mxu0 %v8886
        %10247 = vmatpush1.bf16.msra.mxu0 %v8885
        %10248 = vmatprep.subr.bf16.mxu0 %v8902
        %10249 = vmatpush1.bf16.msra.mxu0 %v8901
        %10250 = vmatprep.subr.bf16.mxu0 %v8918
        %10251 = vmatpush1.bf16.msra.mxu0 %v8917
        %10252 = vmatprep.subr.bf16.mxu0 %v8934
        %10253 = vmatpush1.bf16.msra.mxu0 %v8933
        %10254 = vmatprep.subr.bf16.mxu0 %v8950
        %10255 = vmatpush1.bf16.msra.mxu0 %v8949
        %10256 = vmatprep.subr.bf16.mxu0 %v8966
        %10257 = vmatpush1.bf16.msra.mxu0 %v8965
        %10258 = vmatprep.subr.bf16.mxu0 %v8982
        %10259 = vmatpush1.bf16.msra.mxu0 %v8981
        %10260 = vmatprep.subr.bf16.mxu0 %v8998
        %10261 = vmatpush1.bf16.msra.mxu0 %v8997
        %10262 = vmatprep.subr.bf16.mxu0 %v9014
        %10263 = vmatpush1.bf16.msra.mxu0 %v9013
        %10264 = vmatprep.subr.bf16.mxu0 %v9030
        %10265 = vmatpush1.bf16.msra.mxu0 %v9029
        %10266 = vmatprep.subr.bf16.mxu0 %v9046
        %10267 = vmatpush1.bf16.msra.mxu0 %v9045
        %10268 = vmatprep.subr.bf16.mxu0 %v9062
        %10269 = vmatpush1.bf16.msra.mxu0 %v9061
        %10270 = vmatprep.subr.bf16.mxu0 %v9078
        %10271 = vmatpush1.bf16.msra.mxu0 %v9077
        %10272 = vmatprep.mubr.bf16.mxu0 %v4988
        %10273 = vmatmul.mubr.bf16.gmra.mrb[0].mxu0 %v4986
        %v10274 = vpop.f32.mrb[0].mxu0
        %v10275 = vadd.f32 %v10234, %v10274
        %v10276 = vpop.f32.mrb[0].mxu0
        %v10277 = vadd.f32 %v10236, %v10276
        %v10278 = vpop.f32.mrb[0].mxu0
        %v10279 = vpop.f32.mrb[0].mxu0
        %10280 = vdwg.mxu0
        %10281 = vmatprep.subr.bf16.mxu0 %v8072
        %10282 = vmatpush1.bf16.msra.mxu0 %v8071
        %10283 = vmatprep.subr.bf16.mxu0 %v8088
        %10284 = vmatpush1.bf16.msra.mxu0 %v8087
        %10285 = vmatprep.subr.bf16.mxu0 %v8104
        %10286 = vmatpush1.bf16.msra.mxu0 %v8103
        %10287 = vmatprep.subr.bf16.mxu0 %v8120
        %10288 = vmatpush1.bf16.msra.mxu0 %v8119
        %10289 = vmatprep.subr.bf16.mxu0 %v8136
        %10290 = vmatpush1.bf16.msra.mxu0 %v8135
        %10291 = vmatprep.subr.bf16.mxu0 %v8152
        %10292 = vmatpush1.bf16.msra.mxu0 %v8151
        %10293 = vmatprep.subr.bf16.mxu0 %v8168
        %10294 = vmatpush1.bf16.msra.mxu0 %v8167
        %10295 = vmatprep.subr.bf16.mxu0 %v8184
        %10296 = vmatpush1.bf16.msra.mxu0 %v8183
        %10297 = vmatprep.subr.bf16.mxu0 %v8200
        %10298 = vmatpush1.bf16.msra.mxu0 %v8199
        %10299 = vmatprep.subr.bf16.mxu0 %v8216
        %10300 = vmatpush1.bf16.msra.mxu0 %v8215
        %10301 = vmatprep.subr.bf16.mxu0 %v8232
        %10302 = vmatpush1.bf16.msra.mxu0 %v8231
        %10303 = vmatprep.subr.bf16.mxu0 %v8248
        %10304 = vmatpush1.bf16.msra.mxu0 %v8247
        %10305 = vmatprep.subr.bf16.mxu0 %v8264
        %10306 = vmatpush1.bf16.msra.mxu0 %v8263
        %10307 = vmatprep.subr.bf16.mxu0 %v8280
        %10308 = vmatpush1.bf16.msra.mxu0 %v8279
        %10309 = vmatprep.subr.bf16.mxu0 %v8296
        %10310 = vmatpush1.bf16.msra.mxu0 %v8295
        %10311 = vmatprep.subr.bf16.mxu0 %v8312
        %10312 = vmatpush1.bf16.msra.mxu0 %v8311
        %10313 = vmatprep.mubr.bf16.mxu0 %v4970
        %10314 = vmatmul.mubr.bf16.gmra.mrb[0].mxu0 %v4962
        %v10315 = vpop.f32.mrb[0].mxu0
        %v10316 = vadd.f32 %v4884, %v10315
        %v10317 = vpop.f32.mrb[0].mxu0
        %v10318 = vadd.f32 %v4888, %v10317
        %v10319 = vpop.f32.mrb[0].mxu0
        %v10320 = vpop.f32.mrb[0].mxu0
        %10321 = vdwg.mxu0
        %10322 = vmatprep.subr.bf16.mxu0 %v8328
        %10323 = vmatpush1.bf16.msra.mxu0 %v8327
        %10324 = vmatprep.subr.bf16.mxu0 %v8344
        %10325 = vmatpush1.bf16.msra.mxu0 %v8343
        %10326 = vmatprep.subr.bf16.mxu0 %v8360
        %10327 = vmatpush1.bf16.msra.mxu0 %v8359
        %10328 = vmatprep.subr.bf16.mxu0 %v8376
        %10329 = vmatpush1.bf16.msra.mxu0 %v8375
        %10330 = vmatprep.subr.bf16.mxu0 %v8392
        %10331 = vmatpush1.bf16.msra.mxu0 %v8391
        %10332 = vmatprep.subr.bf16.mxu0 %v8408
        %10333 = vmatpush1.bf16.msra.mxu0 %v8407
        %10334 = vmatprep.subr.bf16.mxu0 %v8424
        %10335 = vmatpush1.bf16.msra.mxu0 %v8423
        %10336 = vmatprep.subr.bf16.mxu0 %v8440
        %10337 = vmatpush1.bf16.msra.mxu0 %v8439
        %10338 = vmatprep.subr.bf16.mxu0 %v8456
        %10339 = vmatpush1.bf16.msra.mxu0 %v8455
        %10340 = vmatprep.subr.bf16.mxu0 %v8472
        %10341 = vmatpush1.bf16.msra.mxu0 %v8471
        %10342 = vmatprep.subr.bf16.mxu0 %v8488
        %10343 = vmatpush1.bf16.msra.mxu0 %v8487
        %10344 = vmatprep.subr.bf16.mxu0 %v8504
        %10345 = vmatpush1.bf16.msra.mxu0 %v8503
        %10346 = vmatprep.subr.bf16.mxu0 %v8520
        %10347 = vmatpush1.bf16.msra.mxu0 %v8519
        %10348 = vmatprep.subr.bf16.mxu0 %v8536
        %10349 = vmatpush1.bf16.msra.mxu0 %v8535
        %10350 = vmatprep.subr.bf16.mxu0 %v8552
        %10351 = vmatpush1.bf16.msra.mxu0 %v8551
        %10352 = vmatprep.subr.bf16.mxu0 %v8568
        %10353 = vmatpush1.bf16.msra.mxu0 %v8567
        %10354 = vmatprep.mubr.bf16.mxu0 %v4971
        %10355 = vmatmul.mubr.bf16.gmra.mrb[0].mxu0 %v4969
        %v10356 = vpop.f32.mrb[0].mxu0
        %v10357 = vadd.f32 %v10316, %v10356
        %v10358 = vpop.f32.mrb[0].mxu0
        %v10359 = vadd.f32 %v10318, %v10358
        %v10360 = vpop.f32.mrb[0].mxu0
        %v10361 = vpop.f32.mrb[0].mxu0
        %10362 = vdwg.mxu0
        %10363 = vmatprep.subr.bf16.mxu0 %v8584
        %10364 = vmatpush1.bf16.msra.mxu0 %v8583
        %10365 = vmatprep.subr.bf16.mxu0 %v8600
        %10366 = vmatpush1.bf16.msra.mxu0 %v8599
        %10367 = vmatprep.subr.bf16.mxu0 %v8616
        %10368 = vmatpush1.bf16.msra.mxu0 %v8615
        %10369 = vmatprep.subr.bf16.mxu0 %v8632
        %10370 = vmatpush1.bf16.msra.mxu0 %v8631
        %10371 = vmatprep.subr.bf16.mxu0 %v8648
        %10372 = vmatpush1.bf16.msra.mxu0 %v8647
        %10373 = vmatprep.subr.bf16.mxu0 %v8664
        %10374 = vmatpush1.bf16.msra.mxu0 %v8663
        %10375 = vmatprep.subr.bf16.mxu0 %v8680
        %10376 = vmatpush1.bf16.msra.mxu0 %v8679
        %10377 = vmatprep.subr.bf16.mxu0 %v8696
        %10378 = vmatpush1.bf16.msra.mxu0 %v8695
        %10379 = vmatprep.subr.bf16.mxu0 %v8712
        %10380 = vmatpush1.bf16.msra.mxu0 %v8711
        %10381 = vmatprep.subr.bf16.mxu0 %v8728
        %10382 = vmatpush1.bf16.msra.mxu0 %v8727
        %10383 = vmatprep.subr.bf16.mxu0 %v8744
        %10384 = vmatpush1.bf16.msra.mxu0 %v8743
        %10385 = vmatprep.subr.bf16.mxu0 %v8760
        %10386 = vmatpush1.bf16.msra.mxu0 %v8759
        %10387 = vmatprep.subr.bf16.mxu0 %v8776
        %10388 = vmatpush1.bf16.msra.mxu0 %v8775
        %10389 = vmatprep.subr.bf16.mxu0 %v8792
        %10390 = vmatpush1.bf16.msra.mxu0 %v8791
        %10391 = vmatprep.subr.bf16.mxu0 %v8808
        %10392 = vmatpush1.bf16.msra.mxu0 %v8807
        %10393 = vmatprep.subr.bf16.mxu0 %v8824
        %10394 = vmatpush1.bf16.msra.mxu0 %v8823
        %10395 = vmatprep.mubr.bf16.mxu0 %v4987
        %10396 = vmatmul.mubr.bf16.gmra.mrb[0].mxu0 %v4979
        %v10397 = vpop.f32.mrb[0].mxu0
        %v10398 = vadd.f32 %v10357, %v10397
        %v10399 = vpop.f32.mrb[0].mxu0
        %v10400 = vadd.f32 %v10359, %v10399
        %v10401 = vpop.f32.mrb[0].mxu0
        %v10402 = vpop.f32.mrb[0].mxu0
        %10403 = vdwg.mxu0
        %10404 = vmatprep.subr.bf16.mxu0 %v8840
        %10405 = vmatpush1.bf16.msra.mxu0 %v8839
        %10406 = vmatprep.subr.bf16.mxu0 %v8856
        %10407 = vmatpush1.bf16.msra.mxu0 %v8855
        %10408 = vmatprep.subr.bf16.mxu0 %v8872
        %10409 = vmatpush1.bf16.msra.mxu0 %v8871
        %10410 = vmatprep.subr.bf16.mxu0 %v8888
        %10411 = vmatpush1.bf16.msra.mxu0 %v8887
        %10412 = vmatprep.subr.bf16.mxu0 %v8904
        %10413 = vmatpush1.bf16.msra.mxu0 %v8903
        %10414 = vmatprep.subr.bf16.mxu0 %v8920
        %10415 = vmatpush1.bf16.msra.mxu0 %v8919
        %10416 = vmatprep.subr.bf16.mxu0 %v8936
        %10417 = vmatpush1.bf16.msra.mxu0 %v8935
        %10418 = vmatprep.subr.bf16.mxu0 %v8952
        %10419 = vmatpush1.bf16.msra.mxu0 %v8951
        %10420 = vmatprep.subr.bf16.mxu0 %v8968
        %10421 = vmatpush1.bf16.msra.mxu0 %v8967
        %10422 = vmatprep.subr.bf16.mxu0 %v8984
        %10423 = vmatpush1.bf16.msra.mxu0 %v8983
        %10424 = vmatprep.subr.bf16.mxu0 %v9000
        %10425 = vmatpush1.bf16.msra.mxu0 %v8999
        %10426 = vmatprep.subr.bf16.mxu0 %v9016
        %10427 = vmatpush1.bf16.msra.mxu0 %v9015
        %10428 = vmatprep.subr.bf16.mxu0 %v9032
        %10429 = vmatpush1.bf16.msra.mxu0 %v9031
        %10430 = vmatprep.subr.bf16.mxu0 %v9048
        %10431 = vmatpush1.bf16.msra.mxu0 %v9047
        %10432 = vmatprep.subr.bf16.mxu0 %v9064
        %10433 = vmatpush1.bf16.msra.mxu0 %v9063
        %10434 = vmatprep.subr.bf16.mxu0 %v9080
        %10435 = vmatpush1.bf16.msra.mxu0 %v9079
        %10436 = vmatprep.mubr.bf16.mxu0 %v4988
        %10437 = vmatmul.mubr.bf16.gmra.mrb[0].mxu0 %v4986
        %v10438 = vpop.f32.mrb[0].mxu0
        %v10439 = vadd.f32 %v10398, %v10438
        %v10440 = vpop.f32.mrb[0].mxu0
        %v10441 = vadd.f32 %v10400, %v10440
        %v10442 = vpop.f32.mrb[0].mxu0
        %v10443 = vpop.f32.mrb[0].mxu0
        %10444 = vdwg.mxu0
        %10445 = vmatprep.subr.bf16.mxu0 %v8074
        %10446 = vmatpush1.bf16.msra.mxu0 %v8073
        %10447 = vmatprep.subr.bf16.mxu0 %v8090
        %10448 = vmatpush1.bf16.msra.mxu0 %v8089
        %10449 = vmatprep.subr.bf16.mxu0 %v8106
        %10450 = vmatpush1.bf16.msra.mxu0 %v8105
        %10451 = vmatprep.subr.bf16.mxu0 %v8122
        %10452 = vmatpush1.bf16.msra.mxu0 %v8121
        %10453 = vmatprep.subr.bf16.mxu0 %v8138
        %10454 = vmatpush1.bf16.msra.mxu0 %v8137
        %10455 = vmatprep.subr.bf16.mxu0 %v8154
        %10456 = vmatpush1.bf16.msra.mxu0 %v8153
        %10457 = vmatprep.subr.bf16.mxu0 %v8170
        %10458 = vmatpush1.bf16.msra.mxu0 %v8169
        %10459 = vmatprep.subr.bf16.mxu0 %v8186
        %10460 = vmatpush1.bf16.msra.mxu0 %v8185
        %10461 = vmatprep.subr.bf16.mxu0 %v8202
        %10462 = vmatpush1.bf16.msra.mxu0 %v8201
        %10463 = vmatprep.subr.bf16.mxu0 %v8218
        %10464 = vmatpush1.bf16.msra.mxu0 %v8217
        %10465 = vmatprep.subr.bf16.mxu0 %v8234
        %10466 = vmatpush1.bf16.msra.mxu0 %v8233
        %10467 = vmatprep.subr.bf16.mxu0 %v8250
        %10468 = vmatpush1.bf16.msra.mxu0 %v8249
        %10469 = vmatprep.subr.bf16.mxu0 %v8266
        %10470 = vmatpush1.bf16.msra.mxu0 %v8265
        %10471 = vmatprep.subr.bf16.mxu0 %v8282
        %10472 = vmatpush1.bf16.msra.mxu0 %v8281
        %10473 = vmatprep.subr.bf16.mxu0 %v8298
        %10474 = vmatpush1.bf16.msra.mxu0 %v8297
        %10475 = vmatprep.subr.bf16.mxu0 %v8314
        %10476 = vmatpush1.bf16.msra.mxu0 %v8313
        %10477 = vmatprep.mubr.bf16.mxu0 %v4970
        %10478 = vmatmul.mubr.bf16.gmra.mrb[0].mxu0 %v4962
        %v10479 = vpop.f32.mrb[0].mxu0
        %v10480 = vadd.f32 %v4892, %v10479
        %v10481 = vpop.f32.mrb[0].mxu0
        %v10482 = vadd.f32 %v4896, %v10481
        %v10483 = vpop.f32.mrb[0].mxu0
        %v10484 = vpop.f32.mrb[0].mxu0
        %10485 = vdwg.mxu0
        %10486 = vmatprep.subr.bf16.mxu0 %v8330
        %10487 = vmatpush1.bf16.msra.mxu0 %v8329
        %10488 = vmatprep.subr.bf16.mxu0 %v8346
        %10489 = vmatpush1.bf16.msra.mxu0 %v8345
        %10490 = vmatprep.subr.bf16.mxu0 %v8362
        %10491 = vmatpush1.bf16.msra.mxu0 %v8361
        %10492 = vmatprep.subr.bf16.mxu0 %v8378
        %10493 = vmatpush1.bf16.msra.mxu0 %v8377
        %10494 = vmatprep.subr.bf16.mxu0 %v8394
        %10495 = vmatpush1.bf16.msra.mxu0 %v8393
        %10496 = vmatprep.subr.bf16.mxu0 %v8410
        %10497 = vmatpush1.bf16.msra.mxu0 %v8409
        %10498 = vmatprep.subr.bf16.mxu0 %v8426
        %10499 = vmatpush1.bf16.msra.mxu0 %v8425
        %10500 = vmatprep.subr.bf16.mxu0 %v8442
        %10501 = vmatpush1.bf16.msra.mxu0 %v8441
        %10502 = vmatprep.subr.bf16.mxu0 %v8458
        %10503 = vmatpush1.bf16.msra.mxu0 %v8457
        %10504 = vmatprep.subr.bf16.mxu0 %v8474
        %10505 = vmatpush1.bf16.msra.mxu0 %v8473
        %10506 = vmatprep.subr.bf16.mxu0 %v8490
        %10507 = vmatpush1.bf16.msra.mxu0 %v8489
        %10508 = vmatprep.subr.bf16.mxu0 %v8506
        %10509 = vmatpush1.bf16.msra.mxu0 %v8505
        %10510 = vmatprep.subr.bf16.mxu0 %v8522
        %10511 = vmatpush1.bf16.msra.mxu0 %v8521
        %10512 = vmatprep.subr.bf16.mxu0 %v8538
        %10513 = vmatpush1.bf16.msra.mxu0 %v8537
        %10514 = vmatprep.subr.bf16.mxu0 %v8554
        %10515 = vmatpush1.bf16.msra.mxu0 %v8553
        %10516 = vmatprep.subr.bf16.mxu0 %v8570
        %10517 = vmatpush1.bf16.msra.mxu0 %v8569
        %10518 = vmatprep.mubr.bf16.mxu0 %v4971
        %10519 = vmatmul.mubr.bf16.gmra.mrb[0].mxu0 %v4969
        %v10520 = vpop.f32.mrb[0].mxu0
        %v10521 = vadd.f32 %v10480, %v10520
        %v10522 = vpop.f32.mrb[0].mxu0
        %v10523 = vadd.f32 %v10482, %v10522
        %v10524 = vpop.f32.mrb[0].mxu0
        %v10525 = vpop.f32.mrb[0].mxu0
        %10526 = vdwg.mxu0
        %10527 = vmatprep.subr.bf16.mxu0 %v8586
        %10528 = vmatpush1.bf16.msra.mxu0 %v8585
        %10529 = vmatprep.subr.bf16.mxu0 %v8602
        %10530 = vmatpush1.bf16.msra.mxu0 %v8601
        %10531 = vmatprep.subr.bf16.mxu0 %v8618
        %10532 = vmatpush1.bf16.msra.mxu0 %v8617
        %10533 = vmatprep.subr.bf16.mxu0 %v8634
        %10534 = vmatpush1.bf16.msra.mxu0 %v8633
        %10535 = vmatprep.subr.bf16.mxu0 %v8650
        %10536 = vmatpush1.bf16.msra.mxu0 %v8649
        %10537 = vmatprep.subr.bf16.mxu0 %v8666
        %10538 = vmatpush1.bf16.msra.mxu0 %v8665
        %10539 = vmatprep.subr.bf16.mxu0 %v8682
        %10540 = vmatpush1.bf16.msra.mxu0 %v8681
        %10541 = vmatprep.subr.bf16.mxu0 %v8698
        %10542 = vmatpush1.bf16.msra.mxu0 %v8697
        %10543 = vmatprep.subr.bf16.mxu0 %v8714
        %10544 = vmatpush1.bf16.msra.mxu0 %v8713
        %10545 = vmatprep.subr.bf16.mxu0 %v8730
        %10546 = vmatpush1.bf16.msra.mxu0 %v8729
        %10547 = vmatprep.subr.bf16.mxu0 %v8746
        %10548 = vmatpush1.bf16.msra.mxu0 %v8745
        %10549 = vmatprep.subr.bf16.mxu0 %v8762
        %10550 = vmatpush1.bf16.msra.mxu0 %v8761
        %10551 = vmatprep.subr.bf16.mxu0 %v8778
        %10552 = vmatpush1.bf16.msra.mxu0 %v8777
        %10553 = vmatprep.subr.bf16.mxu0 %v8794
        %10554 = vmatpush1.bf16.msra.mxu0 %v8793
        %10555 = vmatprep.subr.bf16.mxu0 %v8810
        %10556 = vmatpush1.bf16.msra.mxu0 %v8809
        %10557 = vmatprep.subr.bf16.mxu0 %v8826
        %10558 = vmatpush1.bf16.msra.mxu0 %v8825
        %10559 = vmatprep.mubr.bf16.mxu0 %v4987
        %10560 = vmatmul.mubr.bf16.gmra.mrb[0].mxu0 %v4979
        %v10561 = vpop.f32.mrb[0].mxu0
        %v10562 = vadd.f32 %v10521, %v10561
        %v10563 = vpop.f32.mrb[0].mxu0
        %v10564 = vadd.f32 %v10523, %v10563
        %v10565 = vpop.f32.mrb[0].mxu0
        %v10566 = vpop.f32.mrb[0].mxu0
        %10567 = vdwg.mxu0
        %10568 = vmatprep.subr.bf16.mxu0 %v8842
        %10569 = vmatpush1.bf16.msra.mxu0 %v8841
        %10570 = vmatprep.subr.bf16.mxu0 %v8858
        %10571 = vmatpush1.bf16.msra.mxu0 %v8857
        %10572 = vmatprep.subr.bf16.mxu0 %v8874
        %10573 = vmatpush1.bf16.msra.mxu0 %v8873
        %10574 = vmatprep.subr.bf16.mxu0 %v8890
        %10575 = vmatpush1.bf16.msra.mxu0 %v8889
        %10576 = vmatprep.subr.bf16.mxu0 %v8906
        %10577 = vmatpush1.bf16.msra.mxu0 %v8905
        %10578 = vmatprep.subr.bf16.mxu0 %v8922
        %10579 = vmatpush1.bf16.msra.mxu0 %v8921
        %10580 = vmatprep.subr.bf16.mxu0 %v8938
        %10581 = vmatpush1.bf16.msra.mxu0 %v8937
        %10582 = vmatprep.subr.bf16.mxu0 %v8954
        %10583 = vmatpush1.bf16.msra.mxu0 %v8953
        %10584 = vmatprep.subr.bf16.mxu0 %v8970
        %10585 = vmatpush1.bf16.msra.mxu0 %v8969
        %10586 = vmatprep.subr.bf16.mxu0 %v8986
        %10587 = vmatpush1.bf16.msra.mxu0 %v8985
        %10588 = vmatprep.subr.bf16.mxu0 %v9002
        %10589 = vmatpush1.bf16.msra.mxu0 %v9001
        %10590 = vmatprep.subr.bf16.mxu0 %v9018
        %10591 = vmatpush1.bf16.msra.mxu0 %v9017
        %10592 = vmatprep.subr.bf16.mxu0 %v9034
        %10593 = vmatpush1.bf16.msra.mxu0 %v9033
        %10594 = vmatprep.subr.bf16.mxu0 %v9050
        %10595 = vmatpush1.bf16.msra.mxu0 %v9049
        %10596 = vmatprep.subr.bf16.mxu0 %v9066
        %10597 = vmatpush1.bf16.msra.mxu0 %v9065
        %10598 = vmatprep.subr.bf16.mxu0 %v9082
        %10599 = vmatpush1.bf16.msra.mxu0 %v9081
        %10600 = vmatprep.mubr.bf16.mxu0 %v4988
        %10601 = vmatmul.mubr.bf16.gmra.mrb[0].mxu0 %v4986
        %v10602 = vpop.f32.mrb[0].mxu0
        %v10603 = vadd.f32 %v10562, %v10602
        %v10604 = vpop.f32.mrb[0].mxu0
        %v10605 = vadd.f32 %v10564, %v10604
        %v10606 = vpop.f32.mrb[0].mxu0
        %v10607 = vpop.f32.mrb[0].mxu0
        %10608 = vdwg.mxu0
        %10609 = vmatprep.subr.bf16.mxu0 %v8076
        %10610 = vmatpush1.bf16.msra.mxu0 %v8075
        %10611 = vmatprep.subr.bf16.mxu0 %v8092
        %10612 = vmatpush1.bf16.msra.mxu0 %v8091
        %10613 = vmatprep.subr.bf16.mxu0 %v8108
        %10614 = vmatpush1.bf16.msra.mxu0 %v8107
        %10615 = vmatprep.subr.bf16.mxu0 %v8124
        %10616 = vmatpush1.bf16.msra.mxu0 %v8123
        %10617 = vmatprep.subr.bf16.mxu0 %v8140
        %10618 = vmatpush1.bf16.msra.mxu0 %v8139
        %10619 = vmatprep.subr.bf16.mxu0 %v8156
        %10620 = vmatpush1.bf16.msra.mxu0 %v8155
        %10621 = vmatprep.subr.bf16.mxu0 %v8172
        %10622 = vmatpush1.bf16.msra.mxu0 %v8171
        %10623 = vmatprep.subr.bf16.mxu0 %v8188
        %10624 = vmatpush1.bf16.msra.mxu0 %v8187
        %10625 = vmatprep.subr.bf16.mxu0 %v8204
        %10626 = vmatpush1.bf16.msra.mxu0 %v8203
        %10627 = vmatprep.subr.bf16.mxu0 %v8220
        %10628 = vmatpush1.bf16.msra.mxu0 %v8219
        %10629 = vmatprep.subr.bf16.mxu0 %v8236
        %10630 = vmatpush1.bf16.msra.mxu0 %v8235
        %10631 = vmatprep.subr.bf16.mxu0 %v8252
        %10632 = vmatpush1.bf16.msra.mxu0 %v8251
        %10633 = vmatprep.subr.bf16.mxu0 %v8268
        %10634 = vmatpush1.bf16.msra.mxu0 %v8267
        %10635 = vmatprep.subr.bf16.mxu0 %v8284
        %10636 = vmatpush1.bf16.msra.mxu0 %v8283
        %10637 = vmatprep.subr.bf16.mxu0 %v8300
        %10638 = vmatpush1.bf16.msra.mxu0 %v8299
        %10639 = vmatprep.subr.bf16.mxu0 %v8316
        %10640 = vmatpush1.bf16.msra.mxu0 %v8315
        %10641 = vmatprep.mubr.bf16.mxu0 %v4970
        %10642 = vmatmul.mubr.bf16.gmra.mrb[0].mxu0 %v4962
        %v10643 = vpop.f32.mrb[0].mxu0
        %v10644 = vadd.f32 %v4900, %v10643
        %v10645 = vpop.f32.mrb[0].mxu0
        %v10646 = vadd.f32 %v4904, %v10645
        %v10647 = vpop.f32.mrb[0].mxu0
        %v10648 = vpop.f32.mrb[0].mxu0
        %10649 = vdwg.mxu0
        %10650 = vmatprep.subr.bf16.mxu0 %v8332
        %10651 = vmatpush1.bf16.msra.mxu0 %v8331
        %10652 = vmatprep.subr.bf16.mxu0 %v8348
        %10653 = vmatpush1.bf16.msra.mxu0 %v8347
        %10654 = vmatprep.subr.bf16.mxu0 %v8364
        %10655 = vmatpush1.bf16.msra.mxu0 %v8363
        %10656 = vmatprep.subr.bf16.mxu0 %v8380
        %10657 = vmatpush1.bf16.msra.mxu0 %v8379
        %10658 = vmatprep.subr.bf16.mxu0 %v8396
        %10659 = vmatpush1.bf16.msra.mxu0 %v8395
        %10660 = vmatprep.subr.bf16.mxu0 %v8412
        %10661 = vmatpush1.bf16.msra.mxu0 %v8411
        %10662 = vmatprep.subr.bf16.mxu0 %v8428
        %10663 = vmatpush1.bf16.msra.mxu0 %v8427
        %10664 = vmatprep.subr.bf16.mxu0 %v8444
        %10665 = vmatpush1.bf16.msra.mxu0 %v8443
        %10666 = vmatprep.subr.bf16.mxu0 %v8460
        %10667 = vmatpush1.bf16.msra.mxu0 %v8459
        %10668 = vmatprep.subr.bf16.mxu0 %v8476
        %10669 = vmatpush1.bf16.msra.mxu0 %v8475
        %10670 = vmatprep.subr.bf16.mxu0 %v8492
        %10671 = vmatpush1.bf16.msra.mxu0 %v8491
        %10672 = vmatprep.subr.bf16.mxu0 %v8508
        %10673 = vmatpush1.bf16.msra.mxu0 %v8507
        %10674 = vmatprep.subr.bf16.mxu0 %v8524
        %10675 = vmatpush1.bf16.msra.mxu0 %v8523
        %10676 = vmatprep.subr.bf16.mxu0 %v8540
        %10677 = vmatpush1.bf16.msra.mxu0 %v8539
        %10678 = vmatprep.subr.bf16.mxu0 %v8556
        %10679 = vmatpush1.bf16.msra.mxu0 %v8555
        %10680 = vmatprep.subr.bf16.mxu0 %v8572
        %10681 = vmatpush1.bf16.msra.mxu0 %v8571
        %10682 = vmatprep.mubr.bf16.mxu0 %v4971
        %10683 = vmatmul.mubr.bf16.gmra.mrb[0].mxu0 %v4969
        %v10684 = vpop.f32.mrb[0].mxu0
        %v10685 = vadd.f32 %v10644, %v10684
        %v10686 = vpop.f32.mrb[0].mxu0
        %v10687 = vadd.f32 %v10646, %v10686
        %v10688 = vpop.f32.mrb[0].mxu0
        %v10689 = vpop.f32.mrb[0].mxu0
        %10690 = vdwg.mxu0
        %10691 = vmatprep.subr.bf16.mxu0 %v8588
        %10692 = vmatpush1.bf16.msra.mxu0 %v8587
        %10693 = vmatprep.subr.bf16.mxu0 %v8604
        %10694 = vmatpush1.bf16.msra.mxu0 %v8603
        %10695 = vmatprep.subr.bf16.mxu0 %v8620
        %10696 = vmatpush1.bf16.msra.mxu0 %v8619
        %10697 = vmatprep.subr.bf16.mxu0 %v8636
        %10698 = vmatpush1.bf16.msra.mxu0 %v8635
        %10699 = vmatprep.subr.bf16.mxu0 %v8652
        %10700 = vmatpush1.bf16.msra.mxu0 %v8651
        %10701 = vmatprep.subr.bf16.mxu0 %v8668
        %10702 = vmatpush1.bf16.msra.mxu0 %v8667
        %10703 = vmatprep.subr.bf16.mxu0 %v8684
        %10704 = vmatpush1.bf16.msra.mxu0 %v8683
        %10705 = vmatprep.subr.bf16.mxu0 %v8700
        %10706 = vmatpush1.bf16.msra.mxu0 %v8699
        %10707 = vmatprep.subr.bf16.mxu0 %v8716
        %10708 = vmatpush1.bf16.msra.mxu0 %v8715
        %10709 = vmatprep.subr.bf16.mxu0 %v8732
        %10710 = vmatpush1.bf16.msra.mxu0 %v8731
        %10711 = vmatprep.subr.bf16.mxu0 %v8748
        %10712 = vmatpush1.bf16.msra.mxu0 %v8747
        %10713 = vmatprep.subr.bf16.mxu0 %v8764
        %10714 = vmatpush1.bf16.msra.mxu0 %v8763
        %10715 = vmatprep.subr.bf16.mxu0 %v8780
        %10716 = vmatpush1.bf16.msra.mxu0 %v8779
        %10717 = vmatprep.subr.bf16.mxu0 %v8796
        %10718 = vmatpush1.bf16.msra.mxu0 %v8795
        %10719 = vmatprep.subr.bf16.mxu0 %v8812
        %10720 = vmatpush1.bf16.msra.mxu0 %v8811
        %10721 = vmatprep.subr.bf16.mxu0 %v8828
        %10722 = vmatpush1.bf16.msra.mxu0 %v8827
        %10723 = vmatprep.mubr.bf16.mxu0 %v4987
        %10724 = vmatmul.mubr.bf16.gmra.mrb[0].mxu0 %v4979
        %v10725 = vpop.f32.mrb[0].mxu0
        %v10726 = vadd.f32 %v10685, %v10725
        %v10727 = vpop.f32.mrb[0].mxu0
        %v10728 = vadd.f32 %v10687, %v10727
        %v10729 = vpop.f32.mrb[0].mxu0
        %v10730 = vpop.f32.mrb[0].mxu0
        %10731 = vdwg.mxu0
        %10732 = vmatprep.subr.bf16.mxu0 %v8844
        %10733 = vmatpush1.bf16.msra.mxu0 %v8843
        %10734 = vmatprep.subr.bf16.mxu0 %v8860
        %10735 = vmatpush1.bf16.msra.mxu0 %v8859
        %10736 = vmatprep.subr.bf16.mxu0 %v8876
        %10737 = vmatpush1.bf16.msra.mxu0 %v8875
        %10738 = vmatprep.subr.bf16.mxu0 %v8892
        %10739 = vmatpush1.bf16.msra.mxu0 %v8891
        %10740 = vmatprep.subr.bf16.mxu0 %v8908
        %10741 = vmatpush1.bf16.msra.mxu0 %v8907
        %10742 = vmatprep.subr.bf16.mxu0 %v8924
        %10743 = vmatpush1.bf16.msra.mxu0 %v8923
        %10744 = vmatprep.subr.bf16.mxu0 %v8940
        %10745 = vmatpush1.bf16.msra.mxu0 %v8939
        %10746 = vmatprep.subr.bf16.mxu0 %v8956
        %10747 = vmatpush1.bf16.msra.mxu0 %v8955
        %10748 = vmatprep.subr.bf16.mxu0 %v8972
        %10749 = vmatpush1.bf16.msra.mxu0 %v8971
        %10750 = vmatprep.subr.bf16.mxu0 %v8988
        %10751 = vmatpush1.bf16.msra.mxu0 %v8987
        %10752 = vmatprep.subr.bf16.mxu0 %v9004
        %10753 = vmatpush1.bf16.msra.mxu0 %v9003
        %10754 = vmatprep.subr.bf16.mxu0 %v9020
        %10755 = vmatpush1.bf16.msra.mxu0 %v9019
        %10756 = vmatprep.subr.bf16.mxu0 %v9036
        %10757 = vmatpush1.bf16.msra.mxu0 %v9035
        %10758 = vmatprep.subr.bf16.mxu0 %v9052
        %10759 = vmatpush1.bf16.msra.mxu0 %v9051
        %10760 = vmatprep.subr.bf16.mxu0 %v9068
        %10761 = vmatpush1.bf16.msra.mxu0 %v9067
        %10762 = vmatprep.subr.bf16.mxu0 %v9084
        %10763 = vmatpush1.bf16.msra.mxu0 %v9083
        %10764 = vmatprep.mubr.bf16.mxu0 %v4988
        %10765 = vmatmul.mubr.bf16.gmra.mrb[0].mxu0 %v4986
        %v10766 = vpop.f32.mrb[0].mxu0
        %v10767 = vadd.f32 %v10726, %v10766
        %v10768 = vpop.f32.mrb[0].mxu0
        %v10769 = vadd.f32 %v10728, %v10768
        %v10770 = vpop.f32.mrb[0].mxu0
        %v10771 = vpop.f32.mrb[0].mxu0
        %10772 = vdwg.mxu0
        %10773 = vmatprep.subr.bf16.mxu0 %v8078
        %10774 = vmatpush1.bf16.msra.mxu0 %v8077
        %10775 = vmatprep.subr.bf16.mxu0 %v8094
        %10776 = vmatpush1.bf16.msra.mxu0 %v8093
        %10777 = vmatprep.subr.bf16.mxu0 %v8110
        %10778 = vmatpush1.bf16.msra.mxu0 %v8109
        %10779 = vmatprep.subr.bf16.mxu0 %v8126
        %10780 = vmatpush1.bf16.msra.mxu0 %v8125
        %10781 = vmatprep.subr.bf16.mxu0 %v8142
        %10782 = vmatpush1.bf16.msra.mxu0 %v8141
        %10783 = vmatprep.subr.bf16.mxu0 %v8158
        %10784 = vmatpush1.bf16.msra.mxu0 %v8157
        %10785 = vmatprep.subr.bf16.mxu0 %v8174
        %10786 = vmatpush1.bf16.msra.mxu0 %v8173
        %10787 = vmatprep.subr.bf16.mxu0 %v8190
        %10788 = vmatpush1.bf16.msra.mxu0 %v8189
        %10789 = vmatprep.subr.bf16.mxu0 %v8206
        %10790 = vmatpush1.bf16.msra.mxu0 %v8205
        %10791 = vmatprep.subr.bf16.mxu0 %v8222
        %10792 = vmatpush1.bf16.msra.mxu0 %v8221
        %10793 = vmatprep.subr.bf16.mxu0 %v8238
        %10794 = vmatpush1.bf16.msra.mxu0 %v8237
        %10795 = vmatprep.subr.bf16.mxu0 %v8254
        %10796 = vmatpush1.bf16.msra.mxu0 %v8253
        %10797 = vmatprep.subr.bf16.mxu0 %v8270
        %10798 = vmatpush1.bf16.msra.mxu0 %v8269
        %10799 = vmatprep.subr.bf16.mxu0 %v8286
        %10800 = vmatpush1.bf16.msra.mxu0 %v8285
        %10801 = vmatprep.subr.bf16.mxu0 %v8302
        %10802 = vmatpush1.bf16.msra.mxu0 %v8301
        %10803 = vmatprep.subr.bf16.mxu0 %v8318
        %10804 = vmatpush1.bf16.msra.mxu0 %v8317
        %10805 = vmatprep.mubr.bf16.mxu0 %v4970
        %10806 = vmatmul.mubr.bf16.gmra.mrb[0].mxu0 %v4962
        %v10807 = vpop.f32.mrb[0].mxu0
        %v10808 = vadd.f32 %v4908, %v10807
        %v10809 = vpop.f32.mrb[0].mxu0
        %v10810 = vadd.f32 %v4912, %v10809
        %v10811 = vpop.f32.mrb[0].mxu0
        %v10812 = vpop.f32.mrb[0].mxu0
        %10813 = vdwg.mxu0
        %10814 = vmatprep.subr.bf16.mxu0 %v8334
        %10815 = vmatpush1.bf16.msra.mxu0 %v8333
        %10816 = vmatprep.subr.bf16.mxu0 %v8350
        %10817 = vmatpush1.bf16.msra.mxu0 %v8349
        %10818 = vmatprep.subr.bf16.mxu0 %v8366
        %10819 = vmatpush1.bf16.msra.mxu0 %v8365
        %10820 = vmatprep.subr.bf16.mxu0 %v8382
        %10821 = vmatpush1.bf16.msra.mxu0 %v8381
        %10822 = vmatprep.subr.bf16.mxu0 %v8398
        %10823 = vmatpush1.bf16.msra.mxu0 %v8397
        %10824 = vmatprep.subr.bf16.mxu0 %v8414
        %10825 = vmatpush1.bf16.msra.mxu0 %v8413
        %10826 = vmatprep.subr.bf16.mxu0 %v8430
        %10827 = vmatpush1.bf16.msra.mxu0 %v8429
        %10828 = vmatprep.subr.bf16.mxu0 %v8446
        %10829 = vmatpush1.bf16.msra.mxu0 %v8445
        %10830 = vmatprep.subr.bf16.mxu0 %v8462
        %10831 = vmatpush1.bf16.msra.mxu0 %v8461
        %10832 = vmatprep.subr.bf16.mxu0 %v8478
        %10833 = vmatpush1.bf16.msra.mxu0 %v8477
        %10834 = vmatprep.subr.bf16.mxu0 %v8494
        %10835 = vmatpush1.bf16.msra.mxu0 %v8493
        %10836 = vmatprep.subr.bf16.mxu0 %v8510
        %10837 = vmatpush1.bf16.msra.mxu0 %v8509
        %10838 = vmatprep.subr.bf16.mxu0 %v8526
        %10839 = vmatpush1.bf16.msra.mxu0 %v8525
        %10840 = vmatprep.subr.bf16.mxu0 %v8542
        %10841 = vmatpush1.bf16.msra.mxu0 %v8541
        %10842 = vmatprep.subr.bf16.mxu0 %v8558
        %10843 = vmatpush1.bf16.msra.mxu0 %v8557
        %10844 = vmatprep.subr.bf16.mxu0 %v8574
        %10845 = vmatpush1.bf16.msra.mxu0 %v8573
        %10846 = vmatprep.mubr.bf16.mxu0 %v4971
        %10847 = vmatmul.mubr.bf16.gmra.mrb[0].mxu0 %v4969
        %v10848 = vpop.f32.mrb[0].mxu0
        %v10849 = vadd.f32 %v10808, %v10848
        %v10850 = vpop.f32.mrb[0].mxu0
        %v10851 = vadd.f32 %v10810, %v10850
        %v10852 = vpop.f32.mrb[0].mxu0
        %v10853 = vpop.f32.mrb[0].mxu0
        %10854 = vdwg.mxu0
        %10855 = vmatprep.subr.bf16.mxu0 %v8590
        %10856 = vmatpush1.bf16.msra.mxu0 %v8589
        %10857 = vmatprep.subr.bf16.mxu0 %v8606
        %10858 = vmatpush1.bf16.msra.mxu0 %v8605
        %10859 = vmatprep.subr.bf16.mxu0 %v8622
        %10860 = vmatpush1.bf16.msra.mxu0 %v8621
        %10861 = vmatprep.subr.bf16.mxu0 %v8638
        %10862 = vmatpush1.bf16.msra.mxu0 %v8637
        %10863 = vmatprep.subr.bf16.mxu0 %v8654
        %10864 = vmatpush1.bf16.msra.mxu0 %v8653
        %10865 = vmatprep.subr.bf16.mxu0 %v8670
        %10866 = vmatpush1.bf16.msra.mxu0 %v8669
        %10867 = vmatprep.subr.bf16.mxu0 %v8686
        %10868 = vmatpush1.bf16.msra.mxu0 %v8685
        %10869 = vmatprep.subr.bf16.mxu0 %v8702
        %10870 = vmatpush1.bf16.msra.mxu0 %v8701
        %10871 = vmatprep.subr.bf16.mxu0 %v8718
        %10872 = vmatpush1.bf16.msra.mxu0 %v8717
        %10873 = vmatprep.subr.bf16.mxu0 %v8734
        %10874 = vmatpush1.bf16.msra.mxu0 %v8733
        %10875 = vmatprep.subr.bf16.mxu0 %v8750
        %10876 = vmatpush1.bf16.msra.mxu0 %v8749
        %10877 = vmatprep.subr.bf16.mxu0 %v8766
        %10878 = vmatpush1.bf16.msra.mxu0 %v8765
        %10879 = vmatprep.subr.bf16.mxu0 %v8782
        %10880 = vmatpush1.bf16.msra.mxu0 %v8781
        %10881 = vmatprep.subr.bf16.mxu0 %v8798
        %10882 = vmatpush1.bf16.msra.mxu0 %v8797
        %10883 = vmatprep.subr.bf16.mxu0 %v8814
        %10884 = vmatpush1.bf16.msra.mxu0 %v8813
        %10885 = vmatprep.subr.bf16.mxu0 %v8830
        %10886 = vmatpush1.bf16.msra.mxu0 %v8829
        %10887 = vmatprep.mubr.bf16.mxu0 %v4987
        %10888 = vmatmul.mubr.bf16.gmra.mrb[0].mxu0 %v4979
        %v10889 = vpop.f32.mrb[0].mxu0
        %v10890 = vadd.f32 %v10849, %v10889
        %v10891 = vpop.f32.mrb[0].mxu0
        %v10892 = vadd.f32 %v10851, %v10891
        %v10893 = vpop.f32.mrb[0].mxu0
        %v10894 = vpop.f32.mrb[0].mxu0
        %10895 = vdwg.mxu0
        %10896 = vmatprep.subr.bf16.mxu0 %v8846
        %10897 = vmatpush1.bf16.msra.mxu0 %v8845
        %10898 = vmatprep.subr.bf16.mxu0 %v8862
        %10899 = vmatpush1.bf16.msra.mxu0 %v8861
        %10900 = vmatprep.subr.bf16.mxu0 %v8878
        %10901 = vmatpush1.bf16.msra.mxu0 %v8877
        %10902 = vmatprep.subr.bf16.mxu0 %v8894
        %10903 = vmatpush1.bf16.msra.mxu0 %v8893
        %10904 = vmatprep.subr.bf16.mxu0 %v8910
        %10905 = vmatpush1.bf16.msra.mxu0 %v8909
        %10906 = vmatprep.subr.bf16.mxu0 %v8926
        %10907 = vmatpush1.bf16.msra.mxu0 %v8925
        %10908 = vmatprep.subr.bf16.mxu0 %v8942
        %10909 = vmatpush1.bf16.msra.mxu0 %v8941
        %10910 = vmatprep.subr.bf16.mxu0 %v8958
        %10911 = vmatpush1.bf16.msra.mxu0 %v8957
        %10912 = vmatprep.subr.bf16.mxu0 %v8974
        %10913 = vmatpush1.bf16.msra.mxu0 %v8973
        %10914 = vmatprep.subr.bf16.mxu0 %v8990
        %10915 = vmatpush1.bf16.msra.mxu0 %v8989
        %10916 = vmatprep.subr.bf16.mxu0 %v9006
        %10917 = vmatpush1.bf16.msra.mxu0 %v9005
        %10918 = vmatprep.subr.bf16.mxu0 %v9022
        %10919 = vmatpush1.bf16.msra.mxu0 %v9021
        %10920 = vmatprep.subr.bf16.mxu0 %v9038
        %10921 = vmatpush1.bf16.msra.mxu0 %v9037
        %10922 = vmatprep.subr.bf16.mxu0 %v9054
        %10923 = vmatpush1.bf16.msra.mxu0 %v9053
        %10924 = vmatprep.subr.bf16.mxu0 %v9070
        %10925 = vmatpush1.bf16.msra.mxu0 %v9069
        %10926 = vmatprep.subr.bf16.mxu0 %v9086
        %10927 = vmatpush1.bf16.msra.mxu0 %v9085
        %10928 = vmatprep.mubr.bf16.mxu0 %v4988
        %10929 = vmatmul.mubr.bf16.gmra.mrb[0].mxu0 %v4986
        %v10930 = vpop.f32.mrb[0].mxu0
        %v10931 = vadd.f32 %v10890, %v10930
        %v10932 = vpop.f32.mrb[0].mxu0
        %v10933 = vadd.f32 %v10892, %v10932
        %v10934 = vpop.f32.mrb[0].mxu0
        %v10935 = vpop.f32.mrb[0].mxu0
        %10936 = vdwg.mxu0
        %10937 = vmatprep.subr.bf16.mxu0 %v8080
        %10938 = vmatpush1.bf16.msra.mxu0 %v8079
        %10939 = vmatprep.subr.bf16.mxu0 %v8096
        %10940 = vmatpush1.bf16.msra.mxu0 %v8095
        %10941 = vmatprep.subr.bf16.mxu0 %v8112
        %10942 = vmatpush1.bf16.msra.mxu0 %v8111
        %10943 = vmatprep.subr.bf16.mxu0 %v8128
        %10944 = vmatpush1.bf16.msra.mxu0 %v8127
        %10945 = vmatprep.subr.bf16.mxu0 %v8144
        %10946 = vmatpush1.bf16.msra.mxu0 %v8143
        %10947 = vmatprep.subr.bf16.mxu0 %v8160
        %10948 = vmatpush1.bf16.msra.mxu0 %v8159
        %10949 = vmatprep.subr.bf16.mxu0 %v8176
        %10950 = vmatpush1.bf16.msra.mxu0 %v8175
        %10951 = vmatprep.subr.bf16.mxu0 %v8192
        %10952 = vmatpush1.bf16.msra.mxu0 %v8191
        %10953 = vmatprep.subr.bf16.mxu0 %v8208
        %10954 = vmatpush1.bf16.msra.mxu0 %v8207
        %10955 = vmatprep.subr.bf16.mxu0 %v8224
        %10956 = vmatpush1.bf16.msra.mxu0 %v8223
        %10957 = vmatprep.subr.bf16.mxu0 %v8240
        %10958 = vmatpush1.bf16.msra.mxu0 %v8239
        %10959 = vmatprep.subr.bf16.mxu0 %v8256
        %10960 = vmatpush1.bf16.msra.mxu0 %v8255
        %10961 = vmatprep.subr.bf16.mxu0 %v8272
        %10962 = vmatpush1.bf16.msra.mxu0 %v8271
        %10963 = vmatprep.subr.bf16.mxu0 %v8288
        %10964 = vmatpush1.bf16.msra.mxu0 %v8287
        %10965 = vmatprep.subr.bf16.mxu0 %v8304
        %10966 = vmatpush1.bf16.msra.mxu0 %v8303
        %10967 = vmatprep.subr.bf16.mxu0 %v8320
        %10968 = vmatpush1.bf16.msra.mxu0 %v8319
        %10969 = vmatprep.mubr.bf16.mxu0 %v4970
        %10970 = vmatmul.mubr.bf16.gmra.mrb[0].mxu0 %v4962
        %v10971 = vpop.f32.mrb[0].mxu0
        %v10972 = vadd.f32 %v4916, %v10971
        %v10973 = vpop.f32.mrb[0].mxu0
        %v10974 = vadd.f32 %v4920, %v10973
        %v10975 = vpop.f32.mrb[0].mxu0
        %v10976 = vpop.f32.mrb[0].mxu0
        %10977 = vdwg.mxu0
        %10978 = vmatprep.subr.bf16.mxu0 %v8336
        %10979 = vmatpush1.bf16.msra.mxu0 %v8335
        %10980 = vmatprep.subr.bf16.mxu0 %v8352
        %10981 = vmatpush1.bf16.msra.mxu0 %v8351
        %10982 = vmatprep.subr.bf16.mxu0 %v8368
        %10983 = vmatpush1.bf16.msra.mxu0 %v8367
        %10984 = vmatprep.subr.bf16.mxu0 %v8384
        %10985 = vmatpush1.bf16.msra.mxu0 %v8383
        %10986 = vmatprep.subr.bf16.mxu0 %v8400
        %10987 = vmatpush1.bf16.msra.mxu0 %v8399
        %10988 = vmatprep.subr.bf16.mxu0 %v8416
        %10989 = vmatpush1.bf16.msra.mxu0 %v8415
        %10990 = vmatprep.subr.bf16.mxu0 %v8432
        %10991 = vmatpush1.bf16.msra.mxu0 %v8431
        %10992 = vmatprep.subr.bf16.mxu0 %v8448
        %10993 = vmatpush1.bf16.msra.mxu0 %v8447
        %10994 = vmatprep.subr.bf16.mxu0 %v8464
        %10995 = vmatpush1.bf16.msra.mxu0 %v8463
        %10996 = vmatprep.subr.bf16.mxu0 %v8480
        %10997 = vmatpush1.bf16.msra.mxu0 %v8479
        %10998 = vmatprep.subr.bf16.mxu0 %v8496
        %10999 = vmatpush1.bf16.msra.mxu0 %v8495
        %11000 = vmatprep.subr.bf16.mxu0 %v8512
        %11001 = vmatpush1.bf16.msra.mxu0 %v8511
        %11002 = vmatprep.subr.bf16.mxu0 %v8528
        %11003 = vmatpush1.bf16.msra.mxu0 %v8527
        %11004 = vmatprep.subr.bf16.mxu0 %v8544
        %11005 = vmatpush1.bf16.msra.mxu0 %v8543
        %11006 = vmatprep.subr.bf16.mxu0 %v8560
        %11007 = vmatpush1.bf16.msra.mxu0 %v8559
        %11008 = vmatprep.subr.bf16.mxu0 %v8576
        %11009 = vmatpush1.bf16.msra.mxu0 %v8575
        %11010 = vmatprep.mubr.bf16.mxu0 %v4971
        %11011 = vmatmul.mubr.bf16.gmra.mrb[0].mxu0 %v4969
        %v11012 = vpop.f32.mrb[0].mxu0
        %v11013 = vadd.f32 %v10972, %v11012
        %v11014 = vpop.f32.mrb[0].mxu0
        %v11015 = vadd.f32 %v10974, %v11014
        %v11016 = vpop.f32.mrb[0].mxu0
        %v11017 = vpop.f32.mrb[0].mxu0
        %11018 = vdwg.mxu0
        %11019 = vmatprep.subr.bf16.mxu0 %v8592
        %11020 = vmatpush1.bf16.msra.mxu0 %v8591
        %11021 = vmatprep.subr.bf16.mxu0 %v8608
        %11022 = vmatpush1.bf16.msra.mxu0 %v8607
        %11023 = vmatprep.subr.bf16.mxu0 %v8624
        %11024 = vmatpush1.bf16.msra.mxu0 %v8623
        %11025 = vmatprep.subr.bf16.mxu0 %v8640
        %11026 = vmatpush1.bf16.msra.mxu0 %v8639
        %11027 = vmatprep.subr.bf16.mxu0 %v8656
        %11028 = vmatpush1.bf16.msra.mxu0 %v8655
        %11029 = vmatprep.subr.bf16.mxu0 %v8672
        %11030 = vmatpush1.bf16.msra.mxu0 %v8671
        %11031 = vmatprep.subr.bf16.mxu0 %v8688
        %11032 = vmatpush1.bf16.msra.mxu0 %v8687
        %11033 = vmatprep.subr.bf16.mxu0 %v8704
        %11034 = vmatpush1.bf16.msra.mxu0 %v8703
        %11035 = vmatprep.subr.bf16.mxu0 %v8720
        %11036 = vmatpush1.bf16.msra.mxu0 %v8719
        %11037 = vmatprep.subr.bf16.mxu0 %v8736
        %11038 = vmatpush1.bf16.msra.mxu0 %v8735
        %11039 = vmatprep.subr.bf16.mxu0 %v8752
        %11040 = vmatpush1.bf16.msra.mxu0 %v8751
        %11041 = vmatprep.subr.bf16.mxu0 %v8768
        %11042 = vmatpush1.bf16.msra.mxu0 %v8767
        %11043 = vmatprep.subr.bf16.mxu0 %v8784
        %11044 = vmatpush1.bf16.msra.mxu0 %v8783
        %11045 = vmatprep.subr.bf16.mxu0 %v8800
        %11046 = vmatpush1.bf16.msra.mxu0 %v8799
        %11047 = vmatprep.subr.bf16.mxu0 %v8816
        %11048 = vmatpush1.bf16.msra.mxu0 %v8815
        %11049 = vmatprep.subr.bf16.mxu0 %v8832
        %11050 = vmatpush1.bf16.msra.mxu0 %v8831
        %11051 = vmatprep.mubr.bf16.mxu0 %v4987
        %11052 = vmatmul.mubr.bf16.gmra.mrb[0].mxu0 %v4979
        %v11053 = vpop.f32.mrb[0].mxu0
        %v11054 = vadd.f32 %v11013, %v11053
        %v11055 = vpop.f32.mrb[0].mxu0
        %v11056 = vadd.f32 %v11015, %v11055
        %v11057 = vpop.f32.mrb[0].mxu0
        %v11058 = vpop.f32.mrb[0].mxu0
        %11059 = vdwg.mxu0
        %11060 = vmatprep.subr.bf16.mxu0 %v8848
        %11061 = vmatpush1.bf16.msra.mxu0 %v8847
        %11062 = vmatprep.subr.bf16.mxu0 %v8864
        %11063 = vmatpush1.bf16.msra.mxu0 %v8863
        %11064 = vmatprep.subr.bf16.mxu0 %v8880
        %11065 = vmatpush1.bf16.msra.mxu0 %v8879
        %11066 = vmatprep.subr.bf16.mxu0 %v8896
        %11067 = vmatpush1.bf16.msra.mxu0 %v8895
        %11068 = vmatprep.subr.bf16.mxu0 %v8912
        %11069 = vmatpush1.bf16.msra.mxu0 %v8911
        %11070 = vmatprep.subr.bf16.mxu0 %v8928
        %11071 = vmatpush1.bf16.msra.mxu0 %v8927
        %11072 = vmatprep.subr.bf16.mxu0 %v8944
        %11073 = vmatpush1.bf16.msra.mxu0 %v8943
        %11074 = vmatprep.subr.bf16.mxu0 %v8960
        %11075 = vmatpush1.bf16.msra.mxu0 %v8959
        %11076 = vmatprep.subr.bf16.mxu0 %v8976
        %11077 = vmatpush1.bf16.msra.mxu0 %v8975
        %11078 = vmatprep.subr.bf16.mxu0 %v8992
        %11079 = vmatpush1.bf16.msra.mxu0 %v8991
        %11080 = vmatprep.subr.bf16.mxu0 %v9008
        %11081 = vmatpush1.bf16.msra.mxu0 %v9007
        %11082 = vmatprep.subr.bf16.mxu0 %v9024
        %11083 = vmatpush1.bf16.msra.mxu0 %v9023
        %11084 = vmatprep.subr.bf16.mxu0 %v9040
        %11085 = vmatpush1.bf16.msra.mxu0 %v9039
        %11086 = vmatprep.subr.bf16.mxu0 %v9056
        %11087 = vmatpush1.bf16.msra.mxu0 %v9055
        %11088 = vmatprep.subr.bf16.mxu0 %v9072
        %11089 = vmatpush1.bf16.msra.mxu0 %v9071
        %11090 = vmatprep.subr.bf16.mxu0 %v9088
        %11091 = vmatpush1.bf16.msra.mxu0 %v9087
        %11092 = vmatprep.mubr.bf16.mxu0 %v4988
        %11093 = vmatmul.mubr.bf16.gmra.mrb[0].mxu0 %v4986
        %v11094 = vpop.f32.mrb[0].mxu0
        %v11095 = vadd.f32 %v11054, %v11094
        %v11096 = vpop.f32.mrb[0].mxu0
        %v11097 = vadd.f32 %v11056, %v11096
        %v11098 = vpop.f32.mrb[0].mxu0
        %v11099 = vpop.f32.mrb[0].mxu0
        %11100 = vdwg.mxu0
        %11101 = vmatprep.subr.bf16.mxu0 %v8082
        %11102 = vmatpush1.bf16.msra.mxu0 %v8081
        %11103 = vmatprep.subr.bf16.mxu0 %v8098
        %11104 = vmatpush1.bf16.msra.mxu0 %v8097
        %11105 = vmatprep.subr.bf16.mxu0 %v8114
        %11106 = vmatpush1.bf16.msra.mxu0 %v8113
        %11107 = vmatprep.subr.bf16.mxu0 %v8130
        %11108 = vmatpush1.bf16.msra.mxu0 %v8129
        %11109 = vmatprep.subr.bf16.mxu0 %v8146
        %11110 = vmatpush1.bf16.msra.mxu0 %v8145
        %11111 = vmatprep.subr.bf16.mxu0 %v8162
        %11112 = vmatpush1.bf16.msra.mxu0 %v8161
        %11113 = vmatprep.subr.bf16.mxu0 %v8178
        %11114 = vmatpush1.bf16.msra.mxu0 %v8177
        %11115 = vmatprep.subr.bf16.mxu0 %v8194
        %11116 = vmatpush1.bf16.msra.mxu0 %v8193
        %11117 = vmatprep.subr.bf16.mxu0 %v8210
        %11118 = vmatpush1.bf16.msra.mxu0 %v8209
        %11119 = vmatprep.subr.bf16.mxu0 %v8226
        %11120 = vmatpush1.bf16.msra.mxu0 %v8225
        %11121 = vmatprep.subr.bf16.mxu0 %v8242
        %11122 = vmatpush1.bf16.msra.mxu0 %v8241
        %11123 = vmatprep.subr.bf16.mxu0 %v8258
        %11124 = vmatpush1.bf16.msra.mxu0 %v8257
        %11125 = vmatprep.subr.bf16.mxu0 %v8274
        %11126 = vmatpush1.bf16.msra.mxu0 %v8273
        %11127 = vmatprep.subr.bf16.mxu0 %v8290
        %11128 = vmatpush1.bf16.msra.mxu0 %v8289
        %11129 = vmatprep.subr.bf16.mxu0 %v8306
        %11130 = vmatpush1.bf16.msra.mxu0 %v8305
        %11131 = vmatprep.subr.bf16.mxu0 %v8322
        %11132 = vmatpush1.bf16.msra.mxu0 %v8321
        %11133 = vmatprep.mubr.bf16.mxu0 %v4970
        %11134 = vmatmul.mubr.bf16.gmra.mrb[0].mxu0 %v4962
        %v11135 = vpop.f32.mrb[0].mxu0
        %v11136 = vadd.f32 %v4924, %v11135
        %v11137 = vpop.f32.mrb[0].mxu0
        %v11138 = vadd.f32 %v4928, %v11137
        %v11139 = vpop.f32.mrb[0].mxu0
        %v11140 = vpop.f32.mrb[0].mxu0
        %11141 = vdwg.mxu0
        %11142 = vmatprep.subr.bf16.mxu0 %v8338
        %11143 = vmatpush1.bf16.msra.mxu0 %v8337
        %11144 = vmatprep.subr.bf16.mxu0 %v8354
        %11145 = vmatpush1.bf16.msra.mxu0 %v8353
        %11146 = vmatprep.subr.bf16.mxu0 %v8370
        %11147 = vmatpush1.bf16.msra.mxu0 %v8369
        %11148 = vmatprep.subr.bf16.mxu0 %v8386
        %11149 = vmatpush1.bf16.msra.mxu0 %v8385
        %11150 = vmatprep.subr.bf16.mxu0 %v8402
        %11151 = vmatpush1.bf16.msra.mxu0 %v8401
        %11152 = vmatprep.subr.bf16.mxu0 %v8418
        %11153 = vmatpush1.bf16.msra.mxu0 %v8417
        %11154 = vmatprep.subr.bf16.mxu0 %v8434
        %11155 = vmatpush1.bf16.msra.mxu0 %v8433
        %11156 = vmatprep.subr.bf16.mxu0 %v8450
        %11157 = vmatpush1.bf16.msra.mxu0 %v8449
        %11158 = vmatprep.subr.bf16.mxu0 %v8466
        %11159 = vmatpush1.bf16.msra.mxu0 %v8465
        %11160 = vmatprep.subr.bf16.mxu0 %v8482
        %11161 = vmatpush1.bf16.msra.mxu0 %v8481
        %11162 = vmatprep.subr.bf16.mxu0 %v8498
        %11163 = vmatpush1.bf16.msra.mxu0 %v8497
        %11164 = vmatprep.subr.bf16.mxu0 %v8514
        %11165 = vmatpush1.bf16.msra.mxu0 %v8513
        %11166 = vmatprep.subr.bf16.mxu0 %v8530
        %11167 = vmatpush1.bf16.msra.mxu0 %v8529
        %11168 = vmatprep.subr.bf16.mxu0 %v8546
        %11169 = vmatpush1.bf16.msra.mxu0 %v8545
        %11170 = vmatprep.subr.bf16.mxu0 %v8562
        %11171 = vmatpush1.bf16.msra.mxu0 %v8561
        %11172 = vmatprep.subr.bf16.mxu0 %v8578
        %11173 = vmatpush1.bf16.msra.mxu0 %v8577
        %11174 = vmatprep.mubr.bf16.mxu0 %v4971
        %11175 = vmatmul.mubr.bf16.gmra.mrb[0].mxu0 %v4969
        %v11176 = vpop.f32.mrb[0].mxu0
        %v11177 = vadd.f32 %v11136, %v11176
        %v11178 = vpop.f32.mrb[0].mxu0
        %v11179 = vadd.f32 %v11138, %v11178
        %v11180 = vpop.f32.mrb[0].mxu0
        %v11181 = vpop.f32.mrb[0].mxu0
        %11182 = vdwg.mxu0
        %11183 = vmatprep.subr.bf16.mxu0 %v8594
        %11184 = vmatpush1.bf16.msra.mxu0 %v8593
        %11185 = vmatprep.subr.bf16.mxu0 %v8610
        %11186 = vmatpush1.bf16.msra.mxu0 %v8609
        %11187 = vmatprep.subr.bf16.mxu0 %v8626
        %11188 = vmatpush1.bf16.msra.mxu0 %v8625
        %11189 = vmatprep.subr.bf16.mxu0 %v8642
        %11190 = vmatpush1.bf16.msra.mxu0 %v8641
        %11191 = vmatprep.subr.bf16.mxu0 %v8658
        %11192 = vmatpush1.bf16.msra.mxu0 %v8657
        %11193 = vmatprep.subr.bf16.mxu0 %v8674
        %11194 = vmatpush1.bf16.msra.mxu0 %v8673
        %11195 = vmatprep.subr.bf16.mxu0 %v8690
        %11196 = vmatpush1.bf16.msra.mxu0 %v8689
        %11197 = vmatprep.subr.bf16.mxu0 %v8706
        %11198 = vmatpush1.bf16.msra.mxu0 %v8705
        %11199 = vmatprep.subr.bf16.mxu0 %v8722
        %11200 = vmatpush1.bf16.msra.mxu0 %v8721
        %11201 = vmatprep.subr.bf16.mxu0 %v8738
        %11202 = vmatpush1.bf16.msra.mxu0 %v8737
        %11203 = vmatprep.subr.bf16.mxu0 %v8754
        %11204 = vmatpush1.bf16.msra.mxu0 %v8753
        %11205 = vmatprep.subr.bf16.mxu0 %v8770
        %11206 = vmatpush1.bf16.msra.mxu0 %v8769
        %11207 = vmatprep.subr.bf16.mxu0 %v8786
        %11208 = vmatpush1.bf16.msra.mxu0 %v8785
        %11209 = vmatprep.subr.bf16.mxu0 %v8802
        %11210 = vmatpush1.bf16.msra.mxu0 %v8801
        %11211 = vmatprep.subr.bf16.mxu0 %v8818
        %11212 = vmatpush1.bf16.msra.mxu0 %v8817
        %11213 = vmatprep.subr.bf16.mxu0 %v8834
        %11214 = vmatpush1.bf16.msra.mxu0 %v8833
        %11215 = vmatprep.mubr.bf16.mxu0 %v4987
        %11216 = vmatmul.mubr.bf16.gmra.mrb[0].mxu0 %v4979
        %v11217 = vpop.f32.mrb[0].mxu0
        %v11218 = vadd.f32 %v11177, %v11217
        %v11219 = vpop.f32.mrb[0].mxu0
        %v11220 = vadd.f32 %v11179, %v11219
        %v11221 = vpop.f32.mrb[0].mxu0
        %v11222 = vpop.f32.mrb[0].mxu0
        %11223 = vdwg.mxu0
        %11224 = vmatprep.subr.bf16.mxu0 %v8850
        %11225 = vmatpush1.bf16.msra.mxu0 %v8849
        %11226 = vmatprep.subr.bf16.mxu0 %v8866
        %11227 = vmatpush1.bf16.msra.mxu0 %v8865
        %11228 = vmatprep.subr.bf16.mxu0 %v8882
        %11229 = vmatpush1.bf16.msra.mxu0 %v8881
        %11230 = vmatprep.subr.bf16.mxu0 %v8898
        %11231 = vmatpush1.bf16.msra.mxu0 %v8897
        %11232 = vmatprep.subr.bf16.mxu0 %v8914
        %11233 = vmatpush1.bf16.msra.mxu0 %v8913
        %11234 = vmatprep.subr.bf16.mxu0 %v8930
        %11235 = vmatpush1.bf16.msra.mxu0 %v8929
        %11236 = vmatprep.subr.bf16.mxu0 %v8946
        %11237 = vmatpush1.bf16.msra.mxu0 %v8945
        %11238 = vmatprep.subr.bf16.mxu0 %v8962
        %11239 = vmatpush1.bf16.msra.mxu0 %v8961
        %11240 = vmatprep.subr.bf16.mxu0 %v8978
        %11241 = vmatpush1.bf16.msra.mxu0 %v8977
        %11242 = vmatprep.subr.bf16.mxu0 %v8994
        %11243 = vmatpush1.bf16.msra.mxu0 %v8993
        %11244 = vmatprep.subr.bf16.mxu0 %v9010
        %11245 = vmatpush1.bf16.msra.mxu0 %v9009
        %11246 = vmatprep.subr.bf16.mxu0 %v9026
        %11247 = vmatpush1.bf16.msra.mxu0 %v9025
        %11248 = vmatprep.subr.bf16.mxu0 %v9042
        %11249 = vmatpush1.bf16.msra.mxu0 %v9041
        %11250 = vmatprep.subr.bf16.mxu0 %v9058
        %11251 = vmatpush1.bf16.msra.mxu0 %v9057
        %11252 = vmatprep.subr.bf16.mxu0 %v9074
        %11253 = vmatpush1.bf16.msra.mxu0 %v9073
        %11254 = vmatprep.subr.bf16.mxu0 %v9090
        %11255 = vmatpush1.bf16.msra.mxu0 %v9089
        %11256 = vmatprep.mubr.bf16.mxu0 %v4988
        %11257 = vmatmul.mubr.bf16.gmra.mrb[0].mxu0 %v4986
        %v11258 = vpop.f32.mrb[0].mxu0
        %v11259 = vadd.f32 %v11218, %v11258
        %v11260 = vpop.f32.mrb[0].mxu0
        %v11261 = vadd.f32 %v11220, %v11260
        %v11262 = vpop.f32.mrb[0].mxu0
        %v11263 = vpop.f32.mrb[0].mxu0
        %11264 = vdwg.mxu0
        %11265 = vmatprep.subr.bf16.mxu0 %v8084
        %11266 = vmatpush1.bf16.msra.mxu0 %v8083
        %11267 = vmatprep.subr.bf16.mxu0 %v8100
        %11268 = vmatpush1.bf16.msra.mxu0 %v8099
        %11269 = vmatprep.subr.bf16.mxu0 %v8116
        %11270 = vmatpush1.bf16.msra.mxu0 %v8115
        %11271 = vmatprep.subr.bf16.mxu0 %v8132
        %11272 = vmatpush1.bf16.msra.mxu0 %v8131
        %11273 = vmatprep.subr.bf16.mxu0 %v8148
        %11274 = vmatpush1.bf16.msra.mxu0 %v8147
        %11275 = vmatprep.subr.bf16.mxu0 %v8164
        %11276 = vmatpush1.bf16.msra.mxu0 %v8163
        %11277 = vmatprep.subr.bf16.mxu0 %v8180
        %11278 = vmatpush1.bf16.msra.mxu0 %v8179
        %11279 = vmatprep.subr.bf16.mxu0 %v8196
        %11280 = vmatpush1.bf16.msra.mxu0 %v8195
        %11281 = vmatprep.subr.bf16.mxu0 %v8212
        %11282 = vmatpush1.bf16.msra.mxu0 %v8211
        %11283 = vmatprep.subr.bf16.mxu0 %v8228
        %11284 = vmatpush1.bf16.msra.mxu0 %v8227
        %11285 = vmatprep.subr.bf16.mxu0 %v8244
        %11286 = vmatpush1.bf16.msra.mxu0 %v8243
        %11287 = vmatprep.subr.bf16.mxu0 %v8260
        %11288 = vmatpush1.bf16.msra.mxu0 %v8259
        %11289 = vmatprep.subr.bf16.mxu0 %v8276
        %11290 = vmatpush1.bf16.msra.mxu0 %v8275
        %11291 = vmatprep.subr.bf16.mxu0 %v8292
        %11292 = vmatpush1.bf16.msra.mxu0 %v8291
        %11293 = vmatprep.subr.bf16.mxu0 %v8308
        %11294 = vmatpush1.bf16.msra.mxu0 %v8307
        %11295 = vmatprep.subr.bf16.mxu0 %v8324
        %11296 = vmatpush1.bf16.msra.mxu0 %v8323
        %11297 = vmatprep.mubr.bf16.mxu0 %v4970
        %11298 = vmatmul.mubr.bf16.gmra.mrb[0].mxu0 %v4962
        %v11299 = vpop.f32.mrb[0].mxu0
        %v11300 = vadd.f32 %v4932, %v11299
        %v11301 = vpop.f32.mrb[0].mxu0
        %v11302 = vadd.f32 %v4936, %v11301
        %v11303 = vpop.f32.mrb[0].mxu0
        %v11304 = vpop.f32.mrb[0].mxu0
        %11305 = vdwg.mxu0
        %11306 = vmatprep.subr.bf16.mxu0 %v8340
        %11307 = vmatpush1.bf16.msra.mxu0 %v8339
        %11308 = vmatprep.subr.bf16.mxu0 %v8356
        %11309 = vmatpush1.bf16.msra.mxu0 %v8355
        %11310 = vmatprep.subr.bf16.mxu0 %v8372
        %11311 = vmatpush1.bf16.msra.mxu0 %v8371
        %11312 = vmatprep.subr.bf16.mxu0 %v8388
        %11313 = vmatpush1.bf16.msra.mxu0 %v8387
        %11314 = vmatprep.subr.bf16.mxu0 %v8404
        %11315 = vmatpush1.bf16.msra.mxu0 %v8403
        %11316 = vmatprep.subr.bf16.mxu0 %v8420
        %11317 = vmatpush1.bf16.msra.mxu0 %v8419
        %11318 = vmatprep.subr.bf16.mxu0 %v8436
        %11319 = vmatpush1.bf16.msra.mxu0 %v8435
        %11320 = vmatprep.subr.bf16.mxu0 %v8452
        %11321 = vmatpush1.bf16.msra.mxu0 %v8451
        %11322 = vmatprep.subr.bf16.mxu0 %v8468
        %11323 = vmatpush1.bf16.msra.mxu0 %v8467
        %11324 = vmatprep.subr.bf16.mxu0 %v8484
        %11325 = vmatpush1.bf16.msra.mxu0 %v8483
        %11326 = vmatprep.subr.bf16.mxu0 %v8500
        %11327 = vmatpush1.bf16.msra.mxu0 %v8499
        %11328 = vmatprep.subr.bf16.mxu0 %v8516
        %11329 = vmatpush1.bf16.msra.mxu0 %v8515
        %11330 = vmatprep.subr.bf16.mxu0 %v8532
        %11331 = vmatpush1.bf16.msra.mxu0 %v8531
        %11332 = vmatprep.subr.bf16.mxu0 %v8548
        %11333 = vmatpush1.bf16.msra.mxu0 %v8547
        %11334 = vmatprep.subr.bf16.mxu0 %v8564
        %11335 = vmatpush1.bf16.msra.mxu0 %v8563
        %11336 = vmatprep.subr.bf16.mxu0 %v8580
        %11337 = vmatpush1.bf16.msra.mxu0 %v8579
        %11338 = vmatprep.mubr.bf16.mxu0 %v4971
        %11339 = vmatmul.mubr.bf16.gmra.mrb[0].mxu0 %v4969
        %v11340 = vpop.f32.mrb[0].mxu0
        %v11341 = vadd.f32 %v11300, %v11340
        %v11342 = vpop.f32.mrb[0].mxu0
        %v11343 = vadd.f32 %v11302, %v11342
        %v11344 = vpop.f32.mrb[0].mxu0
        %v11345 = vpop.f32.mrb[0].mxu0
        %11346 = vdwg.mxu0
        %11347 = vmatprep.subr.bf16.mxu0 %v8596
        %11348 = vmatpush1.bf16.msra.mxu0 %v8595
        %11349 = vmatprep.subr.bf16.mxu0 %v8612
        %11350 = vmatpush1.bf16.msra.mxu0 %v8611
        %11351 = vmatprep.subr.bf16.mxu0 %v8628
        %11352 = vmatpush1.bf16.msra.mxu0 %v8627
        %11353 = vmatprep.subr.bf16.mxu0 %v8644
        %11354 = vmatpush1.bf16.msra.mxu0 %v8643
        %11355 = vmatprep.subr.bf16.mxu0 %v8660
        %11356 = vmatpush1.bf16.msra.mxu0 %v8659
        %11357 = vmatprep.subr.bf16.mxu0 %v8676
        %11358 = vmatpush1.bf16.msra.mxu0 %v8675
        %11359 = vmatprep.subr.bf16.mxu0 %v8692
        %11360 = vmatpush1.bf16.msra.mxu0 %v8691
        %11361 = vmatprep.subr.bf16.mxu0 %v8708
        %11362 = vmatpush1.bf16.msra.mxu0 %v8707
        %11363 = vmatprep.subr.bf16.mxu0 %v8724
        %11364 = vmatpush1.bf16.msra.mxu0 %v8723
        %11365 = vmatprep.subr.bf16.mxu0 %v8740
        %11366 = vmatpush1.bf16.msra.mxu0 %v8739
        %11367 = vmatprep.subr.bf16.mxu0 %v8756
        %11368 = vmatpush1.bf16.msra.mxu0 %v8755
        %11369 = vmatprep.subr.bf16.mxu0 %v8772
        %11370 = vmatpush1.bf16.msra.mxu0 %v8771
        %11371 = vmatprep.subr.bf16.mxu0 %v8788
        %11372 = vmatpush1.bf16.msra.mxu0 %v8787
        %11373 = vmatprep.subr.bf16.mxu0 %v8804
        %11374 = vmatpush1.bf16.msra.mxu0 %v8803
        %11375 = vmatprep.subr.bf16.mxu0 %v8820
        %11376 = vmatpush1.bf16.msra.mxu0 %v8819
        %11377 = vmatprep.subr.bf16.mxu0 %v8836
        %11378 = vmatpush1.bf16.msra.mxu0 %v8835
        %11379 = vmatprep.mubr.bf16.mxu0 %v4987
        %11380 = vmatmul.mubr.bf16.gmra.mrb[0].mxu0 %v4979
        %v11381 = vpop.f32.mrb[0].mxu0
        %v11382 = vadd.f32 %v11341, %v11381
        %v11383 = vpop.f32.mrb[0].mxu0
        %v11384 = vadd.f32 %v11343, %v11383
        %v11385 = vpop.f32.mrb[0].mxu0
        %v11386 = vpop.f32.mrb[0].mxu0
        %11387 = vdwg.mxu0
        %11388 = vmatprep.subr.bf16.mxu0 %v8852
        %11389 = vmatpush1.bf16.msra.mxu0 %v8851
        %11390 = vmatprep.subr.bf16.mxu0 %v8868
        %11391 = vmatpush1.bf16.msra.mxu0 %v8867
        %11392 = vmatprep.subr.bf16.mxu0 %v8884
        %11393 = vmatpush1.bf16.msra.mxu0 %v8883
        %11394 = vmatprep.subr.bf16.mxu0 %v8900
        %11395 = vmatpush1.bf16.msra.mxu0 %v8899
        %11396 = vmatprep.subr.bf16.mxu0 %v8916
        %11397 = vmatpush1.bf16.msra.mxu0 %v8915
        %11398 = vmatprep.subr.bf16.mxu0 %v8932
        %11399 = vmatpush1.bf16.msra.mxu0 %v8931
        %11400 = vmatprep.subr.bf16.mxu0 %v8948
        %11401 = vmatpush1.bf16.msra.mxu0 %v8947
        %11402 = vmatprep.subr.bf16.mxu0 %v8964
        %11403 = vmatpush1.bf16.msra.mxu0 %v8963
        %11404 = vmatprep.subr.bf16.mxu0 %v8980
        %11405 = vmatpush1.bf16.msra.mxu0 %v8979
        %11406 = vmatprep.subr.bf16.mxu0 %v8996
        %11407 = vmatpush1.bf16.msra.mxu0 %v8995
        %11408 = vmatprep.subr.bf16.mxu0 %v9012
        %11409 = vmatpush1.bf16.msra.mxu0 %v9011
        %11410 = vmatprep.subr.bf16.mxu0 %v9028
        %11411 = vmatpush1.bf16.msra.mxu0 %v9027
        %11412 = vmatprep.subr.bf16.mxu0 %v9044
        %11413 = vmatpush1.bf16.msra.mxu0 %v9043
        %11414 = vmatprep.subr.bf16.mxu0 %v9060
        %11415 = vmatpush1.bf16.msra.mxu0 %v9059
        %11416 = vmatprep.subr.bf16.mxu0 %v9076
        %11417 = vmatpush1.bf16.msra.mxu0 %v9075
        %11418 = vmatprep.subr.bf16.mxu0 %v9092
        %11419 = vmatpush1.bf16.msra.mxu0 %v9091
        %11420 = vmatprep.mubr.bf16.mxu0 %v4988
        %11421 = vmatmul.mubr.bf16.gmra.mrb[0].mxu0 %v4986
        %v11422 = vpop.f32.mrb[0].mxu0
        %v11423 = vadd.f32 %v11382, %v11422
        %v11424 = vpop.f32.mrb[0].mxu0
        %v11425 = vadd.f32 %v11384, %v11424
        %v11426 = vpop.f32.mrb[0].mxu0
        %v11427 = vpop.f32.mrb[0].mxu0
        %11428 = vdwg.mxu0
        %v11429 = vxor.u32 %v10275, 2147483648
        %v11430 = vxor.u32 %v10277, 2147483648
        %v11431 = vxor.u32 %v10439, 2147483648
        %v11432 = vxor.u32 %v10441, 2147483648
        %v11433 = vxor.u32 %v10603, 2147483648
        %v11434 = vxor.u32 %v10605, 2147483648
        %v11435 = vxor.u32 %v10767, 2147483648
        %v11436 = vxor.u32 %v10769, 2147483648
        %v11437 = vxor.u32 %v10931, 2147483648
        %v11438 = vxor.u32 %v10933, 2147483648
        %v11439 = vxor.u32 %v11095, 2147483648
        %v11440 = vxor.u32 %v11097, 2147483648
        %v11441 = vxor.u32 %v11259, 2147483648
        %v11442 = vxor.u32 %v11261, 2147483648
        %v11443 = vxor.u32 %v11423, 2147483648
        %v11444 = vxor.u32 %v11425, 2147483648
        %v11445 = vmul.f32 %v11429, 1.442695
        %v11446 = vpow.pop %v11445
        %v11447 = vmul.f32 %v11430, 1.442695
        %v11448 = vpow.pop %v11447
        %v11449 = vmul.f32 %v11431, 1.442695
        %v11450 = vpow.pop %v11449
        %v11451 = vmul.f32 %v11432, 1.442695
        %v11452 = vpow.pop %v11451
        %v11453 = vmul.f32 %v11433, 1.442695
        %v11454 = vpow.pop %v11453
        %v11455 = vmul.f32 %v11434, 1.442695
        %v11456 = vpow.pop %v11455
        %v11457 = vmul.f32 %v11435, 1.442695
        %v11458 = vpow.pop %v11457
        %v11459 = vmul.f32 %v11436, 1.442695
        %v11460 = vpow.pop %v11459
        %v11461 = vmul.f32 %v11437, 1.442695
        %v11462 = vpow.pop %v11461
        %v11463 = vmul.f32 %v11438, 1.442695
        %v11464 = vpow.pop %v11463
        %v11465 = vmul.f32 %v11439, 1.442695
        %v11466 = vpow.pop %v11465
        %v11467 = vmul.f32 %v11440, 1.442695
        %v11468 = vpow.pop %v11467
        %v11469 = vmul.f32 %v11441, 1.442695
        %v11470 = vpow.pop %v11469
        %v11471 = vmul.f32 %v11442, 1.442695
        %v11472 = vpow.pop %v11471
        %v11473 = vmul.f32 %v11443, 1.442695
        %v11474 = vpow.pop %v11473
        %v11475 = vmul.f32 %v11444, 1.442695
        %v11476 = vpow.pop %v11475
        %v11477 = vadd.f32 %v11446, 1.0
        %v11478 = vadd.f32 %v11448, 1.0
        %v11479 = vadd.f32 %v11450, 1.0
        %v11480 = vadd.f32 %v11452, 1.0
        %v11481 = vadd.f32 %v11454, 1.0
        %v11482 = vadd.f32 %v11456, 1.0
        %v11483 = vadd.f32 %v11458, 1.0
        %v11484 = vadd.f32 %v11460, 1.0
        %v11485 = vadd.f32 %v11462, 1.0
        %v11486 = vadd.f32 %v11464, 1.0
        %v11487 = vadd.f32 %v11466, 1.0
        %v11488 = vadd.f32 %v11468, 1.0
        %v11489 = vadd.f32 %v11470, 1.0
        %v11490 = vadd.f32 %v11472, 1.0
        %v11491 = vadd.f32 %v11474, 1.0
        %v11492 = vadd.f32 %v11476, 1.0
        %v11493 = vrcp.pop %v11477
        %v11494 = vmul.f32 1.0, %v11493
        %v11495 = vrcp.pop %v11478
        %v11496 = vmul.f32 1.0, %v11495
        %v11497 = vrcp.pop %v11479
        %v11498 = vmul.f32 1.0, %v11497
        %v11499 = vrcp.pop %v11480
        %v11500 = vmul.f32 1.0, %v11499
        %v11501 = vrcp.pop %v11481
        %v11502 = vmul.f32 1.0, %v11501
        %v11503 = vrcp.pop %v11482
        %v11504 = vmul.f32 1.0, %v11503
        %v11505 = vrcp.pop %v11483
        %v11506 = vmul.f32 1.0, %v11505
        %v11507 = vrcp.pop %v11484
        %v11508 = vmul.f32 1.0, %v11507
        %v11509 = vrcp.pop %v11485
        %v11510 = vmul.f32 1.0, %v11509
        %v11511 = vrcp.pop %v11486
        %v11512 = vmul.f32 1.0, %v11511
        %v11513 = vrcp.pop %v11487
        %v11514 = vmul.f32 1.0, %v11513
        %v11515 = vrcp.pop %v11488
        %v11516 = vmul.f32 1.0, %v11515
        %v11517 = vrcp.pop %v11489
        %v11518 = vmul.f32 1.0, %v11517
        %v11519 = vrcp.pop %v11490
        %v11520 = vmul.f32 1.0, %v11519
        %v11521 = vrcp.pop %v11491
        %v11522 = vmul.f32 1.0, %v11521
        %v11523 = vrcp.pop %v11492
        %v11524 = vmul.f32 1.0, %v11523
        %v11541 = vcombine.low %v11494, %v11496
        %v11542 = vcombine.low %v11498, %v11500
        %v11543 = vcombine.low %v11502, %v11504
        %v11544 = vcombine.low %v11506, %v11508
        %v11545 = vcombine.low %v11510, %v11512
        %v11546 = vcombine.low %v11514, %v11516
        %v11547 = vcombine.low %v11518, %v11520
        %v11548 = vcombine.low %v11522, %v11524
        %11557 = vst [vmem:[%s720] sm:$0xff] %v11541
        %11558 = vst [vmem:[%s720 + $0x8] sm:$0xff] %v11542
        %11559 = vst [vmem:[%s720 + $0x10] sm:$0xff] %v11543
        %11560 = vst [vmem:[%s720 + $0x18] sm:$0xff] %v11544
        %11561 = vst [vmem:[%s720 + $0x20] sm:$0xff] %v11545
        %11562 = vst [vmem:[%s720 + $0x28] sm:$0xff] %v11546
        %11563 = vst [vmem:[%s720 + $0x30] sm:$0xff] %v11547
        %11564 = vst [vmem:[%s720 + $0x38] sm:$0xff] %v11548
        %s11565 = smul.u32 16, %s36
        %p11566 = scmp.lt.s32.totalorder %s11565, 127
        %s11567 = scalar_select %p11566, %s11565, 127
        %s11568 = smul.addr %s11567, 4
        %s11569 = scalar_lea.vmem %s15, %s11568
        // Predicated region
        $region145: #{generator_forward.1} parent=79 // pred_check
          %p11570 = pneg %p379
        $region146: #{generator_forward.1} parent=79 // pred_check_branch
          %11572 = sbr.rel (%p11570) target = $region148
        $region147: #{generator_forward.1} parent=79 // pred_region
          %s11573 = smul.u32 16, %s36
        $region148: #{generator_forward.1} parent=79 // pred_fallthru
          _
      $region80: #{generator_forward.1} parent=5 // pred_fallthru
        _
      %p11574 = scmp.le.s32.totalorder 2, %s31
      // Predicated region
      $region149: #{generator_forward.1} parent=5 // pred_check
        %p11575 = pneg %p11574
      $region150: #{generator_forward.1} parent=5 // pred_check_branch
        %11577 = sbr.rel (%p11575) target = $region152
      $region151: #{generator_forward.1} parent=5 // pred_region
        %s11578 = ssub.s32 %s31, 2
        // Predicated region
        $region153: #{generator_forward.1} parent=151 // pred_check
          %p11579 = pneg %p385
        $region154: #{generator_forward.1} parent=151 // pred_check_branch
          %11581 = sbr.rel (%p11579) target = $region156
        $region155: #{generator_forward.1} parent=151 // pred_region
          %s11582 = smul.u32 16, %s37
          %p11583 = scmp.lt.s32.totalorder %s11582, 127
          %s11584 = scalar_select %p11583, %s11582, 127
          %s11585 = smul.addr %s11584, 4
          %s11586 = scalar_lea.vmem %s15, %s11585
        $region156: #{generator_forward.1} parent=151 // pred_fallthru
          _
      $region152: #{generator_forward.1} parent=5 // pred_fallthru
        _
    $region6: #{generator_forward.1} parent=1 // loop_footer
      %s35 = sadd.s32 1, %s31
    $region7: #{generator_forward.1} parent=1 // loop_footer_branch
      %30 = sbr.rel target = $region3
    $region8: #{generator_forward.1} parent=1 // loop_exit
      _
    %11587 = vsyncpa [#allocation4], 1
    %s11588 = scalar_lea.sflag [#allocation4], 1
    %11589 = vsyncpa %s11588, 1
    %11590 = vsyncpa [#allocation6], 1
    %11591 = vsyncpa [#allocation9], 1
    %11592 = vsyncpa [#allocation12], 1
    %11593 = vsyncpa [#allocation15], 1
    %11594 = vsyncpa [#allocation18], 1
    %11595 = vsyncpa [#allocation21], 1
    %11596 = vsyncpa [#allocation24], 1
    %s11597 = scalar_lea.sflag [#allocation24], 1
    %11598 = vsyncpa %s11597, 1

</llo_original>
